<compile_context>
chip_gen: v5e
topology: v5e:2x2
jax: 0.10.0
libtpu: 0.0.40
codegen_flags: <defaults>
</compile_context>

<pallas_src>
import jax
import jax.numpy as jnp
from jax import lax
from jax.experimental import pallas as pl
from jax.experimental.pallas import tpu as pltpu

SEQ_LEN = 8
N_FEATURES = 1
EMB = 32             # embedding_dim
HID = 2 * EMB        # hidden_dim = 2 * embedding_dim = 64
PAD = 128            # lane width; each gate gets its own 128-lane block


# ----------------------------- kernel ---------------------------------------
def _cell(xproj_row, h, c, whh):
    """One LSTM cell step. `xproj_row` = x_t @ W_ih^T + b (bias included),
    shape (1, 4*PAD) with gate k in lanes [k*PAD, (k+1)*PAD)."""
    gates = xproj_row + jnp.dot(h, whh, preferred_element_type=jnp.float32)
    i = jax.nn.sigmoid(gates[:, 0 * PAD:1 * PAD])
    f = jax.nn.sigmoid(gates[:, 1 * PAD:2 * PAD])
    g = jnp.tanh(gates[:, 2 * PAD:3 * PAD])
    o = jax.nn.sigmoid(gates[:, 3 * PAD:4 * PAD])
    c_new = f * c + i * g
    h_new = o * jnp.tanh(c_new)
    return h_new, c_new


def _fused_pair(T, xproj1_row, whh1, wih2, b2, whh2, collect2=None):
    """Two stacked LSTM layers, interleaved (layer-1 step t with layer-2 step
    t-1), fully unrolled. `xproj1_row(t)` returns layer-1's precomputed input
    projection (bias included) for step t. Returns layer-2's final hidden."""
    zero = jnp.zeros((1, PAD), jnp.float32)
    h1, c1, h2, c2 = zero, zero, zero, zero
    for t in range(T + 1):
        if t < T:
            nh1, nc1 = _cell(xproj1_row(t), h1, c1, whh1)
        if t >= 1:
            # layer-2 step t-1 consumes layer-1's hidden from step t-1 (= h1)
            xp2 = jnp.dot(h1, wih2, preferred_element_type=jnp.float32) + b2
            h2, c2 = _cell(xp2, h2, c2, whh2)
            if collect2 is not None:
                collect2(t - 1, h2)
        if t < T:
            h1, c1 = nh1, nc1
    return h2


def _rae_kernel(x_ref,
                e1_wih, e1_whh, e1_b,
                e2_wih, e2_whh, e2_b,
                d1_wih, d1_whh, d1_b,
                d2_wih, d2_whh, d2_b,
                lin_w, lin_b,
                y_ref, d2_seq):
    T = SEQ_LEN

    # ---------------- Encoder: rnn1 (1->HID) + rnn2 (HID->EMB), interleaved --
    # rnn1 input projection hoisted for the whole sequence; K=1 matmul done as
    # a broadcast multiply on the VPU (no MXU), bias folded in.
    xp1 = x_ref[...] * e1_wih[...] + e1_b[...]          # (T, 4*PAD)
    h_enc = _fused_pair(
        T, lambda t: xp1[t:t + 1, :],
        e1_whh[...], e2_wih[...], e2_b[...], e2_whh[...])

    # ---------------- Decoder: rnn1 (EMB->EMB) + rnn2 (EMB->HID), interleaved
    # rnn1's input is the constant embedding -> project it exactly once.
    xpd1 = (jnp.dot(h_enc, d1_wih[...], preferred_element_type=jnp.float32)
            + d1_b[...])                                 # (1, 4*PAD), constant

    def collect(s, h):                                   # static-index stores
        d2_seq[pl.ds(s, 1), :] = h

    _fused_pair(
        T, lambda t: xpd1,
        d1_whh[...], d2_wih[...], d2_b[...], d2_whh[...], collect)

    # ---------------- Output linear (N=1): multiply + lane reduce ------------
    y_ref[...] = (jnp.sum(d2_seq[...] * lin_w[...], axis=-1, keepdims=True)
                  + lin_b[...])


# ----------------------------- wrapper ---------------------------------------
def recurrent_autoencoder(x, packed_params):
    vmem = pl.BlockSpec(memory_space=pltpu.MemorySpace.VMEM)
    return pl.pallas_call(
        _rae_kernel,
        out_shape=jax.ShapeDtypeStruct((SEQ_LEN, N_FEATURES), jnp.float32),
        in_specs=[vmem] * (1 + len(packed_params)),
        out_specs=vmem,
        scratch_shapes=[pltpu.VMEM((SEQ_LEN, PAD), jnp.float32)],  # decoder rnn2 outputs
    )(x, *packed_params)


# ----------------------------- parameters ------------------------------------
def _init_lstm_raw(key, in_dim, hidden):
    """PyTorch-style init: W_ih:(4H,in), W_hh:(4H,H), summed bias:(4H,)."""
    k = 1.0 / float(hidden) ** 0.5
    k1, k2, k3, k4 = jax.random.split(key, 4)
    wih = jax.random.uniform(k1, (4 * hidden, in_dim), jnp.float32, -k, k)
    whh = jax.random.uniform(k2, (4 * hidden, hidden), jnp.float32, -k, k)
    bih = jax.random.uniform(k3, (4 * hidden,), jnp.float32, -k, k)
    bhh = jax.random.uniform(k4, (4 * hidden,), jnp.float32, -k, k)
    return wih, whh, bih + bhh


def make_raw_params(key):
    ks = jax.random.split(key, 5)
    e1 = _init_lstm_raw(ks[0], N_FEATURES, HID)   # encoder rnn1
    e2 = _init_lstm_raw(ks[1], HID, EMB)          # encoder rnn2
    d1 = _init_lstm_raw(ks[2], EMB, EMB)          # decoder rnn1
    d2 = _init_lstm_raw(ks[3], EMB, HID)          # decoder rnn2
    kl = 1.0 / float(HID) ** 0.5
    kw, kb = jax.random.split(ks[4])
    lw = jax.random.uniform(kw, (N_FEATURES, HID), jnp.float32, -kl, kl)
    lb = jax.random.uniform(kb, (N_FEATURES,), jnp.float32, -kl, kl)
    return dict(e1=e1, e2=e2, d1=d1, d2=d2, lin=(lw, lb))


def _pad_lstm(wih, whh, b, in_pad):
    """Pre-transpose and pad so each gate occupies its own 128-lane block."""
    four_h, in_dim = wih.shape
    H = four_h // 4
    wih_t, whh_t = wih.T, whh.T                     # (in, 4H), (H, 4H)
    wih_p = jnp.zeros((in_pad, 4 * PAD), jnp.float32)
    whh_p = jnp.zeros((PAD, 4 * PAD), jnp.float32)
    b_p = jnp.zeros((1, 4 * PAD), jnp.float32)
    for k in range(4):                              # PyTorch gate order i,f,g,o
        wih_p = wih_p.at[:in_dim, k * PAD:k * PAD + H].set(wih_t[:, k * H:(k + 1) * H])
        whh_p = whh_p.at[:H, k * PAD:k * PAD + H].set(whh_t[:, k * H:(k + 1) * H])
        b_p = b_p.at[:, k * PAD:k * PAD + H].set(b[None, k * H:(k + 1) * H])
    return wih_p, whh_p, b_p


def pack_params(raw):
    e1 = _pad_lstm(*raw["e1"], in_pad=N_FEATURES)   # (1, 4*PAD) -> broadcast mult
    e2 = _pad_lstm(*raw["e2"], in_pad=PAD)
    d1 = _pad_lstm(*raw["d1"], in_pad=PAD)
    d2 = _pad_lstm(*raw["d2"], in_pad=PAD)
    lw, lb = raw["lin"]
    lin_w_p = jnp.zeros((1, PAD), jnp.float32).at[:, :HID].set(lw)
    lin_b_p = lb.reshape(1, 1)
    return (*e1, *e2, *d1, *d2, lin_w_p, lin_b_p)


# ----------------------------- pure-JAX reference ----------------------------
def _lstm_ref(x_seq, wih, whh, b, H):
    wih_t, whh_t = wih.T, whh.T

    def step(carry, x_t):
        h, c = carry
        gates = x_t @ wih_t + h @ whh_t + b
        i = jax.nn.sigmoid(gates[:H])
        f = jax.nn.sigmoid(gates[H:2 * H])
        g = jnp.tanh(gates[2 * H:3 * H])
        o = jax.nn.sigmoid(gates[3 * H:])
        c = f * c + i * g
        h = o * jnp.tanh(c)
        return (h, c), h

    (hT, _), ys = lax.scan(step, (jnp.zeros(H), jnp.zeros(H)), x_seq)
    return ys, hT


def ref_forward(x, raw):
    seq1, _ = _lstm_ref(x, *raw["e1"], HID)
    _, h_enc = _lstm_ref(seq1, *raw["e2"], EMB)
    dec_in = jnp.tile(h_enc[None, :], (SEQ_LEN, 1))
    seq2, _ = _lstm_ref(dec_in, *raw["d1"], EMB)
    seq3, _ = _lstm_ref(seq2, *raw["d2"], HID)
    lw, lb = raw["lin"]
    return seq3 @ lw.T + lb


# ----------------------------- main -------------------------------------------
if __name__ == "__main__":
    key = jax.random.PRNGKey(0)
    kx, kp = jax.random.split(key)
    x = jax.random.normal(kx, (SEQ_LEN, N_FEATURES), jnp.float32)

    raw = make_raw_params(kp)
    packed = pack_params(raw)

    y = jax.block_until_ready(recurrent_autoencoder(x, packed))
    y_ref = jax.block_until_ready(ref_forward(x, raw))

    assert y.shape == (SEQ_LEN, N_FEATURES)
    assert jnp.allclose(y, y_ref, atol=1e-4, rtol=1e-4), (y, y_ref)
    print("KERNEL_OK")
</pallas_src>

<mosaic_0001>
module attributes {stable_mosaic.version = 11 : i64} {
  func.func @_rae_kernel(%arg0: memref<8x1xf32, #tpu.memory_space<vmem>>, %arg1: memref<1x512xf32, #tpu.memory_space<vmem>>, %arg2: memref<128x512xf32, #tpu.memory_space<vmem>>, %arg3: memref<1x512xf32, #tpu.memory_space<vmem>>, %arg4: memref<128x512xf32, #tpu.memory_space<vmem>>, %arg5: memref<128x512xf32, #tpu.memory_space<vmem>>, %arg6: memref<1x512xf32, #tpu.memory_space<vmem>>, %arg7: memref<128x512xf32, #tpu.memory_space<vmem>>, %arg8: memref<128x512xf32, #tpu.memory_space<vmem>>, %arg9: memref<1x512xf32, #tpu.memory_space<vmem>>, %arg10: memref<128x512xf32, #tpu.memory_space<vmem>>, %arg11: memref<128x512xf32, #tpu.memory_space<vmem>>, %arg12: memref<1x512xf32, #tpu.memory_space<vmem>>, %arg13: memref<1x128xf32, #tpu.memory_space<vmem>>, %arg14: memref<1x1xf32, #tpu.memory_space<vmem>>, %arg15: memref<8x1xf32, #tpu.memory_space<vmem>>, %arg16: memref<8x128xf32, #tpu.memory_space<vmem>>) attributes {dimension_semantics = [], scalar_prefetch = 0 : i64, scratch_operands = 1 : i64, tpu.core_type = #tpu.core_type<tc>} {
    %c0 = arith.constant 0 : index
    %c0_0 = arith.constant 0 : index
    %0 = vector.load %arg0[%c0, %c0_0] : memref<8x1xf32, #tpu.memory_space<vmem>>, vector<8x1xf32>
    %c0_1 = arith.constant 0 : index
    %c0_2 = arith.constant 0 : index
    %1 = vector.load %arg1[%c0_1, %c0_2] : memref<1x512xf32, #tpu.memory_space<vmem>>, vector<1x512xf32>
    %2 = vector.broadcast %0 : vector<8x1xf32> to vector<8x512xf32>
    %3 = vector.broadcast %1 : vector<1x512xf32> to vector<8x512xf32>
    %4 = arith.mulf %2, %3 : vector<8x512xf32>
    %c0_3 = arith.constant 0 : index
    %c0_4 = arith.constant 0 : index
    %5 = vector.load %arg3[%c0_3, %c0_4] : memref<1x512xf32, #tpu.memory_space<vmem>>, vector<1x512xf32>
    %6 = vector.broadcast %5 : vector<1x512xf32> to vector<8x512xf32>
    %7 = arith.addf %4, %6 : vector<8x512xf32>
    %c0_5 = arith.constant 0 : index
    %c0_6 = arith.constant 0 : index
    %8 = vector.load %arg2[%c0_5, %c0_6] : memref<128x512xf32, #tpu.memory_space<vmem>>, vector<128x512xf32>
    %c0_7 = arith.constant 0 : index
    %c0_8 = arith.constant 0 : index
    %9 = vector.load %arg4[%c0_7, %c0_8] : memref<128x512xf32, #tpu.memory_space<vmem>>, vector<128x512xf32>
    %c0_9 = arith.constant 0 : index
    %c0_10 = arith.constant 0 : index
    %10 = vector.load %arg6[%c0_9, %c0_10] : memref<1x512xf32, #tpu.memory_space<vmem>>, vector<1x512xf32>
    %c0_11 = arith.constant 0 : index
    %c0_12 = arith.constant 0 : index
    %11 = vector.load %arg5[%c0_11, %c0_12] : memref<128x512xf32, #tpu.memory_space<vmem>>, vector<128x512xf32>
    %cst = arith.constant 0.000000e+00 : f32
    %12 = vector.broadcast %cst : f32 to vector<1x128xf32>
    %13 = vector.extract_strided_slice %7 {offsets = [0, 0], sizes = [1, 512], strides = [1, 1]} : vector<8x512xf32> to vector<1x512xf32>
    %cst_13 = arith.constant dense<0.000000e+00> : vector<1x512xf32>
    %14 = tpu.matmul %12, %8, %cst_13 {dimension_numbers = #tpu.dot_dimension_numbers<[1], [0], [0], [1], [0, 0, 1, 1], [], []>} : vector<1x128xf32>, vector<128x512xf32>, vector<1x512xf32> -> vector<1x512xf32>
    %15 = arith.addf %13, %14 : vector<1x512xf32>
    %16 = vector.extract_strided_slice %15 {offsets = [0, 0], sizes = [1, 128], strides = [1, 1]} : vector<1x512xf32> to vector<1x128xf32>
    %17 = arith.negf %16 : vector<1x128xf32>
    %18 = math.exp %17 : vector<1x128xf32>
    %cst_14 = arith.constant 1.000000e+00 : f32
    %19 = vector.broadcast %cst_14 : f32 to vector<1x128xf32>
    %20 = arith.addf %19, %18 : vector<1x128xf32>
    %21 = arith.divf %19, %20 : vector<1x128xf32>
    %22 = vector.extract_strided_slice %15 {offsets = [0, 128], sizes = [1, 128], strides = [1, 1]} : vector<1x512xf32> to vector<1x128xf32>
    %23 = arith.negf %22 : vector<1x128xf32>
    %24 = math.exp %23 : vector<1x128xf32>
    %cst_15 = arith.constant 1.000000e+00 : f32
    %25 = vector.broadcast %cst_15 : f32 to vector<1x128xf32>
    %26 = arith.addf %25, %24 : vector<1x128xf32>
    %27 = arith.divf %25, %26 : vector<1x128xf32>
    %28 = vector.extract_strided_slice %15 {offsets = [0, 256], sizes = [1, 128], strides = [1, 1]} : vector<1x512xf32> to vector<1x128xf32>
    %29 = math.tanh %28 : vector<1x128xf32>
    %30 = vector.extract_strided_slice %15 {offsets = [0, 384], sizes = [1, 128], strides = [1, 1]} : vector<1x512xf32> to vector<1x128xf32>
    %31 = arith.negf %30 : vector<1x128xf32>
    %32 = math.exp %31 : vector<1x128xf32>
    %cst_16 = arith.constant 1.000000e+00 : f32
    %33 = vector.broadcast %cst_16 : f32 to vector<1x128xf32>
    %34 = arith.addf %33, %32 : vector<1x128xf32>
    %35 = arith.divf %33, %34 : vector<1x128xf32>
    %36 = arith.mulf %27, %12 : vector<1x128xf32>
    %37 = arith.mulf %21, %29 : vector<1x128xf32>
    %38 = arith.addf %36, %37 : vector<1x128xf32>
    %39 = math.tanh %38 : vector<1x128xf32>
    %40 = arith.mulf %35, %39 : vector<1x128xf32>
    %41 = vector.extract_strided_slice %7 {offsets = [1, 0], sizes = [1, 512], strides = [1, 1]} : vector<8x512xf32> to vector<1x512xf32>
    %cst_17 = arith.constant dense<0.000000e+00> : vector<1x512xf32>
    %42 = tpu.matmul %40, %8, %cst_17 {dimension_numbers = #tpu.dot_dimension_numbers<[1], [0], [0], [1], [0, 0, 1, 1], [], []>} : vector<1x128xf32>, vector<128x512xf32>, vector<1x512xf32> -> vector<1x512xf32>
    %43 = arith.addf %41, %42 : vector<1x512xf32>
    %44 = vector.extract_strided_slice %43 {offsets = [0, 0], sizes = [1, 128], strides = [1, 1]} : vector<1x512xf32> to vector<1x128xf32>
    %45 = arith.negf %44 : vector<1x128xf32>
    %46 = math.exp %45 : vector<1x128xf32>
    %cst_18 = arith.constant 1.000000e+00 : f32
    %47 = vector.broadcast %cst_18 : f32 to vector<1x128xf32>
    %48 = arith.addf %47, %46 : vector<1x128xf32>
    %49 = arith.divf %47, %48 : vector<1x128xf32>
    %50 = vector.extract_strided_slice %43 {offsets = [0, 128], sizes = [1, 128], strides = [1, 1]} : vector<1x512xf32> to vector<1x128xf32>
    %51 = arith.negf %50 : vector<1x128xf32>
    %52 = math.exp %51 : vector<1x128xf32>
    %cst_19 = arith.constant 1.000000e+00 : f32
    %53 = vector.broadcast %cst_19 : f32 to vector<1x128xf32>
    %54 = arith.addf %53, %52 : vector<1x128xf32>
    %55 = arith.divf %53, %54 : vector<1x128xf32>
    %56 = vector.extract_strided_slice %43 {offsets = [0, 256], sizes = [1, 128], strides = [1, 1]} : vector<1x512xf32> to vector<1x128xf32>
    %57 = math.tanh %56 : vector<1x128xf32>
    %58 = vector.extract_strided_slice %43 {offsets = [0, 384], sizes = [1, 128], strides = [1, 1]} : vector<1x512xf32> to vector<1x128xf32>
    %59 = arith.negf %58 : vector<1x128xf32>
    %60 = math.exp %59 : vector<1x128xf32>
    %cst_20 = arith.constant 1.000000e+00 : f32
    %61 = vector.broadcast %cst_20 : f32 to vector<1x128xf32>
    %62 = arith.addf %61, %60 : vector<1x128xf32>
    %63 = arith.divf %61, %62 : vector<1x128xf32>
    %64 = arith.mulf %55, %38 : vector<1x128xf32>
    %65 = arith.mulf %49, %57 : vector<1x128xf32>
    %66 = arith.addf %64, %65 : vector<1x128xf32>
    %67 = math.tanh %66 : vector<1x128xf32>
    %68 = arith.mulf %63, %67 : vector<1x128xf32>
    %cst_21 = arith.constant dense<0.000000e+00> : vector<1x512xf32>
    %69 = tpu.matmul %40, %9, %cst_21 {dimension_numbers = #tpu.dot_dimension_numbers<[1], [0], [0], [1], [0, 0, 1, 1], [], []>} : vector<1x128xf32>, vector<128x512xf32>, vector<1x512xf32> -> vector<1x512xf32>
    %70 = arith.addf %69, %10 : vector<1x512xf32>
    %cst_22 = arith.constant dense<0.000000e+00> : vector<1x512xf32>
    %71 = tpu.matmul %12, %11, %cst_22 {dimension_numbers = #tpu.dot_dimension_numbers<[1], [0], [0], [1], [0, 0, 1, 1], [], []>} : vector<1x128xf32>, vector<128x512xf32>, vector<1x512xf32> -> vector<1x512xf32>
    %72 = arith.addf %70, %71 : vector<1x512xf32>
    %73 = vector.extract_strided_slice %72 {offsets = [0, 0], sizes = [1, 128], strides = [1, 1]} : vector<1x512xf32> to vector<1x128xf32>
    %74 = arith.negf %73 : vector<1x128xf32>
    %75 = math.exp %74 : vector<1x128xf32>
    %cst_23 = arith.constant 1.000000e+00 : f32
    %76 = vector.broadcast %cst_23 : f32 to vector<1x128xf32>
    %77 = arith.addf %76, %75 : vector<1x128xf32>
    %78 = arith.divf %76, %77 : vector<1x128xf32>
    %79 = vector.extract_strided_slice %72 {offsets = [0, 128], sizes = [1, 128], strides = [1, 1]} : vector<1x512xf32> to vector<1x128xf32>
    %80 = arith.negf %79 : vector<1x128xf32>
    %81 = math.exp %80 : vector<1x128xf32>
    %cst_24 = arith.constant 1.000000e+00 : f32
    %82 = vector.broadcast %cst_24 : f32 to vector<1x128xf32>
    %83 = arith.addf %82, %81 : vector<1x128xf32>
    %84 = arith.divf %82, %83 : vector<1x128xf32>
    %85 = vector.extract_strided_slice %72 {offsets = [0, 256], sizes = [1, 128], strides = [1, 1]} : vector<1x512xf32> to vector<1x128xf32>
    %86 = math.tanh %85 : vector<1x128xf32>
    %87 = vector.extract_strided_slice %72 {offsets = [0, 384], sizes = [1, 128], strides = [1, 1]} : vector<1x512xf32> to vector<1x128xf32>
    %88 = arith.negf %87 : vector<1x128xf32>
    %89 = math.exp %88 : vector<1x128xf32>
    %cst_25 = arith.constant 1.000000e+00 : f32
    %90 = vector.broadcast %cst_25 : f32 to vector<1x128xf32>
    %91 = arith.addf %90, %89 : vector<1x128xf32>
    %92 = arith.divf %90, %91 : vector<1x128xf32>
    %93 = arith.mulf %84, %12 : vector<1x128xf32>
    %94 = arith.mulf %78, %86 : vector<1x128xf32>
    %95 = arith.addf %93, %94 : vector<1x128xf32>
    %96 = math.tanh %95 : vector<1x128xf32>
    %97 = arith.mulf %92, %96 : vector<1x128xf32>
    %98 = vector.extract_strided_slice %7 {offsets = [2, 0], sizes = [1, 512], strides = [1, 1]} : vector<8x512xf32> to vector<1x512xf32>
    %cst_26 = arith.constant dense<0.000000e+00> : vector<1x512xf32>
    %99 = tpu.matmul %68, %8, %cst_26 {dimension_numbers = #tpu.dot_dimension_numbers<[1], [0], [0], [1], [0, 0, 1, 1], [], []>} : vector<1x128xf32>, vector<128x512xf32>, vector<1x512xf32> -> vector<1x512xf32>
    %100 = arith.addf %98, %99 : vector<1x512xf32>
    %101 = vector.extract_strided_slice %100 {offsets = [0, 0], sizes = [1, 128], strides = [1, 1]} : vector<1x512xf32> to vector<1x128xf32>
    %102 = arith.negf %101 : vector<1x128xf32>
    %103 = math.exp %102 : vector<1x128xf32>
    %cst_27 = arith.constant 1.000000e+00 : f32
    %104 = vector.broadcast %cst_27 : f32 to vector<1x128xf32>
    %105 = arith.addf %104, %103 : vector<1x128xf32>
    %106 = arith.divf %104, %105 : vector<1x128xf32>
    %107 = vector.extract_strided_slice %100 {offsets = [0, 128], sizes = [1, 128], strides = [1, 1]} : vector<1x512xf32> to vector<1x128xf32>
    %108 = arith.negf %107 : vector<1x128xf32>
    %109 = math.exp %108 : vector<1x128xf32>
    %cst_28 = arith.constant 1.000000e+00 : f32
    %110 = vector.broadcast %cst_28 : f32 to vector<1x128xf32>
    %111 = arith.addf %110, %109 : vector<1x128xf32>
    %112 = arith.divf %110, %111 : vector<1x128xf32>
    %113 = vector.extract_strided_slice %100 {offsets = [0, 256], sizes = [1, 128], strides = [1, 1]} : vector<1x512xf32> to vector<1x128xf32>
    %114 = math.tanh %113 : vector<1x128xf32>
    %115 = vector.extract_strided_slice %100 {offsets = [0, 384], sizes = [1, 128], strides = [1, 1]} : vector<1x512xf32> to vector<1x128xf32>
    %116 = arith.negf %115 : vector<1x128xf32>
    %117 = math.exp %116 : vector<1x128xf32>
    %cst_29 = arith.constant 1.000000e+00 : f32
    %118 = vector.broadcast %cst_29 : f32 to vector<1x128xf32>
    %119 = arith.addf %118, %117 : vector<1x128xf32>
    %120 = arith.divf %118, %119 : vector<1x128xf32>
    %121 = arith.mulf %112, %66 : vector<1x128xf32>
    %122 = arith.mulf %106, %114 : vector<1x128xf32>
    %123 = arith.addf %121, %122 : vector<1x128xf32>
    %124 = math.tanh %123 : vector<1x128xf32>
    %125 = arith.mulf %120, %124 : vector<1x128xf32>
    %cst_30 = arith.constant dense<0.000000e+00> : vector<1x512xf32>
    %126 = tpu.matmul %68, %9, %cst_30 {dimension_numbers = #tpu.dot_dimension_numbers<[1], [0], [0], [1], [0, 0, 1, 1], [], []>} : vector<1x128xf32>, vector<128x512xf32>, vector<1x512xf32> -> vector<1x512xf32>
    %127 = arith.addf %126, %10 : vector<1x512xf32>
    %cst_31 = arith.constant dense<0.000000e+00> : vector<1x512xf32>
    %128 = tpu.matmul %97, %11, %cst_31 {dimension_numbers = #tpu.dot_dimension_numbers<[1], [0], [0], [1], [0, 0, 1, 1], [], []>} : vector<1x128xf32>, vector<128x512xf32>, vector<1x512xf32> -> vector<1x512xf32>
    %129 = arith.addf %127, %128 : vector<1x512xf32>
    %130 = vector.extract_strided_slice %129 {offsets = [0, 0], sizes = [1, 128], strides = [1, 1]} : vector<1x512xf32> to vector<1x128xf32>
    %131 = arith.negf %130 : vector<1x128xf32>
    %132 = math.exp %131 : vector<1x128xf32>
    %cst_32 = arith.constant 1.000000e+00 : f32
    %133 = vector.broadcast %cst_32 : f32 to vector<1x128xf32>
    %134 = arith.addf %133, %132 : vector<1x128xf32>
    %135 = arith.divf %133, %134 : vector<1x128xf32>
    %136 = vector.extract_strided_slice %129 {offsets = [0, 128], sizes = [1, 128], strides = [1, 1]} : vector<1x512xf32> to vector<1x128xf32>
    %137 = arith.negf %136 : vector<1x128xf32>
    %138 = math.exp %137 : vector<1x128xf32>
    %cst_33 = arith.constant 1.000000e+00 : f32
    %139 = vector.broadcast %cst_33 : f32 to vector<1x128xf32>
    %140 = arith.addf %139, %138 : vector<1x128xf32>
    %141 = arith.divf %139, %140 : vector<1x128xf32>
    %142 = vector.extract_strided_slice %129 {offsets = [0, 256], sizes = [1, 128], strides = [1, 1]} : vector<1x512xf32> to vector<1x128xf32>
    %143 = math.tanh %142 : vector<1x128xf32>
    %144 = vector.extract_strided_slice %129 {offsets = [0, 384], sizes = [1, 128], strides = [1, 1]} : vector<1x512xf32> to vector<1x128xf32>
    %145 = arith.negf %144 : vector<1x128xf32>
    %146 = math.exp %145 : vector<1x128xf32>
    %cst_34 = arith.constant 1.000000e+00 : f32
    %147 = vector.broadcast %cst_34 : f32 to vector<1x128xf32>
    %148 = arith.addf %147, %146 : vector<1x128xf32>
    %149 = arith.divf %147, %148 : vector<1x128xf32>
    %150 = arith.mulf %141, %95 : vector<1x128xf32>
    %151 = arith.mulf %135, %143 : vector<1x128xf32>
    %152 = arith.addf %150, %151 : vector<1x128xf32>
    %153 = math.tanh %152 : vector<1x128xf32>
    %154 = arith.mulf %149, %153 : vector<1x128xf32>
    %155 = vector.extract_strided_slice %7 {offsets = [3, 0], sizes = [1, 512], strides = [1, 1]} : vector<8x512xf32> to vector<1x512xf32>
    %cst_35 = arith.constant dense<0.000000e+00> : vector<1x512xf32>
    %156 = tpu.matmul %125, %8, %cst_35 {dimension_numbers = #tpu.dot_dimension_numbers<[1], [0], [0], [1], [0, 0, 1, 1], [], []>} : vector<1x128xf32>, vector<128x512xf32>, vector<1x512xf32> -> vector<1x512xf32>
    %157 = arith.addf %155, %156 : vector<1x512xf32>
    %158 = vector.extract_strided_slice %157 {offsets = [0, 0], sizes = [1, 128], strides = [1, 1]} : vector<1x512xf32> to vector<1x128xf32>
    %159 = arith.negf %158 : vector<1x128xf32>
    %160 = math.exp %159 : vector<1x128xf32>
    %cst_36 = arith.constant 1.000000e+00 : f32
    %161 = vector.broadcast %cst_36 : f32 to vector<1x128xf32>
    %162 = arith.addf %161, %160 : vector<1x128xf32>
    %163 = arith.divf %161, %162 : vector<1x128xf32>
    %164 = vector.extract_strided_slice %157 {offsets = [0, 128], sizes = [1, 128], strides = [1, 1]} : vector<1x512xf32> to vector<1x128xf32>
    %165 = arith.negf %164 : vector<1x128xf32>
    %166 = math.exp %165 : vector<1x128xf32>
    %cst_37 = arith.constant 1.000000e+00 : f32
    %167 = vector.broadcast %cst_37 : f32 to vector<1x128xf32>
    %168 = arith.addf %167, %166 : vector<1x128xf32>
    %169 = arith.divf %167, %168 : vector<1x128xf32>
    %170 = vector.extract_strided_slice %157 {offsets = [0, 256], sizes = [1, 128], strides = [1, 1]} : vector<1x512xf32> to vector<1x128xf32>
    %171 = math.tanh %170 : vector<1x128xf32>
    %172 = vector.extract_strided_slice %157 {offsets = [0, 384], sizes = [1, 128], strides = [1, 1]} : vector<1x512xf32> to vector<1x128xf32>
    %173 = arith.negf %172 : vector<1x128xf32>
    %174 = math.exp %173 : vector<1x128xf32>
    %cst_38 = arith.constant 1.000000e+00 : f32
    %175 = vector.broadcast %cst_38 : f32 to vector<1x128xf32>
    %176 = arith.addf %175, %174 : vector<1x128xf32>
    %177 = arith.divf %175, %176 : vector<1x128xf32>
    %178 = arith.mulf %169, %123 : vector<1x128xf32>
    %179 = arith.mulf %163, %171 : vector<1x128xf32>
    %180 = arith.addf %178, %179 : vector<1x128xf32>
    %181 = math.tanh %180 : vector<1x128xf32>
    %182 = arith.mulf %177, %181 : vector<1x128xf32>
    %cst_39 = arith.constant dense<0.000000e+00> : vector<1x512xf32>
    %183 = tpu.matmul %125, %9, %cst_39 {dimension_numbers = #tpu.dot_dimension_numbers<[1], [0], [0], [1], [0, 0, 1, 1], [], []>} : vector<1x128xf32>, vector<128x512xf32>, vector<1x512xf32> -> vector<1x512xf32>
    %184 = arith.addf %183, %10 : vector<1x512xf32>
    %cst_40 = arith.constant dense<0.000000e+00> : vector<1x512xf32>
    %185 = tpu.matmul %154, %11, %cst_40 {dimension_numbers = #tpu.dot_dimension_numbers<[1], [0], [0], [1], [0, 0, 1, 1], [], []>} : vector<1x128xf32>, vector<128x512xf32>, vector<1x512xf32> -> vector<1x512xf32>
    %186 = arith.addf %184, %185 : vector<1x512xf32>
    %187 = vector.extract_strided_slice %186 {offsets = [0, 0], sizes = [1, 128], strides = [1, 1]} : vector<1x512xf32> to vector<1x128xf32>
    %188 = arith.negf %187 : vector<1x128xf32>
    %189 = math.exp %188 : vector<1x128xf32>
    %cst_41 = arith.constant 1.000000e+00 : f32
    %190 = vector.broadcast %cst_41 : f32 to vector<1x128xf32>
    %191 = arith.addf %190, %189 : vector<1x128xf32>
    %192 = arith.divf %190, %191 : vector<1x128xf32>
    %193 = vector.extract_strided_slice %186 {offsets = [0, 128], sizes = [1, 128], strides = [1, 1]} : vector<1x512xf32> to vector<1x128xf32>
    %194 = arith.negf %193 : vector<1x128xf32>
    %195 = math.exp %194 : vector<1x128xf32>
    %cst_42 = arith.constant 1.000000e+00 : f32
    %196 = vector.broadcast %cst_42 : f32 to vector<1x128xf32>
    %197 = arith.addf %196, %195 : vector<1x128xf32>
    %198 = arith.divf %196, %197 : vector<1x128xf32>
    %199 = vector.extract_strided_slice %186 {offsets = [0, 256], sizes = [1, 128], strides = [1, 1]} : vector<1x512xf32> to vector<1x128xf32>
    %200 = math.tanh %199 : vector<1x128xf32>
    %201 = vector.extract_strided_slice %186 {offsets = [0, 384], sizes = [1, 128], strides = [1, 1]} : vector<1x512xf32> to vector<1x128xf32>
    %202 = arith.negf %201 : vector<1x128xf32>
    %203 = math.exp %202 : vector<1x128xf32>
    %cst_43 = arith.constant 1.000000e+00 : f32
    %204 = vector.broadcast %cst_43 : f32 to vector<1x128xf32>
    %205 = arith.addf %204, %203 : vector<1x128xf32>
    %206 = arith.divf %204, %205 : vector<1x128xf32>
    %207 = arith.mulf %198, %152 : vector<1x128xf32>
    %208 = arith.mulf %192, %200 : vector<1x128xf32>
    %209 = arith.addf %207, %208 : vector<1x128xf32>
    %210 = math.tanh %209 : vector<1x128xf32>
    %211 = arith.mulf %206, %210 : vector<1x128xf32>
    %212 = vector.extract_strided_slice %7 {offsets = [4, 0], sizes = [1, 512], strides = [1, 1]} : vector<8x512xf32> to vector<1x512xf32>
    %cst_44 = arith.constant dense<0.000000e+00> : vector<1x512xf32>
    %213 = tpu.matmul %182, %8, %cst_44 {dimension_numbers = #tpu.dot_dimension_numbers<[1], [0], [0], [1], [0, 0, 1, 1], [], []>} : vector<1x128xf32>, vector<128x512xf32>, vector<1x512xf32> -> vector<1x512xf32>
    %214 = arith.addf %212, %213 : vector<1x512xf32>
    %215 = vector.extract_strided_slice %214 {offsets = [0, 0], sizes = [1, 128], strides = [1, 1]} : vector<1x512xf32> to vector<1x128xf32>
    %216 = arith.negf %215 : vector<1x128xf32>
    %217 = math.exp %216 : vector<1x128xf32>
    %cst_45 = arith.constant 1.000000e+00 : f32
    %218 = vector.broadcast %cst_45 : f32 to vector<1x128xf32>
    %219 = arith.addf %218, %217 : vector<1x128xf32>
    %220 = arith.divf %218, %219 : vector<1x128xf32>
    %221 = vector.extract_strided_slice %214 {offsets = [0, 128], sizes = [1, 128], strides = [1, 1]} : vector<1x512xf32> to vector<1x128xf32>
    %222 = arith.negf %221 : vector<1x128xf32>
    %223 = math.exp %222 : vector<1x128xf32>
    %cst_46 = arith.constant 1.000000e+00 : f32
    %224 = vector.broadcast %cst_46 : f32 to vector<1x128xf32>
    %225 = arith.addf %224, %223 : vector<1x128xf32>
    %226 = arith.divf %224, %225 : vector<1x128xf32>
    %227 = vector.extract_strided_slice %214 {offsets = [0, 256], sizes = [1, 128], strides = [1, 1]} : vector<1x512xf32> to vector<1x128xf32>
    %228 = math.tanh %227 : vector<1x128xf32>
    %229 = vector.extract_strided_slice %214 {offsets = [0, 384], sizes = [1, 128], strides = [1, 1]} : vector<1x512xf32> to vector<1x128xf32>
    %230 = arith.negf %229 : vector<1x128xf32>
    %231 = math.exp %230 : vector<1x128xf32>
    %cst_47 = arith.constant 1.000000e+00 : f32
    %232 = vector.broadcast %cst_47 : f32 to vector<1x128xf32>
    %233 = arith.addf %232, %231 : vector<1x128xf32>
    %234 = arith.divf %232, %233 : vector<1x128xf32>
    %235 = arith.mulf %226, %180 : vector<1x128xf32>
    %236 = arith.mulf %220, %228 : vector<1x128xf32>
    %237 = arith.addf %235, %236 : vector<1x128xf32>
    %238 = math.tanh %237 : vector<1x128xf32>
    %239 = arith.mulf %234, %238 : vector<1x128xf32>
    %cst_48 = arith.constant dense<0.000000e+00> : vector<1x512xf32>
    %240 = tpu.matmul %182, %9, %cst_48 {dimension_numbers = #tpu.dot_dimension_numbers<[1], [0], [0], [1], [0, 0, 1, 1], [], []>} : vector<1x128xf32>, vector<128x512xf32>, vector<1x512xf32> -> vector<1x512xf32>
    %241 = arith.addf %240, %10 : vector<1x512xf32>
    %cst_49 = arith.constant dense<0.000000e+00> : vector<1x512xf32>
    %242 = tpu.matmul %211, %11, %cst_49 {dimension_numbers = #tpu.dot_dimension_numbers<[1], [0], [0], [1], [0, 0, 1, 1], [], []>} : vector<1x128xf32>, vector<128x512xf32>, vector<1x512xf32> -> vector<1x512xf32>
    %243 = arith.addf %241, %242 : vector<1x512xf32>
    %244 = vector.extract_strided_slice %243 {offsets = [0, 0], sizes = [1, 128], strides = [1, 1]} : vector<1x512xf32> to vector<1x128xf32>
    %245 = arith.negf %244 : vector<1x128xf32>
    %246 = math.exp %245 : vector<1x128xf32>
    %cst_50 = arith.constant 1.000000e+00 : f32
    %247 = vector.broadcast %cst_50 : f32 to vector<1x128xf32>
    %248 = arith.addf %247, %246 : vector<1x128xf32>
    %249 = arith.divf %247, %248 : vector<1x128xf32>
    %250 = vector.extract_strided_slice %243 {offsets = [0, 128], sizes = [1, 128], strides = [1, 1]} : vector<1x512xf32> to vector<1x128xf32>
    %251 = arith.negf %250 : vector<1x128xf32>
    %252 = math.exp %251 : vector<1x128xf32>
    %cst_51 = arith.constant 1.000000e+00 : f32
    %253 = vector.broadcast %cst_51 : f32 to vector<1x128xf32>
    %254 = arith.addf %253, %252 : vector<1x128xf32>
    %255 = arith.divf %253, %254 : vector<1x128xf32>
    %256 = vector.extract_strided_slice %243 {offsets = [0, 256], sizes = [1, 128], strides = [1, 1]} : vector<1x512xf32> to vector<1x128xf32>
    %257 = math.tanh %256 : vector<1x128xf32>
    %258 = vector.extract_strided_slice %243 {offsets = [0, 384], sizes = [1, 128], strides = [1, 1]} : vector<1x512xf32> to vector<1x128xf32>
    %259 = arith.negf %258 : vector<1x128xf32>
    %260 = math.exp %259 : vector<1x128xf32>
    %cst_52 = arith.constant 1.000000e+00 : f32
    %261 = vector.broadcast %cst_52 : f32 to vector<1x128xf32>
    %262 = arith.addf %261, %260 : vector<1x128xf32>
    %263 = arith.divf %261, %262 : vector<1x128xf32>
    %264 = arith.mulf %255, %209 : vector<1x128xf32>
    %265 = arith.mulf %249, %257 : vector<1x128xf32>
    %266 = arith.addf %264, %265 : vector<1x128xf32>
    %267 = math.tanh %266 : vector<1x128xf32>
    %268 = arith.mulf %263, %267 : vector<1x128xf32>
    %269 = vector.extract_strided_slice %7 {offsets = [5, 0], sizes = [1, 512], strides = [1, 1]} : vector<8x512xf32> to vector<1x512xf32>
    %cst_53 = arith.constant dense<0.000000e+00> : vector<1x512xf32>
    %270 = tpu.matmul %239, %8, %cst_53 {dimension_numbers = #tpu.dot_dimension_numbers<[1], [0], [0], [1], [0, 0, 1, 1], [], []>} : vector<1x128xf32>, vector<128x512xf32>, vector<1x512xf32> -> vector<1x512xf32>
    %271 = arith.addf %269, %270 : vector<1x512xf32>
    %272 = vector.extract_strided_slice %271 {offsets = [0, 0], sizes = [1, 128], strides = [1, 1]} : vector<1x512xf32> to vector<1x128xf32>
    %273 = arith.negf %272 : vector<1x128xf32>
    %274 = math.exp %273 : vector<1x128xf32>
    %cst_54 = arith.constant 1.000000e+00 : f32
    %275 = vector.broadcast %cst_54 : f32 to vector<1x128xf32>
    %276 = arith.addf %275, %274 : vector<1x128xf32>
    %277 = arith.divf %275, %276 : vector<1x128xf32>
    %278 = vector.extract_strided_slice %271 {offsets = [0, 128], sizes = [1, 128], strides = [1, 1]} : vector<1x512xf32> to vector<1x128xf32>
    %279 = arith.negf %278 : vector<1x128xf32>
    %280 = math.exp %279 : vector<1x128xf32>
    %cst_55 = arith.constant 1.000000e+00 : f32
    %281 = vector.broadcast %cst_55 : f32 to vector<1x128xf32>
    %282 = arith.addf %281, %280 : vector<1x128xf32>
    %283 = arith.divf %281, %282 : vector<1x128xf32>
    %284 = vector.extract_strided_slice %271 {offsets = [0, 256], sizes = [1, 128], strides = [1, 1]} : vector<1x512xf32> to vector<1x128xf32>
    %285 = math.tanh %284 : vector<1x128xf32>
    %286 = vector.extract_strided_slice %271 {offsets = [0, 384], sizes = [1, 128], strides = [1, 1]} : vector<1x512xf32> to vector<1x128xf32>
    %287 = arith.negf %286 : vector<1x128xf32>
    %288 = math.exp %287 : vector<1x128xf32>
    %cst_56 = arith.constant 1.000000e+00 : f32
    %289 = vector.broadcast %cst_56 : f32 to vector<1x128xf32>
    %290 = arith.addf %289, %288 : vector<1x128xf32>
    %291 = arith.divf %289, %290 : vector<1x128xf32>
    %292 = arith.mulf %283, %237 : vector<1x128xf32>
    %293 = arith.mulf %277, %285 : vector<1x128xf32>
    %294 = arith.addf %292, %293 : vector<1x128xf32>
    %295 = math.tanh %294 : vector<1x128xf32>
    %296 = arith.mulf %291, %295 : vector<1x128xf32>
    %cst_57 = arith.constant dense<0.000000e+00> : vector<1x512xf32>
    %297 = tpu.matmul %239, %9, %cst_57 {dimension_numbers = #tpu.dot_dimension_numbers<[1], [0], [0], [1], [0, 0, 1, 1], [], []>} : vector<1x128xf32>, vector<128x512xf32>, vector<1x512xf32> -> vector<1x512xf32>
    %298 = arith.addf %297, %10 : vector<1x512xf32>
    %cst_58 = arith.constant dense<0.000000e+00> : vector<1x512xf32>
    %299 = tpu.matmul %268, %11, %cst_58 {dimension_numbers = #tpu.dot_dimension_numbers<[1], [0], [0], [1], [0, 0, 1, 1], [], []>} : vector<1x128xf32>, vector<128x512xf32>, vector<1x512xf32> -> vector<1x512xf32>
    %300 = arith.addf %298, %299 : vector<1x512xf32>
    %301 = vector.extract_strided_slice %300 {offsets = [0, 0], sizes = [1, 128], strides = [1, 1]} : vector<1x512xf32> to vector<1x128xf32>
    %302 = arith.negf %301 : vector<1x128xf32>
    %303 = math.exp %302 : vector<1x128xf32>
    %cst_59 = arith.constant 1.000000e+00 : f32
    %304 = vector.broadcast %cst_59 : f32 to vector<1x128xf32>
    %305 = arith.addf %304, %303 : vector<1x128xf32>
    %306 = arith.divf %304, %305 : vector<1x128xf32>
    %307 = vector.extract_strided_slice %300 {offsets = [0, 128], sizes = [1, 128], strides = [1, 1]} : vector<1x512xf32> to vector<1x128xf32>
    %308 = arith.negf %307 : vector<1x128xf32>
    %309 = math.exp %308 : vector<1x128xf32>
    %cst_60 = arith.constant 1.000000e+00 : f32
    %310 = vector.broadcast %cst_60 : f32 to vector<1x128xf32>
    %311 = arith.addf %310, %309 : vector<1x128xf32>
    %312 = arith.divf %310, %311 : vector<1x128xf32>
    %313 = vector.extract_strided_slice %300 {offsets = [0, 256], sizes = [1, 128], strides = [1, 1]} : vector<1x512xf32> to vector<1x128xf32>
    %314 = math.tanh %313 : vector<1x128xf32>
    %315 = vector.extract_strided_slice %300 {offsets = [0, 384], sizes = [1, 128], strides = [1, 1]} : vector<1x512xf32> to vector<1x128xf32>
    %316 = arith.negf %315 : vector<1x128xf32>
    %317 = math.exp %316 : vector<1x128xf32>
    %cst_61 = arith.constant 1.000000e+00 : f32
    %318 = vector.broadcast %cst_61 : f32 to vector<1x128xf32>
    %319 = arith.addf %318, %317 : vector<1x128xf32>
    %320 = arith.divf %318, %319 : vector<1x128xf32>
    %321 = arith.mulf %312, %266 : vector<1x128xf32>
    %322 = arith.mulf %306, %314 : vector<1x128xf32>
    %323 = arith.addf %321, %322 : vector<1x128xf32>
    %324 = math.tanh %323 : vector<1x128xf32>
    %325 = arith.mulf %320, %324 : vector<1x128xf32>
    %326 = vector.extract_strided_slice %7 {offsets = [6, 0], sizes = [1, 512], strides = [1, 1]} : vector<8x512xf32> to vector<1x512xf32>
    %cst_62 = arith.constant dense<0.000000e+00> : vector<1x512xf32>
    %327 = tpu.matmul %296, %8, %cst_62 {dimension_numbers = #tpu.dot_dimension_numbers<[1], [0], [0], [1], [0, 0, 1, 1], [], []>} : vector<1x128xf32>, vector<128x512xf32>, vector<1x512xf32> -> vector<1x512xf32>
    %328 = arith.addf %326, %327 : vector<1x512xf32>
    %329 = vector.extract_strided_slice %328 {offsets = [0, 0], sizes = [1, 128], strides = [1, 1]} : vector<1x512xf32> to vector<1x128xf32>
    %330 = arith.negf %329 : vector<1x128xf32>
    %331 = math.exp %330 : vector<1x128xf32>
    %cst_63 = arith.constant 1.000000e+00 : f32
    %332 = vector.broadcast %cst_63 : f32 to vector<1x128xf32>
    %333 = arith.addf %332, %331 : vector<1x128xf32>
    %334 = arith.divf %332, %333 : vector<1x128xf32>
    %335 = vector.extract_strided_slice %328 {offsets = [0, 128], sizes = [1, 128], strides = [1, 1]} : vector<1x512xf32> to vector<1x128xf32>
    %336 = arith.negf %335 : vector<1x128xf32>
    %337 = math.exp %336 : vector<1x128xf32>
    %cst_64 = arith.constant 1.000000e+00 : f32
    %338 = vector.broadcast %cst_64 : f32 to vector<1x128xf32>
    %339 = arith.addf %338, %337 : vector<1x128xf32>
    %340 = arith.divf %338, %339 : vector<1x128xf32>
    %341 = vector.extract_strided_slice %328 {offsets = [0, 256], sizes = [1, 128], strides = [1, 1]} : vector<1x512xf32> to vector<1x128xf32>
    %342 = math.tanh %341 : vector<1x128xf32>
    %343 = vector.extract_strided_slice %328 {offsets = [0, 384], sizes = [1, 128], strides = [1, 1]} : vector<1x512xf32> to vector<1x128xf32>
    %344 = arith.negf %343 : vector<1x128xf32>
    %345 = math.exp %344 : vector<1x128xf32>
    %cst_65 = arith.constant 1.000000e+00 : f32
    %346 = vector.broadcast %cst_65 : f32 to vector<1x128xf32>
    %347 = arith.addf %346, %345 : vector<1x128xf32>
    %348 = arith.divf %346, %347 : vector<1x128xf32>
    %349 = arith.mulf %340, %294 : vector<1x128xf32>
    %350 = arith.mulf %334, %342 : vector<1x128xf32>
    %351 = arith.addf %349, %350 : vector<1x128xf32>
    %352 = math.tanh %351 : vector<1x128xf32>
    %353 = arith.mulf %348, %352 : vector<1x128xf32>
    %cst_66 = arith.constant dense<0.000000e+00> : vector<1x512xf32>
    %354 = tpu.matmul %296, %9, %cst_66 {dimension_numbers = #tpu.dot_dimension_numbers<[1], [0], [0], [1], [0, 0, 1, 1], [], []>} : vector<1x128xf32>, vector<128x512xf32>, vector<1x512xf32> -> vector<1x512xf32>
    %355 = arith.addf %354, %10 : vector<1x512xf32>
    %cst_67 = arith.constant dense<0.000000e+00> : vector<1x512xf32>
    %356 = tpu.matmul %325, %11, %cst_67 {dimension_numbers = #tpu.dot_dimension_numbers<[1], [0], [0], [1], [0, 0, 1, 1], [], []>} : vector<1x128xf32>, vector<128x512xf32>, vector<1x512xf32> -> vector<1x512xf32>
    %357 = arith.addf %355, %356 : vector<1x512xf32>
    %358 = vector.extract_strided_slice %357 {offsets = [0, 0], sizes = [1, 128], strides = [1, 1]} : vector<1x512xf32> to vector<1x128xf32>
    %359 = arith.negf %358 : vector<1x128xf32>
    %360 = math.exp %359 : vector<1x128xf32>
    %cst_68 = arith.constant 1.000000e+00 : f32
    %361 = vector.broadcast %cst_68 : f32 to vector<1x128xf32>
    %362 = arith.addf %361, %360 : vector<1x128xf32>
    %363 = arith.divf %361, %362 : vector<1x128xf32>
    %364 = vector.extract_strided_slice %357 {offsets = [0, 128], sizes = [1, 128], strides = [1, 1]} : vector<1x512xf32> to vector<1x128xf32>
    %365 = arith.negf %364 : vector<1x128xf32>
    %366 = math.exp %365 : vector<1x128xf32>
    %cst_69 = arith.constant 1.000000e+00 : f32
    %367 = vector.broadcast %cst_69 : f32 to vector<1x128xf32>
    %368 = arith.addf %367, %366 : vector<1x128xf32>
    %369 = arith.divf %367, %368 : vector<1x128xf32>
    %370 = vector.extract_strided_slice %357 {offsets = [0, 256], sizes = [1, 128], strides = [1, 1]} : vector<1x512xf32> to vector<1x128xf32>
    %371 = math.tanh %370 : vector<1x128xf32>
    %372 = vector.extract_strided_slice %357 {offsets = [0, 384], sizes = [1, 128], strides = [1, 1]} : vector<1x512xf32> to vector<1x128xf32>
    %373 = arith.negf %372 : vector<1x128xf32>
    %374 = math.exp %373 : vector<1x128xf32>
    %cst_70 = arith.constant 1.000000e+00 : f32
    %375 = vector.broadcast %cst_70 : f32 to vector<1x128xf32>
    %376 = arith.addf %375, %374 : vector<1x128xf32>
    %377 = arith.divf %375, %376 : vector<1x128xf32>
    %378 = arith.mulf %369, %323 : vector<1x128xf32>
    %379 = arith.mulf %363, %371 : vector<1x128xf32>
    %380 = arith.addf %378, %379 : vector<1x128xf32>
    %381 = math.tanh %380 : vector<1x128xf32>
    %382 = arith.mulf %377, %381 : vector<1x128xf32>
    %383 = vector.extract_strided_slice %7 {offsets = [7, 0], sizes = [1, 512], strides = [1, 1]} : vector<8x512xf32> to vector<1x512xf32>
    %cst_71 = arith.constant dense<0.000000e+00> : vector<1x512xf32>
    %384 = tpu.matmul %353, %8, %cst_71 {dimension_numbers = #tpu.dot_dimension_numbers<[1], [0], [0], [1], [0, 0, 1, 1], [], []>} : vector<1x128xf32>, vector<128x512xf32>, vector<1x512xf32> -> vector<1x512xf32>
    %385 = arith.addf %383, %384 : vector<1x512xf32>
    %386 = vector.extract_strided_slice %385 {offsets = [0, 0], sizes = [1, 128], strides = [1, 1]} : vector<1x512xf32> to vector<1x128xf32>
    %387 = arith.negf %386 : vector<1x128xf32>
    %388 = math.exp %387 : vector<1x128xf32>
    %cst_72 = arith.constant 1.000000e+00 : f32
    %389 = vector.broadcast %cst_72 : f32 to vector<1x128xf32>
    %390 = arith.addf %389, %388 : vector<1x128xf32>
    %391 = arith.divf %389, %390 : vector<1x128xf32>
    %392 = vector.extract_strided_slice %385 {offsets = [0, 128], sizes = [1, 128], strides = [1, 1]} : vector<1x512xf32> to vector<1x128xf32>
    %393 = arith.negf %392 : vector<1x128xf32>
    %394 = math.exp %393 : vector<1x128xf32>
    %cst_73 = arith.constant 1.000000e+00 : f32
    %395 = vector.broadcast %cst_73 : f32 to vector<1x128xf32>
    %396 = arith.addf %395, %394 : vector<1x128xf32>
    %397 = arith.divf %395, %396 : vector<1x128xf32>
    %398 = vector.extract_strided_slice %385 {offsets = [0, 256], sizes = [1, 128], strides = [1, 1]} : vector<1x512xf32> to vector<1x128xf32>
    %399 = math.tanh %398 : vector<1x128xf32>
    %400 = vector.extract_strided_slice %385 {offsets = [0, 384], sizes = [1, 128], strides = [1, 1]} : vector<1x512xf32> to vector<1x128xf32>
    %401 = arith.negf %400 : vector<1x128xf32>
    %402 = math.exp %401 : vector<1x128xf32>
    %cst_74 = arith.constant 1.000000e+00 : f32
    %403 = vector.broadcast %cst_74 : f32 to vector<1x128xf32>
    %404 = arith.addf %403, %402 : vector<1x128xf32>
    %405 = arith.divf %403, %404 : vector<1x128xf32>
    %406 = arith.mulf %397, %351 : vector<1x128xf32>
    %407 = arith.mulf %391, %399 : vector<1x128xf32>
    %408 = arith.addf %406, %407 : vector<1x128xf32>
    %409 = math.tanh %408 : vector<1x128xf32>
    %410 = arith.mulf %405, %409 : vector<1x128xf32>
    %cst_75 = arith.constant dense<0.000000e+00> : vector<1x512xf32>
    %411 = tpu.matmul %353, %9, %cst_75 {dimension_numbers = #tpu.dot_dimension_numbers<[1], [0], [0], [1], [0, 0, 1, 1], [], []>} : vector<1x128xf32>, vector<128x512xf32>, vector<1x512xf32> -> vector<1x512xf32>
    %412 = arith.addf %411, %10 : vector<1x512xf32>
    %cst_76 = arith.constant dense<0.000000e+00> : vector<1x512xf32>
    %413 = tpu.matmul %382, %11, %cst_76 {dimension_numbers = #tpu.dot_dimension_numbers<[1], [0], [0], [1], [0, 0, 1, 1], [], []>} : vector<1x128xf32>, vector<128x512xf32>, vector<1x512xf32> -> vector<1x512xf32>
    %414 = arith.addf %412, %413 : vector<1x512xf32>
    %415 = vector.extract_strided_slice %414 {offsets = [0, 0], sizes = [1, 128], strides = [1, 1]} : vector<1x512xf32> to vector<1x128xf32>
    %416 = arith.negf %415 : vector<1x128xf32>
    %417 = math.exp %416 : vector<1x128xf32>
    %cst_77 = arith.constant 1.000000e+00 : f32
    %418 = vector.broadcast %cst_77 : f32 to vector<1x128xf32>
    %419 = arith.addf %418, %417 : vector<1x128xf32>
    %420 = arith.divf %418, %419 : vector<1x128xf32>
    %421 = vector.extract_strided_slice %414 {offsets = [0, 128], sizes = [1, 128], strides = [1, 1]} : vector<1x512xf32> to vector<1x128xf32>
    %422 = arith.negf %421 : vector<1x128xf32>
    %423 = math.exp %422 : vector<1x128xf32>
    %cst_78 = arith.constant 1.000000e+00 : f32
    %424 = vector.broadcast %cst_78 : f32 to vector<1x128xf32>
    %425 = arith.addf %424, %423 : vector<1x128xf32>
    %426 = arith.divf %424, %425 : vector<1x128xf32>
    %427 = vector.extract_strided_slice %414 {offsets = [0, 256], sizes = [1, 128], strides = [1, 1]} : vector<1x512xf32> to vector<1x128xf32>
    %428 = math.tanh %427 : vector<1x128xf32>
    %429 = vector.extract_strided_slice %414 {offsets = [0, 384], sizes = [1, 128], strides = [1, 1]} : vector<1x512xf32> to vector<1x128xf32>
    %430 = arith.negf %429 : vector<1x128xf32>
    %431 = math.exp %430 : vector<1x128xf32>
    %cst_79 = arith.constant 1.000000e+00 : f32
    %432 = vector.broadcast %cst_79 : f32 to vector<1x128xf32>
    %433 = arith.addf %432, %431 : vector<1x128xf32>
    %434 = arith.divf %432, %433 : vector<1x128xf32>
    %435 = arith.mulf %426, %380 : vector<1x128xf32>
    %436 = arith.mulf %420, %428 : vector<1x128xf32>
    %437 = arith.addf %435, %436 : vector<1x128xf32>
    %438 = math.tanh %437 : vector<1x128xf32>
    %439 = arith.mulf %434, %438 : vector<1x128xf32>
    %cst_80 = arith.constant dense<0.000000e+00> : vector<1x512xf32>
    %440 = tpu.matmul %410, %9, %cst_80 {dimension_numbers = #tpu.dot_dimension_numbers<[1], [0], [0], [1], [0, 0, 1, 1], [], []>} : vector<1x128xf32>, vector<128x512xf32>, vector<1x512xf32> -> vector<1x512xf32>
    %441 = arith.addf %440, %10 : vector<1x512xf32>
    %cst_81 = arith.constant dense<0.000000e+00> : vector<1x512xf32>
    %442 = tpu.matmul %439, %11, %cst_81 {dimension_numbers = #tpu.dot_dimension_numbers<[1], [0], [0], [1], [0, 0, 1, 1], [], []>} : vector<1x128xf32>, vector<128x512xf32>, vector<1x512xf32> -> vector<1x512xf32>
    %443 = arith.addf %441, %442 : vector<1x512xf32>
    %444 = vector.extract_strided_slice %443 {offsets = [0, 0], sizes = [1, 128], strides = [1, 1]} : vector<1x512xf32> to vector<1x128xf32>
    %445 = arith.negf %444 : vector<1x128xf32>
    %446 = math.exp %445 : vector<1x128xf32>
    %cst_82 = arith.constant 1.000000e+00 : f32
    %447 = vector.broadcast %cst_82 : f32 to vector<1x128xf32>
    %448 = arith.addf %447, %446 : vector<1x128xf32>
    %449 = arith.divf %447, %448 : vector<1x128xf32>
    %450 = vector.extract_strided_slice %443 {offsets = [0, 128], sizes = [1, 128], strides = [1, 1]} : vector<1x512xf32> to vector<1x128xf32>
    %451 = arith.negf %450 : vector<1x128xf32>
    %452 = math.exp %451 : vector<1x128xf32>
    %cst_83 = arith.constant 1.000000e+00 : f32
    %453 = vector.broadcast %cst_83 : f32 to vector<1x128xf32>
    %454 = arith.addf %453, %452 : vector<1x128xf32>
    %455 = arith.divf %453, %454 : vector<1x128xf32>
    %456 = vector.extract_strided_slice %443 {offsets = [0, 256], sizes = [1, 128], strides = [1, 1]} : vector<1x512xf32> to vector<1x128xf32>
    %457 = math.tanh %456 : vector<1x128xf32>
    %458 = vector.extract_strided_slice %443 {offsets = [0, 384], sizes = [1, 128], strides = [1, 1]} : vector<1x512xf32> to vector<1x128xf32>
    %459 = arith.negf %458 : vector<1x128xf32>
    %460 = math.exp %459 : vector<1x128xf32>
    %cst_84 = arith.constant 1.000000e+00 : f32
    %461 = vector.broadcast %cst_84 : f32 to vector<1x128xf32>
    %462 = arith.addf %461, %460 : vector<1x128xf32>
    %463 = arith.divf %461, %462 : vector<1x128xf32>
    %464 = arith.mulf %455, %437 : vector<1x128xf32>
    %465 = arith.mulf %449, %457 : vector<1x128xf32>
    %466 = arith.addf %464, %465 : vector<1x128xf32>
    %467 = math.tanh %466 : vector<1x128xf32>
    %468 = arith.mulf %463, %467 : vector<1x128xf32>
    %c0_85 = arith.constant 0 : index
    %c0_86 = arith.constant 0 : index
    %469 = vector.load %arg7[%c0_85, %c0_86] : memref<128x512xf32, #tpu.memory_space<vmem>>, vector<128x512xf32>
    %cst_87 = arith.constant dense<0.000000e+00> : vector<1x512xf32>
    %470 = tpu.matmul %468, %469, %cst_87 {dimension_numbers = #tpu.dot_dimension_numbers<[1], [0], [0], [1], [0, 0, 1, 1], [], []>} : vector<1x128xf32>, vector<128x512xf32>, vector<1x512xf32> -> vector<1x512xf32>
    %c0_88 = arith.constant 0 : index
    %c0_89 = arith.constant 0 : index
    %471 = vector.load %arg9[%c0_88, %c0_89] : memref<1x512xf32, #tpu.memory_space<vmem>>, vector<1x512xf32>
    %472 = arith.addf %470, %471 : vector<1x512xf32>
    %c0_90 = arith.constant 0 : index
    %c0_91 = arith.constant 0 : index
    %473 = vector.load %arg8[%c0_90, %c0_91] : memref<128x512xf32, #tpu.memory_space<vmem>>, vector<128x512xf32>
    %c0_92 = arith.constant 0 : index
    %c0_93 = arith.constant 0 : index
    %474 = vector.load %arg10[%c0_92, %c0_93] : memref<128x512xf32, #tpu.memory_space<vmem>>, vector<128x512xf32>
    %c0_94 = arith.constant 0 : index
    %c0_95 = arith.constant 0 : index
    %475 = vector.load %arg12[%c0_94, %c0_95] : memref<1x512xf32, #tpu.memory_space<vmem>>, vector<1x512xf32>
    %c0_96 = arith.constant 0 : index
    %c0_97 = arith.constant 0 : index
    %476 = vector.load %arg11[%c0_96, %c0_97] : memref<128x512xf32, #tpu.memory_space<vmem>>, vector<128x512xf32>
    %cst_98 = arith.constant 0.000000e+00 : f32
    %477 = vector.broadcast %cst_98 : f32 to vector<1x128xf32>
    %cst_99 = arith.constant dense<0.000000e+00> : vector<1x512xf32>
    %478 = tpu.matmul %477, %473, %cst_99 {dimension_numbers = #tpu.dot_dimension_numbers<[1], [0], [0], [1], [0, 0, 1, 1], [], []>} : vector<1x128xf32>, vector<128x512xf32>, vector<1x512xf32> -> vector<1x512xf32>
    %479 = arith.addf %472, %478 : vector<1x512xf32>
    %480 = vector.extract_strided_slice %479 {offsets = [0, 0], sizes = [1, 128], strides = [1, 1]} : vector<1x512xf32> to vector<1x128xf32>
    %481 = arith.negf %480 : vector<1x128xf32>
    %482 = math.exp %481 : vector<1x128xf32>
    %cst_100 = arith.constant 1.000000e+00 : f32
    %483 = vector.broadcast %cst_100 : f32 to vector<1x128xf32>
    %484 = arith.addf %483, %482 : vector<1x128xf32>
    %485 = arith.divf %483, %484 : vector<1x128xf32>
    %486 = vector.extract_strided_slice %479 {offsets = [0, 128], sizes = [1, 128], strides = [1, 1]} : vector<1x512xf32> to vector<1x128xf32>
    %487 = arith.negf %486 : vector<1x128xf32>
    %488 = math.exp %487 : vector<1x128xf32>
    %cst_101 = arith.constant 1.000000e+00 : f32
    %489 = vector.broadcast %cst_101 : f32 to vector<1x128xf32>
    %490 = arith.addf %489, %488 : vector<1x128xf32>
    %491 = arith.divf %489, %490 : vector<1x128xf32>
    %492 = vector.extract_strided_slice %479 {offsets = [0, 256], sizes = [1, 128], strides = [1, 1]} : vector<1x512xf32> to vector<1x128xf32>
    %493 = math.tanh %492 : vector<1x128xf32>
    %494 = vector.extract_strided_slice %479 {offsets = [0, 384], sizes = [1, 128], strides = [1, 1]} : vector<1x512xf32> to vector<1x128xf32>
    %495 = arith.negf %494 : vector<1x128xf32>
    %496 = math.exp %495 : vector<1x128xf32>
    %cst_102 = arith.constant 1.000000e+00 : f32
    %497 = vector.broadcast %cst_102 : f32 to vector<1x128xf32>
    %498 = arith.addf %497, %496 : vector<1x128xf32>
    %499 = arith.divf %497, %498 : vector<1x128xf32>
    %500 = arith.mulf %491, %477 : vector<1x128xf32>
    %501 = arith.mulf %485, %493 : vector<1x128xf32>
    %502 = arith.addf %500, %501 : vector<1x128xf32>
    %503 = math.tanh %502 : vector<1x128xf32>
    %504 = arith.mulf %499, %503 : vector<1x128xf32>
    %cst_103 = arith.constant dense<0.000000e+00> : vector<1x512xf32>
    %505 = tpu.matmul %504, %473, %cst_103 {dimension_numbers = #tpu.dot_dimension_numbers<[1], [0], [0], [1], [0, 0, 1, 1], [], []>} : vector<1x128xf32>, vector<128x512xf32>, vector<1x512xf32> -> vector<1x512xf32>
    %506 = arith.addf %472, %505 : vector<1x512xf32>
    %507 = vector.extract_strided_slice %506 {offsets = [0, 0], sizes = [1, 128], strides = [1, 1]} : vector<1x512xf32> to vector<1x128xf32>
    %508 = arith.negf %507 : vector<1x128xf32>
    %509 = math.exp %508 : vector<1x128xf32>
    %cst_104 = arith.constant 1.000000e+00 : f32
    %510 = vector.broadcast %cst_104 : f32 to vector<1x128xf32>
    %511 = arith.addf %510, %509 : vector<1x128xf32>
    %512 = arith.divf %510, %511 : vector<1x128xf32>
    %513 = vector.extract_strided_slice %506 {offsets = [0, 128], sizes = [1, 128], strides = [1, 1]} : vector<1x512xf32> to vector<1x128xf32>
    %514 = arith.negf %513 : vector<1x128xf32>
    %515 = math.exp %514 : vector<1x128xf32>
    %cst_105 = arith.constant 1.000000e+00 : f32
    %516 = vector.broadcast %cst_105 : f32 to vector<1x128xf32>
    %517 = arith.addf %516, %515 : vector<1x128xf32>
    %518 = arith.divf %516, %517 : vector<1x128xf32>
    %519 = vector.extract_strided_slice %506 {offsets = [0, 256], sizes = [1, 128], strides = [1, 1]} : vector<1x512xf32> to vector<1x128xf32>
    %520 = math.tanh %519 : vector<1x128xf32>
    %521 = vector.extract_strided_slice %506 {offsets = [0, 384], sizes = [1, 128], strides = [1, 1]} : vector<1x512xf32> to vector<1x128xf32>
    %522 = arith.negf %521 : vector<1x128xf32>
    %523 = math.exp %522 : vector<1x128xf32>
    %cst_106 = arith.constant 1.000000e+00 : f32
    %524 = vector.broadcast %cst_106 : f32 to vector<1x128xf32>
    %525 = arith.addf %524, %523 : vector<1x128xf32>
    %526 = arith.divf %524, %525 : vector<1x128xf32>
    %527 = arith.mulf %518, %502 : vector<1x128xf32>
    %528 = arith.mulf %512, %520 : vector<1x128xf32>
    %529 = arith.addf %527, %528 : vector<1x128xf32>
    %530 = math.tanh %529 : vector<1x128xf32>
    %531 = arith.mulf %526, %530 : vector<1x128xf32>
    %cst_107 = arith.constant dense<0.000000e+00> : vector<1x512xf32>
    %532 = tpu.matmul %504, %474, %cst_107 {dimension_numbers = #tpu.dot_dimension_numbers<[1], [0], [0], [1], [0, 0, 1, 1], [], []>} : vector<1x128xf32>, vector<128x512xf32>, vector<1x512xf32> -> vector<1x512xf32>
    %533 = arith.addf %532, %475 : vector<1x512xf32>
    %cst_108 = arith.constant dense<0.000000e+00> : vector<1x512xf32>
    %534 = tpu.matmul %477, %476, %cst_108 {dimension_numbers = #tpu.dot_dimension_numbers<[1], [0], [0], [1], [0, 0, 1, 1], [], []>} : vector<1x128xf32>, vector<128x512xf32>, vector<1x512xf32> -> vector<1x512xf32>
    %535 = arith.addf %533, %534 : vector<1x512xf32>
    %536 = vector.extract_strided_slice %535 {offsets = [0, 0], sizes = [1, 128], strides = [1, 1]} : vector<1x512xf32> to vector<1x128xf32>
    %537 = arith.negf %536 : vector<1x128xf32>
    %538 = math.exp %537 : vector<1x128xf32>
    %cst_109 = arith.constant 1.000000e+00 : f32
    %539 = vector.broadcast %cst_109 : f32 to vector<1x128xf32>
    %540 = arith.addf %539, %538 : vector<1x128xf32>
    %541 = arith.divf %539, %540 : vector<1x128xf32>
    %542 = vector.extract_strided_slice %535 {offsets = [0, 128], sizes = [1, 128], strides = [1, 1]} : vector<1x512xf32> to vector<1x128xf32>
    %543 = arith.negf %542 : vector<1x128xf32>
    %544 = math.exp %543 : vector<1x128xf32>
    %cst_110 = arith.constant 1.000000e+00 : f32
    %545 = vector.broadcast %cst_110 : f32 to vector<1x128xf32>
    %546 = arith.addf %545, %544 : vector<1x128xf32>
    %547 = arith.divf %545, %546 : vector<1x128xf32>
    %548 = vector.extract_strided_slice %535 {offsets = [0, 256], sizes = [1, 128], strides = [1, 1]} : vector<1x512xf32> to vector<1x128xf32>
    %549 = math.tanh %548 : vector<1x128xf32>
    %550 = vector.extract_strided_slice %535 {offsets = [0, 384], sizes = [1, 128], strides = [1, 1]} : vector<1x512xf32> to vector<1x128xf32>
    %551 = arith.negf %550 : vector<1x128xf32>
    %552 = math.exp %551 : vector<1x128xf32>
    %cst_111 = arith.constant 1.000000e+00 : f32
    %553 = vector.broadcast %cst_111 : f32 to vector<1x128xf32>
    %554 = arith.addf %553, %552 : vector<1x128xf32>
    %555 = arith.divf %553, %554 : vector<1x128xf32>
    %556 = arith.mulf %547, %477 : vector<1x128xf32>
    %557 = arith.mulf %541, %549 : vector<1x128xf32>
    %558 = arith.addf %556, %557 : vector<1x128xf32>
    %559 = math.tanh %558 : vector<1x128xf32>
    %560 = arith.mulf %555, %559 : vector<1x128xf32>
    %c0_112 = arith.constant 0 : index
    %c0_113 = arith.constant 0 : index
    %561 = vector.load %arg16[%c0_112, %c0_113] : memref<8x128xf32, #tpu.memory_space<vmem>>, vector<1x128xf32>
    tpu.vector_store %arg16[%c0_112, %c0_113], %560 {strides = array<i32>} : memref<8x128xf32, #tpu.memory_space<vmem>>, vector<1x128xf32>,
    %cst_114 = arith.constant dense<0.000000e+00> : vector<1x512xf32>
    %562 = tpu.matmul %531, %473, %cst_114 {dimension_numbers = #tpu.dot_dimension_numbers<[1], [0], [0], [1], [0, 0, 1, 1], [], []>} : vector<1x128xf32>, vector<128x512xf32>, vector<1x512xf32> -> vector<1x512xf32>
    %563 = arith.addf %472, %562 : vector<1x512xf32>
    %564 = vector.extract_strided_slice %563 {offsets = [0, 0], sizes = [1, 128], strides = [1, 1]} : vector<1x512xf32> to vector<1x128xf32>
    %565 = arith.negf %564 : vector<1x128xf32>
    %566 = math.exp %565 : vector<1x128xf32>
    %cst_115 = arith.constant 1.000000e+00 : f32
    %567 = vector.broadcast %cst_115 : f32 to vector<1x128xf32>
    %568 = arith.addf %567, %566 : vector<1x128xf32>
    %569 = arith.divf %567, %568 : vector<1x128xf32>
    %570 = vector.extract_strided_slice %563 {offsets = [0, 128], sizes = [1, 128], strides = [1, 1]} : vector<1x512xf32> to vector<1x128xf32>
    %571 = arith.negf %570 : vector<1x128xf32>
    %572 = math.exp %571 : vector<1x128xf32>
    %cst_116 = arith.constant 1.000000e+00 : f32
    %573 = vector.broadcast %cst_116 : f32 to vector<1x128xf32>
    %574 = arith.addf %573, %572 : vector<1x128xf32>
    %575 = arith.divf %573, %574 : vector<1x128xf32>
    %576 = vector.extract_strided_slice %563 {offsets = [0, 256], sizes = [1, 128], strides = [1, 1]} : vector<1x512xf32> to vector<1x128xf32>
    %577 = math.tanh %576 : vector<1x128xf32>
    %578 = vector.extract_strided_slice %563 {offsets = [0, 384], sizes = [1, 128], strides = [1, 1]} : vector<1x512xf32> to vector<1x128xf32>
    %579 = arith.negf %578 : vector<1x128xf32>
    %580 = math.exp %579 : vector<1x128xf32>
    %cst_117 = arith.constant 1.000000e+00 : f32
    %581 = vector.broadcast %cst_117 : f32 to vector<1x128xf32>
    %582 = arith.addf %581, %580 : vector<1x128xf32>
    %583 = arith.divf %581, %582 : vector<1x128xf32>
    %584 = arith.mulf %575, %529 : vector<1x128xf32>
    %585 = arith.mulf %569, %577 : vector<1x128xf32>
    %586 = arith.addf %584, %585 : vector<1x128xf32>
    %587 = math.tanh %586 : vector<1x128xf32>
    %588 = arith.mulf %583, %587 : vector<1x128xf32>
    %cst_118 = arith.constant dense<0.000000e+00> : vector<1x512xf32>
    %589 = tpu.matmul %531, %474, %cst_118 {dimension_numbers = #tpu.dot_dimension_numbers<[1], [0], [0], [1], [0, 0, 1, 1], [], []>} : vector<1x128xf32>, vector<128x512xf32>, vector<1x512xf32> -> vector<1x512xf32>
    %590 = arith.addf %589, %475 : vector<1x512xf32>
    %cst_119 = arith.constant dense<0.000000e+00> : vector<1x512xf32>
    %591 = tpu.matmul %560, %476, %cst_119 {dimension_numbers = #tpu.dot_dimension_numbers<[1], [0], [0], [1], [0, 0, 1, 1], [], []>} : vector<1x128xf32>, vector<128x512xf32>, vector<1x512xf32> -> vector<1x512xf32>
    %592 = arith.addf %590, %591 : vector<1x512xf32>
    %593 = vector.extract_strided_slice %592 {offsets = [0, 0], sizes = [1, 128], strides = [1, 1]} : vector<1x512xf32> to vector<1x128xf32>
    %594 = arith.negf %593 : vector<1x128xf32>
    %595 = math.exp %594 : vector<1x128xf32>
    %cst_120 = arith.constant 1.000000e+00 : f32
    %596 = vector.broadcast %cst_120 : f32 to vector<1x128xf32>
    %597 = arith.addf %596, %595 : vector<1x128xf32>
    %598 = arith.divf %596, %597 : vector<1x128xf32>
    %599 = vector.extract_strided_slice %592 {offsets = [0, 128], sizes = [1, 128], strides = [1, 1]} : vector<1x512xf32> to vector<1x128xf32>
    %600 = arith.negf %599 : vector<1x128xf32>
    %601 = math.exp %600 : vector<1x128xf32>
    %cst_121 = arith.constant 1.000000e+00 : f32
    %602 = vector.broadcast %cst_121 : f32 to vector<1x128xf32>
    %603 = arith.addf %602, %601 : vector<1x128xf32>
    %604 = arith.divf %602, %603 : vector<1x128xf32>
    %605 = vector.extract_strided_slice %592 {offsets = [0, 256], sizes = [1, 128], strides = [1, 1]} : vector<1x512xf32> to vector<1x128xf32>
    %606 = math.tanh %605 : vector<1x128xf32>
    %607 = vector.extract_strided_slice %592 {offsets = [0, 384], sizes = [1, 128], strides = [1, 1]} : vector<1x512xf32> to vector<1x128xf32>
    %608 = arith.negf %607 : vector<1x128xf32>
    %609 = math.exp %608 : vector<1x128xf32>
    %cst_122 = arith.constant 1.000000e+00 : f32
    %610 = vector.broadcast %cst_122 : f32 to vector<1x128xf32>
    %611 = arith.addf %610, %609 : vector<1x128xf32>
    %612 = arith.divf %610, %611 : vector<1x128xf32>
    %613 = arith.mulf %604, %558 : vector<1x128xf32>
    %614 = arith.mulf %598, %606 : vector<1x128xf32>
    %615 = arith.addf %613, %614 : vector<1x128xf32>
    %616 = math.tanh %615 : vector<1x128xf32>
    %617 = arith.mulf %612, %616 : vector<1x128xf32>
    %c1 = arith.constant 1 : index
    %c0_123 = arith.constant 0 : index
    %618 = vector.load %arg16[%c1, %c0_123] : memref<8x128xf32, #tpu.memory_space<vmem>>, vector<1x128xf32>
    tpu.vector_store %arg16[%c1, %c0_123], %617 {strides = array<i32>} : memref<8x128xf32, #tpu.memory_space<vmem>>, vector<1x128xf32>,
    %cst_124 = arith.constant dense<0.000000e+00> : vector<1x512xf32>
    %619 = tpu.matmul %588, %473, %cst_124 {dimension_numbers = #tpu.dot_dimension_numbers<[1], [0], [0], [1], [0, 0, 1, 1], [], []>} : vector<1x128xf32>, vector<128x512xf32>, vector<1x512xf32> -> vector<1x512xf32>
    %620 = arith.addf %472, %619 : vector<1x512xf32>
    %621 = vector.extract_strided_slice %620 {offsets = [0, 0], sizes = [1, 128], strides = [1, 1]} : vector<1x512xf32> to vector<1x128xf32>
    %622 = arith.negf %621 : vector<1x128xf32>
    %623 = math.exp %622 : vector<1x128xf32>
    %cst_125 = arith.constant 1.000000e+00 : f32
    %624 = vector.broadcast %cst_125 : f32 to vector<1x128xf32>
    %625 = arith.addf %624, %623 : vector<1x128xf32>
    %626 = arith.divf %624, %625 : vector<1x128xf32>
    %627 = vector.extract_strided_slice %620 {offsets = [0, 128], sizes = [1, 128], strides = [1, 1]} : vector<1x512xf32> to vector<1x128xf32>
    %628 = arith.negf %627 : vector<1x128xf32>
    %629 = math.exp %628 : vector<1x128xf32>
    %cst_126 = arith.constant 1.000000e+00 : f32
    %630 = vector.broadcast %cst_126 : f32 to vector<1x128xf32>
    %631 = arith.addf %630, %629 : vector<1x128xf32>
    %632 = arith.divf %630, %631 : vector<1x128xf32>
    %633 = vector.extract_strided_slice %620 {offsets = [0, 256], sizes = [1, 128], strides = [1, 1]} : vector<1x512xf32> to vector<1x128xf32>
    %634 = math.tanh %633 : vector<1x128xf32>
    %635 = vector.extract_strided_slice %620 {offsets = [0, 384], sizes = [1, 128], strides = [1, 1]} : vector<1x512xf32> to vector<1x128xf32>
    %636 = arith.negf %635 : vector<1x128xf32>
    %637 = math.exp %636 : vector<1x128xf32>
    %cst_127 = arith.constant 1.000000e+00 : f32
    %638 = vector.broadcast %cst_127 : f32 to vector<1x128xf32>
    %639 = arith.addf %638, %637 : vector<1x128xf32>
    %640 = arith.divf %638, %639 : vector<1x128xf32>
    %641 = arith.mulf %632, %586 : vector<1x128xf32>
    %642 = arith.mulf %626, %634 : vector<1x128xf32>
    %643 = arith.addf %641, %642 : vector<1x128xf32>
    %644 = math.tanh %643 : vector<1x128xf32>
    %645 = arith.mulf %640, %644 : vector<1x128xf32>
    %cst_128 = arith.constant dense<0.000000e+00> : vector<1x512xf32>
    %646 = tpu.matmul %588, %474, %cst_128 {dimension_numbers = #tpu.dot_dimension_numbers<[1], [0], [0], [1], [0, 0, 1, 1], [], []>} : vector<1x128xf32>, vector<128x512xf32>, vector<1x512xf32> -> vector<1x512xf32>
    %647 = arith.addf %646, %475 : vector<1x512xf32>
    %cst_129 = arith.constant dense<0.000000e+00> : vector<1x512xf32>
    %648 = tpu.matmul %617, %476, %cst_129 {dimension_numbers = #tpu.dot_dimension_numbers<[1], [0], [0], [1], [0, 0, 1, 1], [], []>} : vector<1x128xf32>, vector<128x512xf32>, vector<1x512xf32> -> vector<1x512xf32>
    %649 = arith.addf %647, %648 : vector<1x512xf32>
    %650 = vector.extract_strided_slice %649 {offsets = [0, 0], sizes = [1, 128], strides = [1, 1]} : vector<1x512xf32> to vector<1x128xf32>
    %651 = arith.negf %650 : vector<1x128xf32>
    %652 = math.exp %651 : vector<1x128xf32>
    %cst_130 = arith.constant 1.000000e+00 : f32
    %653 = vector.broadcast %cst_130 : f32 to vector<1x128xf32>
    %654 = arith.addf %653, %652 : vector<1x128xf32>
    %655 = arith.divf %653, %654 : vector<1x128xf32>
    %656 = vector.extract_strided_slice %649 {offsets = [0, 128], sizes = [1, 128], strides = [1, 1]} : vector<1x512xf32> to vector<1x128xf32>
    %657 = arith.negf %656 : vector<1x128xf32>
    %658 = math.exp %657 : vector<1x128xf32>
    %cst_131 = arith.constant 1.000000e+00 : f32
    %659 = vector.broadcast %cst_131 : f32 to vector<1x128xf32>
    %660 = arith.addf %659, %658 : vector<1x128xf32>
    %661 = arith.divf %659, %660 : vector<1x128xf32>
    %662 = vector.extract_strided_slice %649 {offsets = [0, 256], sizes = [1, 128], strides = [1, 1]} : vector<1x512xf32> to vector<1x128xf32>
    %663 = math.tanh %662 : vector<1x128xf32>
    %664 = vector.extract_strided_slice %649 {offsets = [0, 384], sizes = [1, 128], strides = [1, 1]} : vector<1x512xf32> to vector<1x128xf32>
    %665 = arith.negf %664 : vector<1x128xf32>
    %666 = math.exp %665 : vector<1x128xf32>
    %cst_132 = arith.constant 1.000000e+00 : f32
    %667 = vector.broadcast %cst_132 : f32 to vector<1x128xf32>
    %668 = arith.addf %667, %666 : vector<1x128xf32>
    %669 = arith.divf %667, %668 : vector<1x128xf32>
    %670 = arith.mulf %661, %615 : vector<1x128xf32>
    %671 = arith.mulf %655, %663 : vector<1x128xf32>
    %672 = arith.addf %670, %671 : vector<1x128xf32>
    %673 = math.tanh %672 : vector<1x128xf32>
    %674 = arith.mulf %669, %673 : vector<1x128xf32>
    %c2 = arith.constant 2 : index
    %c0_133 = arith.constant 0 : index
    %675 = vector.load %arg16[%c2, %c0_133] : memref<8x128xf32, #tpu.memory_space<vmem>>, vector<1x128xf32>
    tpu.vector_store %arg16[%c2, %c0_133], %674 {strides = array<i32>} : memref<8x128xf32, #tpu.memory_space<vmem>>, vector<1x128xf32>,
    %cst_134 = arith.constant dense<0.000000e+00> : vector<1x512xf32>
    %676 = tpu.matmul %645, %473, %cst_134 {dimension_numbers = #tpu.dot_dimension_numbers<[1], [0], [0], [1], [0, 0, 1, 1], [], []>} : vector<1x128xf32>, vector<128x512xf32>, vector<1x512xf32> -> vector<1x512xf32>
    %677 = arith.addf %472, %676 : vector<1x512xf32>
    %678 = vector.extract_strided_slice %677 {offsets = [0, 0], sizes = [1, 128], strides = [1, 1]} : vector<1x512xf32> to vector<1x128xf32>
    %679 = arith.negf %678 : vector<1x128xf32>
    %680 = math.exp %679 : vector<1x128xf32>
    %cst_135 = arith.constant 1.000000e+00 : f32
    %681 = vector.broadcast %cst_135 : f32 to vector<1x128xf32>
    %682 = arith.addf %681, %680 : vector<1x128xf32>
    %683 = arith.divf %681, %682 : vector<1x128xf32>
    %684 = vector.extract_strided_slice %677 {offsets = [0, 128], sizes = [1, 128], strides = [1, 1]} : vector<1x512xf32> to vector<1x128xf32>
    %685 = arith.negf %684 : vector<1x128xf32>
    %686 = math.exp %685 : vector<1x128xf32>
    %cst_136 = arith.constant 1.000000e+00 : f32
    %687 = vector.broadcast %cst_136 : f32 to vector<1x128xf32>
    %688 = arith.addf %687, %686 : vector<1x128xf32>
    %689 = arith.divf %687, %688 : vector<1x128xf32>
    %690 = vector.extract_strided_slice %677 {offsets = [0, 256], sizes = [1, 128], strides = [1, 1]} : vector<1x512xf32> to vector<1x128xf32>
    %691 = math.tanh %690 : vector<1x128xf32>
    %692 = vector.extract_strided_slice %677 {offsets = [0, 384], sizes = [1, 128], strides = [1, 1]} : vector<1x512xf32> to vector<1x128xf32>
    %693 = arith.negf %692 : vector<1x128xf32>
    %694 = math.exp %693 : vector<1x128xf32>
    %cst_137 = arith.constant 1.000000e+00 : f32
    %695 = vector.broadcast %cst_137 : f32 to vector<1x128xf32>
    %696 = arith.addf %695, %694 : vector<1x128xf32>
    %697 = arith.divf %695, %696 : vector<1x128xf32>
    %698 = arith.mulf %689, %643 : vector<1x128xf32>
    %699 = arith.mulf %683, %691 : vector<1x128xf32>
    %700 = arith.addf %698, %699 : vector<1x128xf32>
    %701 = math.tanh %700 : vector<1x128xf32>
    %702 = arith.mulf %697, %701 : vector<1x128xf32>
    %cst_138 = arith.constant dense<0.000000e+00> : vector<1x512xf32>
    %703 = tpu.matmul %645, %474, %cst_138 {dimension_numbers = #tpu.dot_dimension_numbers<[1], [0], [0], [1], [0, 0, 1, 1], [], []>} : vector<1x128xf32>, vector<128x512xf32>, vector<1x512xf32> -> vector<1x512xf32>
    %704 = arith.addf %703, %475 : vector<1x512xf32>
    %cst_139 = arith.constant dense<0.000000e+00> : vector<1x512xf32>
    %705 = tpu.matmul %674, %476, %cst_139 {dimension_numbers = #tpu.dot_dimension_numbers<[1], [0], [0], [1], [0, 0, 1, 1], [], []>} : vector<1x128xf32>, vector<128x512xf32>, vector<1x512xf32> -> vector<1x512xf32>
    %706 = arith.addf %704, %705 : vector<1x512xf32>
    %707 = vector.extract_strided_slice %706 {offsets = [0, 0], sizes = [1, 128], strides = [1, 1]} : vector<1x512xf32> to vector<1x128xf32>
    %708 = arith.negf %707 : vector<1x128xf32>
    %709 = math.exp %708 : vector<1x128xf32>
    %cst_140 = arith.constant 1.000000e+00 : f32
    %710 = vector.broadcast %cst_140 : f32 to vector<1x128xf32>
    %711 = arith.addf %710, %709 : vector<1x128xf32>
    %712 = arith.divf %710, %711 : vector<1x128xf32>
    %713 = vector.extract_strided_slice %706 {offsets = [0, 128], sizes = [1, 128], strides = [1, 1]} : vector<1x512xf32> to vector<1x128xf32>
    %714 = arith.negf %713 : vector<1x128xf32>
    %715 = math.exp %714 : vector<1x128xf32>
    %cst_141 = arith.constant 1.000000e+00 : f32
    %716 = vector.broadcast %cst_141 : f32 to vector<1x128xf32>
    %717 = arith.addf %716, %715 : vector<1x128xf32>
    %718 = arith.divf %716, %717 : vector<1x128xf32>
    %719 = vector.extract_strided_slice %706 {offsets = [0, 256], sizes = [1, 128], strides = [1, 1]} : vector<1x512xf32> to vector<1x128xf32>
    %720 = math.tanh %719 : vector<1x128xf32>
    %721 = vector.extract_strided_slice %706 {offsets = [0, 384], sizes = [1, 128], strides = [1, 1]} : vector<1x512xf32> to vector<1x128xf32>
    %722 = arith.negf %721 : vector<1x128xf32>
    %723 = math.exp %722 : vector<1x128xf32>
    %cst_142 = arith.constant 1.000000e+00 : f32
    %724 = vector.broadcast %cst_142 : f32 to vector<1x128xf32>
    %725 = arith.addf %724, %723 : vector<1x128xf32>
    %726 = arith.divf %724, %725 : vector<1x128xf32>
    %727 = arith.mulf %718, %672 : vector<1x128xf32>
    %728 = arith.mulf %712, %720 : vector<1x128xf32>
    %729 = arith.addf %727, %728 : vector<1x128xf32>
    %730 = math.tanh %729 : vector<1x128xf32>
    %731 = arith.mulf %726, %730 : vector<1x128xf32>
    %c3 = arith.constant 3 : index
    %c0_143 = arith.constant 0 : index
    %732 = vector.load %arg16[%c3, %c0_143] : memref<8x128xf32, #tpu.memory_space<vmem>>, vector<1x128xf32>
    tpu.vector_store %arg16[%c3, %c0_143], %731 {strides = array<i32>} : memref<8x128xf32, #tpu.memory_space<vmem>>, vector<1x128xf32>,
    %cst_144 = arith.constant dense<0.000000e+00> : vector<1x512xf32>
    %733 = tpu.matmul %702, %473, %cst_144 {dimension_numbers = #tpu.dot_dimension_numbers<[1], [0], [0], [1], [0, 0, 1, 1], [], []>} : vector<1x128xf32>, vector<128x512xf32>, vector<1x512xf32> -> vector<1x512xf32>
    %734 = arith.addf %472, %733 : vector<1x512xf32>
    %735 = vector.extract_strided_slice %734 {offsets = [0, 0], sizes = [1, 128], strides = [1, 1]} : vector<1x512xf32> to vector<1x128xf32>
    %736 = arith.negf %735 : vector<1x128xf32>
    %737 = math.exp %736 : vector<1x128xf32>
    %cst_145 = arith.constant 1.000000e+00 : f32
    %738 = vector.broadcast %cst_145 : f32 to vector<1x128xf32>
    %739 = arith.addf %738, %737 : vector<1x128xf32>
    %740 = arith.divf %738, %739 : vector<1x128xf32>
    %741 = vector.extract_strided_slice %734 {offsets = [0, 128], sizes = [1, 128], strides = [1, 1]} : vector<1x512xf32> to vector<1x128xf32>
    %742 = arith.negf %741 : vector<1x128xf32>
    %743 = math.exp %742 : vector<1x128xf32>
    %cst_146 = arith.constant 1.000000e+00 : f32
    %744 = vector.broadcast %cst_146 : f32 to vector<1x128xf32>
    %745 = arith.addf %744, %743 : vector<1x128xf32>
    %746 = arith.divf %744, %745 : vector<1x128xf32>
    %747 = vector.extract_strided_slice %734 {offsets = [0, 256], sizes = [1, 128], strides = [1, 1]} : vector<1x512xf32> to vector<1x128xf32>
    %748 = math.tanh %747 : vector<1x128xf32>
    %749 = vector.extract_strided_slice %734 {offsets = [0, 384], sizes = [1, 128], strides = [1, 1]} : vector<1x512xf32> to vector<1x128xf32>
    %750 = arith.negf %749 : vector<1x128xf32>
    %751 = math.exp %750 : vector<1x128xf32>
    %cst_147 = arith.constant 1.000000e+00 : f32
    %752 = vector.broadcast %cst_147 : f32 to vector<1x128xf32>
    %753 = arith.addf %752, %751 : vector<1x128xf32>
    %754 = arith.divf %752, %753 : vector<1x128xf32>
    %755 = arith.mulf %746, %700 : vector<1x128xf32>
    %756 = arith.mulf %740, %748 : vector<1x128xf32>
    %757 = arith.addf %755, %756 : vector<1x128xf32>
    %758 = math.tanh %757 : vector<1x128xf32>
    %759 = arith.mulf %754, %758 : vector<1x128xf32>
    %cst_148 = arith.constant dense<0.000000e+00> : vector<1x512xf32>
    %760 = tpu.matmul %702, %474, %cst_148 {dimension_numbers = #tpu.dot_dimension_numbers<[1], [0], [0], [1], [0, 0, 1, 1], [], []>} : vector<1x128xf32>, vector<128x512xf32>, vector<1x512xf32> -> vector<1x512xf32>
    %761 = arith.addf %760, %475 : vector<1x512xf32>
    %cst_149 = arith.constant dense<0.000000e+00> : vector<1x512xf32>
    %762 = tpu.matmul %731, %476, %cst_149 {dimension_numbers = #tpu.dot_dimension_numbers<[1], [0], [0], [1], [0, 0, 1, 1], [], []>} : vector<1x128xf32>, vector<128x512xf32>, vector<1x512xf32> -> vector<1x512xf32>
    %763 = arith.addf %761, %762 : vector<1x512xf32>
    %764 = vector.extract_strided_slice %763 {offsets = [0, 0], sizes = [1, 128], strides = [1, 1]} : vector<1x512xf32> to vector<1x128xf32>
    %765 = arith.negf %764 : vector<1x128xf32>
    %766 = math.exp %765 : vector<1x128xf32>
    %cst_150 = arith.constant 1.000000e+00 : f32
    %767 = vector.broadcast %cst_150 : f32 to vector<1x128xf32>
    %768 = arith.addf %767, %766 : vector<1x128xf32>
    %769 = arith.divf %767, %768 : vector<1x128xf32>
    %770 = vector.extract_strided_slice %763 {offsets = [0, 128], sizes = [1, 128], strides = [1, 1]} : vector<1x512xf32> to vector<1x128xf32>
    %771 = arith.negf %770 : vector<1x128xf32>
    %772 = math.exp %771 : vector<1x128xf32>
    %cst_151 = arith.constant 1.000000e+00 : f32
    %773 = vector.broadcast %cst_151 : f32 to vector<1x128xf32>
    %774 = arith.addf %773, %772 : vector<1x128xf32>
    %775 = arith.divf %773, %774 : vector<1x128xf32>
    %776 = vector.extract_strided_slice %763 {offsets = [0, 256], sizes = [1, 128], strides = [1, 1]} : vector<1x512xf32> to vector<1x128xf32>
    %777 = math.tanh %776 : vector<1x128xf32>
    %778 = vector.extract_strided_slice %763 {offsets = [0, 384], sizes = [1, 128], strides = [1, 1]} : vector<1x512xf32> to vector<1x128xf32>
    %779 = arith.negf %778 : vector<1x128xf32>
    %780 = math.exp %779 : vector<1x128xf32>
    %cst_152 = arith.constant 1.000000e+00 : f32
    %781 = vector.broadcast %cst_152 : f32 to vector<1x128xf32>
    %782 = arith.addf %781, %780 : vector<1x128xf32>
    %783 = arith.divf %781, %782 : vector<1x128xf32>
    %784 = arith.mulf %775, %729 : vector<1x128xf32>
    %785 = arith.mulf %769, %777 : vector<1x128xf32>
    %786 = arith.addf %784, %785 : vector<1x128xf32>
    %787 = math.tanh %786 : vector<1x128xf32>
    %788 = arith.mulf %783, %787 : vector<1x128xf32>
    %c4 = arith.constant 4 : index
    %c0_153 = arith.constant 0 : index
    %789 = vector.load %arg16[%c4, %c0_153] : memref<8x128xf32, #tpu.memory_space<vmem>>, vector<1x128xf32>
    tpu.vector_store %arg16[%c4, %c0_153], %788 {strides = array<i32>} : memref<8x128xf32, #tpu.memory_space<vmem>>, vector<1x128xf32>,
    %cst_154 = arith.constant dense<0.000000e+00> : vector<1x512xf32>
    %790 = tpu.matmul %759, %473, %cst_154 {dimension_numbers = #tpu.dot_dimension_numbers<[1], [0], [0], [1], [0, 0, 1, 1], [], []>} : vector<1x128xf32>, vector<128x512xf32>, vector<1x512xf32> -> vector<1x512xf32>
    %791 = arith.addf %472, %790 : vector<1x512xf32>
    %792 = vector.extract_strided_slice %791 {offsets = [0, 0], sizes = [1, 128], strides = [1, 1]} : vector<1x512xf32> to vector<1x128xf32>
    %793 = arith.negf %792 : vector<1x128xf32>
    %794 = math.exp %793 : vector<1x128xf32>
    %cst_155 = arith.constant 1.000000e+00 : f32
    %795 = vector.broadcast %cst_155 : f32 to vector<1x128xf32>
    %796 = arith.addf %795, %794 : vector<1x128xf32>
    %797 = arith.divf %795, %796 : vector<1x128xf32>
    %798 = vector.extract_strided_slice %791 {offsets = [0, 128], sizes = [1, 128], strides = [1, 1]} : vector<1x512xf32> to vector<1x128xf32>
    %799 = arith.negf %798 : vector<1x128xf32>
    %800 = math.exp %799 : vector<1x128xf32>
    %cst_156 = arith.constant 1.000000e+00 : f32
    %801 = vector.broadcast %cst_156 : f32 to vector<1x128xf32>
    %802 = arith.addf %801, %800 : vector<1x128xf32>
    %803 = arith.divf %801, %802 : vector<1x128xf32>
    %804 = vector.extract_strided_slice %791 {offsets = [0, 256], sizes = [1, 128], strides = [1, 1]} : vector<1x512xf32> to vector<1x128xf32>
    %805 = math.tanh %804 : vector<1x128xf32>
    %806 = vector.extract_strided_slice %791 {offsets = [0, 384], sizes = [1, 128], strides = [1, 1]} : vector<1x512xf32> to vector<1x128xf32>
    %807 = arith.negf %806 : vector<1x128xf32>
    %808 = math.exp %807 : vector<1x128xf32>
    %cst_157 = arith.constant 1.000000e+00 : f32
    %809 = vector.broadcast %cst_157 : f32 to vector<1x128xf32>
    %810 = arith.addf %809, %808 : vector<1x128xf32>
    %811 = arith.divf %809, %810 : vector<1x128xf32>
    %812 = arith.mulf %803, %757 : vector<1x128xf32>
    %813 = arith.mulf %797, %805 : vector<1x128xf32>
    %814 = arith.addf %812, %813 : vector<1x128xf32>
    %815 = math.tanh %814 : vector<1x128xf32>
    %816 = arith.mulf %811, %815 : vector<1x128xf32>
    %cst_158 = arith.constant dense<0.000000e+00> : vector<1x512xf32>
    %817 = tpu.matmul %759, %474, %cst_158 {dimension_numbers = #tpu.dot_dimension_numbers<[1], [0], [0], [1], [0, 0, 1, 1], [], []>} : vector<1x128xf32>, vector<128x512xf32>, vector<1x512xf32> -> vector<1x512xf32>
    %818 = arith.addf %817, %475 : vector<1x512xf32>
    %cst_159 = arith.constant dense<0.000000e+00> : vector<1x512xf32>
    %819 = tpu.matmul %788, %476, %cst_159 {dimension_numbers = #tpu.dot_dimension_numbers<[1], [0], [0], [1], [0, 0, 1, 1], [], []>} : vector<1x128xf32>, vector<128x512xf32>, vector<1x512xf32> -> vector<1x512xf32>
    %820 = arith.addf %818, %819 : vector<1x512xf32>
    %821 = vector.extract_strided_slice %820 {offsets = [0, 0], sizes = [1, 128], strides = [1, 1]} : vector<1x512xf32> to vector<1x128xf32>
    %822 = arith.negf %821 : vector<1x128xf32>
    %823 = math.exp %822 : vector<1x128xf32>
    %cst_160 = arith.constant 1.000000e+00 : f32
    %824 = vector.broadcast %cst_160 : f32 to vector<1x128xf32>
    %825 = arith.addf %824, %823 : vector<1x128xf32>
    %826 = arith.divf %824, %825 : vector<1x128xf32>
    %827 = vector.extract_strided_slice %820 {offsets = [0, 128], sizes = [1, 128], strides = [1, 1]} : vector<1x512xf32> to vector<1x128xf32>
    %828 = arith.negf %827 : vector<1x128xf32>
    %829 = math.exp %828 : vector<1x128xf32>
    %cst_161 = arith.constant 1.000000e+00 : f32
    %830 = vector.broadcast %cst_161 : f32 to vector<1x128xf32>
    %831 = arith.addf %830, %829 : vector<1x128xf32>
    %832 = arith.divf %830, %831 : vector<1x128xf32>
    %833 = vector.extract_strided_slice %820 {offsets = [0, 256], sizes = [1, 128], strides = [1, 1]} : vector<1x512xf32> to vector<1x128xf32>
    %834 = math.tanh %833 : vector<1x128xf32>
    %835 = vector.extract_strided_slice %820 {offsets = [0, 384], sizes = [1, 128], strides = [1, 1]} : vector<1x512xf32> to vector<1x128xf32>
    %836 = arith.negf %835 : vector<1x128xf32>
    %837 = math.exp %836 : vector<1x128xf32>
    %cst_162 = arith.constant 1.000000e+00 : f32
    %838 = vector.broadcast %cst_162 : f32 to vector<1x128xf32>
    %839 = arith.addf %838, %837 : vector<1x128xf32>
    %840 = arith.divf %838, %839 : vector<1x128xf32>
    %841 = arith.mulf %832, %786 : vector<1x128xf32>
    %842 = arith.mulf %826, %834 : vector<1x128xf32>
    %843 = arith.addf %841, %842 : vector<1x128xf32>
    %844 = math.tanh %843 : vector<1x128xf32>
    %845 = arith.mulf %840, %844 : vector<1x128xf32>
    %c5 = arith.constant 5 : index
    %c0_163 = arith.constant 0 : index
    %846 = vector.load %arg16[%c5, %c0_163] : memref<8x128xf32, #tpu.memory_space<vmem>>, vector<1x128xf32>
    tpu.vector_store %arg16[%c5, %c0_163], %845 {strides = array<i32>} : memref<8x128xf32, #tpu.memory_space<vmem>>, vector<1x128xf32>,
    %cst_164 = arith.constant dense<0.000000e+00> : vector<1x512xf32>
    %847 = tpu.matmul %816, %473, %cst_164 {dimension_numbers = #tpu.dot_dimension_numbers<[1], [0], [0], [1], [0, 0, 1, 1], [], []>} : vector<1x128xf32>, vector<128x512xf32>, vector<1x512xf32> -> vector<1x512xf32>
    %848 = arith.addf %472, %847 : vector<1x512xf32>
    %849 = vector.extract_strided_slice %848 {offsets = [0, 0], sizes = [1, 128], strides = [1, 1]} : vector<1x512xf32> to vector<1x128xf32>
    %850 = arith.negf %849 : vector<1x128xf32>
    %851 = math.exp %850 : vector<1x128xf32>
    %cst_165 = arith.constant 1.000000e+00 : f32
    %852 = vector.broadcast %cst_165 : f32 to vector<1x128xf32>
    %853 = arith.addf %852, %851 : vector<1x128xf32>
    %854 = arith.divf %852, %853 : vector<1x128xf32>
    %855 = vector.extract_strided_slice %848 {offsets = [0, 128], sizes = [1, 128], strides = [1, 1]} : vector<1x512xf32> to vector<1x128xf32>
    %856 = arith.negf %855 : vector<1x128xf32>
    %857 = math.exp %856 : vector<1x128xf32>
    %cst_166 = arith.constant 1.000000e+00 : f32
    %858 = vector.broadcast %cst_166 : f32 to vector<1x128xf32>
    %859 = arith.addf %858, %857 : vector<1x128xf32>
    %860 = arith.divf %858, %859 : vector<1x128xf32>
    %861 = vector.extract_strided_slice %848 {offsets = [0, 256], sizes = [1, 128], strides = [1, 1]} : vector<1x512xf32> to vector<1x128xf32>
    %862 = math.tanh %861 : vector<1x128xf32>
    %863 = vector.extract_strided_slice %848 {offsets = [0, 384], sizes = [1, 128], strides = [1, 1]} : vector<1x512xf32> to vector<1x128xf32>
    %864 = arith.negf %863 : vector<1x128xf32>
    %865 = math.exp %864 : vector<1x128xf32>
    %cst_167 = arith.constant 1.000000e+00 : f32
    %866 = vector.broadcast %cst_167 : f32 to vector<1x128xf32>
    %867 = arith.addf %866, %865 : vector<1x128xf32>
    %868 = arith.divf %866, %867 : vector<1x128xf32>
    %869 = arith.mulf %860, %814 : vector<1x128xf32>
    %870 = arith.mulf %854, %862 : vector<1x128xf32>
    %871 = arith.addf %869, %870 : vector<1x128xf32>
    %872 = math.tanh %871 : vector<1x128xf32>
    %873 = arith.mulf %868, %872 : vector<1x128xf32>
    %cst_168 = arith.constant dense<0.000000e+00> : vector<1x512xf32>
    %874 = tpu.matmul %816, %474, %cst_168 {dimension_numbers = #tpu.dot_dimension_numbers<[1], [0], [0], [1], [0, 0, 1, 1], [], []>} : vector<1x128xf32>, vector<128x512xf32>, vector<1x512xf32> -> vector<1x512xf32>
    %875 = arith.addf %874, %475 : vector<1x512xf32>
    %cst_169 = arith.constant dense<0.000000e+00> : vector<1x512xf32>
    %876 = tpu.matmul %845, %476, %cst_169 {dimension_numbers = #tpu.dot_dimension_numbers<[1], [0], [0], [1], [0, 0, 1, 1], [], []>} : vector<1x128xf32>, vector<128x512xf32>, vector<1x512xf32> -> vector<1x512xf32>
    %877 = arith.addf %875, %876 : vector<1x512xf32>
    %878 = vector.extract_strided_slice %877 {offsets = [0, 0], sizes = [1, 128], strides = [1, 1]} : vector<1x512xf32> to vector<1x128xf32>
    %879 = arith.negf %878 : vector<1x128xf32>
    %880 = math.exp %879 : vector<1x128xf32>
    %cst_170 = arith.constant 1.000000e+00 : f32
    %881 = vector.broadcast %cst_170 : f32 to vector<1x128xf32>
    %882 = arith.addf %881, %880 : vector<1x128xf32>
    %883 = arith.divf %881, %882 : vector<1x128xf32>
    %884 = vector.extract_strided_slice %877 {offsets = [0, 128], sizes = [1, 128], strides = [1, 1]} : vector<1x512xf32> to vector<1x128xf32>
    %885 = arith.negf %884 : vector<1x128xf32>
    %886 = math.exp %885 : vector<1x128xf32>
    %cst_171 = arith.constant 1.000000e+00 : f32
    %887 = vector.broadcast %cst_171 : f32 to vector<1x128xf32>
    %888 = arith.addf %887, %886 : vector<1x128xf32>
    %889 = arith.divf %887, %888 : vector<1x128xf32>
    %890 = vector.extract_strided_slice %877 {offsets = [0, 256], sizes = [1, 128], strides = [1, 1]} : vector<1x512xf32> to vector<1x128xf32>
    %891 = math.tanh %890 : vector<1x128xf32>
    %892 = vector.extract_strided_slice %877 {offsets = [0, 384], sizes = [1, 128], strides = [1, 1]} : vector<1x512xf32> to vector<1x128xf32>
    %893 = arith.negf %892 : vector<1x128xf32>
    %894 = math.exp %893 : vector<1x128xf32>
    %cst_172 = arith.constant 1.000000e+00 : f32
    %895 = vector.broadcast %cst_172 : f32 to vector<1x128xf32>
    %896 = arith.addf %895, %894 : vector<1x128xf32>
    %897 = arith.divf %895, %896 : vector<1x128xf32>
    %898 = arith.mulf %889, %843 : vector<1x128xf32>
    %899 = arith.mulf %883, %891 : vector<1x128xf32>
    %900 = arith.addf %898, %899 : vector<1x128xf32>
    %901 = math.tanh %900 : vector<1x128xf32>
    %902 = arith.mulf %897, %901 : vector<1x128xf32>
    %c6 = arith.constant 6 : index
    %c0_173 = arith.constant 0 : index
    %903 = vector.load %arg16[%c6, %c0_173] : memref<8x128xf32, #tpu.memory_space<vmem>>, vector<1x128xf32>
    tpu.vector_store %arg16[%c6, %c0_173], %902 {strides = array<i32>} : memref<8x128xf32, #tpu.memory_space<vmem>>, vector<1x128xf32>,
    %cst_174 = arith.constant dense<0.000000e+00> : vector<1x512xf32>
    %904 = tpu.matmul %873, %474, %cst_174 {dimension_numbers = #tpu.dot_dimension_numbers<[1], [0], [0], [1], [0, 0, 1, 1], [], []>} : vector<1x128xf32>, vector<128x512xf32>, vector<1x512xf32> -> vector<1x512xf32>
    %905 = arith.addf %904, %475 : vector<1x512xf32>
    %cst_175 = arith.constant dense<0.000000e+00> : vector<1x512xf32>
    %906 = tpu.matmul %902, %476, %cst_175 {dimension_numbers = #tpu.dot_dimension_numbers<[1], [0], [0], [1], [0, 0, 1, 1], [], []>} : vector<1x128xf32>, vector<128x512xf32>, vector<1x512xf32> -> vector<1x512xf32>
    %907 = arith.addf %905, %906 : vector<1x512xf32>
    %908 = vector.extract_strided_slice %907 {offsets = [0, 0], sizes = [1, 128], strides = [1, 1]} : vector<1x512xf32> to vector<1x128xf32>
    %909 = arith.negf %908 : vector<1x128xf32>
    %910 = math.exp %909 : vector<1x128xf32>
    %cst_176 = arith.constant 1.000000e+00 : f32
    %911 = vector.broadcast %cst_176 : f32 to vector<1x128xf32>
    %912 = arith.addf %911, %910 : vector<1x128xf32>
    %913 = arith.divf %911, %912 : vector<1x128xf32>
    %914 = vector.extract_strided_slice %907 {offsets = [0, 128], sizes = [1, 128], strides = [1, 1]} : vector<1x512xf32> to vector<1x128xf32>
    %915 = arith.negf %914 : vector<1x128xf32>
    %916 = math.exp %915 : vector<1x128xf32>
    %cst_177 = arith.constant 1.000000e+00 : f32
    %917 = vector.broadcast %cst_177 : f32 to vector<1x128xf32>
    %918 = arith.addf %917, %916 : vector<1x128xf32>
    %919 = arith.divf %917, %918 : vector<1x128xf32>
    %920 = vector.extract_strided_slice %907 {offsets = [0, 256], sizes = [1, 128], strides = [1, 1]} : vector<1x512xf32> to vector<1x128xf32>
    %921 = math.tanh %920 : vector<1x128xf32>
    %922 = vector.extract_strided_slice %907 {offsets = [0, 384], sizes = [1, 128], strides = [1, 1]} : vector<1x512xf32> to vector<1x128xf32>
    %923 = arith.negf %922 : vector<1x128xf32>
    %924 = math.exp %923 : vector<1x128xf32>
    %cst_178 = arith.constant 1.000000e+00 : f32
    %925 = vector.broadcast %cst_178 : f32 to vector<1x128xf32>
    %926 = arith.addf %925, %924 : vector<1x128xf32>
    %927 = arith.divf %925, %926 : vector<1x128xf32>
    %928 = arith.mulf %919, %900 : vector<1x128xf32>
    %929 = arith.mulf %913, %921 : vector<1x128xf32>
    %930 = arith.addf %928, %929 : vector<1x128xf32>
    %931 = math.tanh %930 : vector<1x128xf32>
    %932 = arith.mulf %927, %931 : vector<1x128xf32>
    %c7 = arith.constant 7 : index
    %c0_179 = arith.constant 0 : index
    %933 = vector.load %arg16[%c7, %c0_179] : memref<8x128xf32, #tpu.memory_space<vmem>>, vector<1x128xf32>
    tpu.vector_store %arg16[%c7, %c0_179], %932 {strides = array<i32>} : memref<8x128xf32, #tpu.memory_space<vmem>>, vector<1x128xf32>,
    %c0_180 = arith.constant 0 : index
    %c0_181 = arith.constant 0 : index
    %934 = vector.load %arg16[%c0_180, %c0_181] : memref<8x128xf32, #tpu.memory_space<vmem>>, vector<8x128xf32>
    %c0_182 = arith.constant 0 : index
    %c0_183 = arith.constant 0 : index
    %935 = vector.load %arg13[%c0_182, %c0_183] : memref<1x128xf32, #tpu.memory_space<vmem>>, vector<1x128xf32>
    %936 = vector.broadcast %935 : vector<1x128xf32> to vector<8x128xf32>
    %937 = arith.mulf %934, %936 : vector<8x128xf32>
    %cst_184 = arith.constant dense<0.000000e+00> : vector<8xf32>
    %938 = vector.multi_reduction <add>, %937, %cst_184 [1] : vector<8x128xf32> to vector<8xf32>
    %939 = vector.shape_cast %938 : vector<8xf32> to vector<8x1xf32>
    %c0_185 = arith.constant 0 : index
    %c0_186 = arith.constant 0 : index
    %940 = vector.load %arg14[%c0_185, %c0_186] : memref<1x1xf32, #tpu.memory_space<vmem>>, vector<1x1xf32>
    %941 = vector.broadcast %940 : vector<1x1xf32> to vector<8x1xf32>
    %942 = arith.addf %939, %941 : vector<8x1xf32>
    %c0_187 = arith.constant 0 : index
    %c0_188 = arith.constant 0 : index
    %943 = vector.load %arg15[%c0_187, %c0_188] : memref<8x1xf32, #tpu.memory_space<vmem>>, vector<8x1xf32>
    tpu.vector_store %arg15[%c0_187, %c0_188], %942 {strides = array<i32>} : memref<8x1xf32, #tpu.memory_space<vmem>>, vector<8x1xf32>,
    return
  }
}

</mosaic_0001>

<llo_original>
// kernel: tpu_custom_call.1
$region0: #{tpu_custom_call.1}
  #allocation0 [shape = 'u32[]', space=smem, size = 0x4, offset = 0x4, fixed_abs, tag = 'smem constant byte address 0x4 - core index']
  #allocation1 [shape = 'u32[72,128]{1,0:T(1,128)}', space=vmem, size = 0x9000, scoped, tag = 'internal scratch']
  #allocation2 [shape = 'f32[8,128]{1,0:T(8,128)}', space=vmem, size = 0x1000, scoped, tag = 'scratch operand']
  #allocation3 [shape = 'f32[1,1]{1,0:T(1,128)S(1)}', space=vmem, size = 0x200, scoped, tag = 'scoped memory for tpu_custom_call.1']
  %s0 = inlined_call_operand.vmem [shape: f32[8,1], index: 0, kind: input, shape index: {}]
  %s1 = inlined_call_operand.vmem [shape: f32[1,512], index: 1, kind: input, shape index: {}]
  %s2 = inlined_call_operand.hbm [shape: f32[128,512], index: 2, kind: input, shape index: {}]
  %s3 = inlined_call_operand.vmem [shape: f32[1,512], index: 3, kind: input, shape index: {}]
  %s4 = inlined_call_operand.hbm [shape: f32[128,512], index: 4, kind: input, shape index: {}]
  %s5 = inlined_call_operand.hbm [shape: f32[128,512], index: 5, kind: input, shape index: {}]
  %s6 = inlined_call_operand.vmem [shape: f32[1,512], index: 6, kind: input, shape index: {}]
  %s7 = inlined_call_operand.hbm [shape: f32[128,512], index: 7, kind: input, shape index: {}]
  %s8 = inlined_call_operand.hbm [shape: f32[128,512], index: 8, kind: input, shape index: {}]
  %s9 = inlined_call_operand.vmem [shape: f32[1,512], index: 9, kind: input, shape index: {}]
  %s10 = inlined_call_operand.hbm [shape: f32[128,512], index: 10, kind: input, shape index: {}]
  %s11 = inlined_call_operand.hbm [shape: f32[128,512], index: 11, kind: input, shape index: {}]
  %s12 = inlined_call_operand.vmem [shape: f32[1,512], index: 12, kind: input, shape index: {}]
  %s13 = inlined_call_operand.vmem [shape: f32[1,128], index: 13, kind: input, shape index: {}]
  %s14 = inlined_call_operand.<no memory space> [shape: f32[1,1], index: 14, kind: input, shape index: {}]
  %s15 = inlined_call_operand.vmem [shape: f32[8,1], index: 15, kind: output, shape index: {}]
  %s16 = sld [smem:[#allocation0]]
  $region98: #{tpu_custom_call.1} parent=0
    _
  %s18 = ssub.s32 1, %s16
  %s19 = scalar_select 0, %s18, %s16
  %v20 = vstv %s14
  %21 = vst [vmem:[#allocation3] sm:$0x1] %v20
  $region1: #{tpu_custom_call.1} parent=0
    #allocation4 [shape = 'u8[262144]{0}', space=vmem, size = 0x40000, scoped, tag = 'input window, operand 2, single buffered']
    #allocation5 [shape = 's32[1]{0}', space=sflag, size = 0x4, scoped, tag = 'scoped memory for tpu_custom_call.1']
    #allocation6 [shape = 'u8[262144]{0}', space=vmem, size = 0x40000, scoped, tag = 'input window, operand 4, single buffered']
    #allocation7 [shape = 's32[1]{0}', space=sflag, size = 0x4, scoped, tag = 'scoped memory for tpu_custom_call.1']
    #allocation8 [shape = 'u8[262144]{0}', space=vmem, size = 0x40000, scoped, tag = 'input window, operand 5, single buffered']
    #allocation9 [shape = 'u8[262144]{0}', space=vmem, size = 0x40000, scoped, tag = 'input window, operand 7, single buffered']
    #allocation10 [shape = 's32[1]{0}', space=sflag, size = 0x4, scoped, tag = 'scoped memory for tpu_custom_call.1']
    #allocation11 [shape = 'u8[262144]{0}', space=vmem, size = 0x40000, scoped, tag = 'input window, operand 8, single buffered']
    #allocation12 [shape = 'u8[262144]{0}', space=vmem, size = 0x40000, scoped, tag = 'input window, operand 10, single buffered']
    #allocation13 [shape = 's32[1]{0}', space=sflag, size = 0x4, scoped, tag = 'scoped memory for tpu_custom_call.1']
    #allocation14 [shape = 'u8[262144]{0}', space=vmem, size = 0x40000, scoped, tag = 'input window, operand 11, single buffered']
    %22 = vsyncpa [#allocation5], 0
    %23 = vsyncpa [#allocation7], 0
    %24 = vsyncpa [#allocation10], 0
    %25 = vsyncpa [#allocation13], 0
    // Predicated region
    $region2: #{tpu_custom_call.1} parent=1 // pred_check
      _
    $region3: #{tpu_custom_call.1} parent=1 // pred_check_branch
      %27 = sbr.rel (0) target = $region5
    $region4: #{tpu_custom_call.1} parent=1 // pred_region
      _
    $region5: #{tpu_custom_call.1} parent=1 // pred_fallthru
      _
    // Predicated region
    $region6: #{tpu_custom_call.1} parent=1 // pred_check
      _
    $region7: #{tpu_custom_call.1} parent=1 // pred_check_branch
      %29 = sbr.rel (0) target = $region9
    $region8: #{tpu_custom_call.1} parent=1 // pred_region
      _
    $region9: #{tpu_custom_call.1} parent=1 // pred_fallthru
      _
    // Predicated region
    $region10: #{tpu_custom_call.1} parent=1 // pred_check
      _
    $region11: #{tpu_custom_call.1} parent=1 // pred_check_branch
      %31 = sbr.rel (0) target = $region13
    $region12: #{tpu_custom_call.1} parent=1 // pred_region
      %33 = vsyncadd [#allocation5], 0
      %s34 = sshll.u32 %s2, 4
      %s35 = int_to_ptr.hbm [resolvable:$true] %s34
      %s36 = sshll.u32 [#allocation4], 4
      %s37 = int_to_ptr.vmem [resolvable:$true] %s36
      %42 = dma.hbm_to_vmem [thread:$0]  %s35, 8192, %s37, [#allocation5], 512, 512, 32
    $region13: #{tpu_custom_call.1} parent=1 // pred_fallthru
      _
    // Predicated region
    $region14: #{tpu_custom_call.1} parent=1 // pred_check
      _
    $region15: #{tpu_custom_call.1} parent=1 // pred_check_branch
      %44 = sbr.rel (0) target = $region17
    $region16: #{tpu_custom_call.1} parent=1 // pred_region
      _
    $region17: #{tpu_custom_call.1} parent=1 // pred_fallthru
      _
    // Predicated region
    $region18: #{tpu_custom_call.1} parent=1 // pred_check
      _
    $region19: #{tpu_custom_call.1} parent=1 // pred_check_branch
      %46 = sbr.rel (0) target = $region21
    $region20: #{tpu_custom_call.1} parent=1 // pred_region
      %48 = vsyncadd [#allocation7], 0
      %s49 = sshll.u32 %s4, 4
      %s50 = int_to_ptr.hbm [resolvable:$true] %s49
      %s51 = sshll.u32 [#allocation6], 4
      %s52 = int_to_ptr.vmem [resolvable:$true] %s51
      %57 = dma.hbm_to_vmem [thread:$0]  %s50, 8192, %s52, [#allocation7], 512, 512, 32
    $region21: #{tpu_custom_call.1} parent=1 // pred_fallthru
      _
    // Predicated region
    $region22: #{tpu_custom_call.1} parent=1 // pred_check
      _
    $region23: #{tpu_custom_call.1} parent=1 // pred_check_branch
      %59 = sbr.rel (0) target = $region25
    $region24: #{tpu_custom_call.1} parent=1 // pred_region
      %61 = vsyncadd [#allocation7], 0
      %s62 = sshll.u32 %s5, 4
      %s63 = int_to_ptr.hbm [resolvable:$true] %s62
      %s64 = sshll.u32 [#allocation8], 4
      %s65 = int_to_ptr.vmem [resolvable:$true] %s64
      %70 = dma.hbm_to_vmem [thread:$0]  %s63, 8192, %s65, [#allocation7], 512, 512, 32
    $region25: #{tpu_custom_call.1} parent=1 // pred_fallthru
      _
    // Predicated region
    $region26: #{tpu_custom_call.1} parent=1 // pred_check
      _
    $region27: #{tpu_custom_call.1} parent=1 // pred_check_branch
      %72 = sbr.rel (0) target = $region29
    $region28: #{tpu_custom_call.1} parent=1 // pred_region
      _
    $region29: #{tpu_custom_call.1} parent=1 // pred_fallthru
      _
    // Predicated region
    $region30: #{tpu_custom_call.1} parent=1 // pred_check
      _
    $region31: #{tpu_custom_call.1} parent=1 // pred_check_branch
      %74 = sbr.rel (0) target = $region33
    $region32: #{tpu_custom_call.1} parent=1 // pred_region
      %76 = vsyncadd [#allocation10], 0
      %s77 = sshll.u32 %s7, 4
      %s78 = int_to_ptr.hbm [resolvable:$true] %s77
      %s79 = sshll.u32 [#allocation9], 4
      %s80 = int_to_ptr.vmem [resolvable:$true] %s79
      %85 = dma.hbm_to_vmem [thread:$0]  %s78, 8192, %s80, [#allocation10], 512, 512, 32
    $region33: #{tpu_custom_call.1} parent=1 // pred_fallthru
      _
    // Predicated region
    $region34: #{tpu_custom_call.1} parent=1 // pred_check
      _
    $region35: #{tpu_custom_call.1} parent=1 // pred_check_branch
      %87 = sbr.rel (0) target = $region37
    $region36: #{tpu_custom_call.1} parent=1 // pred_region
      %89 = vsyncadd [#allocation10], 0
      %s90 = sshll.u32 %s8, 4
      %s91 = int_to_ptr.hbm [resolvable:$true] %s90
      %s92 = sshll.u32 [#allocation11], 4
      %s93 = int_to_ptr.vmem [resolvable:$true] %s92
      %98 = dma.hbm_to_vmem [thread:$0]  %s91, 8192, %s93, [#allocation10], 512, 512, 32
    $region37: #{tpu_custom_call.1} parent=1 // pred_fallthru
      _
    // Predicated region
    $region38: #{tpu_custom_call.1} parent=1 // pred_check
      _
    $region39: #{tpu_custom_call.1} parent=1 // pred_check_branch
      %100 = sbr.rel (0) target = $region41
    $region40: #{tpu_custom_call.1} parent=1 // pred_region
      _
    $region41: #{tpu_custom_call.1} parent=1 // pred_fallthru
      _
    // Predicated region
    $region42: #{tpu_custom_call.1} parent=1 // pred_check
      _
    $region43: #{tpu_custom_call.1} parent=1 // pred_check_branch
      %102 = sbr.rel (0) target = $region45
    $region44: #{tpu_custom_call.1} parent=1 // pred_region
      %104 = vsyncadd [#allocation13], 0
      %s105 = sshll.u32 %s10, 4
      %s106 = int_to_ptr.hbm [resolvable:$true] %s105
      %s107 = sshll.u32 [#allocation12], 4
      %s108 = int_to_ptr.vmem [resolvable:$true] %s107
      %113 = dma.hbm_to_vmem [thread:$0]  %s106, 8192, %s108, [#allocation13], 512, 512, 32
    $region45: #{tpu_custom_call.1} parent=1 // pred_fallthru
      _
    // Predicated region
    $region46: #{tpu_custom_call.1} parent=1 // pred_check
      _
    $region47: #{tpu_custom_call.1} parent=1 // pred_check_branch
      %115 = sbr.rel (0) target = $region49
    $region48: #{tpu_custom_call.1} parent=1 // pred_region
      %117 = vsyncadd [#allocation13], 0
      %s118 = sshll.u32 %s11, 4
      %s119 = int_to_ptr.hbm [resolvable:$true] %s118
      %s120 = sshll.u32 [#allocation14], 4
      %s121 = int_to_ptr.vmem [resolvable:$true] %s120
      %126 = dma.hbm_to_vmem [thread:$0]  %s119, 8192, %s121, [#allocation13], 512, 512, 32
    $region49: #{tpu_custom_call.1} parent=1 // pred_fallthru
      _
    // Predicated region
    $region50: #{tpu_custom_call.1} parent=1 // pred_check
      _
    $region51: #{tpu_custom_call.1} parent=1 // pred_check_branch
      %128 = sbr.rel (0) target = $region53
    $region52: #{tpu_custom_call.1} parent=1 // pred_region
      _
    $region53: #{tpu_custom_call.1} parent=1 // pred_fallthru
      _
    // Predicated region
    $region54: #{tpu_custom_call.1} parent=1 // pred_check
      _
    $region55: #{tpu_custom_call.1} parent=1 // pred_check_branch
      %130 = sbr.rel (0) target = $region57
    $region56: #{tpu_custom_call.1} parent=1 // pred_region
      _
    $region57: #{tpu_custom_call.1} parent=1 // pred_fallthru
      _
    // Predicated region
    $region58: #{tpu_custom_call.1} parent=1 // pred_check
      _
    $region59: #{tpu_custom_call.1} parent=1 // pred_check_branch
      %132 = sbr.rel (0) target = $region61
    $region60: #{tpu_custom_call.1} parent=1 // pred_region
      _
    $region61: #{tpu_custom_call.1} parent=1 // pred_fallthru
      _
    // Predicated region
    $region62: #{tpu_custom_call.1} parent=1 // pred_check
      _
    $region63: #{tpu_custom_call.1} parent=1 // pred_check_branch
      %134 = sbr.rel (0) target = $region65
    $region64: #{tpu_custom_call.1} parent=1 // pred_region
      %136 = dma.done [#allocation5], 8192
    $region65: #{tpu_custom_call.1} parent=1 // pred_fallthru
      _
    // Predicated region
    $region66: #{tpu_custom_call.1} parent=1 // pred_check
      _
    $region67: #{tpu_custom_call.1} parent=1 // pred_check_branch
      %138 = sbr.rel (0) target = $region69
    $region68: #{tpu_custom_call.1} parent=1 // pred_region
      %140 = dma.done [#allocation7], 8192
    $region69: #{tpu_custom_call.1} parent=1 // pred_fallthru
      _
    // Predicated region
    $region70: #{tpu_custom_call.1} parent=1 // pred_check
      _
    $region71: #{tpu_custom_call.1} parent=1 // pred_check_branch
      %142 = sbr.rel (0) target = $region73
    $region72: #{tpu_custom_call.1} parent=1 // pred_region
      %144 = dma.done [#allocation7], 8192
    $region73: #{tpu_custom_call.1} parent=1 // pred_fallthru
      _
    // Predicated region
    $region74: #{tpu_custom_call.1} parent=1 // pred_check
      _
    $region75: #{tpu_custom_call.1} parent=1 // pred_check_branch
      %146 = sbr.rel (0) target = $region77
    $region76: #{tpu_custom_call.1} parent=1 // pred_region
      %148 = dma.done [#allocation10], 8192
    $region77: #{tpu_custom_call.1} parent=1 // pred_fallthru
      _
    // Predicated region
    $region78: #{tpu_custom_call.1} parent=1 // pred_check
      _
    $region79: #{tpu_custom_call.1} parent=1 // pred_check_branch
      %150 = sbr.rel (0) target = $region81
    $region80: #{tpu_custom_call.1} parent=1 // pred_region
      %152 = dma.done [#allocation10], 8192
    $region81: #{tpu_custom_call.1} parent=1 // pred_fallthru
      _
    // Predicated region
    $region82: #{tpu_custom_call.1} parent=1 // pred_check
      _
    $region83: #{tpu_custom_call.1} parent=1 // pred_check_branch
      %154 = sbr.rel (0) target = $region85
    $region84: #{tpu_custom_call.1} parent=1 // pred_region
      %156 = dma.done [#allocation13], 8192
    $region85: #{tpu_custom_call.1} parent=1 // pred_fallthru
      _
    // Predicated region
    $region86: #{tpu_custom_call.1} parent=1 // pred_check
      _
    $region87: #{tpu_custom_call.1} parent=1 // pred_check_branch
      %158 = sbr.rel (0) target = $region89
    $region88: #{tpu_custom_call.1} parent=1 // pred_region
      %160 = dma.done [#allocation13], 8192
    $region89: #{tpu_custom_call.1} parent=1 // pred_fallthru
      _
    %v161 = vld [vmem:[%s0] sm:$0xff]
    %v162 = vld [vmem:[%s1] sm:$0xf]
    %164 = vset.pattern.permute.xlu0 0
    %165 = vperm.xlu0 %164, %v161
    %v166 = vpop.permute.xlu0 %165
    %v169 = vperm.slane %v162, 0
    %v170 = vperm.slane %v162, 1
    %v171 = vperm.slane %v162, 2
    %v172 = vperm.slane %v162, 3
    %v177 = vmul.f32 %v166, %v169
    %v178 = vmul.f32 %v166, %v170
    %v179 = vmul.f32 %v166, %v171
    %v180 = vmul.f32 %v166, %v172
    %v181 = vld [vmem:[%s3] sm:$0xf]
    %v183 = vperm.slane %v181, 0
    %v184 = vperm.slane %v181, 1
    %v185 = vperm.slane %v181, 2
    %v186 = vperm.slane %v181, 3
    %v191 = vadd.f32 %v177, %v183
    %v192 = vadd.f32 %v178, %v184
    %v193 = vadd.f32 %v179, %v185
    %v194 = vadd.f32 %v180, %v186
    %v195 = vld [vmem:[#allocation4] sm:$0xff]
    %v196 = vld [vmem:[#allocation4 + $0x8] sm:$0xff]
    %v197 = vld [vmem:[#allocation4 + $0x10] sm:$0xff]
    %v198 = vld [vmem:[#allocation4 + $0x18] sm:$0xff]
    %v199 = vld [vmem:[#allocation4 + $0x20] sm:$0xff]
    %v200 = vld [vmem:[#allocation4 + $0x28] sm:$0xff]
    %v201 = vld [vmem:[#allocation4 + $0x30] sm:$0xff]
    %v202 = vld [vmem:[#allocation4 + $0x38] sm:$0xff]
    %v203 = vld [vmem:[#allocation4 + $0x40] sm:$0xff]
    %v204 = vld [vmem:[#allocation4 + $0x48] sm:$0xff]
    %v205 = vld [vmem:[#allocation4 + $0x50] sm:$0xff]
    %v206 = vld [vmem:[#allocation4 + $0x58] sm:$0xff]
    %v207 = vld [vmem:[#allocation4 + $0x60] sm:$0xff]
    %v208 = vld [vmem:[#allocation4 + $0x68] sm:$0xff]
    %v209 = vld [vmem:[#allocation4 + $0x70] sm:$0xff]
    %v210 = vld [vmem:[#allocation4 + $0x78] sm:$0xff]
    %v211 = vld [vmem:[#allocation4 + $0x80] sm:$0xff]
    %v212 = vld [vmem:[#allocation4 + $0x88] sm:$0xff]
    %v213 = vld [vmem:[#allocation4 + $0x90] sm:$0xff]
    %v214 = vld [vmem:[#allocation4 + $0x98] sm:$0xff]
    %v215 = vld [vmem:[#allocation4 + $0xa0] sm:$0xff]
    %v216 = vld [vmem:[#allocation4 + $0xa8] sm:$0xff]
    %v217 = vld [vmem:[#allocation4 + $0xb0] sm:$0xff]
    %v218 = vld [vmem:[#allocation4 + $0xb8] sm:$0xff]
    %v219 = vld [vmem:[#allocation4 + $0xc0] sm:$0xff]
    %v220 = vld [vmem:[#allocation4 + $0xc8] sm:$0xff]
    %v221 = vld [vmem:[#allocation4 + $0xd0] sm:$0xff]
    %v222 = vld [vmem:[#allocation4 + $0xd8] sm:$0xff]
    %v223 = vld [vmem:[#allocation4 + $0xe0] sm:$0xff]
    %v224 = vld [vmem:[#allocation4 + $0xe8] sm:$0xff]
    %v225 = vld [vmem:[#allocation4 + $0xf0] sm:$0xff]
    %v226 = vld [vmem:[#allocation4 + $0xf8] sm:$0xff]
    %v227 = vld [vmem:[#allocation4 + $0x100] sm:$0xff]
    %v228 = vld [vmem:[#allocation4 + $0x108] sm:$0xff]
    %v229 = vld [vmem:[#allocation4 + $0x110] sm:$0xff]
    %v230 = vld [vmem:[#allocation4 + $0x118] sm:$0xff]
    %v231 = vld [vmem:[#allocation4 + $0x120] sm:$0xff]
    %v232 = vld [vmem:[#allocation4 + $0x128] sm:$0xff]
    %v233 = vld [vmem:[#allocation4 + $0x130] sm:$0xff]
    %v234 = vld [vmem:[#allocation4 + $0x138] sm:$0xff]
    %v235 = vld [vmem:[#allocation4 + $0x140] sm:$0xff]
    %v236 = vld [vmem:[#allocation4 + $0x148] sm:$0xff]
    %v237 = vld [vmem:[#allocation4 + $0x150] sm:$0xff]
    %v238 = vld [vmem:[#allocation4 + $0x158] sm:$0xff]
    %v239 = vld [vmem:[#allocation4 + $0x160] sm:$0xff]
    %v240 = vld [vmem:[#allocation4 + $0x168] sm:$0xff]
    %v241 = vld [vmem:[#allocation4 + $0x170] sm:$0xff]
    %v242 = vld [vmem:[#allocation4 + $0x178] sm:$0xff]
    %v243 = vld [vmem:[#allocation4 + $0x180] sm:$0xff]
    %v244 = vld [vmem:[#allocation4 + $0x188] sm:$0xff]
    %v245 = vld [vmem:[#allocation4 + $0x190] sm:$0xff]
    %v246 = vld [vmem:[#allocation4 + $0x198] sm:$0xff]
    %v247 = vld [vmem:[#allocation4 + $0x1a0] sm:$0xff]
    %v248 = vld [vmem:[#allocation4 + $0x1a8] sm:$0xff]
    %v249 = vld [vmem:[#allocation4 + $0x1b0] sm:$0xff]
    %v250 = vld [vmem:[#allocation4 + $0x1b8] sm:$0xff]
    %v251 = vld [vmem:[#allocation4 + $0x1c0] sm:$0xff]
    %v252 = vld [vmem:[#allocation4 + $0x1c8] sm:$0xff]
    %v253 = vld [vmem:[#allocation4 + $0x1d0] sm:$0xff]
    %v254 = vld [vmem:[#allocation4 + $0x1d8] sm:$0xff]
    %v255 = vld [vmem:[#allocation4 + $0x1e0] sm:$0xff]
    %v256 = vld [vmem:[#allocation4 + $0x1e8] sm:$0xff]
    %v257 = vld [vmem:[#allocation4 + $0x1f0] sm:$0xff]
    %v258 = vld [vmem:[#allocation4 + $0x1f8] sm:$0xff]
    %v259 = vld [vmem:[#allocation6] sm:$0xff]
    %v260 = vld [vmem:[#allocation6 + $0x8] sm:$0xff]
    %v261 = vld [vmem:[#allocation6 + $0x10] sm:$0xff]
    %v262 = vld [vmem:[#allocation6 + $0x18] sm:$0xff]
    %v263 = vld [vmem:[#allocation6 + $0x20] sm:$0xff]
    %v264 = vld [vmem:[#allocation6 + $0x28] sm:$0xff]
    %v265 = vld [vmem:[#allocation6 + $0x30] sm:$0xff]
    %v266 = vld [vmem:[#allocation6 + $0x38] sm:$0xff]
    %v267 = vld [vmem:[#allocation6 + $0x40] sm:$0xff]
    %v268 = vld [vmem:[#allocation6 + $0x48] sm:$0xff]
    %v269 = vld [vmem:[#allocation6 + $0x50] sm:$0xff]
    %v270 = vld [vmem:[#allocation6 + $0x58] sm:$0xff]
    %v271 = vld [vmem:[#allocation6 + $0x60] sm:$0xff]
    %v272 = vld [vmem:[#allocation6 + $0x68] sm:$0xff]
    %v273 = vld [vmem:[#allocation6 + $0x70] sm:$0xff]
    %v274 = vld [vmem:[#allocation6 + $0x78] sm:$0xff]
    %v275 = vld [vmem:[#allocation6 + $0x80] sm:$0xff]
    %v276 = vld [vmem:[#allocation6 + $0x88] sm:$0xff]
    %v277 = vld [vmem:[#allocation6 + $0x90] sm:$0xff]
    %v278 = vld [vmem:[#allocation6 + $0x98] sm:$0xff]
    %v279 = vld [vmem:[#allocation6 + $0xa0] sm:$0xff]
    %v280 = vld [vmem:[#allocation6 + $0xa8] sm:$0xff]
    %v281 = vld [vmem:[#allocation6 + $0xb0] sm:$0xff]
    %v282 = vld [vmem:[#allocation6 + $0xb8] sm:$0xff]
    %v283 = vld [vmem:[#allocation6 + $0xc0] sm:$0xff]
    %v284 = vld [vmem:[#allocation6 + $0xc8] sm:$0xff]
    %v285 = vld [vmem:[#allocation6 + $0xd0] sm:$0xff]
    %v286 = vld [vmem:[#allocation6 + $0xd8] sm:$0xff]
    %v287 = vld [vmem:[#allocation6 + $0xe0] sm:$0xff]
    %v288 = vld [vmem:[#allocation6 + $0xe8] sm:$0xff]
    %v289 = vld [vmem:[#allocation6 + $0xf0] sm:$0xff]
    %v290 = vld [vmem:[#allocation6 + $0xf8] sm:$0xff]
    %v291 = vld [vmem:[#allocation6 + $0x100] sm:$0xff]
    %v292 = vld [vmem:[#allocation6 + $0x108] sm:$0xff]
    %v293 = vld [vmem:[#allocation6 + $0x110] sm:$0xff]
    %v294 = vld [vmem:[#allocation6 + $0x118] sm:$0xff]
    %v295 = vld [vmem:[#allocation6 + $0x120] sm:$0xff]
    %v296 = vld [vmem:[#allocation6 + $0x128] sm:$0xff]
    %v297 = vld [vmem:[#allocation6 + $0x130] sm:$0xff]
    %v298 = vld [vmem:[#allocation6 + $0x138] sm:$0xff]
    %v299 = vld [vmem:[#allocation6 + $0x140] sm:$0xff]
    %v300 = vld [vmem:[#allocation6 + $0x148] sm:$0xff]
    %v301 = vld [vmem:[#allocation6 + $0x150] sm:$0xff]
    %v302 = vld [vmem:[#allocation6 + $0x158] sm:$0xff]
    %v303 = vld [vmem:[#allocation6 + $0x160] sm:$0xff]
    %v304 = vld [vmem:[#allocation6 + $0x168] sm:$0xff]
    %v305 = vld [vmem:[#allocation6 + $0x170] sm:$0xff]
    %v306 = vld [vmem:[#allocation6 + $0x178] sm:$0xff]
    %v307 = vld [vmem:[#allocation6 + $0x180] sm:$0xff]
    %v308 = vld [vmem:[#allocation6 + $0x188] sm:$0xff]
    %v309 = vld [vmem:[#allocation6 + $0x190] sm:$0xff]
    %v310 = vld [vmem:[#allocation6 + $0x198] sm:$0xff]
    %v311 = vld [vmem:[#allocation6 + $0x1a0] sm:$0xff]
    %v312 = vld [vmem:[#allocation6 + $0x1a8] sm:$0xff]
    %v313 = vld [vmem:[#allocation6 + $0x1b0] sm:$0xff]
    %v314 = vld [vmem:[#allocation6 + $0x1b8] sm:$0xff]
    %v315 = vld [vmem:[#allocation6 + $0x1c0] sm:$0xff]
    %v316 = vld [vmem:[#allocation6 + $0x1c8] sm:$0xff]
    %v317 = vld [vmem:[#allocation6 + $0x1d0] sm:$0xff]
    %v318 = vld [vmem:[#allocation6 + $0x1d8] sm:$0xff]
    %v319 = vld [vmem:[#allocation6 + $0x1e0] sm:$0xff]
    %v320 = vld [vmem:[#allocation6 + $0x1e8] sm:$0xff]
    %v321 = vld [vmem:[#allocation6 + $0x1f0] sm:$0xff]
    %v322 = vld [vmem:[#allocation6 + $0x1f8] sm:$0xff]
    %v323 = vld [vmem:[%s6] sm:$0xf]
    %v324 = vld [vmem:[#allocation8] sm:$0xff]
    %v325 = vld [vmem:[#allocation8 + $0x8] sm:$0xff]
    %v326 = vld [vmem:[#allocation8 + $0x10] sm:$0xff]
    %v327 = vld [vmem:[#allocation8 + $0x18] sm:$0xff]
    %v328 = vld [vmem:[#allocation8 + $0x20] sm:$0xff]
    %v329 = vld [vmem:[#allocation8 + $0x28] sm:$0xff]
    %v330 = vld [vmem:[#allocation8 + $0x30] sm:$0xff]
    %v331 = vld [vmem:[#allocation8 + $0x38] sm:$0xff]
    %v332 = vld [vmem:[#allocation8 + $0x40] sm:$0xff]
    %v333 = vld [vmem:[#allocation8 + $0x48] sm:$0xff]
    %v334 = vld [vmem:[#allocation8 + $0x50] sm:$0xff]
    %v335 = vld [vmem:[#allocation8 + $0x58] sm:$0xff]
    %v336 = vld [vmem:[#allocation8 + $0x60] sm:$0xff]
    %v337 = vld [vmem:[#allocation8 + $0x68] sm:$0xff]
    %v338 = vld [vmem:[#allocation8 + $0x70] sm:$0xff]
    %v339 = vld [vmem:[#allocation8 + $0x78] sm:$0xff]
    %v340 = vld [vmem:[#allocation8 + $0x80] sm:$0xff]
    %v341 = vld [vmem:[#allocation8 + $0x88] sm:$0xff]
    %v342 = vld [vmem:[#allocation8 + $0x90] sm:$0xff]
    %v343 = vld [vmem:[#allocation8 + $0x98] sm:$0xff]
    %v344 = vld [vmem:[#allocation8 + $0xa0] sm:$0xff]
    %v345 = vld [vmem:[#allocation8 + $0xa8] sm:$0xff]
    %v346 = vld [vmem:[#allocation8 + $0xb0] sm:$0xff]
    %v347 = vld [vmem:[#allocation8 + $0xb8] sm:$0xff]
    %v348 = vld [vmem:[#allocation8 + $0xc0] sm:$0xff]
    %v349 = vld [vmem:[#allocation8 + $0xc8] sm:$0xff]
    %v350 = vld [vmem:[#allocation8 + $0xd0] sm:$0xff]
    %v351 = vld [vmem:[#allocation8 + $0xd8] sm:$0xff]
    %v352 = vld [vmem:[#allocation8 + $0xe0] sm:$0xff]
    %v353 = vld [vmem:[#allocation8 + $0xe8] sm:$0xff]
    %v354 = vld [vmem:[#allocation8 + $0xf0] sm:$0xff]
    %v355 = vld [vmem:[#allocation8 + $0xf8] sm:$0xff]
    %v356 = vld [vmem:[#allocation8 + $0x100] sm:$0xff]
    %v357 = vld [vmem:[#allocation8 + $0x108] sm:$0xff]
    %v358 = vld [vmem:[#allocation8 + $0x110] sm:$0xff]
    %v359 = vld [vmem:[#allocation8 + $0x118] sm:$0xff]
    %v360 = vld [vmem:[#allocation8 + $0x120] sm:$0xff]
    %v361 = vld [vmem:[#allocation8 + $0x128] sm:$0xff]
    %v362 = vld [vmem:[#allocation8 + $0x130] sm:$0xff]
    %v363 = vld [vmem:[#allocation8 + $0x138] sm:$0xff]
    %v364 = vld [vmem:[#allocation8 + $0x140] sm:$0xff]
    %v365 = vld [vmem:[#allocation8 + $0x148] sm:$0xff]
    %v366 = vld [vmem:[#allocation8 + $0x150] sm:$0xff]
    %v367 = vld [vmem:[#allocation8 + $0x158] sm:$0xff]
    %v368 = vld [vmem:[#allocation8 + $0x160] sm:$0xff]
    %v369 = vld [vmem:[#allocation8 + $0x168] sm:$0xff]
    %v370 = vld [vmem:[#allocation8 + $0x170] sm:$0xff]
    %v371 = vld [vmem:[#allocation8 + $0x178] sm:$0xff]
    %v372 = vld [vmem:[#allocation8 + $0x180] sm:$0xff]
    %v373 = vld [vmem:[#allocation8 + $0x188] sm:$0xff]
    %v374 = vld [vmem:[#allocation8 + $0x190] sm:$0xff]
    %v375 = vld [vmem:[#allocation8 + $0x198] sm:$0xff]
    %v376 = vld [vmem:[#allocation8 + $0x1a0] sm:$0xff]
    %v377 = vld [vmem:[#allocation8 + $0x1a8] sm:$0xff]
    %v378 = vld [vmem:[#allocation8 + $0x1b0] sm:$0xff]
    %v379 = vld [vmem:[#allocation8 + $0x1b8] sm:$0xff]
    %v380 = vld [vmem:[#allocation8 + $0x1c0] sm:$0xff]
    %v381 = vld [vmem:[#allocation8 + $0x1c8] sm:$0xff]
    %v382 = vld [vmem:[#allocation8 + $0x1d0] sm:$0xff]
    %v383 = vld [vmem:[#allocation8 + $0x1d8] sm:$0xff]
    %v384 = vld [vmem:[#allocation8 + $0x1e0] sm:$0xff]
    %v385 = vld [vmem:[#allocation8 + $0x1e8] sm:$0xff]
    %v386 = vld [vmem:[#allocation8 + $0x1f0] sm:$0xff]
    %v387 = vld [vmem:[#allocation8 + $0x1f8] sm:$0xff]
    %388 = vmatpush.msra.mxu0 %v255
    %389 = vmatpush.msra.mxu0 %v251
    %390 = vmatpush.msra.mxu0 %v247
    %391 = vmatpush.msra.mxu0 %v243
    %392 = vmatpush.msra.mxu0 %v239
    %393 = vmatpush.msra.mxu0 %v235
    %394 = vmatpush.msra.mxu0 %v231
    %395 = vmatpush.msra.mxu0 %v227
    %396 = vmatpush.msra.mxu0 %v223
    %397 = vmatpush.msra.mxu0 %v219
    %398 = vmatpush.msra.mxu0 %v215
    %399 = vmatpush.msra.mxu0 %v211
    %400 = vmatpush.msra.mxu0 %v207
    %401 = vmatpush.msra.mxu0 %v203
    %402 = vmatpush.msra.mxu0 %v199
    %403 = vmatpush.msra.mxu0 %v195
    %404 = vmatmul.f32.gmra.mxu0 0.0
    %v405 = vpop.f32.mrf.mxu0
    %v406 = vadd.f32 0.0, %v405
    %407 = vdwg.mxu0
    %408 = vmatpush.msra.mxu0 %v256
    %409 = vmatpush.msra.mxu0 %v252
    %410 = vmatpush.msra.mxu0 %v248
    %411 = vmatpush.msra.mxu0 %v244
    %412 = vmatpush.msra.mxu0 %v240
    %413 = vmatpush.msra.mxu0 %v236
    %414 = vmatpush.msra.mxu0 %v232
    %415 = vmatpush.msra.mxu0 %v228
    %416 = vmatpush.msra.mxu0 %v224
    %417 = vmatpush.msra.mxu0 %v220
    %418 = vmatpush.msra.mxu0 %v216
    %419 = vmatpush.msra.mxu0 %v212
    %420 = vmatpush.msra.mxu0 %v208
    %421 = vmatpush.msra.mxu0 %v204
    %422 = vmatpush.msra.mxu0 %v200
    %423 = vmatpush.msra.mxu0 %v196
    %424 = vmatmul.f32.gmra.mxu0 0.0
    %v425 = vpop.f32.mrf.mxu0
    %v426 = vadd.f32 0.0, %v425
    %427 = vdwg.mxu0
    %428 = vmatpush.msra.mxu0 %v257
    %429 = vmatpush.msra.mxu0 %v253
    %430 = vmatpush.msra.mxu0 %v249
    %431 = vmatpush.msra.mxu0 %v245
    %432 = vmatpush.msra.mxu0 %v241
    %433 = vmatpush.msra.mxu0 %v237
    %434 = vmatpush.msra.mxu0 %v233
    %435 = vmatpush.msra.mxu0 %v229
    %436 = vmatpush.msra.mxu0 %v225
    %437 = vmatpush.msra.mxu0 %v221
    %438 = vmatpush.msra.mxu0 %v217
    %439 = vmatpush.msra.mxu0 %v213
    %440 = vmatpush.msra.mxu0 %v209
    %441 = vmatpush.msra.mxu0 %v205
    %442 = vmatpush.msra.mxu0 %v201
    %443 = vmatpush.msra.mxu0 %v197
    %444 = vmatmul.f32.gmra.mxu0 0.0
    %v445 = vpop.f32.mrf.mxu0
    %v446 = vadd.f32 0.0, %v445
    %447 = vdwg.mxu0
    %448 = vmatpush.msra.mxu0 %v258
    %449 = vmatpush.msra.mxu0 %v254
    %450 = vmatpush.msra.mxu0 %v250
    %451 = vmatpush.msra.mxu0 %v246
    %452 = vmatpush.msra.mxu0 %v242
    %453 = vmatpush.msra.mxu0 %v238
    %454 = vmatpush.msra.mxu0 %v234
    %455 = vmatpush.msra.mxu0 %v230
    %456 = vmatpush.msra.mxu0 %v226
    %457 = vmatpush.msra.mxu0 %v222
    %458 = vmatpush.msra.mxu0 %v218
    %459 = vmatpush.msra.mxu0 %v214
    %460 = vmatpush.msra.mxu0 %v210
    %461 = vmatpush.msra.mxu0 %v206
    %462 = vmatpush.msra.mxu0 %v202
    %463 = vmatpush.msra.mxu0 %v198
    %464 = vmatmul.f32.gmra.mxu0 0.0
    %v465 = vpop.f32.mrf.mxu0
    %v466 = vadd.f32 0.0, %v465
    %467 = vdwg.mxu0
    %v468 = vadd.f32 %v191, %v406
    %v469 = vadd.f32 %v192, %v426
    %v470 = vadd.f32 %v193, %v446
    %v471 = vadd.f32 %v194, %v466
    %v472 = vxor.u32 %v468, 2147483648
    %v473 = vmul.f32 %v472, 1.442695
    %v474 = vpow.pop %v473
    %v475 = vadd.f32 %v474, 1.0
    %v476 = vrcp.pop %v475
    %v477 = vmul.f32 %v475, %v476
    %v478 = vsub.f32 1.0, %v477
    %v479 = vmul.f32 %v476, %v478
    %v480 = vadd.f32 %v476, %v479
    %vm481 = vweird.f32 %v475
    %vm482 = vweird.f32 %v476
    %vm483 = vmor %vm481, %vm482
    %v484 = vsel %vm483, %v476, %v480
    %v485 = vand.u32 2147483647, %v475
    %vm486 = vcmp.eq.f32.partialorder %v485, 8.507059e+37
    %v487 = vand.u32 %v475, 2147483648
    %v488 = vor.u32 1.1754944e-38, %v487
    %v489 = vsel %vm486, %v488, %v484
    %v490 = vmul.f32 1.0, %v489
    %v491 = vxor.u32 %v469, 2147483648
    %v492 = vmul.f32 %v491, 1.442695
    %v493 = vpow.pop %v492
    %v494 = vadd.f32 %v493, 1.0
    %v495 = vrcp.pop %v494
    %v496 = vmul.f32 %v494, %v495
    %v497 = vsub.f32 1.0, %v496
    %v498 = vmul.f32 %v495, %v497
    %v499 = vadd.f32 %v495, %v498
    %vm500 = vweird.f32 %v494
    %vm501 = vweird.f32 %v495
    %vm502 = vmor %vm500, %vm501
    %v503 = vsel %vm502, %v495, %v499
    %v504 = vand.u32 2147483647, %v494
    %vm505 = vcmp.eq.f32.partialorder %v504, 8.507059e+37
    %v506 = vand.u32 %v494, 2147483648
    %v507 = vor.u32 1.1754944e-38, %v506
    %v508 = vsel %vm505, %v507, %v503
    %v509 = vmul.f32 1.0, %v508
    %v510 = vtanh.pop %v470
    %v511 = vxor.u32 %v471, 2147483648
    %v512 = vmul.f32 %v511, 1.442695
    %v513 = vpow.pop %v512
    %v514 = vadd.f32 %v513, 1.0
    %v515 = vrcp.pop %v514
    %v516 = vmul.f32 %v514, %v515
    %v517 = vsub.f32 1.0, %v516
    %v518 = vmul.f32 %v515, %v517
    %v519 = vadd.f32 %v515, %v518
    %vm520 = vweird.f32 %v514
    %vm521 = vweird.f32 %v515
    %vm522 = vmor %vm520, %vm521
    %v523 = vsel %vm522, %v515, %v519
    %v524 = vand.u32 2147483647, %v514
    %vm525 = vcmp.eq.f32.partialorder %v524, 8.507059e+37
    %v526 = vand.u32 %v514, 2147483648
    %v527 = vor.u32 1.1754944e-38, %v526
    %v528 = vsel %vm525, %v527, %v523
    %v529 = vmul.f32 1.0, %v528
    %v530 = vmul.f32 %v509, 0.0
    %v531 = vmul.f32 %v490, %v510
    %v532 = vadd.f32 %v530, %v531
    %v533 = vtanh.pop %v532
    %v534 = vmul.f32 %v529, %v533
    %535 = vmatpush.msra.mxu0 %v255
    %536 = vmatpush.msra.mxu0 %v251
    %537 = vmatpush.msra.mxu0 %v247
    %538 = vmatpush.msra.mxu0 %v243
    %539 = vmatpush.msra.mxu0 %v239
    %540 = vmatpush.msra.mxu0 %v235
    %541 = vmatpush.msra.mxu0 %v231
    %542 = vmatpush.msra.mxu0 %v227
    %543 = vmatpush.msra.mxu0 %v223
    %544 = vmatpush.msra.mxu0 %v219
    %545 = vmatpush.msra.mxu0 %v215
    %546 = vmatpush.msra.mxu0 %v211
    %547 = vmatpush.msra.mxu0 %v207
    %548 = vmatpush.msra.mxu0 %v203
    %549 = vmatpush.msra.mxu0 %v199
    %550 = vmatpush.msra.mxu0 %v195
    %551 = vmatmul.f32.gmra.mxu0 %v534
    %v552 = vpop.f32.mrf.mxu0
    %v553 = vadd.f32 0.0, %v552
    %554 = vdwg.mxu0
    %555 = vmatpush.msra.mxu0 %v256
    %556 = vmatpush.msra.mxu0 %v252
    %557 = vmatpush.msra.mxu0 %v248
    %558 = vmatpush.msra.mxu0 %v244
    %559 = vmatpush.msra.mxu0 %v240
    %560 = vmatpush.msra.mxu0 %v236
    %561 = vmatpush.msra.mxu0 %v232
    %562 = vmatpush.msra.mxu0 %v228
    %563 = vmatpush.msra.mxu0 %v224
    %564 = vmatpush.msra.mxu0 %v220
    %565 = vmatpush.msra.mxu0 %v216
    %566 = vmatpush.msra.mxu0 %v212
    %567 = vmatpush.msra.mxu0 %v208
    %568 = vmatpush.msra.mxu0 %v204
    %569 = vmatpush.msra.mxu0 %v200
    %570 = vmatpush.msra.mxu0 %v196
    %571 = vmatmul.f32.gmra.mxu0 %v534
    %v572 = vpop.f32.mrf.mxu0
    %v573 = vadd.f32 0.0, %v572
    %574 = vdwg.mxu0
    %575 = vmatpush.msra.mxu0 %v257
    %576 = vmatpush.msra.mxu0 %v253
    %577 = vmatpush.msra.mxu0 %v249
    %578 = vmatpush.msra.mxu0 %v245
    %579 = vmatpush.msra.mxu0 %v241
    %580 = vmatpush.msra.mxu0 %v237
    %581 = vmatpush.msra.mxu0 %v233
    %582 = vmatpush.msra.mxu0 %v229
    %583 = vmatpush.msra.mxu0 %v225
    %584 = vmatpush.msra.mxu0 %v221
    %585 = vmatpush.msra.mxu0 %v217
    %586 = vmatpush.msra.mxu0 %v213
    %587 = vmatpush.msra.mxu0 %v209
    %588 = vmatpush.msra.mxu0 %v205
    %589 = vmatpush.msra.mxu0 %v201
    %590 = vmatpush.msra.mxu0 %v197
    %591 = vmatmul.f32.gmra.mxu0 %v534
    %v592 = vpop.f32.mrf.mxu0
    %v593 = vadd.f32 0.0, %v592
    %594 = vdwg.mxu0
    %595 = vmatpush.msra.mxu0 %v258
    %596 = vmatpush.msra.mxu0 %v254
    %597 = vmatpush.msra.mxu0 %v250
    %598 = vmatpush.msra.mxu0 %v246
    %599 = vmatpush.msra.mxu0 %v242
    %600 = vmatpush.msra.mxu0 %v238
    %601 = vmatpush.msra.mxu0 %v234
    %602 = vmatpush.msra.mxu0 %v230
    %603 = vmatpush.msra.mxu0 %v226
    %604 = vmatpush.msra.mxu0 %v222
    %605 = vmatpush.msra.mxu0 %v218
    %606 = vmatpush.msra.mxu0 %v214
    %607 = vmatpush.msra.mxu0 %v210
    %608 = vmatpush.msra.mxu0 %v206
    %609 = vmatpush.msra.mxu0 %v202
    %610 = vmatpush.msra.mxu0 %v198
    %611 = vmatmul.f32.gmra.mxu0 %v534
    %v612 = vpop.f32.mrf.mxu0
    %v613 = vadd.f32 0.0, %v612
    %614 = vdwg.mxu0
    %v619 = vrot.slane %v553, 7
    %v620 = vrot.slane %v573, 7
    %v621 = vrot.slane %v593, 7
    %v622 = vrot.slane %v613, 7
    %v627 = vadd.f32 %v191, %v619
    %v628 = vadd.f32 %v192, %v620
    %v629 = vadd.f32 %v193, %v621
    %v630 = vadd.f32 %v194, %v622
    %v631 = vxor.u32 %v627, 2147483648
    %v632 = vmul.f32 %v631, 1.442695
    %v633 = vpow.pop %v632
    %v634 = vadd.f32 %v633, 1.0
    %v635 = vrcp.pop %v634
    %v636 = vmul.f32 %v634, %v635
    %v637 = vsub.f32 1.0, %v636
    %v638 = vmul.f32 %v635, %v637
    %v639 = vadd.f32 %v635, %v638
    %vm640 = vweird.f32 %v634
    %vm641 = vweird.f32 %v635
    %vm642 = vmor %vm640, %vm641
    %v643 = vsel %vm642, %v635, %v639
    %v644 = vand.u32 2147483647, %v634
    %vm645 = vcmp.eq.f32.partialorder %v644, 8.507059e+37
    %v646 = vand.u32 %v634, 2147483648
    %v647 = vor.u32 1.1754944e-38, %v646
    %v648 = vsel %vm645, %v647, %v643
    %v649 = vmul.f32 1.0, %v648
    %v650 = vxor.u32 %v628, 2147483648
    %v651 = vmul.f32 %v650, 1.442695
    %v652 = vpow.pop %v651
    %v653 = vadd.f32 %v652, 1.0
    %v654 = vrcp.pop %v653
    %v655 = vmul.f32 %v653, %v654
    %v656 = vsub.f32 1.0, %v655
    %v657 = vmul.f32 %v654, %v656
    %v658 = vadd.f32 %v654, %v657
    %vm659 = vweird.f32 %v653
    %vm660 = vweird.f32 %v654
    %vm661 = vmor %vm659, %vm660
    %v662 = vsel %vm661, %v654, %v658
    %v663 = vand.u32 2147483647, %v653
    %vm664 = vcmp.eq.f32.partialorder %v663, 8.507059e+37
    %v665 = vand.u32 %v653, 2147483648
    %v666 = vor.u32 1.1754944e-38, %v665
    %v667 = vsel %vm664, %v666, %v662
    %v668 = vmul.f32 1.0, %v667
    %v669 = vtanh.pop %v629
    %v670 = vxor.u32 %v630, 2147483648
    %v671 = vmul.f32 %v670, 1.442695
    %v672 = vpow.pop %v671
    %v673 = vadd.f32 %v672, 1.0
    %v674 = vrcp.pop %v673
    %v675 = vmul.f32 %v673, %v674
    %v676 = vsub.f32 1.0, %v675
    %v677 = vmul.f32 %v674, %v676
    %v678 = vadd.f32 %v674, %v677
    %vm679 = vweird.f32 %v673
    %vm680 = vweird.f32 %v674
    %vm681 = vmor %vm679, %vm680
    %v682 = vsel %vm681, %v674, %v678
    %v683 = vand.u32 2147483647, %v673
    %vm684 = vcmp.eq.f32.partialorder %v683, 8.507059e+37
    %v685 = vand.u32 %v673, 2147483648
    %v686 = vor.u32 1.1754944e-38, %v685
    %v687 = vsel %vm684, %v686, %v682
    %v688 = vmul.f32 1.0, %v687
    %v690 = vrot.slane %v532, 7
    %v692 = vmul.f32 %v668, %v690
    %v693 = vmul.f32 %v649, %v669
    %v694 = vadd.f32 %v692, %v693
    %v695 = vtanh.pop %v694
    %v696 = vmul.f32 %v688, %v695
    %v698 = vperm.slane %v323, 0
    %v699 = vperm.slane %v323, 1
    %v700 = vperm.slane %v323, 2
    %v701 = vperm.slane %v323, 3
    %706 = vmatpush.msra.mxu0 %v319
    %707 = vmatpush.msra.mxu0 %v315
    %708 = vmatpush.msra.mxu0 %v311
    %709 = vmatpush.msra.mxu0 %v307
    %710 = vmatpush.msra.mxu0 %v303
    %711 = vmatpush.msra.mxu0 %v299
    %712 = vmatpush.msra.mxu0 %v295
    %713 = vmatpush.msra.mxu0 %v291
    %714 = vmatpush.msra.mxu0 %v287
    %715 = vmatpush.msra.mxu0 %v283
    %716 = vmatpush.msra.mxu0 %v279
    %717 = vmatpush.msra.mxu0 %v275
    %718 = vmatpush.msra.mxu0 %v271
    %719 = vmatpush.msra.mxu0 %v267
    %720 = vmatpush.msra.mxu0 %v263
    %721 = vmatpush.msra.mxu0 %v259
    %722 = vmatmul.f32.gmra.mxu0 %v534
    %v723 = vpop.f32.mrf.mxu0
    %v724 = vadd.f32 %v698, %v723
    %725 = vdwg.mxu0
    %726 = vmatpush.msra.mxu0 %v320
    %727 = vmatpush.msra.mxu0 %v316
    %728 = vmatpush.msra.mxu0 %v312
    %729 = vmatpush.msra.mxu0 %v308
    %730 = vmatpush.msra.mxu0 %v304
    %731 = vmatpush.msra.mxu0 %v300
    %732 = vmatpush.msra.mxu0 %v296
    %733 = vmatpush.msra.mxu0 %v292
    %734 = vmatpush.msra.mxu0 %v288
    %735 = vmatpush.msra.mxu0 %v284
    %736 = vmatpush.msra.mxu0 %v280
    %737 = vmatpush.msra.mxu0 %v276
    %738 = vmatpush.msra.mxu0 %v272
    %739 = vmatpush.msra.mxu0 %v268
    %740 = vmatpush.msra.mxu0 %v264
    %741 = vmatpush.msra.mxu0 %v260
    %742 = vmatmul.f32.gmra.mxu0 %v534
    %v743 = vpop.f32.mrf.mxu0
    %v744 = vadd.f32 %v699, %v743
    %745 = vdwg.mxu0
    %746 = vmatpush.msra.mxu0 %v321
    %747 = vmatpush.msra.mxu0 %v317
    %748 = vmatpush.msra.mxu0 %v313
    %749 = vmatpush.msra.mxu0 %v309
    %750 = vmatpush.msra.mxu0 %v305
    %751 = vmatpush.msra.mxu0 %v301
    %752 = vmatpush.msra.mxu0 %v297
    %753 = vmatpush.msra.mxu0 %v293
    %754 = vmatpush.msra.mxu0 %v289
    %755 = vmatpush.msra.mxu0 %v285
    %756 = vmatpush.msra.mxu0 %v281
    %757 = vmatpush.msra.mxu0 %v277
    %758 = vmatpush.msra.mxu0 %v273
    %759 = vmatpush.msra.mxu0 %v269
    %760 = vmatpush.msra.mxu0 %v265
    %761 = vmatpush.msra.mxu0 %v261
    %762 = vmatmul.f32.gmra.mxu0 %v534
    %v763 = vpop.f32.mrf.mxu0
    %v764 = vadd.f32 %v700, %v763
    %765 = vdwg.mxu0
    %766 = vmatpush.msra.mxu0 %v322
    %767 = vmatpush.msra.mxu0 %v318
    %768 = vmatpush.msra.mxu0 %v314
    %769 = vmatpush.msra.mxu0 %v310
    %770 = vmatpush.msra.mxu0 %v306
    %771 = vmatpush.msra.mxu0 %v302
    %772 = vmatpush.msra.mxu0 %v298
    %773 = vmatpush.msra.mxu0 %v294
    %774 = vmatpush.msra.mxu0 %v290
    %775 = vmatpush.msra.mxu0 %v286
    %776 = vmatpush.msra.mxu0 %v282
    %777 = vmatpush.msra.mxu0 %v278
    %778 = vmatpush.msra.mxu0 %v274
    %779 = vmatpush.msra.mxu0 %v270
    %780 = vmatpush.msra.mxu0 %v266
    %781 = vmatpush.msra.mxu0 %v262
    %782 = vmatmul.f32.gmra.mxu0 %v534
    %v783 = vpop.f32.mrf.mxu0
    %v784 = vadd.f32 %v701, %v783
    %785 = vdwg.mxu0
    %786 = vmatpush.msra.mxu0 %v384
    %787 = vmatpush.msra.mxu0 %v380
    %788 = vmatpush.msra.mxu0 %v376
    %789 = vmatpush.msra.mxu0 %v372
    %790 = vmatpush.msra.mxu0 %v368
    %791 = vmatpush.msra.mxu0 %v364
    %792 = vmatpush.msra.mxu0 %v360
    %793 = vmatpush.msra.mxu0 %v356
    %794 = vmatpush.msra.mxu0 %v352
    %795 = vmatpush.msra.mxu0 %v348
    %796 = vmatpush.msra.mxu0 %v344
    %797 = vmatpush.msra.mxu0 %v340
    %798 = vmatpush.msra.mxu0 %v336
    %799 = vmatpush.msra.mxu0 %v332
    %800 = vmatpush.msra.mxu0 %v328
    %801 = vmatpush.msra.mxu0 %v324
    %802 = vmatmul.f32.gmra.mxu0 0.0
    %v803 = vpop.f32.mrf.mxu0
    %v804 = vadd.f32 0.0, %v803
    %805 = vdwg.mxu0
    %806 = vmatpush.msra.mxu0 %v385
    %807 = vmatpush.msra.mxu0 %v381
    %808 = vmatpush.msra.mxu0 %v377
    %809 = vmatpush.msra.mxu0 %v373
    %810 = vmatpush.msra.mxu0 %v369
    %811 = vmatpush.msra.mxu0 %v365
    %812 = vmatpush.msra.mxu0 %v361
    %813 = vmatpush.msra.mxu0 %v357
    %814 = vmatpush.msra.mxu0 %v353
    %815 = vmatpush.msra.mxu0 %v349
    %816 = vmatpush.msra.mxu0 %v345
    %817 = vmatpush.msra.mxu0 %v341
    %818 = vmatpush.msra.mxu0 %v337
    %819 = vmatpush.msra.mxu0 %v333
    %820 = vmatpush.msra.mxu0 %v329
    %821 = vmatpush.msra.mxu0 %v325
    %822 = vmatmul.f32.gmra.mxu0 0.0
    %v823 = vpop.f32.mrf.mxu0
    %v824 = vadd.f32 0.0, %v823
    %825 = vdwg.mxu0
    %826 = vmatpush.msra.mxu0 %v386
    %827 = vmatpush.msra.mxu0 %v382
    %828 = vmatpush.msra.mxu0 %v378
    %829 = vmatpush.msra.mxu0 %v374
    %830 = vmatpush.msra.mxu0 %v370
    %831 = vmatpush.msra.mxu0 %v366
    %832 = vmatpush.msra.mxu0 %v362
    %833 = vmatpush.msra.mxu0 %v358
    %834 = vmatpush.msra.mxu0 %v354
    %835 = vmatpush.msra.mxu0 %v350
    %836 = vmatpush.msra.mxu0 %v346
    %837 = vmatpush.msra.mxu0 %v342
    %838 = vmatpush.msra.mxu0 %v338
    %839 = vmatpush.msra.mxu0 %v334
    %840 = vmatpush.msra.mxu0 %v330
    %841 = vmatpush.msra.mxu0 %v326
    %842 = vmatmul.f32.gmra.mxu0 0.0
    %v843 = vpop.f32.mrf.mxu0
    %v844 = vadd.f32 0.0, %v843
    %845 = vdwg.mxu0
    %846 = vmatpush.msra.mxu0 %v387
    %847 = vmatpush.msra.mxu0 %v383
    %848 = vmatpush.msra.mxu0 %v379
    %849 = vmatpush.msra.mxu0 %v375
    %850 = vmatpush.msra.mxu0 %v371
    %851 = vmatpush.msra.mxu0 %v367
    %852 = vmatpush.msra.mxu0 %v363
    %853 = vmatpush.msra.mxu0 %v359
    %854 = vmatpush.msra.mxu0 %v355
    %855 = vmatpush.msra.mxu0 %v351
    %856 = vmatpush.msra.mxu0 %v347
    %857 = vmatpush.msra.mxu0 %v343
    %858 = vmatpush.msra.mxu0 %v339
    %859 = vmatpush.msra.mxu0 %v335
    %860 = vmatpush.msra.mxu0 %v331
    %861 = vmatpush.msra.mxu0 %v327
    %862 = vmatmul.f32.gmra.mxu0 0.0
    %v863 = vpop.f32.mrf.mxu0
    %v864 = vadd.f32 0.0, %v863
    %865 = vdwg.mxu0
    %v866 = vadd.f32 %v724, %v804
    %v867 = vadd.f32 %v744, %v824
    %v868 = vadd.f32 %v764, %v844
    %v869 = vadd.f32 %v784, %v864
    %v870 = vxor.u32 %v866, 2147483648
    %v871 = vmul.f32 %v870, 1.442695
    %v872 = vpow.pop %v871
    %v873 = vadd.f32 %v872, 1.0
    %v874 = vrcp.pop %v873
    %v875 = vmul.f32 %v873, %v874
    %v876 = vsub.f32 1.0, %v875
    %v877 = vmul.f32 %v874, %v876
    %v878 = vadd.f32 %v874, %v877
    %vm879 = vweird.f32 %v873
    %vm880 = vweird.f32 %v874
    %vm881 = vmor %vm879, %vm880
    %v882 = vsel %vm881, %v874, %v878
    %v883 = vand.u32 2147483647, %v873
    %vm884 = vcmp.eq.f32.partialorder %v883, 8.507059e+37
    %v885 = vand.u32 %v873, 2147483648
    %v886 = vor.u32 1.1754944e-38, %v885
    %v887 = vsel %vm884, %v886, %v882
    %v888 = vmul.f32 1.0, %v887
    %v889 = vxor.u32 %v867, 2147483648
    %v890 = vmul.f32 %v889, 1.442695
    %v891 = vpow.pop %v890
    %v892 = vadd.f32 %v891, 1.0
    %v893 = vrcp.pop %v892
    %v894 = vmul.f32 %v892, %v893
    %v895 = vsub.f32 1.0, %v894
    %v896 = vmul.f32 %v893, %v895
    %v897 = vadd.f32 %v893, %v896
    %vm898 = vweird.f32 %v892
    %vm899 = vweird.f32 %v893
    %vm900 = vmor %vm898, %vm899
    %v901 = vsel %vm900, %v893, %v897
    %v902 = vand.u32 2147483647, %v892
    %vm903 = vcmp.eq.f32.partialorder %v902, 8.507059e+37
    %v904 = vand.u32 %v892, 2147483648
    %v905 = vor.u32 1.1754944e-38, %v904
    %v906 = vsel %vm903, %v905, %v901
    %v907 = vmul.f32 1.0, %v906
    %v908 = vtanh.pop %v868
    %v909 = vxor.u32 %v869, 2147483648
    %v910 = vmul.f32 %v909, 1.442695
    %v911 = vpow.pop %v910
    %v912 = vadd.f32 %v911, 1.0
    %v913 = vrcp.pop %v912
    %v914 = vmul.f32 %v912, %v913
    %v915 = vsub.f32 1.0, %v914
    %v916 = vmul.f32 %v913, %v915
    %v917 = vadd.f32 %v913, %v916
    %vm918 = vweird.f32 %v912
    %vm919 = vweird.f32 %v913
    %vm920 = vmor %vm918, %vm919
    %v921 = vsel %vm920, %v913, %v917
    %v922 = vand.u32 2147483647, %v912
    %vm923 = vcmp.eq.f32.partialorder %v922, 8.507059e+37
    %v924 = vand.u32 %v912, 2147483648
    %v925 = vor.u32 1.1754944e-38, %v924
    %v926 = vsel %vm923, %v925, %v921
    %v927 = vmul.f32 1.0, %v926
    %v928 = vmul.f32 %v907, 0.0
    %v929 = vmul.f32 %v888, %v908
    %v930 = vadd.f32 %v928, %v929
    %v931 = vtanh.pop %v930
    %v932 = vmul.f32 %v927, %v931
    %v934 = vrot.slane %v696, 1
    %936 = vmatpush.msra.mxu0 %v255
    %937 = vmatpush.msra.mxu0 %v251
    %938 = vmatpush.msra.mxu0 %v247
    %939 = vmatpush.msra.mxu0 %v243
    %940 = vmatpush.msra.mxu0 %v239
    %941 = vmatpush.msra.mxu0 %v235
    %942 = vmatpush.msra.mxu0 %v231
    %943 = vmatpush.msra.mxu0 %v227
    %944 = vmatpush.msra.mxu0 %v223
    %945 = vmatpush.msra.mxu0 %v219
    %946 = vmatpush.msra.mxu0 %v215
    %947 = vmatpush.msra.mxu0 %v211
    %948 = vmatpush.msra.mxu0 %v207
    %949 = vmatpush.msra.mxu0 %v203
    %950 = vmatpush.msra.mxu0 %v199
    %951 = vmatpush.msra.mxu0 %v195
    %952 = vmatmul.f32.gmra.mxu0 %v934
    %v953 = vpop.f32.mrf.mxu0
    %v954 = vadd.f32 0.0, %v953
    %955 = vdwg.mxu0
    %956 = vmatpush.msra.mxu0 %v256
    %957 = vmatpush.msra.mxu0 %v252
    %958 = vmatpush.msra.mxu0 %v248
    %959 = vmatpush.msra.mxu0 %v244
    %960 = vmatpush.msra.mxu0 %v240
    %961 = vmatpush.msra.mxu0 %v236
    %962 = vmatpush.msra.mxu0 %v232
    %963 = vmatpush.msra.mxu0 %v228
    %964 = vmatpush.msra.mxu0 %v224
    %965 = vmatpush.msra.mxu0 %v220
    %966 = vmatpush.msra.mxu0 %v216
    %967 = vmatpush.msra.mxu0 %v212
    %968 = vmatpush.msra.mxu0 %v208
    %969 = vmatpush.msra.mxu0 %v204
    %970 = vmatpush.msra.mxu0 %v200
    %971 = vmatpush.msra.mxu0 %v196
    %972 = vmatmul.f32.gmra.mxu0 %v934
    %v973 = vpop.f32.mrf.mxu0
    %v974 = vadd.f32 0.0, %v973
    %975 = vdwg.mxu0
    %976 = vmatpush.msra.mxu0 %v257
    %977 = vmatpush.msra.mxu0 %v253
    %978 = vmatpush.msra.mxu0 %v249
    %979 = vmatpush.msra.mxu0 %v245
    %980 = vmatpush.msra.mxu0 %v241
    %981 = vmatpush.msra.mxu0 %v237
    %982 = vmatpush.msra.mxu0 %v233
    %983 = vmatpush.msra.mxu0 %v229
    %984 = vmatpush.msra.mxu0 %v225
    %985 = vmatpush.msra.mxu0 %v221
    %986 = vmatpush.msra.mxu0 %v217
    %987 = vmatpush.msra.mxu0 %v213
    %988 = vmatpush.msra.mxu0 %v209
    %989 = vmatpush.msra.mxu0 %v205
    %990 = vmatpush.msra.mxu0 %v201
    %991 = vmatpush.msra.mxu0 %v197
    %992 = vmatmul.f32.gmra.mxu0 %v934
    %v993 = vpop.f32.mrf.mxu0
    %v994 = vadd.f32 0.0, %v993
    %995 = vdwg.mxu0
    %996 = vmatpush.msra.mxu0 %v258
    %997 = vmatpush.msra.mxu0 %v254
    %998 = vmatpush.msra.mxu0 %v250
    %999 = vmatpush.msra.mxu0 %v246
    %1000 = vmatpush.msra.mxu0 %v242
    %1001 = vmatpush.msra.mxu0 %v238
    %1002 = vmatpush.msra.mxu0 %v234
    %1003 = vmatpush.msra.mxu0 %v230
    %1004 = vmatpush.msra.mxu0 %v226
    %1005 = vmatpush.msra.mxu0 %v222
    %1006 = vmatpush.msra.mxu0 %v218
    %1007 = vmatpush.msra.mxu0 %v214
    %1008 = vmatpush.msra.mxu0 %v210
    %1009 = vmatpush.msra.mxu0 %v206
    %1010 = vmatpush.msra.mxu0 %v202
    %1011 = vmatpush.msra.mxu0 %v198
    %1012 = vmatmul.f32.gmra.mxu0 %v934
    %v1013 = vpop.f32.mrf.mxu0
    %v1014 = vadd.f32 0.0, %v1013
    %1015 = vdwg.mxu0
    %v1020 = vrot.slane %v954, 6
    %v1021 = vrot.slane %v974, 6
    %v1022 = vrot.slane %v994, 6
    %v1023 = vrot.slane %v1014, 6
    %v1028 = vadd.f32 %v191, %v1020
    %v1029 = vadd.f32 %v192, %v1021
    %v1030 = vadd.f32 %v193, %v1022
    %v1031 = vadd.f32 %v194, %v1023
    %v1032 = vxor.u32 %v1028, 2147483648
    %v1033 = vmul.f32 %v1032, 1.442695
    %v1034 = vpow.pop %v1033
    %v1035 = vadd.f32 %v1034, 1.0
    %v1036 = vrcp.pop %v1035
    %v1037 = vmul.f32 %v1035, %v1036
    %v1038 = vsub.f32 1.0, %v1037
    %v1039 = vmul.f32 %v1036, %v1038
    %v1040 = vadd.f32 %v1036, %v1039
    %vm1041 = vweird.f32 %v1035
    %vm1042 = vweird.f32 %v1036
    %vm1043 = vmor %vm1041, %vm1042
    %v1044 = vsel %vm1043, %v1036, %v1040
    %v1045 = vand.u32 2147483647, %v1035
    %vm1046 = vcmp.eq.f32.partialorder %v1045, 8.507059e+37
    %v1047 = vand.u32 %v1035, 2147483648
    %v1048 = vor.u32 1.1754944e-38, %v1047
    %v1049 = vsel %vm1046, %v1048, %v1044
    %v1050 = vmul.f32 1.0, %v1049
    %v1051 = vxor.u32 %v1029, 2147483648
    %v1052 = vmul.f32 %v1051, 1.442695
    %v1053 = vpow.pop %v1052
    %v1054 = vadd.f32 %v1053, 1.0
    %v1055 = vrcp.pop %v1054
    %v1056 = vmul.f32 %v1054, %v1055
    %v1057 = vsub.f32 1.0, %v1056
    %v1058 = vmul.f32 %v1055, %v1057
    %v1059 = vadd.f32 %v1055, %v1058
    %vm1060 = vweird.f32 %v1054
    %vm1061 = vweird.f32 %v1055
    %vm1062 = vmor %vm1060, %vm1061
    %v1063 = vsel %vm1062, %v1055, %v1059
    %v1064 = vand.u32 2147483647, %v1054
    %vm1065 = vcmp.eq.f32.partialorder %v1064, 8.507059e+37
    %v1066 = vand.u32 %v1054, 2147483648
    %v1067 = vor.u32 1.1754944e-38, %v1066
    %v1068 = vsel %vm1065, %v1067, %v1063
    %v1069 = vmul.f32 1.0, %v1068
    %v1070 = vtanh.pop %v1030
    %v1071 = vxor.u32 %v1031, 2147483648
    %v1072 = vmul.f32 %v1071, 1.442695
    %v1073 = vpow.pop %v1072
    %v1074 = vadd.f32 %v1073, 1.0
    %v1075 = vrcp.pop %v1074
    %v1076 = vmul.f32 %v1074, %v1075
    %v1077 = vsub.f32 1.0, %v1076
    %v1078 = vmul.f32 %v1075, %v1077
    %v1079 = vadd.f32 %v1075, %v1078
    %vm1080 = vweird.f32 %v1074
    %vm1081 = vweird.f32 %v1075
    %vm1082 = vmor %vm1080, %vm1081
    %v1083 = vsel %vm1082, %v1075, %v1079
    %v1084 = vand.u32 2147483647, %v1074
    %vm1085 = vcmp.eq.f32.partialorder %v1084, 8.507059e+37
    %v1086 = vand.u32 %v1074, 2147483648
    %v1087 = vor.u32 1.1754944e-38, %v1086
    %v1088 = vsel %vm1085, %v1087, %v1083
    %v1089 = vmul.f32 1.0, %v1088
    %v1091 = vrot.slane %v694, 7
    %v1093 = vmul.f32 %v1069, %v1091
    %v1094 = vmul.f32 %v1050, %v1070
    %v1095 = vadd.f32 %v1093, %v1094
    %v1096 = vtanh.pop %v1095
    %v1097 = vmul.f32 %v1089, %v1096
    %1098 = vmatpush.msra.mxu0 %v319
    %1099 = vmatpush.msra.mxu0 %v315
    %1100 = vmatpush.msra.mxu0 %v311
    %1101 = vmatpush.msra.mxu0 %v307
    %1102 = vmatpush.msra.mxu0 %v303
    %1103 = vmatpush.msra.mxu0 %v299
    %1104 = vmatpush.msra.mxu0 %v295
    %1105 = vmatpush.msra.mxu0 %v291
    %1106 = vmatpush.msra.mxu0 %v287
    %1107 = vmatpush.msra.mxu0 %v283
    %1108 = vmatpush.msra.mxu0 %v279
    %1109 = vmatpush.msra.mxu0 %v275
    %1110 = vmatpush.msra.mxu0 %v271
    %1111 = vmatpush.msra.mxu0 %v267
    %1112 = vmatpush.msra.mxu0 %v263
    %1113 = vmatpush.msra.mxu0 %v259
    %1114 = vmatmul.f32.gmra.mxu0 %v934
    %v1115 = vpop.f32.mrf.mxu0
    %v1116 = vadd.f32 %v698, %v1115
    %1117 = vdwg.mxu0
    %1118 = vmatpush.msra.mxu0 %v320
    %1119 = vmatpush.msra.mxu0 %v316
    %1120 = vmatpush.msra.mxu0 %v312
    %1121 = vmatpush.msra.mxu0 %v308
    %1122 = vmatpush.msra.mxu0 %v304
    %1123 = vmatpush.msra.mxu0 %v300
    %1124 = vmatpush.msra.mxu0 %v296
    %1125 = vmatpush.msra.mxu0 %v292
    %1126 = vmatpush.msra.mxu0 %v288
    %1127 = vmatpush.msra.mxu0 %v284
    %1128 = vmatpush.msra.mxu0 %v280
    %1129 = vmatpush.msra.mxu0 %v276
    %1130 = vmatpush.msra.mxu0 %v272
    %1131 = vmatpush.msra.mxu0 %v268
    %1132 = vmatpush.msra.mxu0 %v264
    %1133 = vmatpush.msra.mxu0 %v260
    %1134 = vmatmul.f32.gmra.mxu0 %v934
    %v1135 = vpop.f32.mrf.mxu0
    %v1136 = vadd.f32 %v699, %v1135
    %1137 = vdwg.mxu0
    %1138 = vmatpush.msra.mxu0 %v321
    %1139 = vmatpush.msra.mxu0 %v317
    %1140 = vmatpush.msra.mxu0 %v313
    %1141 = vmatpush.msra.mxu0 %v309
    %1142 = vmatpush.msra.mxu0 %v305
    %1143 = vmatpush.msra.mxu0 %v301
    %1144 = vmatpush.msra.mxu0 %v297
    %1145 = vmatpush.msra.mxu0 %v293
    %1146 = vmatpush.msra.mxu0 %v289
    %1147 = vmatpush.msra.mxu0 %v285
    %1148 = vmatpush.msra.mxu0 %v281
    %1149 = vmatpush.msra.mxu0 %v277
    %1150 = vmatpush.msra.mxu0 %v273
    %1151 = vmatpush.msra.mxu0 %v269
    %1152 = vmatpush.msra.mxu0 %v265
    %1153 = vmatpush.msra.mxu0 %v261
    %1154 = vmatmul.f32.gmra.mxu0 %v934
    %v1155 = vpop.f32.mrf.mxu0
    %v1156 = vadd.f32 %v700, %v1155
    %1157 = vdwg.mxu0
    %1158 = vmatpush.msra.mxu0 %v322
    %1159 = vmatpush.msra.mxu0 %v318
    %1160 = vmatpush.msra.mxu0 %v314
    %1161 = vmatpush.msra.mxu0 %v310
    %1162 = vmatpush.msra.mxu0 %v306
    %1163 = vmatpush.msra.mxu0 %v302
    %1164 = vmatpush.msra.mxu0 %v298
    %1165 = vmatpush.msra.mxu0 %v294
    %1166 = vmatpush.msra.mxu0 %v290
    %1167 = vmatpush.msra.mxu0 %v286
    %1168 = vmatpush.msra.mxu0 %v282
    %1169 = vmatpush.msra.mxu0 %v278
    %1170 = vmatpush.msra.mxu0 %v274
    %1171 = vmatpush.msra.mxu0 %v270
    %1172 = vmatpush.msra.mxu0 %v266
    %1173 = vmatpush.msra.mxu0 %v262
    %1174 = vmatmul.f32.gmra.mxu0 %v934
    %v1175 = vpop.f32.mrf.mxu0
    %v1176 = vadd.f32 %v701, %v1175
    %1177 = vdwg.mxu0
    %1178 = vmatpush.msra.mxu0 %v384
    %1179 = vmatpush.msra.mxu0 %v380
    %1180 = vmatpush.msra.mxu0 %v376
    %1181 = vmatpush.msra.mxu0 %v372
    %1182 = vmatpush.msra.mxu0 %v368
    %1183 = vmatpush.msra.mxu0 %v364
    %1184 = vmatpush.msra.mxu0 %v360
    %1185 = vmatpush.msra.mxu0 %v356
    %1186 = vmatpush.msra.mxu0 %v352
    %1187 = vmatpush.msra.mxu0 %v348
    %1188 = vmatpush.msra.mxu0 %v344
    %1189 = vmatpush.msra.mxu0 %v340
    %1190 = vmatpush.msra.mxu0 %v336
    %1191 = vmatpush.msra.mxu0 %v332
    %1192 = vmatpush.msra.mxu0 %v328
    %1193 = vmatpush.msra.mxu0 %v324
    %1194 = vmatmul.f32.gmra.mxu0 %v932
    %v1195 = vpop.f32.mrf.mxu0
    %v1196 = vadd.f32 0.0, %v1195
    %1197 = vdwg.mxu0
    %1198 = vmatpush.msra.mxu0 %v385
    %1199 = vmatpush.msra.mxu0 %v381
    %1200 = vmatpush.msra.mxu0 %v377
    %1201 = vmatpush.msra.mxu0 %v373
    %1202 = vmatpush.msra.mxu0 %v369
    %1203 = vmatpush.msra.mxu0 %v365
    %1204 = vmatpush.msra.mxu0 %v361
    %1205 = vmatpush.msra.mxu0 %v357
    %1206 = vmatpush.msra.mxu0 %v353
    %1207 = vmatpush.msra.mxu0 %v349
    %1208 = vmatpush.msra.mxu0 %v345
    %1209 = vmatpush.msra.mxu0 %v341
    %1210 = vmatpush.msra.mxu0 %v337
    %1211 = vmatpush.msra.mxu0 %v333
    %1212 = vmatpush.msra.mxu0 %v329
    %1213 = vmatpush.msra.mxu0 %v325
    %1214 = vmatmul.f32.gmra.mxu0 %v932
    %v1215 = vpop.f32.mrf.mxu0
    %v1216 = vadd.f32 0.0, %v1215
    %1217 = vdwg.mxu0
    %1218 = vmatpush.msra.mxu0 %v386
    %1219 = vmatpush.msra.mxu0 %v382
    %1220 = vmatpush.msra.mxu0 %v378
    %1221 = vmatpush.msra.mxu0 %v374
    %1222 = vmatpush.msra.mxu0 %v370
    %1223 = vmatpush.msra.mxu0 %v366
    %1224 = vmatpush.msra.mxu0 %v362
    %1225 = vmatpush.msra.mxu0 %v358
    %1226 = vmatpush.msra.mxu0 %v354
    %1227 = vmatpush.msra.mxu0 %v350
    %1228 = vmatpush.msra.mxu0 %v346
    %1229 = vmatpush.msra.mxu0 %v342
    %1230 = vmatpush.msra.mxu0 %v338
    %1231 = vmatpush.msra.mxu0 %v334
    %1232 = vmatpush.msra.mxu0 %v330
    %1233 = vmatpush.msra.mxu0 %v326
    %1234 = vmatmul.f32.gmra.mxu0 %v932
    %v1235 = vpop.f32.mrf.mxu0
    %v1236 = vadd.f32 0.0, %v1235
    %1237 = vdwg.mxu0
    %1238 = vmatpush.msra.mxu0 %v387
    %1239 = vmatpush.msra.mxu0 %v383
    %1240 = vmatpush.msra.mxu0 %v379
    %1241 = vmatpush.msra.mxu0 %v375
    %1242 = vmatpush.msra.mxu0 %v371
    %1243 = vmatpush.msra.mxu0 %v367
    %1244 = vmatpush.msra.mxu0 %v363
    %1245 = vmatpush.msra.mxu0 %v359
    %1246 = vmatpush.msra.mxu0 %v355
    %1247 = vmatpush.msra.mxu0 %v351
    %1248 = vmatpush.msra.mxu0 %v347
    %1249 = vmatpush.msra.mxu0 %v343
    %1250 = vmatpush.msra.mxu0 %v339
    %1251 = vmatpush.msra.mxu0 %v335
    %1252 = vmatpush.msra.mxu0 %v331
    %1253 = vmatpush.msra.mxu0 %v327
    %1254 = vmatmul.f32.gmra.mxu0 %v932
    %v1255 = vpop.f32.mrf.mxu0
    %v1256 = vadd.f32 0.0, %v1255
    %1257 = vdwg.mxu0
    %v1258 = vadd.f32 %v1116, %v1196
    %v1259 = vadd.f32 %v1136, %v1216
    %v1260 = vadd.f32 %v1156, %v1236
    %v1261 = vadd.f32 %v1176, %v1256
    %v1262 = vxor.u32 %v1258, 2147483648
    %v1263 = vmul.f32 %v1262, 1.442695
    %v1264 = vpow.pop %v1263
    %v1265 = vadd.f32 %v1264, 1.0
    %v1266 = vrcp.pop %v1265
    %v1267 = vmul.f32 %v1265, %v1266
    %v1268 = vsub.f32 1.0, %v1267
    %v1269 = vmul.f32 %v1266, %v1268
    %v1270 = vadd.f32 %v1266, %v1269
    %vm1271 = vweird.f32 %v1265
    %vm1272 = vweird.f32 %v1266
    %vm1273 = vmor %vm1271, %vm1272
    %v1274 = vsel %vm1273, %v1266, %v1270
    %v1275 = vand.u32 2147483647, %v1265
    %vm1276 = vcmp.eq.f32.partialorder %v1275, 8.507059e+37
    %v1277 = vand.u32 %v1265, 2147483648
    %v1278 = vor.u32 1.1754944e-38, %v1277
    %v1279 = vsel %vm1276, %v1278, %v1274
    %v1280 = vmul.f32 1.0, %v1279
    %v1281 = vxor.u32 %v1259, 2147483648
    %v1282 = vmul.f32 %v1281, 1.442695
    %v1283 = vpow.pop %v1282
    %v1284 = vadd.f32 %v1283, 1.0
    %v1285 = vrcp.pop %v1284
    %v1286 = vmul.f32 %v1284, %v1285
    %v1287 = vsub.f32 1.0, %v1286
    %v1288 = vmul.f32 %v1285, %v1287
    %v1289 = vadd.f32 %v1285, %v1288
    %vm1290 = vweird.f32 %v1284
    %vm1291 = vweird.f32 %v1285
    %vm1292 = vmor %vm1290, %vm1291
    %v1293 = vsel %vm1292, %v1285, %v1289
    %v1294 = vand.u32 2147483647, %v1284
    %vm1295 = vcmp.eq.f32.partialorder %v1294, 8.507059e+37
    %v1296 = vand.u32 %v1284, 2147483648
    %v1297 = vor.u32 1.1754944e-38, %v1296
    %v1298 = vsel %vm1295, %v1297, %v1293
    %v1299 = vmul.f32 1.0, %v1298
    %v1300 = vtanh.pop %v1260
    %v1301 = vxor.u32 %v1261, 2147483648
    %v1302 = vmul.f32 %v1301, 1.442695
    %v1303 = vpow.pop %v1302
    %v1304 = vadd.f32 %v1303, 1.0
    %v1305 = vrcp.pop %v1304
    %v1306 = vmul.f32 %v1304, %v1305
    %v1307 = vsub.f32 1.0, %v1306
    %v1308 = vmul.f32 %v1305, %v1307
    %v1309 = vadd.f32 %v1305, %v1308
    %vm1310 = vweird.f32 %v1304
    %vm1311 = vweird.f32 %v1305
    %vm1312 = vmor %vm1310, %vm1311
    %v1313 = vsel %vm1312, %v1305, %v1309
    %v1314 = vand.u32 2147483647, %v1304
    %vm1315 = vcmp.eq.f32.partialorder %v1314, 8.507059e+37
    %v1316 = vand.u32 %v1304, 2147483648
    %v1317 = vor.u32 1.1754944e-38, %v1316
    %v1318 = vsel %vm1315, %v1317, %v1313
    %v1319 = vmul.f32 1.0, %v1318
    %v1320 = vmul.f32 %v1299, %v930
    %v1321 = vmul.f32 %v1280, %v1300
    %v1322 = vadd.f32 %v1320, %v1321
    %v1323 = vtanh.pop %v1322
    %v1324 = vmul.f32 %v1319, %v1323
    %v1326 = vrot.slane %v1097, 2
    %1328 = vmatpush.msra.mxu0 %v255
    %1329 = vmatpush.msra.mxu0 %v251
    %1330 = vmatpush.msra.mxu0 %v247
    %1331 = vmatpush.msra.mxu0 %v243
    %1332 = vmatpush.msra.mxu0 %v239
    %1333 = vmatpush.msra.mxu0 %v235
    %1334 = vmatpush.msra.mxu0 %v231
    %1335 = vmatpush.msra.mxu0 %v227
    %1336 = vmatpush.msra.mxu0 %v223
    %1337 = vmatpush.msra.mxu0 %v219
    %1338 = vmatpush.msra.mxu0 %v215
    %1339 = vmatpush.msra.mxu0 %v211
    %1340 = vmatpush.msra.mxu0 %v207
    %1341 = vmatpush.msra.mxu0 %v203
    %1342 = vmatpush.msra.mxu0 %v199
    %1343 = vmatpush.msra.mxu0 %v195
    %1344 = vmatmul.f32.gmra.mxu0 %v1326
    %v1345 = vpop.f32.mrf.mxu0
    %v1346 = vadd.f32 0.0, %v1345
    %1347 = vdwg.mxu0
    %1348 = vmatpush.msra.mxu0 %v256
    %1349 = vmatpush.msra.mxu0 %v252
    %1350 = vmatpush.msra.mxu0 %v248
    %1351 = vmatpush.msra.mxu0 %v244
    %1352 = vmatpush.msra.mxu0 %v240
    %1353 = vmatpush.msra.mxu0 %v236
    %1354 = vmatpush.msra.mxu0 %v232
    %1355 = vmatpush.msra.mxu0 %v228
    %1356 = vmatpush.msra.mxu0 %v224
    %1357 = vmatpush.msra.mxu0 %v220
    %1358 = vmatpush.msra.mxu0 %v216
    %1359 = vmatpush.msra.mxu0 %v212
    %1360 = vmatpush.msra.mxu0 %v208
    %1361 = vmatpush.msra.mxu0 %v204
    %1362 = vmatpush.msra.mxu0 %v200
    %1363 = vmatpush.msra.mxu0 %v196
    %1364 = vmatmul.f32.gmra.mxu0 %v1326
    %v1365 = vpop.f32.mrf.mxu0
    %v1366 = vadd.f32 0.0, %v1365
    %1367 = vdwg.mxu0
    %1368 = vmatpush.msra.mxu0 %v257
    %1369 = vmatpush.msra.mxu0 %v253
    %1370 = vmatpush.msra.mxu0 %v249
    %1371 = vmatpush.msra.mxu0 %v245
    %1372 = vmatpush.msra.mxu0 %v241
    %1373 = vmatpush.msra.mxu0 %v237
    %1374 = vmatpush.msra.mxu0 %v233
    %1375 = vmatpush.msra.mxu0 %v229
    %1376 = vmatpush.msra.mxu0 %v225
    %1377 = vmatpush.msra.mxu0 %v221
    %1378 = vmatpush.msra.mxu0 %v217
    %1379 = vmatpush.msra.mxu0 %v213
    %1380 = vmatpush.msra.mxu0 %v209
    %1381 = vmatpush.msra.mxu0 %v205
    %1382 = vmatpush.msra.mxu0 %v201
    %1383 = vmatpush.msra.mxu0 %v197
    %1384 = vmatmul.f32.gmra.mxu0 %v1326
    %v1385 = vpop.f32.mrf.mxu0
    %v1386 = vadd.f32 0.0, %v1385
    %1387 = vdwg.mxu0
    %1388 = vmatpush.msra.mxu0 %v258
    %1389 = vmatpush.msra.mxu0 %v254
    %1390 = vmatpush.msra.mxu0 %v250
    %1391 = vmatpush.msra.mxu0 %v246
    %1392 = vmatpush.msra.mxu0 %v242
    %1393 = vmatpush.msra.mxu0 %v238
    %1394 = vmatpush.msra.mxu0 %v234
    %1395 = vmatpush.msra.mxu0 %v230
    %1396 = vmatpush.msra.mxu0 %v226
    %1397 = vmatpush.msra.mxu0 %v222
    %1398 = vmatpush.msra.mxu0 %v218
    %1399 = vmatpush.msra.mxu0 %v214
    %1400 = vmatpush.msra.mxu0 %v210
    %1401 = vmatpush.msra.mxu0 %v206
    %1402 = vmatpush.msra.mxu0 %v202
    %1403 = vmatpush.msra.mxu0 %v198
    %1404 = vmatmul.f32.gmra.mxu0 %v1326
    %v1405 = vpop.f32.mrf.mxu0
    %v1406 = vadd.f32 0.0, %v1405
    %1407 = vdwg.mxu0
    %v1412 = vrot.slane %v1346, 5
    %v1413 = vrot.slane %v1366, 5
    %v1414 = vrot.slane %v1386, 5
    %v1415 = vrot.slane %v1406, 5
    %v1420 = vadd.f32 %v191, %v1412
    %v1421 = vadd.f32 %v192, %v1413
    %v1422 = vadd.f32 %v193, %v1414
    %v1423 = vadd.f32 %v194, %v1415
    %v1424 = vxor.u32 %v1420, 2147483648
    %v1425 = vmul.f32 %v1424, 1.442695
    %v1426 = vpow.pop %v1425
    %v1427 = vadd.f32 %v1426, 1.0
    %v1428 = vrcp.pop %v1427
    %v1429 = vmul.f32 %v1427, %v1428
    %v1430 = vsub.f32 1.0, %v1429
    %v1431 = vmul.f32 %v1428, %v1430
    %v1432 = vadd.f32 %v1428, %v1431
    %vm1433 = vweird.f32 %v1427
    %vm1434 = vweird.f32 %v1428
    %vm1435 = vmor %vm1433, %vm1434
    %v1436 = vsel %vm1435, %v1428, %v1432
    %v1437 = vand.u32 2147483647, %v1427
    %vm1438 = vcmp.eq.f32.partialorder %v1437, 8.507059e+37
    %v1439 = vand.u32 %v1427, 2147483648
    %v1440 = vor.u32 1.1754944e-38, %v1439
    %v1441 = vsel %vm1438, %v1440, %v1436
    %v1442 = vmul.f32 1.0, %v1441
    %v1443 = vxor.u32 %v1421, 2147483648
    %v1444 = vmul.f32 %v1443, 1.442695
    %v1445 = vpow.pop %v1444
    %v1446 = vadd.f32 %v1445, 1.0
    %v1447 = vrcp.pop %v1446
    %v1448 = vmul.f32 %v1446, %v1447
    %v1449 = vsub.f32 1.0, %v1448
    %v1450 = vmul.f32 %v1447, %v1449
    %v1451 = vadd.f32 %v1447, %v1450
    %vm1452 = vweird.f32 %v1446
    %vm1453 = vweird.f32 %v1447
    %vm1454 = vmor %vm1452, %vm1453
    %v1455 = vsel %vm1454, %v1447, %v1451
    %v1456 = vand.u32 2147483647, %v1446
    %vm1457 = vcmp.eq.f32.partialorder %v1456, 8.507059e+37
    %v1458 = vand.u32 %v1446, 2147483648
    %v1459 = vor.u32 1.1754944e-38, %v1458
    %v1460 = vsel %vm1457, %v1459, %v1455
    %v1461 = vmul.f32 1.0, %v1460
    %v1462 = vtanh.pop %v1422
    %v1463 = vxor.u32 %v1423, 2147483648
    %v1464 = vmul.f32 %v1463, 1.442695
    %v1465 = vpow.pop %v1464
    %v1466 = vadd.f32 %v1465, 1.0
    %v1467 = vrcp.pop %v1466
    %v1468 = vmul.f32 %v1466, %v1467
    %v1469 = vsub.f32 1.0, %v1468
    %v1470 = vmul.f32 %v1467, %v1469
    %v1471 = vadd.f32 %v1467, %v1470
    %vm1472 = vweird.f32 %v1466
    %vm1473 = vweird.f32 %v1467
    %vm1474 = vmor %vm1472, %vm1473
    %v1475 = vsel %vm1474, %v1467, %v1471
    %v1476 = vand.u32 2147483647, %v1466
    %vm1477 = vcmp.eq.f32.partialorder %v1476, 8.507059e+37
    %v1478 = vand.u32 %v1466, 2147483648
    %v1479 = vor.u32 1.1754944e-38, %v1478
    %v1480 = vsel %vm1477, %v1479, %v1475
    %v1481 = vmul.f32 1.0, %v1480
    %v1483 = vrot.slane %v1095, 7
    %v1485 = vmul.f32 %v1461, %v1483
    %v1486 = vmul.f32 %v1442, %v1462
    %v1487 = vadd.f32 %v1485, %v1486
    %v1488 = vtanh.pop %v1487
    %v1489 = vmul.f32 %v1481, %v1488
    %1490 = vmatpush.msra.mxu0 %v319
    %1491 = vmatpush.msra.mxu0 %v315
    %1492 = vmatpush.msra.mxu0 %v311
    %1493 = vmatpush.msra.mxu0 %v307
    %1494 = vmatpush.msra.mxu0 %v303
    %1495 = vmatpush.msra.mxu0 %v299
    %1496 = vmatpush.msra.mxu0 %v295
    %1497 = vmatpush.msra.mxu0 %v291
    %1498 = vmatpush.msra.mxu0 %v287
    %1499 = vmatpush.msra.mxu0 %v283
    %1500 = vmatpush.msra.mxu0 %v279
    %1501 = vmatpush.msra.mxu0 %v275
    %1502 = vmatpush.msra.mxu0 %v271
    %1503 = vmatpush.msra.mxu0 %v267
    %1504 = vmatpush.msra.mxu0 %v263
    %1505 = vmatpush.msra.mxu0 %v259
    %1506 = vmatmul.f32.gmra.mxu0 %v1326
    %v1507 = vpop.f32.mrf.mxu0
    %v1508 = vadd.f32 %v698, %v1507
    %1509 = vdwg.mxu0
    %1510 = vmatpush.msra.mxu0 %v320
    %1511 = vmatpush.msra.mxu0 %v316
    %1512 = vmatpush.msra.mxu0 %v312
    %1513 = vmatpush.msra.mxu0 %v308
    %1514 = vmatpush.msra.mxu0 %v304
    %1515 = vmatpush.msra.mxu0 %v300
    %1516 = vmatpush.msra.mxu0 %v296
    %1517 = vmatpush.msra.mxu0 %v292
    %1518 = vmatpush.msra.mxu0 %v288
    %1519 = vmatpush.msra.mxu0 %v284
    %1520 = vmatpush.msra.mxu0 %v280
    %1521 = vmatpush.msra.mxu0 %v276
    %1522 = vmatpush.msra.mxu0 %v272
    %1523 = vmatpush.msra.mxu0 %v268
    %1524 = vmatpush.msra.mxu0 %v264
    %1525 = vmatpush.msra.mxu0 %v260
    %1526 = vmatmul.f32.gmra.mxu0 %v1326
    %v1527 = vpop.f32.mrf.mxu0
    %v1528 = vadd.f32 %v699, %v1527
    %1529 = vdwg.mxu0
    %1530 = vmatpush.msra.mxu0 %v321
    %1531 = vmatpush.msra.mxu0 %v317
    %1532 = vmatpush.msra.mxu0 %v313
    %1533 = vmatpush.msra.mxu0 %v309
    %1534 = vmatpush.msra.mxu0 %v305
    %1535 = vmatpush.msra.mxu0 %v301
    %1536 = vmatpush.msra.mxu0 %v297
    %1537 = vmatpush.msra.mxu0 %v293
    %1538 = vmatpush.msra.mxu0 %v289
    %1539 = vmatpush.msra.mxu0 %v285
    %1540 = vmatpush.msra.mxu0 %v281
    %1541 = vmatpush.msra.mxu0 %v277
    %1542 = vmatpush.msra.mxu0 %v273
    %1543 = vmatpush.msra.mxu0 %v269
    %1544 = vmatpush.msra.mxu0 %v265
    %1545 = vmatpush.msra.mxu0 %v261
    %1546 = vmatmul.f32.gmra.mxu0 %v1326
    %v1547 = vpop.f32.mrf.mxu0
    %v1548 = vadd.f32 %v700, %v1547
    %1549 = vdwg.mxu0
    %1550 = vmatpush.msra.mxu0 %v322
    %1551 = vmatpush.msra.mxu0 %v318
    %1552 = vmatpush.msra.mxu0 %v314
    %1553 = vmatpush.msra.mxu0 %v310
    %1554 = vmatpush.msra.mxu0 %v306
    %1555 = vmatpush.msra.mxu0 %v302
    %1556 = vmatpush.msra.mxu0 %v298
    %1557 = vmatpush.msra.mxu0 %v294
    %1558 = vmatpush.msra.mxu0 %v290
    %1559 = vmatpush.msra.mxu0 %v286
    %1560 = vmatpush.msra.mxu0 %v282
    %1561 = vmatpush.msra.mxu0 %v278
    %1562 = vmatpush.msra.mxu0 %v274
    %1563 = vmatpush.msra.mxu0 %v270
    %1564 = vmatpush.msra.mxu0 %v266
    %1565 = vmatpush.msra.mxu0 %v262
    %1566 = vmatmul.f32.gmra.mxu0 %v1326
    %v1567 = vpop.f32.mrf.mxu0
    %v1568 = vadd.f32 %v701, %v1567
    %1569 = vdwg.mxu0
    %1570 = vmatpush.msra.mxu0 %v384
    %1571 = vmatpush.msra.mxu0 %v380
    %1572 = vmatpush.msra.mxu0 %v376
    %1573 = vmatpush.msra.mxu0 %v372
    %1574 = vmatpush.msra.mxu0 %v368
    %1575 = vmatpush.msra.mxu0 %v364
    %1576 = vmatpush.msra.mxu0 %v360
    %1577 = vmatpush.msra.mxu0 %v356
    %1578 = vmatpush.msra.mxu0 %v352
    %1579 = vmatpush.msra.mxu0 %v348
    %1580 = vmatpush.msra.mxu0 %v344
    %1581 = vmatpush.msra.mxu0 %v340
    %1582 = vmatpush.msra.mxu0 %v336
    %1583 = vmatpush.msra.mxu0 %v332
    %1584 = vmatpush.msra.mxu0 %v328
    %1585 = vmatpush.msra.mxu0 %v324
    %1586 = vmatmul.f32.gmra.mxu0 %v1324
    %v1587 = vpop.f32.mrf.mxu0
    %v1588 = vadd.f32 0.0, %v1587
    %1589 = vdwg.mxu0
    %1590 = vmatpush.msra.mxu0 %v385
    %1591 = vmatpush.msra.mxu0 %v381
    %1592 = vmatpush.msra.mxu0 %v377
    %1593 = vmatpush.msra.mxu0 %v373
    %1594 = vmatpush.msra.mxu0 %v369
    %1595 = vmatpush.msra.mxu0 %v365
    %1596 = vmatpush.msra.mxu0 %v361
    %1597 = vmatpush.msra.mxu0 %v357
    %1598 = vmatpush.msra.mxu0 %v353
    %1599 = vmatpush.msra.mxu0 %v349
    %1600 = vmatpush.msra.mxu0 %v345
    %1601 = vmatpush.msra.mxu0 %v341
    %1602 = vmatpush.msra.mxu0 %v337
    %1603 = vmatpush.msra.mxu0 %v333
    %1604 = vmatpush.msra.mxu0 %v329
    %1605 = vmatpush.msra.mxu0 %v325
    %1606 = vmatmul.f32.gmra.mxu0 %v1324
    %v1607 = vpop.f32.mrf.mxu0
    %v1608 = vadd.f32 0.0, %v1607
    %1609 = vdwg.mxu0
    %1610 = vmatpush.msra.mxu0 %v386
    %1611 = vmatpush.msra.mxu0 %v382
    %1612 = vmatpush.msra.mxu0 %v378
    %1613 = vmatpush.msra.mxu0 %v374
    %1614 = vmatpush.msra.mxu0 %v370
    %1615 = vmatpush.msra.mxu0 %v366
    %1616 = vmatpush.msra.mxu0 %v362
    %1617 = vmatpush.msra.mxu0 %v358
    %1618 = vmatpush.msra.mxu0 %v354
    %1619 = vmatpush.msra.mxu0 %v350
    %1620 = vmatpush.msra.mxu0 %v346
    %1621 = vmatpush.msra.mxu0 %v342
    %1622 = vmatpush.msra.mxu0 %v338
    %1623 = vmatpush.msra.mxu0 %v334
    %1624 = vmatpush.msra.mxu0 %v330
    %1625 = vmatpush.msra.mxu0 %v326
    %1626 = vmatmul.f32.gmra.mxu0 %v1324
    %v1627 = vpop.f32.mrf.mxu0
    %v1628 = vadd.f32 0.0, %v1627
    %1629 = vdwg.mxu0
    %1630 = vmatpush.msra.mxu0 %v387
    %1631 = vmatpush.msra.mxu0 %v383
    %1632 = vmatpush.msra.mxu0 %v379
    %1633 = vmatpush.msra.mxu0 %v375
    %1634 = vmatpush.msra.mxu0 %v371
    %1635 = vmatpush.msra.mxu0 %v367
    %1636 = vmatpush.msra.mxu0 %v363
    %1637 = vmatpush.msra.mxu0 %v359
    %1638 = vmatpush.msra.mxu0 %v355
    %1639 = vmatpush.msra.mxu0 %v351
    %1640 = vmatpush.msra.mxu0 %v347
    %1641 = vmatpush.msra.mxu0 %v343
    %1642 = vmatpush.msra.mxu0 %v339
    %1643 = vmatpush.msra.mxu0 %v335
    %1644 = vmatpush.msra.mxu0 %v331
    %1645 = vmatpush.msra.mxu0 %v327
    %1646 = vmatmul.f32.gmra.mxu0 %v1324
    %v1647 = vpop.f32.mrf.mxu0
    %v1648 = vadd.f32 0.0, %v1647
    %1649 = vdwg.mxu0
    %v1650 = vadd.f32 %v1508, %v1588
    %v1651 = vadd.f32 %v1528, %v1608
    %v1652 = vadd.f32 %v1548, %v1628
    %v1653 = vadd.f32 %v1568, %v1648
    %v1654 = vxor.u32 %v1650, 2147483648
    %v1655 = vmul.f32 %v1654, 1.442695
    %v1656 = vpow.pop %v1655
    %v1657 = vadd.f32 %v1656, 1.0
    %v1658 = vrcp.pop %v1657
    %v1659 = vmul.f32 %v1657, %v1658
    %v1660 = vsub.f32 1.0, %v1659
    %v1661 = vmul.f32 %v1658, %v1660
    %v1662 = vadd.f32 %v1658, %v1661
    %vm1663 = vweird.f32 %v1657
    %vm1664 = vweird.f32 %v1658
    %vm1665 = vmor %vm1663, %vm1664
    %v1666 = vsel %vm1665, %v1658, %v1662
    %v1667 = vand.u32 2147483647, %v1657
    %vm1668 = vcmp.eq.f32.partialorder %v1667, 8.507059e+37
    %v1669 = vand.u32 %v1657, 2147483648
    %v1670 = vor.u32 1.1754944e-38, %v1669
    %v1671 = vsel %vm1668, %v1670, %v1666
    %v1672 = vmul.f32 1.0, %v1671
    %v1673 = vxor.u32 %v1651, 2147483648
    %v1674 = vmul.f32 %v1673, 1.442695
    %v1675 = vpow.pop %v1674
    %v1676 = vadd.f32 %v1675, 1.0
    %v1677 = vrcp.pop %v1676
    %v1678 = vmul.f32 %v1676, %v1677
    %v1679 = vsub.f32 1.0, %v1678
    %v1680 = vmul.f32 %v1677, %v1679
    %v1681 = vadd.f32 %v1677, %v1680
    %vm1682 = vweird.f32 %v1676
    %vm1683 = vweird.f32 %v1677
    %vm1684 = vmor %vm1682, %vm1683
    %v1685 = vsel %vm1684, %v1677, %v1681
    %v1686 = vand.u32 2147483647, %v1676
    %vm1687 = vcmp.eq.f32.partialorder %v1686, 8.507059e+37
    %v1688 = vand.u32 %v1676, 2147483648
    %v1689 = vor.u32 1.1754944e-38, %v1688
    %v1690 = vsel %vm1687, %v1689, %v1685
    %v1691 = vmul.f32 1.0, %v1690
    %v1692 = vtanh.pop %v1652
    %v1693 = vxor.u32 %v1653, 2147483648
    %v1694 = vmul.f32 %v1693, 1.442695
    %v1695 = vpow.pop %v1694
    %v1696 = vadd.f32 %v1695, 1.0
    %v1697 = vrcp.pop %v1696
    %v1698 = vmul.f32 %v1696, %v1697
    %v1699 = vsub.f32 1.0, %v1698
    %v1700 = vmul.f32 %v1697, %v1699
    %v1701 = vadd.f32 %v1697, %v1700
    %vm1702 = vweird.f32 %v1696
    %vm1703 = vweird.f32 %v1697
    %vm1704 = vmor %vm1702, %vm1703
    %v1705 = vsel %vm1704, %v1697, %v1701
    %v1706 = vand.u32 2147483647, %v1696
    %vm1707 = vcmp.eq.f32.partialorder %v1706, 8.507059e+37
    %v1708 = vand.u32 %v1696, 2147483648
    %v1709 = vor.u32 1.1754944e-38, %v1708
    %v1710 = vsel %vm1707, %v1709, %v1705
    %v1711 = vmul.f32 1.0, %v1710
    %v1712 = vmul.f32 %v1691, %v1322
    %v1713 = vmul.f32 %v1672, %v1692
    %v1714 = vadd.f32 %v1712, %v1713
    %v1715 = vtanh.pop %v1714
    %v1716 = vmul.f32 %v1711, %v1715
    %v1718 = vrot.slane %v1489, 3
    %1720 = vmatpush.msra.mxu0 %v255
    %1721 = vmatpush.msra.mxu0 %v251
    %1722 = vmatpush.msra.mxu0 %v247
    %1723 = vmatpush.msra.mxu0 %v243
    %1724 = vmatpush.msra.mxu0 %v239
    %1725 = vmatpush.msra.mxu0 %v235
    %1726 = vmatpush.msra.mxu0 %v231
    %1727 = vmatpush.msra.mxu0 %v227
    %1728 = vmatpush.msra.mxu0 %v223
    %1729 = vmatpush.msra.mxu0 %v219
    %1730 = vmatpush.msra.mxu0 %v215
    %1731 = vmatpush.msra.mxu0 %v211
    %1732 = vmatpush.msra.mxu0 %v207
    %1733 = vmatpush.msra.mxu0 %v203
    %1734 = vmatpush.msra.mxu0 %v199
    %1735 = vmatpush.msra.mxu0 %v195
    %1736 = vmatmul.f32.gmra.mxu0 %v1718
    %v1737 = vpop.f32.mrf.mxu0
    %v1738 = vadd.f32 0.0, %v1737
    %1739 = vdwg.mxu0
    %1740 = vmatpush.msra.mxu0 %v256
    %1741 = vmatpush.msra.mxu0 %v252
    %1742 = vmatpush.msra.mxu0 %v248
    %1743 = vmatpush.msra.mxu0 %v244
    %1744 = vmatpush.msra.mxu0 %v240
    %1745 = vmatpush.msra.mxu0 %v236
    %1746 = vmatpush.msra.mxu0 %v232
    %1747 = vmatpush.msra.mxu0 %v228
    %1748 = vmatpush.msra.mxu0 %v224
    %1749 = vmatpush.msra.mxu0 %v220
    %1750 = vmatpush.msra.mxu0 %v216
    %1751 = vmatpush.msra.mxu0 %v212
    %1752 = vmatpush.msra.mxu0 %v208
    %1753 = vmatpush.msra.mxu0 %v204
    %1754 = vmatpush.msra.mxu0 %v200
    %1755 = vmatpush.msra.mxu0 %v196
    %1756 = vmatmul.f32.gmra.mxu0 %v1718
    %v1757 = vpop.f32.mrf.mxu0
    %v1758 = vadd.f32 0.0, %v1757
    %1759 = vdwg.mxu0
    %1760 = vmatpush.msra.mxu0 %v257
    %1761 = vmatpush.msra.mxu0 %v253
    %1762 = vmatpush.msra.mxu0 %v249
    %1763 = vmatpush.msra.mxu0 %v245
    %1764 = vmatpush.msra.mxu0 %v241
    %1765 = vmatpush.msra.mxu0 %v237
    %1766 = vmatpush.msra.mxu0 %v233
    %1767 = vmatpush.msra.mxu0 %v229
    %1768 = vmatpush.msra.mxu0 %v225
    %1769 = vmatpush.msra.mxu0 %v221
    %1770 = vmatpush.msra.mxu0 %v217
    %1771 = vmatpush.msra.mxu0 %v213
    %1772 = vmatpush.msra.mxu0 %v209
    %1773 = vmatpush.msra.mxu0 %v205
    %1774 = vmatpush.msra.mxu0 %v201
    %1775 = vmatpush.msra.mxu0 %v197
    %1776 = vmatmul.f32.gmra.mxu0 %v1718
    %v1777 = vpop.f32.mrf.mxu0
    %v1778 = vadd.f32 0.0, %v1777
    %1779 = vdwg.mxu0
    %1780 = vmatpush.msra.mxu0 %v258
    %1781 = vmatpush.msra.mxu0 %v254
    %1782 = vmatpush.msra.mxu0 %v250
    %1783 = vmatpush.msra.mxu0 %v246
    %1784 = vmatpush.msra.mxu0 %v242
    %1785 = vmatpush.msra.mxu0 %v238
    %1786 = vmatpush.msra.mxu0 %v234
    %1787 = vmatpush.msra.mxu0 %v230
    %1788 = vmatpush.msra.mxu0 %v226
    %1789 = vmatpush.msra.mxu0 %v222
    %1790 = vmatpush.msra.mxu0 %v218
    %1791 = vmatpush.msra.mxu0 %v214
    %1792 = vmatpush.msra.mxu0 %v210
    %1793 = vmatpush.msra.mxu0 %v206
    %1794 = vmatpush.msra.mxu0 %v202
    %1795 = vmatpush.msra.mxu0 %v198
    %1796 = vmatmul.f32.gmra.mxu0 %v1718
    %v1797 = vpop.f32.mrf.mxu0
    %v1798 = vadd.f32 0.0, %v1797
    %1799 = vdwg.mxu0
    %v1804 = vrot.slane %v1738, 4
    %v1805 = vrot.slane %v1758, 4
    %v1806 = vrot.slane %v1778, 4
    %v1807 = vrot.slane %v1798, 4
    %v1812 = vadd.f32 %v191, %v1804
    %v1813 = vadd.f32 %v192, %v1805
    %v1814 = vadd.f32 %v193, %v1806
    %v1815 = vadd.f32 %v194, %v1807
    %v1816 = vxor.u32 %v1812, 2147483648
    %v1817 = vmul.f32 %v1816, 1.442695
    %v1818 = vpow.pop %v1817
    %v1819 = vadd.f32 %v1818, 1.0
    %v1820 = vrcp.pop %v1819
    %v1821 = vmul.f32 %v1819, %v1820
    %v1822 = vsub.f32 1.0, %v1821
    %v1823 = vmul.f32 %v1820, %v1822
    %v1824 = vadd.f32 %v1820, %v1823
    %vm1825 = vweird.f32 %v1819
    %vm1826 = vweird.f32 %v1820
    %vm1827 = vmor %vm1825, %vm1826
    %v1828 = vsel %vm1827, %v1820, %v1824
    %v1829 = vand.u32 2147483647, %v1819
    %vm1830 = vcmp.eq.f32.partialorder %v1829, 8.507059e+37
    %v1831 = vand.u32 %v1819, 2147483648
    %v1832 = vor.u32 1.1754944e-38, %v1831
    %v1833 = vsel %vm1830, %v1832, %v1828
    %v1834 = vmul.f32 1.0, %v1833
    %v1835 = vxor.u32 %v1813, 2147483648
    %v1836 = vmul.f32 %v1835, 1.442695
    %v1837 = vpow.pop %v1836
    %v1838 = vadd.f32 %v1837, 1.0
    %v1839 = vrcp.pop %v1838
    %v1840 = vmul.f32 %v1838, %v1839
    %v1841 = vsub.f32 1.0, %v1840
    %v1842 = vmul.f32 %v1839, %v1841
    %v1843 = vadd.f32 %v1839, %v1842
    %vm1844 = vweird.f32 %v1838
    %vm1845 = vweird.f32 %v1839
    %vm1846 = vmor %vm1844, %vm1845
    %v1847 = vsel %vm1846, %v1839, %v1843
    %v1848 = vand.u32 2147483647, %v1838
    %vm1849 = vcmp.eq.f32.partialorder %v1848, 8.507059e+37
    %v1850 = vand.u32 %v1838, 2147483648
    %v1851 = vor.u32 1.1754944e-38, %v1850
    %v1852 = vsel %vm1849, %v1851, %v1847
    %v1853 = vmul.f32 1.0, %v1852
    %v1854 = vtanh.pop %v1814
    %v1855 = vxor.u32 %v1815, 2147483648
    %v1856 = vmul.f32 %v1855, 1.442695
    %v1857 = vpow.pop %v1856
    %v1858 = vadd.f32 %v1857, 1.0
    %v1859 = vrcp.pop %v1858
    %v1860 = vmul.f32 %v1858, %v1859
    %v1861 = vsub.f32 1.0, %v1860
    %v1862 = vmul.f32 %v1859, %v1861
    %v1863 = vadd.f32 %v1859, %v1862
    %vm1864 = vweird.f32 %v1858
    %vm1865 = vweird.f32 %v1859
    %vm1866 = vmor %vm1864, %vm1865
    %v1867 = vsel %vm1866, %v1859, %v1863
    %v1868 = vand.u32 2147483647, %v1858
    %vm1869 = vcmp.eq.f32.partialorder %v1868, 8.507059e+37
    %v1870 = vand.u32 %v1858, 2147483648
    %v1871 = vor.u32 1.1754944e-38, %v1870
    %v1872 = vsel %vm1869, %v1871, %v1867
    %v1873 = vmul.f32 1.0, %v1872
    %v1875 = vrot.slane %v1487, 7
    %v1877 = vmul.f32 %v1853, %v1875
    %v1878 = vmul.f32 %v1834, %v1854
    %v1879 = vadd.f32 %v1877, %v1878
    %v1880 = vtanh.pop %v1879
    %v1881 = vmul.f32 %v1873, %v1880
    %1882 = vmatpush.msra.mxu0 %v319
    %1883 = vmatpush.msra.mxu0 %v315
    %1884 = vmatpush.msra.mxu0 %v311
    %1885 = vmatpush.msra.mxu0 %v307
    %1886 = vmatpush.msra.mxu0 %v303
    %1887 = vmatpush.msra.mxu0 %v299
    %1888 = vmatpush.msra.mxu0 %v295
    %1889 = vmatpush.msra.mxu0 %v291
    %1890 = vmatpush.msra.mxu0 %v287
    %1891 = vmatpush.msra.mxu0 %v283
    %1892 = vmatpush.msra.mxu0 %v279
    %1893 = vmatpush.msra.mxu0 %v275
    %1894 = vmatpush.msra.mxu0 %v271
    %1895 = vmatpush.msra.mxu0 %v267
    %1896 = vmatpush.msra.mxu0 %v263
    %1897 = vmatpush.msra.mxu0 %v259
    %1898 = vmatmul.f32.gmra.mxu0 %v1718
    %v1899 = vpop.f32.mrf.mxu0
    %v1900 = vadd.f32 %v698, %v1899
    %1901 = vdwg.mxu0
    %1902 = vmatpush.msra.mxu0 %v320
    %1903 = vmatpush.msra.mxu0 %v316
    %1904 = vmatpush.msra.mxu0 %v312
    %1905 = vmatpush.msra.mxu0 %v308
    %1906 = vmatpush.msra.mxu0 %v304
    %1907 = vmatpush.msra.mxu0 %v300
    %1908 = vmatpush.msra.mxu0 %v296
    %1909 = vmatpush.msra.mxu0 %v292
    %1910 = vmatpush.msra.mxu0 %v288
    %1911 = vmatpush.msra.mxu0 %v284
    %1912 = vmatpush.msra.mxu0 %v280
    %1913 = vmatpush.msra.mxu0 %v276
    %1914 = vmatpush.msra.mxu0 %v272
    %1915 = vmatpush.msra.mxu0 %v268
    %1916 = vmatpush.msra.mxu0 %v264
    %1917 = vmatpush.msra.mxu0 %v260
    %1918 = vmatmul.f32.gmra.mxu0 %v1718
    %v1919 = vpop.f32.mrf.mxu0
    %v1920 = vadd.f32 %v699, %v1919
    %1921 = vdwg.mxu0
    %1922 = vmatpush.msra.mxu0 %v321
    %1923 = vmatpush.msra.mxu0 %v317
    %1924 = vmatpush.msra.mxu0 %v313
    %1925 = vmatpush.msra.mxu0 %v309
    %1926 = vmatpush.msra.mxu0 %v305
    %1927 = vmatpush.msra.mxu0 %v301
    %1928 = vmatpush.msra.mxu0 %v297
    %1929 = vmatpush.msra.mxu0 %v293
    %1930 = vmatpush.msra.mxu0 %v289
    %1931 = vmatpush.msra.mxu0 %v285
    %1932 = vmatpush.msra.mxu0 %v281
    %1933 = vmatpush.msra.mxu0 %v277
    %1934 = vmatpush.msra.mxu0 %v273
    %1935 = vmatpush.msra.mxu0 %v269
    %1936 = vmatpush.msra.mxu0 %v265
    %1937 = vmatpush.msra.mxu0 %v261
    %1938 = vmatmul.f32.gmra.mxu0 %v1718
    %v1939 = vpop.f32.mrf.mxu0
    %v1940 = vadd.f32 %v700, %v1939
    %1941 = vdwg.mxu0
    %1942 = vmatpush.msra.mxu0 %v322
    %1943 = vmatpush.msra.mxu0 %v318
    %1944 = vmatpush.msra.mxu0 %v314
    %1945 = vmatpush.msra.mxu0 %v310
    %1946 = vmatpush.msra.mxu0 %v306
    %1947 = vmatpush.msra.mxu0 %v302
    %1948 = vmatpush.msra.mxu0 %v298
    %1949 = vmatpush.msra.mxu0 %v294
    %1950 = vmatpush.msra.mxu0 %v290
    %1951 = vmatpush.msra.mxu0 %v286
    %1952 = vmatpush.msra.mxu0 %v282
    %1953 = vmatpush.msra.mxu0 %v278
    %1954 = vmatpush.msra.mxu0 %v274
    %1955 = vmatpush.msra.mxu0 %v270
    %1956 = vmatpush.msra.mxu0 %v266
    %1957 = vmatpush.msra.mxu0 %v262
    %1958 = vmatmul.f32.gmra.mxu0 %v1718
    %v1959 = vpop.f32.mrf.mxu0
    %v1960 = vadd.f32 %v701, %v1959
    %1961 = vdwg.mxu0
    %1962 = vmatpush.msra.mxu0 %v384
    %1963 = vmatpush.msra.mxu0 %v380
    %1964 = vmatpush.msra.mxu0 %v376
    %1965 = vmatpush.msra.mxu0 %v372
    %1966 = vmatpush.msra.mxu0 %v368
    %1967 = vmatpush.msra.mxu0 %v364
    %1968 = vmatpush.msra.mxu0 %v360
    %1969 = vmatpush.msra.mxu0 %v356
    %1970 = vmatpush.msra.mxu0 %v352
    %1971 = vmatpush.msra.mxu0 %v348
    %1972 = vmatpush.msra.mxu0 %v344
    %1973 = vmatpush.msra.mxu0 %v340
    %1974 = vmatpush.msra.mxu0 %v336
    %1975 = vmatpush.msra.mxu0 %v332
    %1976 = vmatpush.msra.mxu0 %v328
    %1977 = vmatpush.msra.mxu0 %v324
    %1978 = vmatmul.f32.gmra.mxu0 %v1716
    %v1979 = vpop.f32.mrf.mxu0
    %v1980 = vadd.f32 0.0, %v1979
    %1981 = vdwg.mxu0
    %1982 = vmatpush.msra.mxu0 %v385
    %1983 = vmatpush.msra.mxu0 %v381
    %1984 = vmatpush.msra.mxu0 %v377
    %1985 = vmatpush.msra.mxu0 %v373
    %1986 = vmatpush.msra.mxu0 %v369
    %1987 = vmatpush.msra.mxu0 %v365
    %1988 = vmatpush.msra.mxu0 %v361
    %1989 = vmatpush.msra.mxu0 %v357
    %1990 = vmatpush.msra.mxu0 %v353
    %1991 = vmatpush.msra.mxu0 %v349
    %1992 = vmatpush.msra.mxu0 %v345
    %1993 = vmatpush.msra.mxu0 %v341
    %1994 = vmatpush.msra.mxu0 %v337
    %1995 = vmatpush.msra.mxu0 %v333
    %1996 = vmatpush.msra.mxu0 %v329
    %1997 = vmatpush.msra.mxu0 %v325
    %1998 = vmatmul.f32.gmra.mxu0 %v1716
    %v1999 = vpop.f32.mrf.mxu0
    %v2000 = vadd.f32 0.0, %v1999
    %2001 = vdwg.mxu0
    %2002 = vmatpush.msra.mxu0 %v386
    %2003 = vmatpush.msra.mxu0 %v382
    %2004 = vmatpush.msra.mxu0 %v378
    %2005 = vmatpush.msra.mxu0 %v374
    %2006 = vmatpush.msra.mxu0 %v370
    %2007 = vmatpush.msra.mxu0 %v366
    %2008 = vmatpush.msra.mxu0 %v362
    %2009 = vmatpush.msra.mxu0 %v358
    %2010 = vmatpush.msra.mxu0 %v354
    %2011 = vmatpush.msra.mxu0 %v350
    %2012 = vmatpush.msra.mxu0 %v346
    %2013 = vmatpush.msra.mxu0 %v342
    %2014 = vmatpush.msra.mxu0 %v338
    %2015 = vmatpush.msra.mxu0 %v334
    %2016 = vmatpush.msra.mxu0 %v330
    %2017 = vmatpush.msra.mxu0 %v326
    %2018 = vmatmul.f32.gmra.mxu0 %v1716
    %v2019 = vpop.f32.mrf.mxu0
    %v2020 = vadd.f32 0.0, %v2019
    %2021 = vdwg.mxu0
    %2022 = vmatpush.msra.mxu0 %v387
    %2023 = vmatpush.msra.mxu0 %v383
    %2024 = vmatpush.msra.mxu0 %v379
    %2025 = vmatpush.msra.mxu0 %v375
    %2026 = vmatpush.msra.mxu0 %v371
    %2027 = vmatpush.msra.mxu0 %v367
    %2028 = vmatpush.msra.mxu0 %v363
    %2029 = vmatpush.msra.mxu0 %v359
    %2030 = vmatpush.msra.mxu0 %v355
    %2031 = vmatpush.msra.mxu0 %v351
    %2032 = vmatpush.msra.mxu0 %v347
    %2033 = vmatpush.msra.mxu0 %v343
    %2034 = vmatpush.msra.mxu0 %v339
    %2035 = vmatpush.msra.mxu0 %v335
    %2036 = vmatpush.msra.mxu0 %v331
    %2037 = vmatpush.msra.mxu0 %v327
    %2038 = vmatmul.f32.gmra.mxu0 %v1716
    %v2039 = vpop.f32.mrf.mxu0
    %v2040 = vadd.f32 0.0, %v2039
    %2041 = vdwg.mxu0
    %v2042 = vadd.f32 %v1900, %v1980
    %v2043 = vadd.f32 %v1920, %v2000
    %v2044 = vadd.f32 %v1940, %v2020
    %v2045 = vadd.f32 %v1960, %v2040
    %v2046 = vxor.u32 %v2042, 2147483648
    %v2047 = vmul.f32 %v2046, 1.442695
    %v2048 = vpow.pop %v2047
    %v2049 = vadd.f32 %v2048, 1.0
    %v2050 = vrcp.pop %v2049
    %v2051 = vmul.f32 %v2049, %v2050
    %v2052 = vsub.f32 1.0, %v2051
    %v2053 = vmul.f32 %v2050, %v2052
    %v2054 = vadd.f32 %v2050, %v2053
    %vm2055 = vweird.f32 %v2049
    %vm2056 = vweird.f32 %v2050
    %vm2057 = vmor %vm2055, %vm2056
    %v2058 = vsel %vm2057, %v2050, %v2054
    %v2059 = vand.u32 2147483647, %v2049
    %vm2060 = vcmp.eq.f32.partialorder %v2059, 8.507059e+37
    %v2061 = vand.u32 %v2049, 2147483648
    %v2062 = vor.u32 1.1754944e-38, %v2061
    %v2063 = vsel %vm2060, %v2062, %v2058
    %v2064 = vmul.f32 1.0, %v2063
    %v2065 = vxor.u32 %v2043, 2147483648
    %v2066 = vmul.f32 %v2065, 1.442695
    %v2067 = vpow.pop %v2066
    %v2068 = vadd.f32 %v2067, 1.0
    %v2069 = vrcp.pop %v2068
    %v2070 = vmul.f32 %v2068, %v2069
    %v2071 = vsub.f32 1.0, %v2070
    %v2072 = vmul.f32 %v2069, %v2071
    %v2073 = vadd.f32 %v2069, %v2072
    %vm2074 = vweird.f32 %v2068
    %vm2075 = vweird.f32 %v2069
    %vm2076 = vmor %vm2074, %vm2075
    %v2077 = vsel %vm2076, %v2069, %v2073
    %v2078 = vand.u32 2147483647, %v2068
    %vm2079 = vcmp.eq.f32.partialorder %v2078, 8.507059e+37
    %v2080 = vand.u32 %v2068, 2147483648
    %v2081 = vor.u32 1.1754944e-38, %v2080
    %v2082 = vsel %vm2079, %v2081, %v2077
    %v2083 = vmul.f32 1.0, %v2082
    %v2084 = vtanh.pop %v2044
    %v2085 = vxor.u32 %v2045, 2147483648
    %v2086 = vmul.f32 %v2085, 1.442695
    %v2087 = vpow.pop %v2086
    %v2088 = vadd.f32 %v2087, 1.0
    %v2089 = vrcp.pop %v2088
    %v2090 = vmul.f32 %v2088, %v2089
    %v2091 = vsub.f32 1.0, %v2090
    %v2092 = vmul.f32 %v2089, %v2091
    %v2093 = vadd.f32 %v2089, %v2092
    %vm2094 = vweird.f32 %v2088
    %vm2095 = vweird.f32 %v2089
    %vm2096 = vmor %vm2094, %vm2095
    %v2097 = vsel %vm2096, %v2089, %v2093
    %v2098 = vand.u32 2147483647, %v2088
    %vm2099 = vcmp.eq.f32.partialorder %v2098, 8.507059e+37
    %v2100 = vand.u32 %v2088, 2147483648
    %v2101 = vor.u32 1.1754944e-38, %v2100
    %v2102 = vsel %vm2099, %v2101, %v2097
    %v2103 = vmul.f32 1.0, %v2102
    %v2104 = vmul.f32 %v2083, %v1714
    %v2105 = vmul.f32 %v2064, %v2084
    %v2106 = vadd.f32 %v2104, %v2105
    %v2107 = vtanh.pop %v2106
    %v2108 = vmul.f32 %v2103, %v2107
    %v2110 = vrot.slane %v1881, 4
    %2112 = vmatpush.msra.mxu0 %v255
    %2113 = vmatpush.msra.mxu0 %v251
    %2114 = vmatpush.msra.mxu0 %v247
    %2115 = vmatpush.msra.mxu0 %v243
    %2116 = vmatpush.msra.mxu0 %v239
    %2117 = vmatpush.msra.mxu0 %v235
    %2118 = vmatpush.msra.mxu0 %v231
    %2119 = vmatpush.msra.mxu0 %v227
    %2120 = vmatpush.msra.mxu0 %v223
    %2121 = vmatpush.msra.mxu0 %v219
    %2122 = vmatpush.msra.mxu0 %v215
    %2123 = vmatpush.msra.mxu0 %v211
    %2124 = vmatpush.msra.mxu0 %v207
    %2125 = vmatpush.msra.mxu0 %v203
    %2126 = vmatpush.msra.mxu0 %v199
    %2127 = vmatpush.msra.mxu0 %v195
    %2128 = vmatmul.f32.gmra.mxu0 %v2110
    %v2129 = vpop.f32.mrf.mxu0
    %v2130 = vadd.f32 0.0, %v2129
    %2131 = vdwg.mxu0
    %2132 = vmatpush.msra.mxu0 %v256
    %2133 = vmatpush.msra.mxu0 %v252
    %2134 = vmatpush.msra.mxu0 %v248
    %2135 = vmatpush.msra.mxu0 %v244
    %2136 = vmatpush.msra.mxu0 %v240
    %2137 = vmatpush.msra.mxu0 %v236
    %2138 = vmatpush.msra.mxu0 %v232
    %2139 = vmatpush.msra.mxu0 %v228
    %2140 = vmatpush.msra.mxu0 %v224
    %2141 = vmatpush.msra.mxu0 %v220
    %2142 = vmatpush.msra.mxu0 %v216
    %2143 = vmatpush.msra.mxu0 %v212
    %2144 = vmatpush.msra.mxu0 %v208
    %2145 = vmatpush.msra.mxu0 %v204
    %2146 = vmatpush.msra.mxu0 %v200
    %2147 = vmatpush.msra.mxu0 %v196
    %2148 = vmatmul.f32.gmra.mxu0 %v2110
    %v2149 = vpop.f32.mrf.mxu0
    %v2150 = vadd.f32 0.0, %v2149
    %2151 = vdwg.mxu0
    %2152 = vmatpush.msra.mxu0 %v257
    %2153 = vmatpush.msra.mxu0 %v253
    %2154 = vmatpush.msra.mxu0 %v249
    %2155 = vmatpush.msra.mxu0 %v245
    %2156 = vmatpush.msra.mxu0 %v241
    %2157 = vmatpush.msra.mxu0 %v237
    %2158 = vmatpush.msra.mxu0 %v233
    %2159 = vmatpush.msra.mxu0 %v229
    %2160 = vmatpush.msra.mxu0 %v225
    %2161 = vmatpush.msra.mxu0 %v221
    %2162 = vmatpush.msra.mxu0 %v217
    %2163 = vmatpush.msra.mxu0 %v213
    %2164 = vmatpush.msra.mxu0 %v209
    %2165 = vmatpush.msra.mxu0 %v205
    %2166 = vmatpush.msra.mxu0 %v201
    %2167 = vmatpush.msra.mxu0 %v197
    %2168 = vmatmul.f32.gmra.mxu0 %v2110
    %v2169 = vpop.f32.mrf.mxu0
    %v2170 = vadd.f32 0.0, %v2169
    %2171 = vdwg.mxu0
    %2172 = vmatpush.msra.mxu0 %v258
    %2173 = vmatpush.msra.mxu0 %v254
    %2174 = vmatpush.msra.mxu0 %v250
    %2175 = vmatpush.msra.mxu0 %v246
    %2176 = vmatpush.msra.mxu0 %v242
    %2177 = vmatpush.msra.mxu0 %v238
    %2178 = vmatpush.msra.mxu0 %v234
    %2179 = vmatpush.msra.mxu0 %v230
    %2180 = vmatpush.msra.mxu0 %v226
    %2181 = vmatpush.msra.mxu0 %v222
    %2182 = vmatpush.msra.mxu0 %v218
    %2183 = vmatpush.msra.mxu0 %v214
    %2184 = vmatpush.msra.mxu0 %v210
    %2185 = vmatpush.msra.mxu0 %v206
    %2186 = vmatpush.msra.mxu0 %v202
    %2187 = vmatpush.msra.mxu0 %v198
    %2188 = vmatmul.f32.gmra.mxu0 %v2110
    %v2189 = vpop.f32.mrf.mxu0
    %v2190 = vadd.f32 0.0, %v2189
    %2191 = vdwg.mxu0
    %v2196 = vrot.slane %v2130, 3
    %v2197 = vrot.slane %v2150, 3
    %v2198 = vrot.slane %v2170, 3
    %v2199 = vrot.slane %v2190, 3
    %v2204 = vadd.f32 %v191, %v2196
    %v2205 = vadd.f32 %v192, %v2197
    %v2206 = vadd.f32 %v193, %v2198
    %v2207 = vadd.f32 %v194, %v2199
    %v2208 = vxor.u32 %v2204, 2147483648
    %v2209 = vmul.f32 %v2208, 1.442695
    %v2210 = vpow.pop %v2209
    %v2211 = vadd.f32 %v2210, 1.0
    %v2212 = vrcp.pop %v2211
    %v2213 = vmul.f32 %v2211, %v2212
    %v2214 = vsub.f32 1.0, %v2213
    %v2215 = vmul.f32 %v2212, %v2214
    %v2216 = vadd.f32 %v2212, %v2215
    %vm2217 = vweird.f32 %v2211
    %vm2218 = vweird.f32 %v2212
    %vm2219 = vmor %vm2217, %vm2218
    %v2220 = vsel %vm2219, %v2212, %v2216
    %v2221 = vand.u32 2147483647, %v2211
    %vm2222 = vcmp.eq.f32.partialorder %v2221, 8.507059e+37
    %v2223 = vand.u32 %v2211, 2147483648
    %v2224 = vor.u32 1.1754944e-38, %v2223
    %v2225 = vsel %vm2222, %v2224, %v2220
    %v2226 = vmul.f32 1.0, %v2225
    %v2227 = vxor.u32 %v2205, 2147483648
    %v2228 = vmul.f32 %v2227, 1.442695
    %v2229 = vpow.pop %v2228
    %v2230 = vadd.f32 %v2229, 1.0
    %v2231 = vrcp.pop %v2230
    %v2232 = vmul.f32 %v2230, %v2231
    %v2233 = vsub.f32 1.0, %v2232
    %v2234 = vmul.f32 %v2231, %v2233
    %v2235 = vadd.f32 %v2231, %v2234
    %vm2236 = vweird.f32 %v2230
    %vm2237 = vweird.f32 %v2231
    %vm2238 = vmor %vm2236, %vm2237
    %v2239 = vsel %vm2238, %v2231, %v2235
    %v2240 = vand.u32 2147483647, %v2230
    %vm2241 = vcmp.eq.f32.partialorder %v2240, 8.507059e+37
    %v2242 = vand.u32 %v2230, 2147483648
    %v2243 = vor.u32 1.1754944e-38, %v2242
    %v2244 = vsel %vm2241, %v2243, %v2239
    %v2245 = vmul.f32 1.0, %v2244
    %v2246 = vtanh.pop %v2206
    %v2247 = vxor.u32 %v2207, 2147483648
    %v2248 = vmul.f32 %v2247, 1.442695
    %v2249 = vpow.pop %v2248
    %v2250 = vadd.f32 %v2249, 1.0
    %v2251 = vrcp.pop %v2250
    %v2252 = vmul.f32 %v2250, %v2251
    %v2253 = vsub.f32 1.0, %v2252
    %v2254 = vmul.f32 %v2251, %v2253
    %v2255 = vadd.f32 %v2251, %v2254
    %vm2256 = vweird.f32 %v2250
    %vm2257 = vweird.f32 %v2251
    %vm2258 = vmor %vm2256, %vm2257
    %v2259 = vsel %vm2258, %v2251, %v2255
    %v2260 = vand.u32 2147483647, %v2250
    %vm2261 = vcmp.eq.f32.partialorder %v2260, 8.507059e+37
    %v2262 = vand.u32 %v2250, 2147483648
    %v2263 = vor.u32 1.1754944e-38, %v2262
    %v2264 = vsel %vm2261, %v2263, %v2259
    %v2265 = vmul.f32 1.0, %v2264
    %v2267 = vrot.slane %v1879, 7
    %v2269 = vmul.f32 %v2245, %v2267
    %v2270 = vmul.f32 %v2226, %v2246
    %v2271 = vadd.f32 %v2269, %v2270
    %v2272 = vtanh.pop %v2271
    %v2273 = vmul.f32 %v2265, %v2272
    %2274 = vmatpush.msra.mxu0 %v319
    %2275 = vmatpush.msra.mxu0 %v315
    %2276 = vmatpush.msra.mxu0 %v311
    %2277 = vmatpush.msra.mxu0 %v307
    %2278 = vmatpush.msra.mxu0 %v303
    %2279 = vmatpush.msra.mxu0 %v299
    %2280 = vmatpush.msra.mxu0 %v295
    %2281 = vmatpush.msra.mxu0 %v291
    %2282 = vmatpush.msra.mxu0 %v287
    %2283 = vmatpush.msra.mxu0 %v283
    %2284 = vmatpush.msra.mxu0 %v279
    %2285 = vmatpush.msra.mxu0 %v275
    %2286 = vmatpush.msra.mxu0 %v271
    %2287 = vmatpush.msra.mxu0 %v267
    %2288 = vmatpush.msra.mxu0 %v263
    %2289 = vmatpush.msra.mxu0 %v259
    %2290 = vmatmul.f32.gmra.mxu0 %v2110
    %v2291 = vpop.f32.mrf.mxu0
    %v2292 = vadd.f32 %v698, %v2291
    %2293 = vdwg.mxu0
    %2294 = vmatpush.msra.mxu0 %v320
    %2295 = vmatpush.msra.mxu0 %v316
    %2296 = vmatpush.msra.mxu0 %v312
    %2297 = vmatpush.msra.mxu0 %v308
    %2298 = vmatpush.msra.mxu0 %v304
    %2299 = vmatpush.msra.mxu0 %v300
    %2300 = vmatpush.msra.mxu0 %v296
    %2301 = vmatpush.msra.mxu0 %v292
    %2302 = vmatpush.msra.mxu0 %v288
    %2303 = vmatpush.msra.mxu0 %v284
    %2304 = vmatpush.msra.mxu0 %v280
    %2305 = vmatpush.msra.mxu0 %v276
    %2306 = vmatpush.msra.mxu0 %v272
    %2307 = vmatpush.msra.mxu0 %v268
    %2308 = vmatpush.msra.mxu0 %v264
    %2309 = vmatpush.msra.mxu0 %v260
    %2310 = vmatmul.f32.gmra.mxu0 %v2110
    %v2311 = vpop.f32.mrf.mxu0
    %v2312 = vadd.f32 %v699, %v2311
    %2313 = vdwg.mxu0
    %2314 = vmatpush.msra.mxu0 %v321
    %2315 = vmatpush.msra.mxu0 %v317
    %2316 = vmatpush.msra.mxu0 %v313
    %2317 = vmatpush.msra.mxu0 %v309
    %2318 = vmatpush.msra.mxu0 %v305
    %2319 = vmatpush.msra.mxu0 %v301
    %2320 = vmatpush.msra.mxu0 %v297
    %2321 = vmatpush.msra.mxu0 %v293
    %2322 = vmatpush.msra.mxu0 %v289
    %2323 = vmatpush.msra.mxu0 %v285
    %2324 = vmatpush.msra.mxu0 %v281
    %2325 = vmatpush.msra.mxu0 %v277
    %2326 = vmatpush.msra.mxu0 %v273
    %2327 = vmatpush.msra.mxu0 %v269
    %2328 = vmatpush.msra.mxu0 %v265
    %2329 = vmatpush.msra.mxu0 %v261
    %2330 = vmatmul.f32.gmra.mxu0 %v2110
    %v2331 = vpop.f32.mrf.mxu0
    %v2332 = vadd.f32 %v700, %v2331
    %2333 = vdwg.mxu0
    %2334 = vmatpush.msra.mxu0 %v322
    %2335 = vmatpush.msra.mxu0 %v318
    %2336 = vmatpush.msra.mxu0 %v314
    %2337 = vmatpush.msra.mxu0 %v310
    %2338 = vmatpush.msra.mxu0 %v306
    %2339 = vmatpush.msra.mxu0 %v302
    %2340 = vmatpush.msra.mxu0 %v298
    %2341 = vmatpush.msra.mxu0 %v294
    %2342 = vmatpush.msra.mxu0 %v290
    %2343 = vmatpush.msra.mxu0 %v286
    %2344 = vmatpush.msra.mxu0 %v282
    %2345 = vmatpush.msra.mxu0 %v278
    %2346 = vmatpush.msra.mxu0 %v274
    %2347 = vmatpush.msra.mxu0 %v270
    %2348 = vmatpush.msra.mxu0 %v266
    %2349 = vmatpush.msra.mxu0 %v262
    %2350 = vmatmul.f32.gmra.mxu0 %v2110
    %v2351 = vpop.f32.mrf.mxu0
    %v2352 = vadd.f32 %v701, %v2351
    %2353 = vdwg.mxu0
    %2354 = vmatpush.msra.mxu0 %v384
    %2355 = vmatpush.msra.mxu0 %v380
    %2356 = vmatpush.msra.mxu0 %v376
    %2357 = vmatpush.msra.mxu0 %v372
    %2358 = vmatpush.msra.mxu0 %v368
    %2359 = vmatpush.msra.mxu0 %v364
    %2360 = vmatpush.msra.mxu0 %v360
    %2361 = vmatpush.msra.mxu0 %v356
    %2362 = vmatpush.msra.mxu0 %v352
    %2363 = vmatpush.msra.mxu0 %v348
    %2364 = vmatpush.msra.mxu0 %v344
    %2365 = vmatpush.msra.mxu0 %v340
    %2366 = vmatpush.msra.mxu0 %v336
    %2367 = vmatpush.msra.mxu0 %v332
    %2368 = vmatpush.msra.mxu0 %v328
    %2369 = vmatpush.msra.mxu0 %v324
    %2370 = vmatmul.f32.gmra.mxu0 %v2108
    %v2371 = vpop.f32.mrf.mxu0
    %v2372 = vadd.f32 0.0, %v2371
    %2373 = vdwg.mxu0
    %2374 = vmatpush.msra.mxu0 %v385
    %2375 = vmatpush.msra.mxu0 %v381
    %2376 = vmatpush.msra.mxu0 %v377
    %2377 = vmatpush.msra.mxu0 %v373
    %2378 = vmatpush.msra.mxu0 %v369
    %2379 = vmatpush.msra.mxu0 %v365
    %2380 = vmatpush.msra.mxu0 %v361
    %2381 = vmatpush.msra.mxu0 %v357
    %2382 = vmatpush.msra.mxu0 %v353
    %2383 = vmatpush.msra.mxu0 %v349
    %2384 = vmatpush.msra.mxu0 %v345
    %2385 = vmatpush.msra.mxu0 %v341
    %2386 = vmatpush.msra.mxu0 %v337
    %2387 = vmatpush.msra.mxu0 %v333
    %2388 = vmatpush.msra.mxu0 %v329
    %2389 = vmatpush.msra.mxu0 %v325
    %2390 = vmatmul.f32.gmra.mxu0 %v2108
    %v2391 = vpop.f32.mrf.mxu0
    %v2392 = vadd.f32 0.0, %v2391
    %2393 = vdwg.mxu0
    %2394 = vmatpush.msra.mxu0 %v386
    %2395 = vmatpush.msra.mxu0 %v382
    %2396 = vmatpush.msra.mxu0 %v378
    %2397 = vmatpush.msra.mxu0 %v374
    %2398 = vmatpush.msra.mxu0 %v370
    %2399 = vmatpush.msra.mxu0 %v366
    %2400 = vmatpush.msra.mxu0 %v362
    %2401 = vmatpush.msra.mxu0 %v358
    %2402 = vmatpush.msra.mxu0 %v354
    %2403 = vmatpush.msra.mxu0 %v350
    %2404 = vmatpush.msra.mxu0 %v346
    %2405 = vmatpush.msra.mxu0 %v342
    %2406 = vmatpush.msra.mxu0 %v338
    %2407 = vmatpush.msra.mxu0 %v334
    %2408 = vmatpush.msra.mxu0 %v330
    %2409 = vmatpush.msra.mxu0 %v326
    %2410 = vmatmul.f32.gmra.mxu0 %v2108
    %v2411 = vpop.f32.mrf.mxu0
    %v2412 = vadd.f32 0.0, %v2411
    %2413 = vdwg.mxu0
    %2414 = vmatpush.msra.mxu0 %v387
    %2415 = vmatpush.msra.mxu0 %v383
    %2416 = vmatpush.msra.mxu0 %v379
    %2417 = vmatpush.msra.mxu0 %v375
    %2418 = vmatpush.msra.mxu0 %v371
    %2419 = vmatpush.msra.mxu0 %v367
    %2420 = vmatpush.msra.mxu0 %v363
    %2421 = vmatpush.msra.mxu0 %v359
    %2422 = vmatpush.msra.mxu0 %v355
    %2423 = vmatpush.msra.mxu0 %v351
    %2424 = vmatpush.msra.mxu0 %v347
    %2425 = vmatpush.msra.mxu0 %v343
    %2426 = vmatpush.msra.mxu0 %v339
    %2427 = vmatpush.msra.mxu0 %v335
    %2428 = vmatpush.msra.mxu0 %v331
    %2429 = vmatpush.msra.mxu0 %v327
    %2430 = vmatmul.f32.gmra.mxu0 %v2108
    %v2431 = vpop.f32.mrf.mxu0
    %v2432 = vadd.f32 0.0, %v2431
    %2433 = vdwg.mxu0
    %v2434 = vadd.f32 %v2292, %v2372
    %v2435 = vadd.f32 %v2312, %v2392
    %v2436 = vadd.f32 %v2332, %v2412
    %v2437 = vadd.f32 %v2352, %v2432
    %v2438 = vxor.u32 %v2434, 2147483648
    %v2439 = vmul.f32 %v2438, 1.442695
    %v2440 = vpow.pop %v2439
    %v2441 = vadd.f32 %v2440, 1.0
    %v2442 = vrcp.pop %v2441
    %v2443 = vmul.f32 %v2441, %v2442
    %v2444 = vsub.f32 1.0, %v2443
    %v2445 = vmul.f32 %v2442, %v2444
    %v2446 = vadd.f32 %v2442, %v2445
    %vm2447 = vweird.f32 %v2441
    %vm2448 = vweird.f32 %v2442
    %vm2449 = vmor %vm2447, %vm2448
    %v2450 = vsel %vm2449, %v2442, %v2446
    %v2451 = vand.u32 2147483647, %v2441
    %vm2452 = vcmp.eq.f32.partialorder %v2451, 8.507059e+37
    %v2453 = vand.u32 %v2441, 2147483648
    %v2454 = vor.u32 1.1754944e-38, %v2453
    %v2455 = vsel %vm2452, %v2454, %v2450
    %v2456 = vmul.f32 1.0, %v2455
    %v2457 = vxor.u32 %v2435, 2147483648
    %v2458 = vmul.f32 %v2457, 1.442695
    %v2459 = vpow.pop %v2458
    %v2460 = vadd.f32 %v2459, 1.0
    %v2461 = vrcp.pop %v2460
    %v2462 = vmul.f32 %v2460, %v2461
    %v2463 = vsub.f32 1.0, %v2462
    %v2464 = vmul.f32 %v2461, %v2463
    %v2465 = vadd.f32 %v2461, %v2464
    %vm2466 = vweird.f32 %v2460
    %vm2467 = vweird.f32 %v2461
    %vm2468 = vmor %vm2466, %vm2467
    %v2469 = vsel %vm2468, %v2461, %v2465
    %v2470 = vand.u32 2147483647, %v2460
    %vm2471 = vcmp.eq.f32.partialorder %v2470, 8.507059e+37
    %v2472 = vand.u32 %v2460, 2147483648
    %v2473 = vor.u32 1.1754944e-38, %v2472
    %v2474 = vsel %vm2471, %v2473, %v2469
    %v2475 = vmul.f32 1.0, %v2474
    %v2476 = vtanh.pop %v2436
    %v2477 = vxor.u32 %v2437, 2147483648
    %v2478 = vmul.f32 %v2477, 1.442695
    %v2479 = vpow.pop %v2478
    %v2480 = vadd.f32 %v2479, 1.0
    %v2481 = vrcp.pop %v2480
    %v2482 = vmul.f32 %v2480, %v2481
    %v2483 = vsub.f32 1.0, %v2482
    %v2484 = vmul.f32 %v2481, %v2483
    %v2485 = vadd.f32 %v2481, %v2484
    %vm2486 = vweird.f32 %v2480
    %vm2487 = vweird.f32 %v2481
    %vm2488 = vmor %vm2486, %vm2487
    %v2489 = vsel %vm2488, %v2481, %v2485
    %v2490 = vand.u32 2147483647, %v2480
    %vm2491 = vcmp.eq.f32.partialorder %v2490, 8.507059e+37
    %v2492 = vand.u32 %v2480, 2147483648
    %v2493 = vor.u32 1.1754944e-38, %v2492
    %v2494 = vsel %vm2491, %v2493, %v2489
    %v2495 = vmul.f32 1.0, %v2494
    %v2496 = vmul.f32 %v2475, %v2106
    %v2497 = vmul.f32 %v2456, %v2476
    %v2498 = vadd.f32 %v2496, %v2497
    %v2499 = vtanh.pop %v2498
    %v2500 = vmul.f32 %v2495, %v2499
    %v2502 = vrot.slane %v2273, 5
    %2504 = vmatpush.msra.mxu0 %v255
    %2505 = vmatpush.msra.mxu0 %v251
    %2506 = vmatpush.msra.mxu0 %v247
    %2507 = vmatpush.msra.mxu0 %v243
    %2508 = vmatpush.msra.mxu0 %v239
    %2509 = vmatpush.msra.mxu0 %v235
    %2510 = vmatpush.msra.mxu0 %v231
    %2511 = vmatpush.msra.mxu0 %v227
    %2512 = vmatpush.msra.mxu0 %v223
    %2513 = vmatpush.msra.mxu0 %v219
    %2514 = vmatpush.msra.mxu0 %v215
    %2515 = vmatpush.msra.mxu0 %v211
    %2516 = vmatpush.msra.mxu0 %v207
    %2517 = vmatpush.msra.mxu0 %v203
    %2518 = vmatpush.msra.mxu0 %v199
    %2519 = vmatpush.msra.mxu0 %v195
    %2520 = vmatmul.f32.gmra.mxu0 %v2502
    %v2521 = vpop.f32.mrf.mxu0
    %v2522 = vadd.f32 0.0, %v2521
    %2523 = vdwg.mxu0
    %2524 = vmatpush.msra.mxu0 %v256
    %2525 = vmatpush.msra.mxu0 %v252
    %2526 = vmatpush.msra.mxu0 %v248
    %2527 = vmatpush.msra.mxu0 %v244
    %2528 = vmatpush.msra.mxu0 %v240
    %2529 = vmatpush.msra.mxu0 %v236
    %2530 = vmatpush.msra.mxu0 %v232
    %2531 = vmatpush.msra.mxu0 %v228
    %2532 = vmatpush.msra.mxu0 %v224
    %2533 = vmatpush.msra.mxu0 %v220
    %2534 = vmatpush.msra.mxu0 %v216
    %2535 = vmatpush.msra.mxu0 %v212
    %2536 = vmatpush.msra.mxu0 %v208
    %2537 = vmatpush.msra.mxu0 %v204
    %2538 = vmatpush.msra.mxu0 %v200
    %2539 = vmatpush.msra.mxu0 %v196
    %2540 = vmatmul.f32.gmra.mxu0 %v2502
    %v2541 = vpop.f32.mrf.mxu0
    %v2542 = vadd.f32 0.0, %v2541
    %2543 = vdwg.mxu0
    %2544 = vmatpush.msra.mxu0 %v257
    %2545 = vmatpush.msra.mxu0 %v253
    %2546 = vmatpush.msra.mxu0 %v249
    %2547 = vmatpush.msra.mxu0 %v245
    %2548 = vmatpush.msra.mxu0 %v241
    %2549 = vmatpush.msra.mxu0 %v237
    %2550 = vmatpush.msra.mxu0 %v233
    %2551 = vmatpush.msra.mxu0 %v229
    %2552 = vmatpush.msra.mxu0 %v225
    %2553 = vmatpush.msra.mxu0 %v221
    %2554 = vmatpush.msra.mxu0 %v217
    %2555 = vmatpush.msra.mxu0 %v213
    %2556 = vmatpush.msra.mxu0 %v209
    %2557 = vmatpush.msra.mxu0 %v205
    %2558 = vmatpush.msra.mxu0 %v201
    %2559 = vmatpush.msra.mxu0 %v197
    %2560 = vmatmul.f32.gmra.mxu0 %v2502
    %v2561 = vpop.f32.mrf.mxu0
    %v2562 = vadd.f32 0.0, %v2561
    %2563 = vdwg.mxu0
    %2564 = vmatpush.msra.mxu0 %v258
    %2565 = vmatpush.msra.mxu0 %v254
    %2566 = vmatpush.msra.mxu0 %v250
    %2567 = vmatpush.msra.mxu0 %v246
    %2568 = vmatpush.msra.mxu0 %v242
    %2569 = vmatpush.msra.mxu0 %v238
    %2570 = vmatpush.msra.mxu0 %v234
    %2571 = vmatpush.msra.mxu0 %v230
    %2572 = vmatpush.msra.mxu0 %v226
    %2573 = vmatpush.msra.mxu0 %v222
    %2574 = vmatpush.msra.mxu0 %v218
    %2575 = vmatpush.msra.mxu0 %v214
    %2576 = vmatpush.msra.mxu0 %v210
    %2577 = vmatpush.msra.mxu0 %v206
    %2578 = vmatpush.msra.mxu0 %v202
    %2579 = vmatpush.msra.mxu0 %v198
    %2580 = vmatmul.f32.gmra.mxu0 %v2502
    %v2581 = vpop.f32.mrf.mxu0
    %v2582 = vadd.f32 0.0, %v2581
    %2583 = vdwg.mxu0
    %v2588 = vrot.slane %v2522, 2
    %v2589 = vrot.slane %v2542, 2
    %v2590 = vrot.slane %v2562, 2
    %v2591 = vrot.slane %v2582, 2
    %v2596 = vadd.f32 %v191, %v2588
    %v2597 = vadd.f32 %v192, %v2589
    %v2598 = vadd.f32 %v193, %v2590
    %v2599 = vadd.f32 %v194, %v2591
    %v2600 = vxor.u32 %v2596, 2147483648
    %v2601 = vmul.f32 %v2600, 1.442695
    %v2602 = vpow.pop %v2601
    %v2603 = vadd.f32 %v2602, 1.0
    %v2604 = vrcp.pop %v2603
    %v2605 = vmul.f32 %v2603, %v2604
    %v2606 = vsub.f32 1.0, %v2605
    %v2607 = vmul.f32 %v2604, %v2606
    %v2608 = vadd.f32 %v2604, %v2607
    %vm2609 = vweird.f32 %v2603
    %vm2610 = vweird.f32 %v2604
    %vm2611 = vmor %vm2609, %vm2610
    %v2612 = vsel %vm2611, %v2604, %v2608
    %v2613 = vand.u32 2147483647, %v2603
    %vm2614 = vcmp.eq.f32.partialorder %v2613, 8.507059e+37
    %v2615 = vand.u32 %v2603, 2147483648
    %v2616 = vor.u32 1.1754944e-38, %v2615
    %v2617 = vsel %vm2614, %v2616, %v2612
    %v2618 = vmul.f32 1.0, %v2617
    %v2619 = vxor.u32 %v2597, 2147483648
    %v2620 = vmul.f32 %v2619, 1.442695
    %v2621 = vpow.pop %v2620
    %v2622 = vadd.f32 %v2621, 1.0
    %v2623 = vrcp.pop %v2622
    %v2624 = vmul.f32 %v2622, %v2623
    %v2625 = vsub.f32 1.0, %v2624
    %v2626 = vmul.f32 %v2623, %v2625
    %v2627 = vadd.f32 %v2623, %v2626
    %vm2628 = vweird.f32 %v2622
    %vm2629 = vweird.f32 %v2623
    %vm2630 = vmor %vm2628, %vm2629
    %v2631 = vsel %vm2630, %v2623, %v2627
    %v2632 = vand.u32 2147483647, %v2622
    %vm2633 = vcmp.eq.f32.partialorder %v2632, 8.507059e+37
    %v2634 = vand.u32 %v2622, 2147483648
    %v2635 = vor.u32 1.1754944e-38, %v2634
    %v2636 = vsel %vm2633, %v2635, %v2631
    %v2637 = vmul.f32 1.0, %v2636
    %v2638 = vtanh.pop %v2598
    %v2639 = vxor.u32 %v2599, 2147483648
    %v2640 = vmul.f32 %v2639, 1.442695
    %v2641 = vpow.pop %v2640
    %v2642 = vadd.f32 %v2641, 1.0
    %v2643 = vrcp.pop %v2642
    %v2644 = vmul.f32 %v2642, %v2643
    %v2645 = vsub.f32 1.0, %v2644
    %v2646 = vmul.f32 %v2643, %v2645
    %v2647 = vadd.f32 %v2643, %v2646
    %vm2648 = vweird.f32 %v2642
    %vm2649 = vweird.f32 %v2643
    %vm2650 = vmor %vm2648, %vm2649
    %v2651 = vsel %vm2650, %v2643, %v2647
    %v2652 = vand.u32 2147483647, %v2642
    %vm2653 = vcmp.eq.f32.partialorder %v2652, 8.507059e+37
    %v2654 = vand.u32 %v2642, 2147483648
    %v2655 = vor.u32 1.1754944e-38, %v2654
    %v2656 = vsel %vm2653, %v2655, %v2651
    %v2657 = vmul.f32 1.0, %v2656
    %v2659 = vrot.slane %v2271, 7
    %v2661 = vmul.f32 %v2637, %v2659
    %v2662 = vmul.f32 %v2618, %v2638
    %v2663 = vadd.f32 %v2661, %v2662
    %v2664 = vtanh.pop %v2663
    %v2665 = vmul.f32 %v2657, %v2664
    %2666 = vmatpush.msra.mxu0 %v319
    %2667 = vmatpush.msra.mxu0 %v315
    %2668 = vmatpush.msra.mxu0 %v311
    %2669 = vmatpush.msra.mxu0 %v307
    %2670 = vmatpush.msra.mxu0 %v303
    %2671 = vmatpush.msra.mxu0 %v299
    %2672 = vmatpush.msra.mxu0 %v295
    %2673 = vmatpush.msra.mxu0 %v291
    %2674 = vmatpush.msra.mxu0 %v287
    %2675 = vmatpush.msra.mxu0 %v283
    %2676 = vmatpush.msra.mxu0 %v279
    %2677 = vmatpush.msra.mxu0 %v275
    %2678 = vmatpush.msra.mxu0 %v271
    %2679 = vmatpush.msra.mxu0 %v267
    %2680 = vmatpush.msra.mxu0 %v263
    %2681 = vmatpush.msra.mxu0 %v259
    %2682 = vmatmul.f32.gmra.mxu0 %v2502
    %v2683 = vpop.f32.mrf.mxu0
    %v2684 = vadd.f32 %v698, %v2683
    %2685 = vdwg.mxu0
    %2686 = vmatpush.msra.mxu0 %v320
    %2687 = vmatpush.msra.mxu0 %v316
    %2688 = vmatpush.msra.mxu0 %v312
    %2689 = vmatpush.msra.mxu0 %v308
    %2690 = vmatpush.msra.mxu0 %v304
    %2691 = vmatpush.msra.mxu0 %v300
    %2692 = vmatpush.msra.mxu0 %v296
    %2693 = vmatpush.msra.mxu0 %v292
    %2694 = vmatpush.msra.mxu0 %v288
    %2695 = vmatpush.msra.mxu0 %v284
    %2696 = vmatpush.msra.mxu0 %v280
    %2697 = vmatpush.msra.mxu0 %v276
    %2698 = vmatpush.msra.mxu0 %v272
    %2699 = vmatpush.msra.mxu0 %v268
    %2700 = vmatpush.msra.mxu0 %v264
    %2701 = vmatpush.msra.mxu0 %v260
    %2702 = vmatmul.f32.gmra.mxu0 %v2502
    %v2703 = vpop.f32.mrf.mxu0
    %v2704 = vadd.f32 %v699, %v2703
    %2705 = vdwg.mxu0
    %2706 = vmatpush.msra.mxu0 %v321
    %2707 = vmatpush.msra.mxu0 %v317
    %2708 = vmatpush.msra.mxu0 %v313
    %2709 = vmatpush.msra.mxu0 %v309
    %2710 = vmatpush.msra.mxu0 %v305
    %2711 = vmatpush.msra.mxu0 %v301
    %2712 = vmatpush.msra.mxu0 %v297
    %2713 = vmatpush.msra.mxu0 %v293
    %2714 = vmatpush.msra.mxu0 %v289
    %2715 = vmatpush.msra.mxu0 %v285
    %2716 = vmatpush.msra.mxu0 %v281
    %2717 = vmatpush.msra.mxu0 %v277
    %2718 = vmatpush.msra.mxu0 %v273
    %2719 = vmatpush.msra.mxu0 %v269
    %2720 = vmatpush.msra.mxu0 %v265
    %2721 = vmatpush.msra.mxu0 %v261
    %2722 = vmatmul.f32.gmra.mxu0 %v2502
    %v2723 = vpop.f32.mrf.mxu0
    %v2724 = vadd.f32 %v700, %v2723
    %2725 = vdwg.mxu0
    %2726 = vmatpush.msra.mxu0 %v322
    %2727 = vmatpush.msra.mxu0 %v318
    %2728 = vmatpush.msra.mxu0 %v314
    %2729 = vmatpush.msra.mxu0 %v310
    %2730 = vmatpush.msra.mxu0 %v306
    %2731 = vmatpush.msra.mxu0 %v302
    %2732 = vmatpush.msra.mxu0 %v298
    %2733 = vmatpush.msra.mxu0 %v294
    %2734 = vmatpush.msra.mxu0 %v290
    %2735 = vmatpush.msra.mxu0 %v286
    %2736 = vmatpush.msra.mxu0 %v282
    %2737 = vmatpush.msra.mxu0 %v278
    %2738 = vmatpush.msra.mxu0 %v274
    %2739 = vmatpush.msra.mxu0 %v270
    %2740 = vmatpush.msra.mxu0 %v266
    %2741 = vmatpush.msra.mxu0 %v262
    %2742 = vmatmul.f32.gmra.mxu0 %v2502
    %v2743 = vpop.f32.mrf.mxu0
    %v2744 = vadd.f32 %v701, %v2743
    %2745 = vdwg.mxu0
    %2746 = vmatpush.msra.mxu0 %v384
    %2747 = vmatpush.msra.mxu0 %v380
    %2748 = vmatpush.msra.mxu0 %v376
    %2749 = vmatpush.msra.mxu0 %v372
    %2750 = vmatpush.msra.mxu0 %v368
    %2751 = vmatpush.msra.mxu0 %v364
    %2752 = vmatpush.msra.mxu0 %v360
    %2753 = vmatpush.msra.mxu0 %v356
    %2754 = vmatpush.msra.mxu0 %v352
    %2755 = vmatpush.msra.mxu0 %v348
    %2756 = vmatpush.msra.mxu0 %v344
    %2757 = vmatpush.msra.mxu0 %v340
    %2758 = vmatpush.msra.mxu0 %v336
    %2759 = vmatpush.msra.mxu0 %v332
    %2760 = vmatpush.msra.mxu0 %v328
    %2761 = vmatpush.msra.mxu0 %v324
    %2762 = vmatmul.f32.gmra.mxu0 %v2500
    %v2763 = vpop.f32.mrf.mxu0
    %v2764 = vadd.f32 0.0, %v2763
    %2765 = vdwg.mxu0
    %2766 = vmatpush.msra.mxu0 %v385
    %2767 = vmatpush.msra.mxu0 %v381
    %2768 = vmatpush.msra.mxu0 %v377
    %2769 = vmatpush.msra.mxu0 %v373
    %2770 = vmatpush.msra.mxu0 %v369
    %2771 = vmatpush.msra.mxu0 %v365
    %2772 = vmatpush.msra.mxu0 %v361
    %2773 = vmatpush.msra.mxu0 %v357
    %2774 = vmatpush.msra.mxu0 %v353
    %2775 = vmatpush.msra.mxu0 %v349
    %2776 = vmatpush.msra.mxu0 %v345
    %2777 = vmatpush.msra.mxu0 %v341
    %2778 = vmatpush.msra.mxu0 %v337
    %2779 = vmatpush.msra.mxu0 %v333
    %2780 = vmatpush.msra.mxu0 %v329
    %2781 = vmatpush.msra.mxu0 %v325
    %2782 = vmatmul.f32.gmra.mxu0 %v2500
    %v2783 = vpop.f32.mrf.mxu0
    %v2784 = vadd.f32 0.0, %v2783
    %2785 = vdwg.mxu0
    %2786 = vmatpush.msra.mxu0 %v386
    %2787 = vmatpush.msra.mxu0 %v382
    %2788 = vmatpush.msra.mxu0 %v378
    %2789 = vmatpush.msra.mxu0 %v374
    %2790 = vmatpush.msra.mxu0 %v370
    %2791 = vmatpush.msra.mxu0 %v366
    %2792 = vmatpush.msra.mxu0 %v362
    %2793 = vmatpush.msra.mxu0 %v358
    %2794 = vmatpush.msra.mxu0 %v354
    %2795 = vmatpush.msra.mxu0 %v350
    %2796 = vmatpush.msra.mxu0 %v346
    %2797 = vmatpush.msra.mxu0 %v342
    %2798 = vmatpush.msra.mxu0 %v338
    %2799 = vmatpush.msra.mxu0 %v334
    %2800 = vmatpush.msra.mxu0 %v330
    %2801 = vmatpush.msra.mxu0 %v326
    %2802 = vmatmul.f32.gmra.mxu0 %v2500
    %v2803 = vpop.f32.mrf.mxu0
    %v2804 = vadd.f32 0.0, %v2803
    %2805 = vdwg.mxu0
    %2806 = vmatpush.msra.mxu0 %v387
    %2807 = vmatpush.msra.mxu0 %v383
    %2808 = vmatpush.msra.mxu0 %v379
    %2809 = vmatpush.msra.mxu0 %v375
    %2810 = vmatpush.msra.mxu0 %v371
    %2811 = vmatpush.msra.mxu0 %v367
    %2812 = vmatpush.msra.mxu0 %v363
    %2813 = vmatpush.msra.mxu0 %v359
    %2814 = vmatpush.msra.mxu0 %v355
    %2815 = vmatpush.msra.mxu0 %v351
    %2816 = vmatpush.msra.mxu0 %v347
    %2817 = vmatpush.msra.mxu0 %v343
    %2818 = vmatpush.msra.mxu0 %v339
    %2819 = vmatpush.msra.mxu0 %v335
    %2820 = vmatpush.msra.mxu0 %v331
    %2821 = vmatpush.msra.mxu0 %v327
    %2822 = vmatmul.f32.gmra.mxu0 %v2500
    %v2823 = vpop.f32.mrf.mxu0
    %v2824 = vadd.f32 0.0, %v2823
    %2825 = vdwg.mxu0
    %v2826 = vadd.f32 %v2684, %v2764
    %v2827 = vadd.f32 %v2704, %v2784
    %v2828 = vadd.f32 %v2724, %v2804
    %v2829 = vadd.f32 %v2744, %v2824
    %v2830 = vxor.u32 %v2826, 2147483648
    %v2831 = vmul.f32 %v2830, 1.442695
    %v2832 = vpow.pop %v2831
    %v2833 = vadd.f32 %v2832, 1.0
    %v2834 = vrcp.pop %v2833
    %v2835 = vmul.f32 %v2833, %v2834
    %v2836 = vsub.f32 1.0, %v2835
    %v2837 = vmul.f32 %v2834, %v2836
    %v2838 = vadd.f32 %v2834, %v2837
    %vm2839 = vweird.f32 %v2833
    %vm2840 = vweird.f32 %v2834
    %vm2841 = vmor %vm2839, %vm2840
    %v2842 = vsel %vm2841, %v2834, %v2838
    %v2843 = vand.u32 2147483647, %v2833
    %vm2844 = vcmp.eq.f32.partialorder %v2843, 8.507059e+37
    %v2845 = vand.u32 %v2833, 2147483648
    %v2846 = vor.u32 1.1754944e-38, %v2845
    %v2847 = vsel %vm2844, %v2846, %v2842
    %v2848 = vmul.f32 1.0, %v2847
    %v2849 = vxor.u32 %v2827, 2147483648
    %v2850 = vmul.f32 %v2849, 1.442695
    %v2851 = vpow.pop %v2850
    %v2852 = vadd.f32 %v2851, 1.0
    %v2853 = vrcp.pop %v2852
    %v2854 = vmul.f32 %v2852, %v2853
    %v2855 = vsub.f32 1.0, %v2854
    %v2856 = vmul.f32 %v2853, %v2855
    %v2857 = vadd.f32 %v2853, %v2856
    %vm2858 = vweird.f32 %v2852
    %vm2859 = vweird.f32 %v2853
    %vm2860 = vmor %vm2858, %vm2859
    %v2861 = vsel %vm2860, %v2853, %v2857
    %v2862 = vand.u32 2147483647, %v2852
    %vm2863 = vcmp.eq.f32.partialorder %v2862, 8.507059e+37
    %v2864 = vand.u32 %v2852, 2147483648
    %v2865 = vor.u32 1.1754944e-38, %v2864
    %v2866 = vsel %vm2863, %v2865, %v2861
    %v2867 = vmul.f32 1.0, %v2866
    %v2868 = vtanh.pop %v2828
    %v2869 = vxor.u32 %v2829, 2147483648
    %v2870 = vmul.f32 %v2869, 1.442695
    %v2871 = vpow.pop %v2870
    %v2872 = vadd.f32 %v2871, 1.0
    %v2873 = vrcp.pop %v2872
    %v2874 = vmul.f32 %v2872, %v2873
    %v2875 = vsub.f32 1.0, %v2874
    %v2876 = vmul.f32 %v2873, %v2875
    %v2877 = vadd.f32 %v2873, %v2876
    %vm2878 = vweird.f32 %v2872
    %vm2879 = vweird.f32 %v2873
    %vm2880 = vmor %vm2878, %vm2879
    %v2881 = vsel %vm2880, %v2873, %v2877
    %v2882 = vand.u32 2147483647, %v2872
    %vm2883 = vcmp.eq.f32.partialorder %v2882, 8.507059e+37
    %v2884 = vand.u32 %v2872, 2147483648
    %v2885 = vor.u32 1.1754944e-38, %v2884
    %v2886 = vsel %vm2883, %v2885, %v2881
    %v2887 = vmul.f32 1.0, %v2886
    %v2888 = vmul.f32 %v2867, %v2498
    %v2889 = vmul.f32 %v2848, %v2868
    %v2890 = vadd.f32 %v2888, %v2889
    %v2891 = vtanh.pop %v2890
    %v2892 = vmul.f32 %v2887, %v2891
    %v2894 = vrot.slane %v2665, 6
    %2896 = vmatpush.msra.mxu0 %v255
    %2897 = vmatpush.msra.mxu0 %v251
    %2898 = vmatpush.msra.mxu0 %v247
    %2899 = vmatpush.msra.mxu0 %v243
    %2900 = vmatpush.msra.mxu0 %v239
    %2901 = vmatpush.msra.mxu0 %v235
    %2902 = vmatpush.msra.mxu0 %v231
    %2903 = vmatpush.msra.mxu0 %v227
    %2904 = vmatpush.msra.mxu0 %v223
    %2905 = vmatpush.msra.mxu0 %v219
    %2906 = vmatpush.msra.mxu0 %v215
    %2907 = vmatpush.msra.mxu0 %v211
    %2908 = vmatpush.msra.mxu0 %v207
    %2909 = vmatpush.msra.mxu0 %v203
    %2910 = vmatpush.msra.mxu0 %v199
    %2911 = vmatpush.msra.mxu0 %v195
    %2912 = vmatmul.f32.gmra.mxu0 %v2894
    %v2913 = vpop.f32.mrf.mxu0
    %v2914 = vadd.f32 0.0, %v2913
    %2915 = vdwg.mxu0
    %2916 = vmatpush.msra.mxu0 %v256
    %2917 = vmatpush.msra.mxu0 %v252
    %2918 = vmatpush.msra.mxu0 %v248
    %2919 = vmatpush.msra.mxu0 %v244
    %2920 = vmatpush.msra.mxu0 %v240
    %2921 = vmatpush.msra.mxu0 %v236
    %2922 = vmatpush.msra.mxu0 %v232
    %2923 = vmatpush.msra.mxu0 %v228
    %2924 = vmatpush.msra.mxu0 %v224
    %2925 = vmatpush.msra.mxu0 %v220
    %2926 = vmatpush.msra.mxu0 %v216
    %2927 = vmatpush.msra.mxu0 %v212
    %2928 = vmatpush.msra.mxu0 %v208
    %2929 = vmatpush.msra.mxu0 %v204
    %2930 = vmatpush.msra.mxu0 %v200
    %2931 = vmatpush.msra.mxu0 %v196
    %2932 = vmatmul.f32.gmra.mxu0 %v2894
    %v2933 = vpop.f32.mrf.mxu0
    %v2934 = vadd.f32 0.0, %v2933
    %2935 = vdwg.mxu0
    %2936 = vmatpush.msra.mxu0 %v257
    %2937 = vmatpush.msra.mxu0 %v253
    %2938 = vmatpush.msra.mxu0 %v249
    %2939 = vmatpush.msra.mxu0 %v245
    %2940 = vmatpush.msra.mxu0 %v241
    %2941 = vmatpush.msra.mxu0 %v237
    %2942 = vmatpush.msra.mxu0 %v233
    %2943 = vmatpush.msra.mxu0 %v229
    %2944 = vmatpush.msra.mxu0 %v225
    %2945 = vmatpush.msra.mxu0 %v221
    %2946 = vmatpush.msra.mxu0 %v217
    %2947 = vmatpush.msra.mxu0 %v213
    %2948 = vmatpush.msra.mxu0 %v209
    %2949 = vmatpush.msra.mxu0 %v205
    %2950 = vmatpush.msra.mxu0 %v201
    %2951 = vmatpush.msra.mxu0 %v197
    %2952 = vmatmul.f32.gmra.mxu0 %v2894
    %v2953 = vpop.f32.mrf.mxu0
    %v2954 = vadd.f32 0.0, %v2953
    %2955 = vdwg.mxu0
    %2956 = vmatpush.msra.mxu0 %v258
    %2957 = vmatpush.msra.mxu0 %v254
    %2958 = vmatpush.msra.mxu0 %v250
    %2959 = vmatpush.msra.mxu0 %v246
    %2960 = vmatpush.msra.mxu0 %v242
    %2961 = vmatpush.msra.mxu0 %v238
    %2962 = vmatpush.msra.mxu0 %v234
    %2963 = vmatpush.msra.mxu0 %v230
    %2964 = vmatpush.msra.mxu0 %v226
    %2965 = vmatpush.msra.mxu0 %v222
    %2966 = vmatpush.msra.mxu0 %v218
    %2967 = vmatpush.msra.mxu0 %v214
    %2968 = vmatpush.msra.mxu0 %v210
    %2969 = vmatpush.msra.mxu0 %v206
    %2970 = vmatpush.msra.mxu0 %v202
    %2971 = vmatpush.msra.mxu0 %v198
    %2972 = vmatmul.f32.gmra.mxu0 %v2894
    %v2973 = vpop.f32.mrf.mxu0
    %v2974 = vadd.f32 0.0, %v2973
    %2975 = vdwg.mxu0
    %v2980 = vrot.slane %v2914, 1
    %v2981 = vrot.slane %v2934, 1
    %v2982 = vrot.slane %v2954, 1
    %v2983 = vrot.slane %v2974, 1
    %v2988 = vadd.f32 %v191, %v2980
    %v2989 = vadd.f32 %v192, %v2981
    %v2990 = vadd.f32 %v193, %v2982
    %v2991 = vadd.f32 %v194, %v2983
    %v2992 = vxor.u32 %v2988, 2147483648
    %v2993 = vmul.f32 %v2992, 1.442695
    %v2994 = vpow.pop %v2993
    %v2995 = vadd.f32 %v2994, 1.0
    %v2996 = vrcp.pop %v2995
    %v2997 = vmul.f32 %v2995, %v2996
    %v2998 = vsub.f32 1.0, %v2997
    %v2999 = vmul.f32 %v2996, %v2998
    %v3000 = vadd.f32 %v2996, %v2999
    %vm3001 = vweird.f32 %v2995
    %vm3002 = vweird.f32 %v2996
    %vm3003 = vmor %vm3001, %vm3002
    %v3004 = vsel %vm3003, %v2996, %v3000
    %v3005 = vand.u32 2147483647, %v2995
    %vm3006 = vcmp.eq.f32.partialorder %v3005, 8.507059e+37
    %v3007 = vand.u32 %v2995, 2147483648
    %v3008 = vor.u32 1.1754944e-38, %v3007
    %v3009 = vsel %vm3006, %v3008, %v3004
    %v3010 = vmul.f32 1.0, %v3009
    %v3011 = vxor.u32 %v2989, 2147483648
    %v3012 = vmul.f32 %v3011, 1.442695
    %v3013 = vpow.pop %v3012
    %v3014 = vadd.f32 %v3013, 1.0
    %v3015 = vrcp.pop %v3014
    %v3016 = vmul.f32 %v3014, %v3015
    %v3017 = vsub.f32 1.0, %v3016
    %v3018 = vmul.f32 %v3015, %v3017
    %v3019 = vadd.f32 %v3015, %v3018
    %vm3020 = vweird.f32 %v3014
    %vm3021 = vweird.f32 %v3015
    %vm3022 = vmor %vm3020, %vm3021
    %v3023 = vsel %vm3022, %v3015, %v3019
    %v3024 = vand.u32 2147483647, %v3014
    %vm3025 = vcmp.eq.f32.partialorder %v3024, 8.507059e+37
    %v3026 = vand.u32 %v3014, 2147483648
    %v3027 = vor.u32 1.1754944e-38, %v3026
    %v3028 = vsel %vm3025, %v3027, %v3023
    %v3029 = vmul.f32 1.0, %v3028
    %v3030 = vtanh.pop %v2990
    %v3031 = vxor.u32 %v2991, 2147483648
    %v3032 = vmul.f32 %v3031, 1.442695
    %v3033 = vpow.pop %v3032
    %v3034 = vadd.f32 %v3033, 1.0
    %v3035 = vrcp.pop %v3034
    %v3036 = vmul.f32 %v3034, %v3035
    %v3037 = vsub.f32 1.0, %v3036
    %v3038 = vmul.f32 %v3035, %v3037
    %v3039 = vadd.f32 %v3035, %v3038
    %vm3040 = vweird.f32 %v3034
    %vm3041 = vweird.f32 %v3035
    %vm3042 = vmor %vm3040, %vm3041
    %v3043 = vsel %vm3042, %v3035, %v3039
    %v3044 = vand.u32 2147483647, %v3034
    %vm3045 = vcmp.eq.f32.partialorder %v3044, 8.507059e+37
    %v3046 = vand.u32 %v3034, 2147483648
    %v3047 = vor.u32 1.1754944e-38, %v3046
    %v3048 = vsel %vm3045, %v3047, %v3043
    %v3049 = vmul.f32 1.0, %v3048
    %v3051 = vrot.slane %v2663, 7
    %v3053 = vmul.f32 %v3029, %v3051
    %v3054 = vmul.f32 %v3010, %v3030
    %v3055 = vadd.f32 %v3053, %v3054
    %v3056 = vtanh.pop %v3055
    %v3057 = vmul.f32 %v3049, %v3056
    %3058 = vmatpush.msra.mxu0 %v319
    %3059 = vmatpush.msra.mxu0 %v315
    %3060 = vmatpush.msra.mxu0 %v311
    %3061 = vmatpush.msra.mxu0 %v307
    %3062 = vmatpush.msra.mxu0 %v303
    %3063 = vmatpush.msra.mxu0 %v299
    %3064 = vmatpush.msra.mxu0 %v295
    %3065 = vmatpush.msra.mxu0 %v291
    %3066 = vmatpush.msra.mxu0 %v287
    %3067 = vmatpush.msra.mxu0 %v283
    %3068 = vmatpush.msra.mxu0 %v279
    %3069 = vmatpush.msra.mxu0 %v275
    %3070 = vmatpush.msra.mxu0 %v271
    %3071 = vmatpush.msra.mxu0 %v267
    %3072 = vmatpush.msra.mxu0 %v263
    %3073 = vmatpush.msra.mxu0 %v259
    %3074 = vmatmul.f32.gmra.mxu0 %v2894
    %v3075 = vpop.f32.mrf.mxu0
    %v3076 = vadd.f32 %v698, %v3075
    %3077 = vdwg.mxu0
    %3078 = vmatpush.msra.mxu0 %v320
    %3079 = vmatpush.msra.mxu0 %v316
    %3080 = vmatpush.msra.mxu0 %v312
    %3081 = vmatpush.msra.mxu0 %v308
    %3082 = vmatpush.msra.mxu0 %v304
    %3083 = vmatpush.msra.mxu0 %v300
    %3084 = vmatpush.msra.mxu0 %v296
    %3085 = vmatpush.msra.mxu0 %v292
    %3086 = vmatpush.msra.mxu0 %v288
    %3087 = vmatpush.msra.mxu0 %v284
    %3088 = vmatpush.msra.mxu0 %v280
    %3089 = vmatpush.msra.mxu0 %v276
    %3090 = vmatpush.msra.mxu0 %v272
    %3091 = vmatpush.msra.mxu0 %v268
    %3092 = vmatpush.msra.mxu0 %v264
    %3093 = vmatpush.msra.mxu0 %v260
    %3094 = vmatmul.f32.gmra.mxu0 %v2894
    %v3095 = vpop.f32.mrf.mxu0
    %v3096 = vadd.f32 %v699, %v3095
    %3097 = vdwg.mxu0
    %3098 = vmatpush.msra.mxu0 %v321
    %3099 = vmatpush.msra.mxu0 %v317
    %3100 = vmatpush.msra.mxu0 %v313
    %3101 = vmatpush.msra.mxu0 %v309
    %3102 = vmatpush.msra.mxu0 %v305
    %3103 = vmatpush.msra.mxu0 %v301
    %3104 = vmatpush.msra.mxu0 %v297
    %3105 = vmatpush.msra.mxu0 %v293
    %3106 = vmatpush.msra.mxu0 %v289
    %3107 = vmatpush.msra.mxu0 %v285
    %3108 = vmatpush.msra.mxu0 %v281
    %3109 = vmatpush.msra.mxu0 %v277
    %3110 = vmatpush.msra.mxu0 %v273
    %3111 = vmatpush.msra.mxu0 %v269
    %3112 = vmatpush.msra.mxu0 %v265
    %3113 = vmatpush.msra.mxu0 %v261
    %3114 = vmatmul.f32.gmra.mxu0 %v2894
    %v3115 = vpop.f32.mrf.mxu0
    %v3116 = vadd.f32 %v700, %v3115
    %3117 = vdwg.mxu0
    %3118 = vmatpush.msra.mxu0 %v322
    %3119 = vmatpush.msra.mxu0 %v318
    %3120 = vmatpush.msra.mxu0 %v314
    %3121 = vmatpush.msra.mxu0 %v310
    %3122 = vmatpush.msra.mxu0 %v306
    %3123 = vmatpush.msra.mxu0 %v302
    %3124 = vmatpush.msra.mxu0 %v298
    %3125 = vmatpush.msra.mxu0 %v294
    %3126 = vmatpush.msra.mxu0 %v290
    %3127 = vmatpush.msra.mxu0 %v286
    %3128 = vmatpush.msra.mxu0 %v282
    %3129 = vmatpush.msra.mxu0 %v278
    %3130 = vmatpush.msra.mxu0 %v274
    %3131 = vmatpush.msra.mxu0 %v270
    %3132 = vmatpush.msra.mxu0 %v266
    %3133 = vmatpush.msra.mxu0 %v262
    %3134 = vmatmul.f32.gmra.mxu0 %v2894
    %v3135 = vpop.f32.mrf.mxu0
    %v3136 = vadd.f32 %v701, %v3135
    %3137 = vdwg.mxu0
    %3138 = vmatpush.msra.mxu0 %v384
    %3139 = vmatpush.msra.mxu0 %v380
    %3140 = vmatpush.msra.mxu0 %v376
    %3141 = vmatpush.msra.mxu0 %v372
    %3142 = vmatpush.msra.mxu0 %v368
    %3143 = vmatpush.msra.mxu0 %v364
    %3144 = vmatpush.msra.mxu0 %v360
    %3145 = vmatpush.msra.mxu0 %v356
    %3146 = vmatpush.msra.mxu0 %v352
    %3147 = vmatpush.msra.mxu0 %v348
    %3148 = vmatpush.msra.mxu0 %v344
    %3149 = vmatpush.msra.mxu0 %v340
    %3150 = vmatpush.msra.mxu0 %v336
    %3151 = vmatpush.msra.mxu0 %v332
    %3152 = vmatpush.msra.mxu0 %v328
    %3153 = vmatpush.msra.mxu0 %v324
    %3154 = vmatmul.f32.gmra.mxu0 %v2892
    %v3155 = vpop.f32.mrf.mxu0
    %v3156 = vadd.f32 0.0, %v3155
    %3157 = vdwg.mxu0
    %3158 = vmatpush.msra.mxu0 %v385
    %3159 = vmatpush.msra.mxu0 %v381
    %3160 = vmatpush.msra.mxu0 %v377
    %3161 = vmatpush.msra.mxu0 %v373
    %3162 = vmatpush.msra.mxu0 %v369
    %3163 = vmatpush.msra.mxu0 %v365
    %3164 = vmatpush.msra.mxu0 %v361
    %3165 = vmatpush.msra.mxu0 %v357
    %3166 = vmatpush.msra.mxu0 %v353
    %3167 = vmatpush.msra.mxu0 %v349
    %3168 = vmatpush.msra.mxu0 %v345
    %3169 = vmatpush.msra.mxu0 %v341
    %3170 = vmatpush.msra.mxu0 %v337
    %3171 = vmatpush.msra.mxu0 %v333
    %3172 = vmatpush.msra.mxu0 %v329
    %3173 = vmatpush.msra.mxu0 %v325
    %3174 = vmatmul.f32.gmra.mxu0 %v2892
    %v3175 = vpop.f32.mrf.mxu0
    %v3176 = vadd.f32 0.0, %v3175
    %3177 = vdwg.mxu0
    %3178 = vmatpush.msra.mxu0 %v386
    %3179 = vmatpush.msra.mxu0 %v382
    %3180 = vmatpush.msra.mxu0 %v378
    %3181 = vmatpush.msra.mxu0 %v374
    %3182 = vmatpush.msra.mxu0 %v370
    %3183 = vmatpush.msra.mxu0 %v366
    %3184 = vmatpush.msra.mxu0 %v362
    %3185 = vmatpush.msra.mxu0 %v358
    %3186 = vmatpush.msra.mxu0 %v354
    %3187 = vmatpush.msra.mxu0 %v350
    %3188 = vmatpush.msra.mxu0 %v346
    %3189 = vmatpush.msra.mxu0 %v342
    %3190 = vmatpush.msra.mxu0 %v338
    %3191 = vmatpush.msra.mxu0 %v334
    %3192 = vmatpush.msra.mxu0 %v330
    %3193 = vmatpush.msra.mxu0 %v326
    %3194 = vmatmul.f32.gmra.mxu0 %v2892
    %v3195 = vpop.f32.mrf.mxu0
    %v3196 = vadd.f32 0.0, %v3195
    %3197 = vdwg.mxu0
    %3198 = vmatpush.msra.mxu0 %v387
    %3199 = vmatpush.msra.mxu0 %v383
    %3200 = vmatpush.msra.mxu0 %v379
    %3201 = vmatpush.msra.mxu0 %v375
    %3202 = vmatpush.msra.mxu0 %v371
    %3203 = vmatpush.msra.mxu0 %v367
    %3204 = vmatpush.msra.mxu0 %v363
    %3205 = vmatpush.msra.mxu0 %v359
    %3206 = vmatpush.msra.mxu0 %v355
    %3207 = vmatpush.msra.mxu0 %v351
    %3208 = vmatpush.msra.mxu0 %v347
    %3209 = vmatpush.msra.mxu0 %v343
    %3210 = vmatpush.msra.mxu0 %v339
    %3211 = vmatpush.msra.mxu0 %v335
    %3212 = vmatpush.msra.mxu0 %v331
    %3213 = vmatpush.msra.mxu0 %v327
    %3214 = vmatmul.f32.gmra.mxu0 %v2892
    %v3215 = vpop.f32.mrf.mxu0
    %v3216 = vadd.f32 0.0, %v3215
    %3217 = vdwg.mxu0
    %v3218 = vadd.f32 %v3076, %v3156
    %v3219 = vadd.f32 %v3096, %v3176
    %v3220 = vadd.f32 %v3116, %v3196
    %v3221 = vadd.f32 %v3136, %v3216
    %v3222 = vxor.u32 %v3218, 2147483648
    %v3223 = vmul.f32 %v3222, 1.442695
    %v3224 = vpow.pop %v3223
    %v3225 = vadd.f32 %v3224, 1.0
    %v3226 = vrcp.pop %v3225
    %v3227 = vmul.f32 %v3225, %v3226
    %v3228 = vsub.f32 1.0, %v3227
    %v3229 = vmul.f32 %v3226, %v3228
    %v3230 = vadd.f32 %v3226, %v3229
    %vm3231 = vweird.f32 %v3225
    %vm3232 = vweird.f32 %v3226
    %vm3233 = vmor %vm3231, %vm3232
    %v3234 = vsel %vm3233, %v3226, %v3230
    %v3235 = vand.u32 2147483647, %v3225
    %vm3236 = vcmp.eq.f32.partialorder %v3235, 8.507059e+37
    %v3237 = vand.u32 %v3225, 2147483648
    %v3238 = vor.u32 1.1754944e-38, %v3237
    %v3239 = vsel %vm3236, %v3238, %v3234
    %v3240 = vmul.f32 1.0, %v3239
    %v3241 = vxor.u32 %v3219, 2147483648
    %v3242 = vmul.f32 %v3241, 1.442695
    %v3243 = vpow.pop %v3242
    %v3244 = vadd.f32 %v3243, 1.0
    %v3245 = vrcp.pop %v3244
    %v3246 = vmul.f32 %v3244, %v3245
    %v3247 = vsub.f32 1.0, %v3246
    %v3248 = vmul.f32 %v3245, %v3247
    %v3249 = vadd.f32 %v3245, %v3248
    %vm3250 = vweird.f32 %v3244
    %vm3251 = vweird.f32 %v3245
    %vm3252 = vmor %vm3250, %vm3251
    %v3253 = vsel %vm3252, %v3245, %v3249
    %v3254 = vand.u32 2147483647, %v3244
    %vm3255 = vcmp.eq.f32.partialorder %v3254, 8.507059e+37
    %v3256 = vand.u32 %v3244, 2147483648
    %v3257 = vor.u32 1.1754944e-38, %v3256
    %v3258 = vsel %vm3255, %v3257, %v3253
    %v3259 = vmul.f32 1.0, %v3258
    %v3260 = vtanh.pop %v3220
    %v3261 = vxor.u32 %v3221, 2147483648
    %v3262 = vmul.f32 %v3261, 1.442695
    %v3263 = vpow.pop %v3262
    %v3264 = vadd.f32 %v3263, 1.0
    %v3265 = vrcp.pop %v3264
    %v3266 = vmul.f32 %v3264, %v3265
    %v3267 = vsub.f32 1.0, %v3266
    %v3268 = vmul.f32 %v3265, %v3267
    %v3269 = vadd.f32 %v3265, %v3268
    %vm3270 = vweird.f32 %v3264
    %vm3271 = vweird.f32 %v3265
    %vm3272 = vmor %vm3270, %vm3271
    %v3273 = vsel %vm3272, %v3265, %v3269
    %v3274 = vand.u32 2147483647, %v3264
    %vm3275 = vcmp.eq.f32.partialorder %v3274, 8.507059e+37
    %v3276 = vand.u32 %v3264, 2147483648
    %v3277 = vor.u32 1.1754944e-38, %v3276
    %v3278 = vsel %vm3275, %v3277, %v3273
    %v3279 = vmul.f32 1.0, %v3278
    %v3280 = vmul.f32 %v3259, %v2890
    %v3281 = vmul.f32 %v3240, %v3260
    %v3282 = vadd.f32 %v3280, %v3281
    %v3283 = vtanh.pop %v3282
    %v3284 = vmul.f32 %v3279, %v3283
    %v3286 = vrot.slane %v3057, 7
    %3288 = vmatpush.msra.mxu0 %v319
    %3289 = vmatpush.msra.mxu0 %v315
    %3290 = vmatpush.msra.mxu0 %v311
    %3291 = vmatpush.msra.mxu0 %v307
    %3292 = vmatpush.msra.mxu0 %v303
    %3293 = vmatpush.msra.mxu0 %v299
    %3294 = vmatpush.msra.mxu0 %v295
    %3295 = vmatpush.msra.mxu0 %v291
    %3296 = vmatpush.msra.mxu0 %v287
    %3297 = vmatpush.msra.mxu0 %v283
    %3298 = vmatpush.msra.mxu0 %v279
    %3299 = vmatpush.msra.mxu0 %v275
    %3300 = vmatpush.msra.mxu0 %v271
    %3301 = vmatpush.msra.mxu0 %v267
    %3302 = vmatpush.msra.mxu0 %v263
    %3303 = vmatpush.msra.mxu0 %v259
    %3304 = vmatmul.f32.gmra.mxu0 %v3286
    %v3305 = vpop.f32.mrf.mxu0
    %v3306 = vadd.f32 %v698, %v3305
    %3307 = vdwg.mxu0
    %3308 = vmatpush.msra.mxu0 %v320
    %3309 = vmatpush.msra.mxu0 %v316
    %3310 = vmatpush.msra.mxu0 %v312
    %3311 = vmatpush.msra.mxu0 %v308
    %3312 = vmatpush.msra.mxu0 %v304
    %3313 = vmatpush.msra.mxu0 %v300
    %3314 = vmatpush.msra.mxu0 %v296
    %3315 = vmatpush.msra.mxu0 %v292
    %3316 = vmatpush.msra.mxu0 %v288
    %3317 = vmatpush.msra.mxu0 %v284
    %3318 = vmatpush.msra.mxu0 %v280
    %3319 = vmatpush.msra.mxu0 %v276
    %3320 = vmatpush.msra.mxu0 %v272
    %3321 = vmatpush.msra.mxu0 %v268
    %3322 = vmatpush.msra.mxu0 %v264
    %3323 = vmatpush.msra.mxu0 %v260
    %3324 = vmatmul.f32.gmra.mxu0 %v3286
    %v3325 = vpop.f32.mrf.mxu0
    %v3326 = vadd.f32 %v699, %v3325
    %3327 = vdwg.mxu0
    %3328 = vmatpush.msra.mxu0 %v321
    %3329 = vmatpush.msra.mxu0 %v317
    %3330 = vmatpush.msra.mxu0 %v313
    %3331 = vmatpush.msra.mxu0 %v309
    %3332 = vmatpush.msra.mxu0 %v305
    %3333 = vmatpush.msra.mxu0 %v301
    %3334 = vmatpush.msra.mxu0 %v297
    %3335 = vmatpush.msra.mxu0 %v293
    %3336 = vmatpush.msra.mxu0 %v289
    %3337 = vmatpush.msra.mxu0 %v285
    %3338 = vmatpush.msra.mxu0 %v281
    %3339 = vmatpush.msra.mxu0 %v277
    %3340 = vmatpush.msra.mxu0 %v273
    %3341 = vmatpush.msra.mxu0 %v269
    %3342 = vmatpush.msra.mxu0 %v265
    %3343 = vmatpush.msra.mxu0 %v261
    %3344 = vmatmul.f32.gmra.mxu0 %v3286
    %v3345 = vpop.f32.mrf.mxu0
    %v3346 = vadd.f32 %v700, %v3345
    %3347 = vdwg.mxu0
    %3348 = vmatpush.msra.mxu0 %v322
    %3349 = vmatpush.msra.mxu0 %v318
    %3350 = vmatpush.msra.mxu0 %v314
    %3351 = vmatpush.msra.mxu0 %v310
    %3352 = vmatpush.msra.mxu0 %v306
    %3353 = vmatpush.msra.mxu0 %v302
    %3354 = vmatpush.msra.mxu0 %v298
    %3355 = vmatpush.msra.mxu0 %v294
    %3356 = vmatpush.msra.mxu0 %v290
    %3357 = vmatpush.msra.mxu0 %v286
    %3358 = vmatpush.msra.mxu0 %v282
    %3359 = vmatpush.msra.mxu0 %v278
    %3360 = vmatpush.msra.mxu0 %v274
    %3361 = vmatpush.msra.mxu0 %v270
    %3362 = vmatpush.msra.mxu0 %v266
    %3363 = vmatpush.msra.mxu0 %v262
    %3364 = vmatmul.f32.gmra.mxu0 %v3286
    %v3365 = vpop.f32.mrf.mxu0
    %v3366 = vadd.f32 %v701, %v3365
    %3367 = vdwg.mxu0
    %3368 = vmatpush.msra.mxu0 %v384
    %3369 = vmatpush.msra.mxu0 %v380
    %3370 = vmatpush.msra.mxu0 %v376
    %3371 = vmatpush.msra.mxu0 %v372
    %3372 = vmatpush.msra.mxu0 %v368
    %3373 = vmatpush.msra.mxu0 %v364
    %3374 = vmatpush.msra.mxu0 %v360
    %3375 = vmatpush.msra.mxu0 %v356
    %3376 = vmatpush.msra.mxu0 %v352
    %3377 = vmatpush.msra.mxu0 %v348
    %3378 = vmatpush.msra.mxu0 %v344
    %3379 = vmatpush.msra.mxu0 %v340
    %3380 = vmatpush.msra.mxu0 %v336
    %3381 = vmatpush.msra.mxu0 %v332
    %3382 = vmatpush.msra.mxu0 %v328
    %3383 = vmatpush.msra.mxu0 %v324
    %3384 = vmatmul.f32.gmra.mxu0 %v3284
    %v3385 = vpop.f32.mrf.mxu0
    %v3386 = vadd.f32 0.0, %v3385
    %3387 = vdwg.mxu0
    %3388 = vmatpush.msra.mxu0 %v385
    %3389 = vmatpush.msra.mxu0 %v381
    %3390 = vmatpush.msra.mxu0 %v377
    %3391 = vmatpush.msra.mxu0 %v373
    %3392 = vmatpush.msra.mxu0 %v369
    %3393 = vmatpush.msra.mxu0 %v365
    %3394 = vmatpush.msra.mxu0 %v361
    %3395 = vmatpush.msra.mxu0 %v357
    %3396 = vmatpush.msra.mxu0 %v353
    %3397 = vmatpush.msra.mxu0 %v349
    %3398 = vmatpush.msra.mxu0 %v345
    %3399 = vmatpush.msra.mxu0 %v341
    %3400 = vmatpush.msra.mxu0 %v337
    %3401 = vmatpush.msra.mxu0 %v333
    %3402 = vmatpush.msra.mxu0 %v329
    %3403 = vmatpush.msra.mxu0 %v325
    %3404 = vmatmul.f32.gmra.mxu0 %v3284
    %v3405 = vpop.f32.mrf.mxu0
    %v3406 = vadd.f32 0.0, %v3405
    %3407 = vdwg.mxu0
    %3408 = vmatpush.msra.mxu0 %v386
    %3409 = vmatpush.msra.mxu0 %v382
    %3410 = vmatpush.msra.mxu0 %v378
    %3411 = vmatpush.msra.mxu0 %v374
    %3412 = vmatpush.msra.mxu0 %v370
    %3413 = vmatpush.msra.mxu0 %v366
    %3414 = vmatpush.msra.mxu0 %v362
    %3415 = vmatpush.msra.mxu0 %v358
    %3416 = vmatpush.msra.mxu0 %v354
    %3417 = vmatpush.msra.mxu0 %v350
    %3418 = vmatpush.msra.mxu0 %v346
    %3419 = vmatpush.msra.mxu0 %v342
    %3420 = vmatpush.msra.mxu0 %v338
    %3421 = vmatpush.msra.mxu0 %v334
    %3422 = vmatpush.msra.mxu0 %v330
    %3423 = vmatpush.msra.mxu0 %v326
    %3424 = vmatmul.f32.gmra.mxu0 %v3284
    %v3425 = vpop.f32.mrf.mxu0
    %v3426 = vadd.f32 0.0, %v3425
    %3427 = vdwg.mxu0
    %3428 = vmatpush.msra.mxu0 %v387
    %3429 = vmatpush.msra.mxu0 %v383
    %3430 = vmatpush.msra.mxu0 %v379
    %3431 = vmatpush.msra.mxu0 %v375
    %3432 = vmatpush.msra.mxu0 %v371
    %3433 = vmatpush.msra.mxu0 %v367
    %3434 = vmatpush.msra.mxu0 %v363
    %3435 = vmatpush.msra.mxu0 %v359
    %3436 = vmatpush.msra.mxu0 %v355
    %3437 = vmatpush.msra.mxu0 %v351
    %3438 = vmatpush.msra.mxu0 %v347
    %3439 = vmatpush.msra.mxu0 %v343
    %3440 = vmatpush.msra.mxu0 %v339
    %3441 = vmatpush.msra.mxu0 %v335
    %3442 = vmatpush.msra.mxu0 %v331
    %3443 = vmatpush.msra.mxu0 %v327
    %3444 = vmatmul.f32.gmra.mxu0 %v3284
    %v3445 = vpop.f32.mrf.mxu0
    %v3446 = vadd.f32 0.0, %v3445
    %3447 = vdwg.mxu0
    %v3448 = vadd.f32 %v3306, %v3386
    %v3449 = vadd.f32 %v3326, %v3406
    %v3450 = vadd.f32 %v3346, %v3426
    %v3451 = vadd.f32 %v3366, %v3446
    %v3452 = vxor.u32 %v3448, 2147483648
    %v3453 = vmul.f32 %v3452, 1.442695
    %v3454 = vpow.pop %v3453
    %v3455 = vadd.f32 %v3454, 1.0
    %v3456 = vrcp.pop %v3455
    %v3457 = vmul.f32 %v3455, %v3456
    %v3458 = vsub.f32 1.0, %v3457
    %v3459 = vmul.f32 %v3456, %v3458
    %v3460 = vadd.f32 %v3456, %v3459
    %vm3461 = vweird.f32 %v3455
    %vm3462 = vweird.f32 %v3456
    %vm3463 = vmor %vm3461, %vm3462
    %v3464 = vsel %vm3463, %v3456, %v3460
    %v3465 = vand.u32 2147483647, %v3455
    %vm3466 = vcmp.eq.f32.partialorder %v3465, 8.507059e+37
    %v3467 = vand.u32 %v3455, 2147483648
    %v3468 = vor.u32 1.1754944e-38, %v3467
    %v3469 = vsel %vm3466, %v3468, %v3464
    %v3470 = vmul.f32 1.0, %v3469
    %v3471 = vxor.u32 %v3449, 2147483648
    %v3472 = vmul.f32 %v3471, 1.442695
    %v3473 = vpow.pop %v3472
    %v3474 = vadd.f32 %v3473, 1.0
    %v3475 = vrcp.pop %v3474
    %v3476 = vmul.f32 %v3474, %v3475
    %v3477 = vsub.f32 1.0, %v3476
    %v3478 = vmul.f32 %v3475, %v3477
    %v3479 = vadd.f32 %v3475, %v3478
    %vm3480 = vweird.f32 %v3474
    %vm3481 = vweird.f32 %v3475
    %vm3482 = vmor %vm3480, %vm3481
    %v3483 = vsel %vm3482, %v3475, %v3479
    %v3484 = vand.u32 2147483647, %v3474
    %vm3485 = vcmp.eq.f32.partialorder %v3484, 8.507059e+37
    %v3486 = vand.u32 %v3474, 2147483648
    %v3487 = vor.u32 1.1754944e-38, %v3486
    %v3488 = vsel %vm3485, %v3487, %v3483
    %v3489 = vmul.f32 1.0, %v3488
    %v3490 = vtanh.pop %v3450
    %v3491 = vxor.u32 %v3451, 2147483648
    %v3492 = vmul.f32 %v3491, 1.442695
    %v3493 = vpow.pop %v3492
    %v3494 = vadd.f32 %v3493, 1.0
    %v3495 = vrcp.pop %v3494
    %v3496 = vmul.f32 %v3494, %v3495
    %v3497 = vsub.f32 1.0, %v3496
    %v3498 = vmul.f32 %v3495, %v3497
    %v3499 = vadd.f32 %v3495, %v3498
    %vm3500 = vweird.f32 %v3494
    %vm3501 = vweird.f32 %v3495
    %vm3502 = vmor %vm3500, %vm3501
    %v3503 = vsel %vm3502, %v3495, %v3499
    %v3504 = vand.u32 2147483647, %v3494
    %vm3505 = vcmp.eq.f32.partialorder %v3504, 8.507059e+37
    %v3506 = vand.u32 %v3494, 2147483648
    %v3507 = vor.u32 1.1754944e-38, %v3506
    %v3508 = vsel %vm3505, %v3507, %v3503
    %v3509 = vmul.f32 1.0, %v3508
    %v3510 = vmul.f32 %v3489, %v3282
    %v3511 = vmul.f32 %v3470, %v3490
    %v3512 = vadd.f32 %v3510, %v3511
    %v3513 = vtanh.pop %v3512
    %v3514 = vmul.f32 %v3509, %v3513
    %v3515 = vld [vmem:[#allocation9] sm:$0xff]
    %v3516 = vld [vmem:[#allocation9 + $0x8] sm:$0xff]
    %v3517 = vld [vmem:[#allocation9 + $0x10] sm:$0xff]
    %v3518 = vld [vmem:[#allocation9 + $0x18] sm:$0xff]
    %v3519 = vld [vmem:[#allocation9 + $0x20] sm:$0xff]
    %v3520 = vld [vmem:[#allocation9 + $0x28] sm:$0xff]
    %v3521 = vld [vmem:[#allocation9 + $0x30] sm:$0xff]
    %v3522 = vld [vmem:[#allocation9 + $0x38] sm:$0xff]
    %v3523 = vld [vmem:[#allocation9 + $0x40] sm:$0xff]
    %v3524 = vld [vmem:[#allocation9 + $0x48] sm:$0xff]
    %v3525 = vld [vmem:[#allocation9 + $0x50] sm:$0xff]
    %v3526 = vld [vmem:[#allocation9 + $0x58] sm:$0xff]
    %v3527 = vld [vmem:[#allocation9 + $0x60] sm:$0xff]
    %v3528 = vld [vmem:[#allocation9 + $0x68] sm:$0xff]
    %v3529 = vld [vmem:[#allocation9 + $0x70] sm:$0xff]
    %v3530 = vld [vmem:[#allocation9 + $0x78] sm:$0xff]
    %v3531 = vld [vmem:[#allocation9 + $0x80] sm:$0xff]
    %v3532 = vld [vmem:[#allocation9 + $0x88] sm:$0xff]
    %v3533 = vld [vmem:[#allocation9 + $0x90] sm:$0xff]
    %v3534 = vld [vmem:[#allocation9 + $0x98] sm:$0xff]
    %v3535 = vld [vmem:[#allocation9 + $0xa0] sm:$0xff]
    %v3536 = vld [vmem:[#allocation9 + $0xa8] sm:$0xff]
    %v3537 = vld [vmem:[#allocation9 + $0xb0] sm:$0xff]
    %v3538 = vld [vmem:[#allocation9 + $0xb8] sm:$0xff]
    %v3539 = vld [vmem:[#allocation9 + $0xc0] sm:$0xff]
    %v3540 = vld [vmem:[#allocation9 + $0xc8] sm:$0xff]
    %v3541 = vld [vmem:[#allocation9 + $0xd0] sm:$0xff]
    %v3542 = vld [vmem:[#allocation9 + $0xd8] sm:$0xff]
    %v3543 = vld [vmem:[#allocation9 + $0xe0] sm:$0xff]
    %v3544 = vld [vmem:[#allocation9 + $0xe8] sm:$0xff]
    %v3545 = vld [vmem:[#allocation9 + $0xf0] sm:$0xff]
    %v3546 = vld [vmem:[#allocation9 + $0xf8] sm:$0xff]
    %v3547 = vld [vmem:[#allocation9 + $0x100] sm:$0xff]
    %v3548 = vld [vmem:[#allocation9 + $0x108] sm:$0xff]
    %v3549 = vld [vmem:[#allocation9 + $0x110] sm:$0xff]
    %v3550 = vld [vmem:[#allocation9 + $0x118] sm:$0xff]
    %v3551 = vld [vmem:[#allocation9 + $0x120] sm:$0xff]
    %v3552 = vld [vmem:[#allocation9 + $0x128] sm:$0xff]
    %v3553 = vld [vmem:[#allocation9 + $0x130] sm:$0xff]
    %v3554 = vld [vmem:[#allocation9 + $0x138] sm:$0xff]
    %v3555 = vld [vmem:[#allocation9 + $0x140] sm:$0xff]
    %v3556 = vld [vmem:[#allocation9 + $0x148] sm:$0xff]
    %v3557 = vld [vmem:[#allocation9 + $0x150] sm:$0xff]
    %v3558 = vld [vmem:[#allocation9 + $0x158] sm:$0xff]
    %v3559 = vld [vmem:[#allocation9 + $0x160] sm:$0xff]
    %v3560 = vld [vmem:[#allocation9 + $0x168] sm:$0xff]
    %v3561 = vld [vmem:[#allocation9 + $0x170] sm:$0xff]
    %v3562 = vld [vmem:[#allocation9 + $0x178] sm:$0xff]
    %v3563 = vld [vmem:[#allocation9 + $0x180] sm:$0xff]
    %v3564 = vld [vmem:[#allocation9 + $0x188] sm:$0xff]
    %v3565 = vld [vmem:[#allocation9 + $0x190] sm:$0xff]
    %v3566 = vld [vmem:[#allocation9 + $0x198] sm:$0xff]
    %v3567 = vld [vmem:[#allocation9 + $0x1a0] sm:$0xff]
    %v3568 = vld [vmem:[#allocation9 + $0x1a8] sm:$0xff]
    %v3569 = vld [vmem:[#allocation9 + $0x1b0] sm:$0xff]
    %v3570 = vld [vmem:[#allocation9 + $0x1b8] sm:$0xff]
    %v3571 = vld [vmem:[#allocation9 + $0x1c0] sm:$0xff]
    %v3572 = vld [vmem:[#allocation9 + $0x1c8] sm:$0xff]
    %v3573 = vld [vmem:[#allocation9 + $0x1d0] sm:$0xff]
    %v3574 = vld [vmem:[#allocation9 + $0x1d8] sm:$0xff]
    %v3575 = vld [vmem:[#allocation9 + $0x1e0] sm:$0xff]
    %v3576 = vld [vmem:[#allocation9 + $0x1e8] sm:$0xff]
    %v3577 = vld [vmem:[#allocation9 + $0x1f0] sm:$0xff]
    %v3578 = vld [vmem:[#allocation9 + $0x1f8] sm:$0xff]
    %v3579 = vld [vmem:[%s9] sm:$0xf]
    %v3581 = vperm.slane %v3579, 0
    %v3582 = vperm.slane %v3579, 1
    %v3583 = vperm.slane %v3579, 2
    %v3584 = vperm.slane %v3579, 3
    %3589 = vmatpush.msra.mxu0 %v3575
    %3590 = vmatpush.msra.mxu0 %v3571
    %3591 = vmatpush.msra.mxu0 %v3567
    %3592 = vmatpush.msra.mxu0 %v3563
    %3593 = vmatpush.msra.mxu0 %v3559
    %3594 = vmatpush.msra.mxu0 %v3555
    %3595 = vmatpush.msra.mxu0 %v3551
    %3596 = vmatpush.msra.mxu0 %v3547
    %3597 = vmatpush.msra.mxu0 %v3543
    %3598 = vmatpush.msra.mxu0 %v3539
    %3599 = vmatpush.msra.mxu0 %v3535
    %3600 = vmatpush.msra.mxu0 %v3531
    %3601 = vmatpush.msra.mxu0 %v3527
    %3602 = vmatpush.msra.mxu0 %v3523
    %3603 = vmatpush.msra.mxu0 %v3519
    %3604 = vmatpush.msra.mxu0 %v3515
    %3605 = vmatmul.f32.gmra.mxu0 %v3514
    %v3606 = vpop.f32.mrf.mxu0
    %v3607 = vadd.f32 %v3581, %v3606
    %3608 = vdwg.mxu0
    %3609 = vmatpush.msra.mxu0 %v3576
    %3610 = vmatpush.msra.mxu0 %v3572
    %3611 = vmatpush.msra.mxu0 %v3568
    %3612 = vmatpush.msra.mxu0 %v3564
    %3613 = vmatpush.msra.mxu0 %v3560
    %3614 = vmatpush.msra.mxu0 %v3556
    %3615 = vmatpush.msra.mxu0 %v3552
    %3616 = vmatpush.msra.mxu0 %v3548
    %3617 = vmatpush.msra.mxu0 %v3544
    %3618 = vmatpush.msra.mxu0 %v3540
    %3619 = vmatpush.msra.mxu0 %v3536
    %3620 = vmatpush.msra.mxu0 %v3532
    %3621 = vmatpush.msra.mxu0 %v3528
    %3622 = vmatpush.msra.mxu0 %v3524
    %3623 = vmatpush.msra.mxu0 %v3520
    %3624 = vmatpush.msra.mxu0 %v3516
    %3625 = vmatmul.f32.gmra.mxu0 %v3514
    %v3626 = vpop.f32.mrf.mxu0
    %v3627 = vadd.f32 %v3582, %v3626
    %3628 = vdwg.mxu0
    %3629 = vmatpush.msra.mxu0 %v3577
    %3630 = vmatpush.msra.mxu0 %v3573
    %3631 = vmatpush.msra.mxu0 %v3569
    %3632 = vmatpush.msra.mxu0 %v3565
    %3633 = vmatpush.msra.mxu0 %v3561
    %3634 = vmatpush.msra.mxu0 %v3557
    %3635 = vmatpush.msra.mxu0 %v3553
    %3636 = vmatpush.msra.mxu0 %v3549
    %3637 = vmatpush.msra.mxu0 %v3545
    %3638 = vmatpush.msra.mxu0 %v3541
    %3639 = vmatpush.msra.mxu0 %v3537
    %3640 = vmatpush.msra.mxu0 %v3533
    %3641 = vmatpush.msra.mxu0 %v3529
    %3642 = vmatpush.msra.mxu0 %v3525
    %3643 = vmatpush.msra.mxu0 %v3521
    %3644 = vmatpush.msra.mxu0 %v3517
    %3645 = vmatmul.f32.gmra.mxu0 %v3514
    %v3646 = vpop.f32.mrf.mxu0
    %v3647 = vadd.f32 %v3583, %v3646
    %3648 = vdwg.mxu0
    %3649 = vmatpush.msra.mxu0 %v3578
    %3650 = vmatpush.msra.mxu0 %v3574
    %3651 = vmatpush.msra.mxu0 %v3570
    %3652 = vmatpush.msra.mxu0 %v3566
    %3653 = vmatpush.msra.mxu0 %v3562
    %3654 = vmatpush.msra.mxu0 %v3558
    %3655 = vmatpush.msra.mxu0 %v3554
    %3656 = vmatpush.msra.mxu0 %v3550
    %3657 = vmatpush.msra.mxu0 %v3546
    %3658 = vmatpush.msra.mxu0 %v3542
    %3659 = vmatpush.msra.mxu0 %v3538
    %3660 = vmatpush.msra.mxu0 %v3534
    %3661 = vmatpush.msra.mxu0 %v3530
    %3662 = vmatpush.msra.mxu0 %v3526
    %3663 = vmatpush.msra.mxu0 %v3522
    %3664 = vmatpush.msra.mxu0 %v3518
    %3665 = vmatmul.f32.gmra.mxu0 %v3514
    %v3666 = vpop.f32.mrf.mxu0
    %v3667 = vadd.f32 %v3584, %v3666
    %3668 = vdwg.mxu0
    %v3669 = vld [vmem:[#allocation11] sm:$0xff]
    %v3670 = vld [vmem:[#allocation11 + $0x8] sm:$0xff]
    %v3671 = vld [vmem:[#allocation11 + $0x10] sm:$0xff]
    %v3672 = vld [vmem:[#allocation11 + $0x18] sm:$0xff]
    %v3673 = vld [vmem:[#allocation11 + $0x20] sm:$0xff]
    %v3674 = vld [vmem:[#allocation11 + $0x28] sm:$0xff]
    %v3675 = vld [vmem:[#allocation11 + $0x30] sm:$0xff]
    %v3676 = vld [vmem:[#allocation11 + $0x38] sm:$0xff]
    %v3677 = vld [vmem:[#allocation11 + $0x40] sm:$0xff]
    %v3678 = vld [vmem:[#allocation11 + $0x48] sm:$0xff]
    %v3679 = vld [vmem:[#allocation11 + $0x50] sm:$0xff]
    %v3680 = vld [vmem:[#allocation11 + $0x58] sm:$0xff]
    %v3681 = vld [vmem:[#allocation11 + $0x60] sm:$0xff]
    %v3682 = vld [vmem:[#allocation11 + $0x68] sm:$0xff]
    %v3683 = vld [vmem:[#allocation11 + $0x70] sm:$0xff]
    %v3684 = vld [vmem:[#allocation11 + $0x78] sm:$0xff]
    %v3685 = vld [vmem:[#allocation11 + $0x80] sm:$0xff]
    %v3686 = vld [vmem:[#allocation11 + $0x88] sm:$0xff]
    %v3687 = vld [vmem:[#allocation11 + $0x90] sm:$0xff]
    %v3688 = vld [vmem:[#allocation11 + $0x98] sm:$0xff]
    %v3689 = vld [vmem:[#allocation11 + $0xa0] sm:$0xff]
    %v3690 = vld [vmem:[#allocation11 + $0xa8] sm:$0xff]
    %v3691 = vld [vmem:[#allocation11 + $0xb0] sm:$0xff]
    %v3692 = vld [vmem:[#allocation11 + $0xb8] sm:$0xff]
    %v3693 = vld [vmem:[#allocation11 + $0xc0] sm:$0xff]
    %v3694 = vld [vmem:[#allocation11 + $0xc8] sm:$0xff]
    %v3695 = vld [vmem:[#allocation11 + $0xd0] sm:$0xff]
    %v3696 = vld [vmem:[#allocation11 + $0xd8] sm:$0xff]
    %v3697 = vld [vmem:[#allocation11 + $0xe0] sm:$0xff]
    %v3698 = vld [vmem:[#allocation11 + $0xe8] sm:$0xff]
    %v3699 = vld [vmem:[#allocation11 + $0xf0] sm:$0xff]
    %v3700 = vld [vmem:[#allocation11 + $0xf8] sm:$0xff]
    %v3701 = vld [vmem:[#allocation11 + $0x100] sm:$0xff]
    %v3702 = vld [vmem:[#allocation11 + $0x108] sm:$0xff]
    %v3703 = vld [vmem:[#allocation11 + $0x110] sm:$0xff]
    %v3704 = vld [vmem:[#allocation11 + $0x118] sm:$0xff]
    %v3705 = vld [vmem:[#allocation11 + $0x120] sm:$0xff]
    %v3706 = vld [vmem:[#allocation11 + $0x128] sm:$0xff]
    %v3707 = vld [vmem:[#allocation11 + $0x130] sm:$0xff]
    %v3708 = vld [vmem:[#allocation11 + $0x138] sm:$0xff]
    %v3709 = vld [vmem:[#allocation11 + $0x140] sm:$0xff]
    %v3710 = vld [vmem:[#allocation11 + $0x148] sm:$0xff]
    %v3711 = vld [vmem:[#allocation11 + $0x150] sm:$0xff]
    %v3712 = vld [vmem:[#allocation11 + $0x158] sm:$0xff]
    %v3713 = vld [vmem:[#allocation11 + $0x160] sm:$0xff]
    %v3714 = vld [vmem:[#allocation11 + $0x168] sm:$0xff]
    %v3715 = vld [vmem:[#allocation11 + $0x170] sm:$0xff]
    %v3716 = vld [vmem:[#allocation11 + $0x178] sm:$0xff]
    %v3717 = vld [vmem:[#allocation11 + $0x180] sm:$0xff]
    %v3718 = vld [vmem:[#allocation11 + $0x188] sm:$0xff]
    %v3719 = vld [vmem:[#allocation11 + $0x190] sm:$0xff]
    %v3720 = vld [vmem:[#allocation11 + $0x198] sm:$0xff]
    %v3721 = vld [vmem:[#allocation11 + $0x1a0] sm:$0xff]
    %v3722 = vld [vmem:[#allocation11 + $0x1a8] sm:$0xff]
    %v3723 = vld [vmem:[#allocation11 + $0x1b0] sm:$0xff]
    %v3724 = vld [vmem:[#allocation11 + $0x1b8] sm:$0xff]
    %v3725 = vld [vmem:[#allocation11 + $0x1c0] sm:$0xff]
    %v3726 = vld [vmem:[#allocation11 + $0x1c8] sm:$0xff]
    %v3727 = vld [vmem:[#allocation11 + $0x1d0] sm:$0xff]
    %v3728 = vld [vmem:[#allocation11 + $0x1d8] sm:$0xff]
    %v3729 = vld [vmem:[#allocation11 + $0x1e0] sm:$0xff]
    %v3730 = vld [vmem:[#allocation11 + $0x1e8] sm:$0xff]
    %v3731 = vld [vmem:[#allocation11 + $0x1f0] sm:$0xff]
    %v3732 = vld [vmem:[#allocation11 + $0x1f8] sm:$0xff]
    %v3733 = vld [vmem:[#allocation12] sm:$0xff]
    %v3734 = vld [vmem:[#allocation12 + $0x8] sm:$0xff]
    %v3735 = vld [vmem:[#allocation12 + $0x10] sm:$0xff]
    %v3736 = vld [vmem:[#allocation12 + $0x18] sm:$0xff]
    %v3737 = vld [vmem:[#allocation12 + $0x20] sm:$0xff]
    %v3738 = vld [vmem:[#allocation12 + $0x28] sm:$0xff]
    %v3739 = vld [vmem:[#allocation12 + $0x30] sm:$0xff]
    %v3740 = vld [vmem:[#allocation12 + $0x38] sm:$0xff]
    %v3741 = vld [vmem:[#allocation12 + $0x40] sm:$0xff]
    %v3742 = vld [vmem:[#allocation12 + $0x48] sm:$0xff]
    %v3743 = vld [vmem:[#allocation12 + $0x50] sm:$0xff]
    %v3744 = vld [vmem:[#allocation12 + $0x58] sm:$0xff]
    %v3745 = vld [vmem:[#allocation12 + $0x60] sm:$0xff]
    %v3746 = vld [vmem:[#allocation12 + $0x68] sm:$0xff]
    %v3747 = vld [vmem:[#allocation12 + $0x70] sm:$0xff]
    %v3748 = vld [vmem:[#allocation12 + $0x78] sm:$0xff]
    %v3749 = vld [vmem:[#allocation12 + $0x80] sm:$0xff]
    %v3750 = vld [vmem:[#allocation12 + $0x88] sm:$0xff]
    %v3751 = vld [vmem:[#allocation12 + $0x90] sm:$0xff]
    %v3752 = vld [vmem:[#allocation12 + $0x98] sm:$0xff]
    %v3753 = vld [vmem:[#allocation12 + $0xa0] sm:$0xff]
    %v3754 = vld [vmem:[#allocation12 + $0xa8] sm:$0xff]
    %v3755 = vld [vmem:[#allocation12 + $0xb0] sm:$0xff]
    %v3756 = vld [vmem:[#allocation12 + $0xb8] sm:$0xff]
    %v3757 = vld [vmem:[#allocation12 + $0xc0] sm:$0xff]
    %v3758 = vld [vmem:[#allocation12 + $0xc8] sm:$0xff]
    %v3759 = vld [vmem:[#allocation12 + $0xd0] sm:$0xff]
    %v3760 = vld [vmem:[#allocation12 + $0xd8] sm:$0xff]
    %v3761 = vld [vmem:[#allocation12 + $0xe0] sm:$0xff]
    %v3762 = vld [vmem:[#allocation12 + $0xe8] sm:$0xff]
    %v3763 = vld [vmem:[#allocation12 + $0xf0] sm:$0xff]
    %v3764 = vld [vmem:[#allocation12 + $0xf8] sm:$0xff]
    %v3765 = vld [vmem:[#allocation12 + $0x100] sm:$0xff]
    %v3766 = vld [vmem:[#allocation12 + $0x108] sm:$0xff]
    %v3767 = vld [vmem:[#allocation12 + $0x110] sm:$0xff]
    %v3768 = vld [vmem:[#allocation12 + $0x118] sm:$0xff]
    %v3769 = vld [vmem:[#allocation12 + $0x120] sm:$0xff]
    %v3770 = vld [vmem:[#allocation12 + $0x128] sm:$0xff]
    %v3771 = vld [vmem:[#allocation12 + $0x130] sm:$0xff]
    %v3772 = vld [vmem:[#allocation12 + $0x138] sm:$0xff]
    %v3773 = vld [vmem:[#allocation12 + $0x140] sm:$0xff]
    %v3774 = vld [vmem:[#allocation12 + $0x148] sm:$0xff]
    %v3775 = vld [vmem:[#allocation12 + $0x150] sm:$0xff]
    %v3776 = vld [vmem:[#allocation12 + $0x158] sm:$0xff]
    %v3777 = vld [vmem:[#allocation12 + $0x160] sm:$0xff]
    %v3778 = vld [vmem:[#allocation12 + $0x168] sm:$0xff]
    %v3779 = vld [vmem:[#allocation12 + $0x170] sm:$0xff]
    %v3780 = vld [vmem:[#allocation12 + $0x178] sm:$0xff]
    %v3781 = vld [vmem:[#allocation12 + $0x180] sm:$0xff]
    %v3782 = vld [vmem:[#allocation12 + $0x188] sm:$0xff]
    %v3783 = vld [vmem:[#allocation12 + $0x190] sm:$0xff]
    %v3784 = vld [vmem:[#allocation12 + $0x198] sm:$0xff]
    %v3785 = vld [vmem:[#allocation12 + $0x1a0] sm:$0xff]
    %v3786 = vld [vmem:[#allocation12 + $0x1a8] sm:$0xff]
    %v3787 = vld [vmem:[#allocation12 + $0x1b0] sm:$0xff]
    %v3788 = vld [vmem:[#allocation12 + $0x1b8] sm:$0xff]
    %v3789 = vld [vmem:[#allocation12 + $0x1c0] sm:$0xff]
    %v3790 = vld [vmem:[#allocation12 + $0x1c8] sm:$0xff]
    %v3791 = vld [vmem:[#allocation12 + $0x1d0] sm:$0xff]
    %v3792 = vld [vmem:[#allocation12 + $0x1d8] sm:$0xff]
    %v3793 = vld [vmem:[#allocation12 + $0x1e0] sm:$0xff]
    %v3794 = vld [vmem:[#allocation12 + $0x1e8] sm:$0xff]
    %v3795 = vld [vmem:[#allocation12 + $0x1f0] sm:$0xff]
    %v3796 = vld [vmem:[#allocation12 + $0x1f8] sm:$0xff]
    %v3797 = vld [vmem:[%s12] sm:$0xf]
    %v3798 = vld [vmem:[#allocation14] sm:$0xff]
    %v3799 = vld [vmem:[#allocation14 + $0x8] sm:$0xff]
    %v3800 = vld [vmem:[#allocation14 + $0x10] sm:$0xff]
    %v3801 = vld [vmem:[#allocation14 + $0x18] sm:$0xff]
    %v3802 = vld [vmem:[#allocation14 + $0x20] sm:$0xff]
    %v3803 = vld [vmem:[#allocation14 + $0x28] sm:$0xff]
    %v3804 = vld [vmem:[#allocation14 + $0x30] sm:$0xff]
    %v3805 = vld [vmem:[#allocation14 + $0x38] sm:$0xff]
    %v3806 = vld [vmem:[#allocation14 + $0x40] sm:$0xff]
    %v3807 = vld [vmem:[#allocation14 + $0x48] sm:$0xff]
    %v3808 = vld [vmem:[#allocation14 + $0x50] sm:$0xff]
    %v3809 = vld [vmem:[#allocation14 + $0x58] sm:$0xff]
    %v3810 = vld [vmem:[#allocation14 + $0x60] sm:$0xff]
    %v3811 = vld [vmem:[#allocation14 + $0x68] sm:$0xff]
    %v3812 = vld [vmem:[#allocation14 + $0x70] sm:$0xff]
    %v3813 = vld [vmem:[#allocation14 + $0x78] sm:$0xff]
    %v3814 = vld [vmem:[#allocation14 + $0x80] sm:$0xff]
    %v3815 = vld [vmem:[#allocation14 + $0x88] sm:$0xff]
    %v3816 = vld [vmem:[#allocation14 + $0x90] sm:$0xff]
    %v3817 = vld [vmem:[#allocation14 + $0x98] sm:$0xff]
    %v3818 = vld [vmem:[#allocation14 + $0xa0] sm:$0xff]
    %v3819 = vld [vmem:[#allocation14 + $0xa8] sm:$0xff]
    %v3820 = vld [vmem:[#allocation14 + $0xb0] sm:$0xff]
    %v3821 = vld [vmem:[#allocation14 + $0xb8] sm:$0xff]
    %v3822 = vld [vmem:[#allocation14 + $0xc0] sm:$0xff]
    %v3823 = vld [vmem:[#allocation14 + $0xc8] sm:$0xff]
    %v3824 = vld [vmem:[#allocation14 + $0xd0] sm:$0xff]
    %v3825 = vld [vmem:[#allocation14 + $0xd8] sm:$0xff]
    %v3826 = vld [vmem:[#allocation14 + $0xe0] sm:$0xff]
    %v3827 = vld [vmem:[#allocation14 + $0xe8] sm:$0xff]
    %v3828 = vld [vmem:[#allocation14 + $0xf0] sm:$0xff]
    %v3829 = vld [vmem:[#allocation14 + $0xf8] sm:$0xff]
    %v3830 = vld [vmem:[#allocation14 + $0x100] sm:$0xff]
    %v3831 = vld [vmem:[#allocation14 + $0x108] sm:$0xff]
    %v3832 = vld [vmem:[#allocation14 + $0x110] sm:$0xff]
    %v3833 = vld [vmem:[#allocation14 + $0x118] sm:$0xff]
    %v3834 = vld [vmem:[#allocation14 + $0x120] sm:$0xff]
    %v3835 = vld [vmem:[#allocation14 + $0x128] sm:$0xff]
    %v3836 = vld [vmem:[#allocation14 + $0x130] sm:$0xff]
    %v3837 = vld [vmem:[#allocation14 + $0x138] sm:$0xff]
    %v3838 = vld [vmem:[#allocation14 + $0x140] sm:$0xff]
    %v3839 = vld [vmem:[#allocation14 + $0x148] sm:$0xff]
    %v3840 = vld [vmem:[#allocation14 + $0x150] sm:$0xff]
    %v3841 = vld [vmem:[#allocation14 + $0x158] sm:$0xff]
    %v3842 = vld [vmem:[#allocation14 + $0x160] sm:$0xff]
    %v3843 = vld [vmem:[#allocation14 + $0x168] sm:$0xff]
    %v3844 = vld [vmem:[#allocation14 + $0x170] sm:$0xff]
    %v3845 = vld [vmem:[#allocation14 + $0x178] sm:$0xff]
    %v3846 = vld [vmem:[#allocation14 + $0x180] sm:$0xff]
    %v3847 = vld [vmem:[#allocation14 + $0x188] sm:$0xff]
    %v3848 = vld [vmem:[#allocation14 + $0x190] sm:$0xff]
    %v3849 = vld [vmem:[#allocation14 + $0x198] sm:$0xff]
    %v3850 = vld [vmem:[#allocation14 + $0x1a0] sm:$0xff]
    %v3851 = vld [vmem:[#allocation14 + $0x1a8] sm:$0xff]
    %v3852 = vld [vmem:[#allocation14 + $0x1b0] sm:$0xff]
    %v3853 = vld [vmem:[#allocation14 + $0x1b8] sm:$0xff]
    %v3854 = vld [vmem:[#allocation14 + $0x1c0] sm:$0xff]
    %v3855 = vld [vmem:[#allocation14 + $0x1c8] sm:$0xff]
    %v3856 = vld [vmem:[#allocation14 + $0x1d0] sm:$0xff]
    %v3857 = vld [vmem:[#allocation14 + $0x1d8] sm:$0xff]
    %v3858 = vld [vmem:[#allocation14 + $0x1e0] sm:$0xff]
    %v3859 = vld [vmem:[#allocation14 + $0x1e8] sm:$0xff]
    %v3860 = vld [vmem:[#allocation14 + $0x1f0] sm:$0xff]
    %v3861 = vld [vmem:[#allocation14 + $0x1f8] sm:$0xff]
    %3862 = vmatpush.msra.mxu0 %v3729
    %3863 = vmatpush.msra.mxu0 %v3725
    %3864 = vmatpush.msra.mxu0 %v3721
    %3865 = vmatpush.msra.mxu0 %v3717
    %3866 = vmatpush.msra.mxu0 %v3713
    %3867 = vmatpush.msra.mxu0 %v3709
    %3868 = vmatpush.msra.mxu0 %v3705
    %3869 = vmatpush.msra.mxu0 %v3701
    %3870 = vmatpush.msra.mxu0 %v3697
    %3871 = vmatpush.msra.mxu0 %v3693
    %3872 = vmatpush.msra.mxu0 %v3689
    %3873 = vmatpush.msra.mxu0 %v3685
    %3874 = vmatpush.msra.mxu0 %v3681
    %3875 = vmatpush.msra.mxu0 %v3677
    %3876 = vmatpush.msra.mxu0 %v3673
    %3877 = vmatpush.msra.mxu0 %v3669
    %3878 = vmatmul.f32.gmra.mxu0 0.0
    %v3879 = vpop.f32.mrf.mxu0
    %v3880 = vadd.f32 0.0, %v3879
    %3881 = vdwg.mxu0
    %3882 = vmatpush.msra.mxu0 %v3730
    %3883 = vmatpush.msra.mxu0 %v3726
    %3884 = vmatpush.msra.mxu0 %v3722
    %3885 = vmatpush.msra.mxu0 %v3718
    %3886 = vmatpush.msra.mxu0 %v3714
    %3887 = vmatpush.msra.mxu0 %v3710
    %3888 = vmatpush.msra.mxu0 %v3706
    %3889 = vmatpush.msra.mxu0 %v3702
    %3890 = vmatpush.msra.mxu0 %v3698
    %3891 = vmatpush.msra.mxu0 %v3694
    %3892 = vmatpush.msra.mxu0 %v3690
    %3893 = vmatpush.msra.mxu0 %v3686
    %3894 = vmatpush.msra.mxu0 %v3682
    %3895 = vmatpush.msra.mxu0 %v3678
    %3896 = vmatpush.msra.mxu0 %v3674
    %3897 = vmatpush.msra.mxu0 %v3670
    %3898 = vmatmul.f32.gmra.mxu0 0.0
    %v3899 = vpop.f32.mrf.mxu0
    %v3900 = vadd.f32 0.0, %v3899
    %3901 = vdwg.mxu0
    %3902 = vmatpush.msra.mxu0 %v3731
    %3903 = vmatpush.msra.mxu0 %v3727
    %3904 = vmatpush.msra.mxu0 %v3723
    %3905 = vmatpush.msra.mxu0 %v3719
    %3906 = vmatpush.msra.mxu0 %v3715
    %3907 = vmatpush.msra.mxu0 %v3711
    %3908 = vmatpush.msra.mxu0 %v3707
    %3909 = vmatpush.msra.mxu0 %v3703
    %3910 = vmatpush.msra.mxu0 %v3699
    %3911 = vmatpush.msra.mxu0 %v3695
    %3912 = vmatpush.msra.mxu0 %v3691
    %3913 = vmatpush.msra.mxu0 %v3687
    %3914 = vmatpush.msra.mxu0 %v3683
    %3915 = vmatpush.msra.mxu0 %v3679
    %3916 = vmatpush.msra.mxu0 %v3675
    %3917 = vmatpush.msra.mxu0 %v3671
    %3918 = vmatmul.f32.gmra.mxu0 0.0
    %v3919 = vpop.f32.mrf.mxu0
    %v3920 = vadd.f32 0.0, %v3919
    %3921 = vdwg.mxu0
    %3922 = vmatpush.msra.mxu0 %v3732
    %3923 = vmatpush.msra.mxu0 %v3728
    %3924 = vmatpush.msra.mxu0 %v3724
    %3925 = vmatpush.msra.mxu0 %v3720
    %3926 = vmatpush.msra.mxu0 %v3716
    %3927 = vmatpush.msra.mxu0 %v3712
    %3928 = vmatpush.msra.mxu0 %v3708
    %3929 = vmatpush.msra.mxu0 %v3704
    %3930 = vmatpush.msra.mxu0 %v3700
    %3931 = vmatpush.msra.mxu0 %v3696
    %3932 = vmatpush.msra.mxu0 %v3692
    %3933 = vmatpush.msra.mxu0 %v3688
    %3934 = vmatpush.msra.mxu0 %v3684
    %3935 = vmatpush.msra.mxu0 %v3680
    %3936 = vmatpush.msra.mxu0 %v3676
    %3937 = vmatpush.msra.mxu0 %v3672
    %3938 = vmatmul.f32.gmra.mxu0 0.0
    %v3939 = vpop.f32.mrf.mxu0
    %v3940 = vadd.f32 0.0, %v3939
    %3941 = vdwg.mxu0
    %v3942 = vadd.f32 %v3607, %v3880
    %v3943 = vadd.f32 %v3627, %v3900
    %v3944 = vadd.f32 %v3647, %v3920
    %v3945 = vadd.f32 %v3667, %v3940
    %v3946 = vxor.u32 %v3942, 2147483648
    %v3947 = vmul.f32 %v3946, 1.442695
    %v3948 = vpow.pop %v3947
    %v3949 = vadd.f32 %v3948, 1.0
    %v3950 = vrcp.pop %v3949
    %v3951 = vmul.f32 %v3949, %v3950
    %v3952 = vsub.f32 1.0, %v3951
    %v3953 = vmul.f32 %v3950, %v3952
    %v3954 = vadd.f32 %v3950, %v3953
    %vm3955 = vweird.f32 %v3949
    %vm3956 = vweird.f32 %v3950
    %vm3957 = vmor %vm3955, %vm3956
    %v3958 = vsel %vm3957, %v3950, %v3954
    %v3959 = vand.u32 2147483647, %v3949
    %vm3960 = vcmp.eq.f32.partialorder %v3959, 8.507059e+37
    %v3961 = vand.u32 %v3949, 2147483648
    %v3962 = vor.u32 1.1754944e-38, %v3961
    %v3963 = vsel %vm3960, %v3962, %v3958
    %v3964 = vmul.f32 1.0, %v3963
    %v3965 = vxor.u32 %v3943, 2147483648
    %v3966 = vmul.f32 %v3965, 1.442695
    %v3967 = vpow.pop %v3966
    %v3968 = vadd.f32 %v3967, 1.0
    %v3969 = vrcp.pop %v3968
    %v3970 = vmul.f32 %v3968, %v3969
    %v3971 = vsub.f32 1.0, %v3970
    %v3972 = vmul.f32 %v3969, %v3971
    %v3973 = vadd.f32 %v3969, %v3972
    %vm3974 = vweird.f32 %v3968
    %vm3975 = vweird.f32 %v3969
    %vm3976 = vmor %vm3974, %vm3975
    %v3977 = vsel %vm3976, %v3969, %v3973
    %v3978 = vand.u32 2147483647, %v3968
    %vm3979 = vcmp.eq.f32.partialorder %v3978, 8.507059e+37
    %v3980 = vand.u32 %v3968, 2147483648
    %v3981 = vor.u32 1.1754944e-38, %v3980
    %v3982 = vsel %vm3979, %v3981, %v3977
    %v3983 = vmul.f32 1.0, %v3982
    %v3984 = vtanh.pop %v3944
    %v3985 = vxor.u32 %v3945, 2147483648
    %v3986 = vmul.f32 %v3985, 1.442695
    %v3987 = vpow.pop %v3986
    %v3988 = vadd.f32 %v3987, 1.0
    %v3989 = vrcp.pop %v3988
    %v3990 = vmul.f32 %v3988, %v3989
    %v3991 = vsub.f32 1.0, %v3990
    %v3992 = vmul.f32 %v3989, %v3991
    %v3993 = vadd.f32 %v3989, %v3992
    %vm3994 = vweird.f32 %v3988
    %vm3995 = vweird.f32 %v3989
    %vm3996 = vmor %vm3994, %vm3995
    %v3997 = vsel %vm3996, %v3989, %v3993
    %v3998 = vand.u32 2147483647, %v3988
    %vm3999 = vcmp.eq.f32.partialorder %v3998, 8.507059e+37
    %v4000 = vand.u32 %v3988, 2147483648
    %v4001 = vor.u32 1.1754944e-38, %v4000
    %v4002 = vsel %vm3999, %v4001, %v3997
    %v4003 = vmul.f32 1.0, %v4002
    %v4004 = vmul.f32 %v3983, 0.0
    %v4005 = vmul.f32 %v3964, %v3984
    %v4006 = vadd.f32 %v4004, %v4005
    %v4007 = vtanh.pop %v4006
    %v4008 = vmul.f32 %v4003, %v4007
    %4009 = vmatpush.msra.mxu0 %v3729
    %4010 = vmatpush.msra.mxu0 %v3725
    %4011 = vmatpush.msra.mxu0 %v3721
    %4012 = vmatpush.msra.mxu0 %v3717
    %4013 = vmatpush.msra.mxu0 %v3713
    %4014 = vmatpush.msra.mxu0 %v3709
    %4015 = vmatpush.msra.mxu0 %v3705
    %4016 = vmatpush.msra.mxu0 %v3701
    %4017 = vmatpush.msra.mxu0 %v3697
    %4018 = vmatpush.msra.mxu0 %v3693
    %4019 = vmatpush.msra.mxu0 %v3689
    %4020 = vmatpush.msra.mxu0 %v3685
    %4021 = vmatpush.msra.mxu0 %v3681
    %4022 = vmatpush.msra.mxu0 %v3677
    %4023 = vmatpush.msra.mxu0 %v3673
    %4024 = vmatpush.msra.mxu0 %v3669
    %4025 = vmatmul.f32.gmra.mxu0 %v4008
    %v4026 = vpop.f32.mrf.mxu0
    %v4027 = vadd.f32 0.0, %v4026
    %4028 = vdwg.mxu0
    %4029 = vmatpush.msra.mxu0 %v3730
    %4030 = vmatpush.msra.mxu0 %v3726
    %4031 = vmatpush.msra.mxu0 %v3722
    %4032 = vmatpush.msra.mxu0 %v3718
    %4033 = vmatpush.msra.mxu0 %v3714
    %4034 = vmatpush.msra.mxu0 %v3710
    %4035 = vmatpush.msra.mxu0 %v3706
    %4036 = vmatpush.msra.mxu0 %v3702
    %4037 = vmatpush.msra.mxu0 %v3698
    %4038 = vmatpush.msra.mxu0 %v3694
    %4039 = vmatpush.msra.mxu0 %v3690
    %4040 = vmatpush.msra.mxu0 %v3686
    %4041 = vmatpush.msra.mxu0 %v3682
    %4042 = vmatpush.msra.mxu0 %v3678
    %4043 = vmatpush.msra.mxu0 %v3674
    %4044 = vmatpush.msra.mxu0 %v3670
    %4045 = vmatmul.f32.gmra.mxu0 %v4008
    %v4046 = vpop.f32.mrf.mxu0
    %v4047 = vadd.f32 0.0, %v4046
    %4048 = vdwg.mxu0
    %4049 = vmatpush.msra.mxu0 %v3731
    %4050 = vmatpush.msra.mxu0 %v3727
    %4051 = vmatpush.msra.mxu0 %v3723
    %4052 = vmatpush.msra.mxu0 %v3719
    %4053 = vmatpush.msra.mxu0 %v3715
    %4054 = vmatpush.msra.mxu0 %v3711
    %4055 = vmatpush.msra.mxu0 %v3707
    %4056 = vmatpush.msra.mxu0 %v3703
    %4057 = vmatpush.msra.mxu0 %v3699
    %4058 = vmatpush.msra.mxu0 %v3695
    %4059 = vmatpush.msra.mxu0 %v3691
    %4060 = vmatpush.msra.mxu0 %v3687
    %4061 = vmatpush.msra.mxu0 %v3683
    %4062 = vmatpush.msra.mxu0 %v3679
    %4063 = vmatpush.msra.mxu0 %v3675
    %4064 = vmatpush.msra.mxu0 %v3671
    %4065 = vmatmul.f32.gmra.mxu0 %v4008
    %v4066 = vpop.f32.mrf.mxu0
    %v4067 = vadd.f32 0.0, %v4066
    %4068 = vdwg.mxu0
    %4069 = vmatpush.msra.mxu0 %v3732
    %4070 = vmatpush.msra.mxu0 %v3728
    %4071 = vmatpush.msra.mxu0 %v3724
    %4072 = vmatpush.msra.mxu0 %v3720
    %4073 = vmatpush.msra.mxu0 %v3716
    %4074 = vmatpush.msra.mxu0 %v3712
    %4075 = vmatpush.msra.mxu0 %v3708
    %4076 = vmatpush.msra.mxu0 %v3704
    %4077 = vmatpush.msra.mxu0 %v3700
    %4078 = vmatpush.msra.mxu0 %v3696
    %4079 = vmatpush.msra.mxu0 %v3692
    %4080 = vmatpush.msra.mxu0 %v3688
    %4081 = vmatpush.msra.mxu0 %v3684
    %4082 = vmatpush.msra.mxu0 %v3680
    %4083 = vmatpush.msra.mxu0 %v3676
    %4084 = vmatpush.msra.mxu0 %v3672
    %4085 = vmatmul.f32.gmra.mxu0 %v4008
    %v4086 = vpop.f32.mrf.mxu0
    %v4087 = vadd.f32 0.0, %v4086
    %4088 = vdwg.mxu0
    %v4089 = vadd.f32 %v3607, %v4027
    %v4090 = vadd.f32 %v3627, %v4047
    %v4091 = vadd.f32 %v3647, %v4067
    %v4092 = vadd.f32 %v3667, %v4087
    %v4093 = vxor.u32 %v4089, 2147483648
    %v4094 = vmul.f32 %v4093, 1.442695
    %v4095 = vpow.pop %v4094
    %v4096 = vadd.f32 %v4095, 1.0
    %v4097 = vrcp.pop %v4096
    %v4098 = vmul.f32 %v4096, %v4097
    %v4099 = vsub.f32 1.0, %v4098
    %v4100 = vmul.f32 %v4097, %v4099
    %v4101 = vadd.f32 %v4097, %v4100
    %vm4102 = vweird.f32 %v4096
    %vm4103 = vweird.f32 %v4097
    %vm4104 = vmor %vm4102, %vm4103
    %v4105 = vsel %vm4104, %v4097, %v4101
    %v4106 = vand.u32 2147483647, %v4096
    %vm4107 = vcmp.eq.f32.partialorder %v4106, 8.507059e+37
    %v4108 = vand.u32 %v4096, 2147483648
    %v4109 = vor.u32 1.1754944e-38, %v4108
    %v4110 = vsel %vm4107, %v4109, %v4105
    %v4111 = vmul.f32 1.0, %v4110
    %v4112 = vxor.u32 %v4090, 2147483648
    %v4113 = vmul.f32 %v4112, 1.442695
    %v4114 = vpow.pop %v4113
    %v4115 = vadd.f32 %v4114, 1.0
    %v4116 = vrcp.pop %v4115
    %v4117 = vmul.f32 %v4115, %v4116
    %v4118 = vsub.f32 1.0, %v4117
    %v4119 = vmul.f32 %v4116, %v4118
    %v4120 = vadd.f32 %v4116, %v4119
    %vm4121 = vweird.f32 %v4115
    %vm4122 = vweird.f32 %v4116
    %vm4123 = vmor %vm4121, %vm4122
    %v4124 = vsel %vm4123, %v4116, %v4120
    %v4125 = vand.u32 2147483647, %v4115
    %vm4126 = vcmp.eq.f32.partialorder %v4125, 8.507059e+37
    %v4127 = vand.u32 %v4115, 2147483648
    %v4128 = vor.u32 1.1754944e-38, %v4127
    %v4129 = vsel %vm4126, %v4128, %v4124
    %v4130 = vmul.f32 1.0, %v4129
    %v4131 = vtanh.pop %v4091
    %v4132 = vxor.u32 %v4092, 2147483648
    %v4133 = vmul.f32 %v4132, 1.442695
    %v4134 = vpow.pop %v4133
    %v4135 = vadd.f32 %v4134, 1.0
    %v4136 = vrcp.pop %v4135
    %v4137 = vmul.f32 %v4135, %v4136
    %v4138 = vsub.f32 1.0, %v4137
    %v4139 = vmul.f32 %v4136, %v4138
    %v4140 = vadd.f32 %v4136, %v4139
    %vm4141 = vweird.f32 %v4135
    %vm4142 = vweird.f32 %v4136
    %vm4143 = vmor %vm4141, %vm4142
    %v4144 = vsel %vm4143, %v4136, %v4140
    %v4145 = vand.u32 2147483647, %v4135
    %vm4146 = vcmp.eq.f32.partialorder %v4145, 8.507059e+37
    %v4147 = vand.u32 %v4135, 2147483648
    %v4148 = vor.u32 1.1754944e-38, %v4147
    %v4149 = vsel %vm4146, %v4148, %v4144
    %v4150 = vmul.f32 1.0, %v4149
    %v4151 = vmul.f32 %v4130, %v4006
    %v4152 = vmul.f32 %v4111, %v4131
    %v4153 = vadd.f32 %v4151, %v4152
    %v4154 = vtanh.pop %v4153
    %v4155 = vmul.f32 %v4150, %v4154
    %v4157 = vperm.slane %v3797, 0
    %v4158 = vperm.slane %v3797, 1
    %v4159 = vperm.slane %v3797, 2
    %v4160 = vperm.slane %v3797, 3
    %4165 = vmatpush.msra.mxu0 %v3793
    %4166 = vmatpush.msra.mxu0 %v3789
    %4167 = vmatpush.msra.mxu0 %v3785
    %4168 = vmatpush.msra.mxu0 %v3781
    %4169 = vmatpush.msra.mxu0 %v3777
    %4170 = vmatpush.msra.mxu0 %v3773
    %4171 = vmatpush.msra.mxu0 %v3769
    %4172 = vmatpush.msra.mxu0 %v3765
    %4173 = vmatpush.msra.mxu0 %v3761
    %4174 = vmatpush.msra.mxu0 %v3757
    %4175 = vmatpush.msra.mxu0 %v3753
    %4176 = vmatpush.msra.mxu0 %v3749
    %4177 = vmatpush.msra.mxu0 %v3745
    %4178 = vmatpush.msra.mxu0 %v3741
    %4179 = vmatpush.msra.mxu0 %v3737
    %4180 = vmatpush.msra.mxu0 %v3733
    %4181 = vmatmul.f32.gmra.mxu0 %v4008
    %v4182 = vpop.f32.mrf.mxu0
    %v4183 = vadd.f32 %v4157, %v4182
    %4184 = vdwg.mxu0
    %4185 = vmatpush.msra.mxu0 %v3794
    %4186 = vmatpush.msra.mxu0 %v3790
    %4187 = vmatpush.msra.mxu0 %v3786
    %4188 = vmatpush.msra.mxu0 %v3782
    %4189 = vmatpush.msra.mxu0 %v3778
    %4190 = vmatpush.msra.mxu0 %v3774
    %4191 = vmatpush.msra.mxu0 %v3770
    %4192 = vmatpush.msra.mxu0 %v3766
    %4193 = vmatpush.msra.mxu0 %v3762
    %4194 = vmatpush.msra.mxu0 %v3758
    %4195 = vmatpush.msra.mxu0 %v3754
    %4196 = vmatpush.msra.mxu0 %v3750
    %4197 = vmatpush.msra.mxu0 %v3746
    %4198 = vmatpush.msra.mxu0 %v3742
    %4199 = vmatpush.msra.mxu0 %v3738
    %4200 = vmatpush.msra.mxu0 %v3734
    %4201 = vmatmul.f32.gmra.mxu0 %v4008
    %v4202 = vpop.f32.mrf.mxu0
    %v4203 = vadd.f32 %v4158, %v4202
    %4204 = vdwg.mxu0
    %4205 = vmatpush.msra.mxu0 %v3795
    %4206 = vmatpush.msra.mxu0 %v3791
    %4207 = vmatpush.msra.mxu0 %v3787
    %4208 = vmatpush.msra.mxu0 %v3783
    %4209 = vmatpush.msra.mxu0 %v3779
    %4210 = vmatpush.msra.mxu0 %v3775
    %4211 = vmatpush.msra.mxu0 %v3771
    %4212 = vmatpush.msra.mxu0 %v3767
    %4213 = vmatpush.msra.mxu0 %v3763
    %4214 = vmatpush.msra.mxu0 %v3759
    %4215 = vmatpush.msra.mxu0 %v3755
    %4216 = vmatpush.msra.mxu0 %v3751
    %4217 = vmatpush.msra.mxu0 %v3747
    %4218 = vmatpush.msra.mxu0 %v3743
    %4219 = vmatpush.msra.mxu0 %v3739
    %4220 = vmatpush.msra.mxu0 %v3735
    %4221 = vmatmul.f32.gmra.mxu0 %v4008
    %v4222 = vpop.f32.mrf.mxu0
    %v4223 = vadd.f32 %v4159, %v4222
    %4224 = vdwg.mxu0
    %4225 = vmatpush.msra.mxu0 %v3796
    %4226 = vmatpush.msra.mxu0 %v3792
    %4227 = vmatpush.msra.mxu0 %v3788
    %4228 = vmatpush.msra.mxu0 %v3784
    %4229 = vmatpush.msra.mxu0 %v3780
    %4230 = vmatpush.msra.mxu0 %v3776
    %4231 = vmatpush.msra.mxu0 %v3772
    %4232 = vmatpush.msra.mxu0 %v3768
    %4233 = vmatpush.msra.mxu0 %v3764
    %4234 = vmatpush.msra.mxu0 %v3760
    %4235 = vmatpush.msra.mxu0 %v3756
    %4236 = vmatpush.msra.mxu0 %v3752
    %4237 = vmatpush.msra.mxu0 %v3748
    %4238 = vmatpush.msra.mxu0 %v3744
    %4239 = vmatpush.msra.mxu0 %v3740
    %4240 = vmatpush.msra.mxu0 %v3736
    %4241 = vmatmul.f32.gmra.mxu0 %v4008
    %v4242 = vpop.f32.mrf.mxu0
    %v4243 = vadd.f32 %v4160, %v4242
    %4244 = vdwg.mxu0
    %4245 = vmatpush.msra.mxu0 %v3858
    %4246 = vmatpush.msra.mxu0 %v3854
    %4247 = vmatpush.msra.mxu0 %v3850
    %4248 = vmatpush.msra.mxu0 %v3846
    %4249 = vmatpush.msra.mxu0 %v3842
    %4250 = vmatpush.msra.mxu0 %v3838
    %4251 = vmatpush.msra.mxu0 %v3834
    %4252 = vmatpush.msra.mxu0 %v3830
    %4253 = vmatpush.msra.mxu0 %v3826
    %4254 = vmatpush.msra.mxu0 %v3822
    %4255 = vmatpush.msra.mxu0 %v3818
    %4256 = vmatpush.msra.mxu0 %v3814
    %4257 = vmatpush.msra.mxu0 %v3810
    %4258 = vmatpush.msra.mxu0 %v3806
    %4259 = vmatpush.msra.mxu0 %v3802
    %4260 = vmatpush.msra.mxu0 %v3798
    %4261 = vmatmul.f32.gmra.mxu0 0.0
    %v4262 = vpop.f32.mrf.mxu0
    %v4263 = vadd.f32 0.0, %v4262
    %4264 = vdwg.mxu0
    %4265 = vmatpush.msra.mxu0 %v3859
    %4266 = vmatpush.msra.mxu0 %v3855
    %4267 = vmatpush.msra.mxu0 %v3851
    %4268 = vmatpush.msra.mxu0 %v3847
    %4269 = vmatpush.msra.mxu0 %v3843
    %4270 = vmatpush.msra.mxu0 %v3839
    %4271 = vmatpush.msra.mxu0 %v3835
    %4272 = vmatpush.msra.mxu0 %v3831
    %4273 = vmatpush.msra.mxu0 %v3827
    %4274 = vmatpush.msra.mxu0 %v3823
    %4275 = vmatpush.msra.mxu0 %v3819
    %4276 = vmatpush.msra.mxu0 %v3815
    %4277 = vmatpush.msra.mxu0 %v3811
    %4278 = vmatpush.msra.mxu0 %v3807
    %4279 = vmatpush.msra.mxu0 %v3803
    %4280 = vmatpush.msra.mxu0 %v3799
    %4281 = vmatmul.f32.gmra.mxu0 0.0
    %v4282 = vpop.f32.mrf.mxu0
    %v4283 = vadd.f32 0.0, %v4282
    %4284 = vdwg.mxu0
    %4285 = vmatpush.msra.mxu0 %v3860
    %4286 = vmatpush.msra.mxu0 %v3856
    %4287 = vmatpush.msra.mxu0 %v3852
    %4288 = vmatpush.msra.mxu0 %v3848
    %4289 = vmatpush.msra.mxu0 %v3844
    %4290 = vmatpush.msra.mxu0 %v3840
    %4291 = vmatpush.msra.mxu0 %v3836
    %4292 = vmatpush.msra.mxu0 %v3832
    %4293 = vmatpush.msra.mxu0 %v3828
    %4294 = vmatpush.msra.mxu0 %v3824
    %4295 = vmatpush.msra.mxu0 %v3820
    %4296 = vmatpush.msra.mxu0 %v3816
    %4297 = vmatpush.msra.mxu0 %v3812
    %4298 = vmatpush.msra.mxu0 %v3808
    %4299 = vmatpush.msra.mxu0 %v3804
    %4300 = vmatpush.msra.mxu0 %v3800
    %4301 = vmatmul.f32.gmra.mxu0 0.0
    %v4302 = vpop.f32.mrf.mxu0
    %v4303 = vadd.f32 0.0, %v4302
    %4304 = vdwg.mxu0
    %4305 = vmatpush.msra.mxu0 %v3861
    %4306 = vmatpush.msra.mxu0 %v3857
    %4307 = vmatpush.msra.mxu0 %v3853
    %4308 = vmatpush.msra.mxu0 %v3849
    %4309 = vmatpush.msra.mxu0 %v3845
    %4310 = vmatpush.msra.mxu0 %v3841
    %4311 = vmatpush.msra.mxu0 %v3837
    %4312 = vmatpush.msra.mxu0 %v3833
    %4313 = vmatpush.msra.mxu0 %v3829
    %4314 = vmatpush.msra.mxu0 %v3825
    %4315 = vmatpush.msra.mxu0 %v3821
    %4316 = vmatpush.msra.mxu0 %v3817
    %4317 = vmatpush.msra.mxu0 %v3813
    %4318 = vmatpush.msra.mxu0 %v3809
    %4319 = vmatpush.msra.mxu0 %v3805
    %4320 = vmatpush.msra.mxu0 %v3801
    %4321 = vmatmul.f32.gmra.mxu0 0.0
    %v4322 = vpop.f32.mrf.mxu0
    %v4323 = vadd.f32 0.0, %v4322
    %4324 = vdwg.mxu0
    %v4325 = vadd.f32 %v4183, %v4263
    %v4326 = vadd.f32 %v4203, %v4283
    %v4327 = vadd.f32 %v4223, %v4303
    %v4328 = vadd.f32 %v4243, %v4323
    %v4329 = vxor.u32 %v4325, 2147483648
    %v4330 = vmul.f32 %v4329, 1.442695
    %v4331 = vpow.pop %v4330
    %v4332 = vadd.f32 %v4331, 1.0
    %v4333 = vrcp.pop %v4332
    %v4334 = vmul.f32 %v4332, %v4333
    %v4335 = vsub.f32 1.0, %v4334
    %v4336 = vmul.f32 %v4333, %v4335
    %v4337 = vadd.f32 %v4333, %v4336
    %vm4338 = vweird.f32 %v4332
    %vm4339 = vweird.f32 %v4333
    %vm4340 = vmor %vm4338, %vm4339
    %v4341 = vsel %vm4340, %v4333, %v4337
    %v4342 = vand.u32 2147483647, %v4332
    %vm4343 = vcmp.eq.f32.partialorder %v4342, 8.507059e+37
    %v4344 = vand.u32 %v4332, 2147483648
    %v4345 = vor.u32 1.1754944e-38, %v4344
    %v4346 = vsel %vm4343, %v4345, %v4341
    %v4347 = vmul.f32 1.0, %v4346
    %v4348 = vxor.u32 %v4326, 2147483648
    %v4349 = vmul.f32 %v4348, 1.442695
    %v4350 = vpow.pop %v4349
    %v4351 = vadd.f32 %v4350, 1.0
    %v4352 = vrcp.pop %v4351
    %v4353 = vmul.f32 %v4351, %v4352
    %v4354 = vsub.f32 1.0, %v4353
    %v4355 = vmul.f32 %v4352, %v4354
    %v4356 = vadd.f32 %v4352, %v4355
    %vm4357 = vweird.f32 %v4351
    %vm4358 = vweird.f32 %v4352
    %vm4359 = vmor %vm4357, %vm4358
    %v4360 = vsel %vm4359, %v4352, %v4356
    %v4361 = vand.u32 2147483647, %v4351
    %vm4362 = vcmp.eq.f32.partialorder %v4361, 8.507059e+37
    %v4363 = vand.u32 %v4351, 2147483648
    %v4364 = vor.u32 1.1754944e-38, %v4363
    %v4365 = vsel %vm4362, %v4364, %v4360
    %v4366 = vmul.f32 1.0, %v4365
    %v4367 = vtanh.pop %v4327
    %v4368 = vxor.u32 %v4328, 2147483648
    %v4369 = vmul.f32 %v4368, 1.442695
    %v4370 = vpow.pop %v4369
    %v4371 = vadd.f32 %v4370, 1.0
    %v4372 = vrcp.pop %v4371
    %v4373 = vmul.f32 %v4371, %v4372
    %v4374 = vsub.f32 1.0, %v4373
    %v4375 = vmul.f32 %v4372, %v4374
    %v4376 = vadd.f32 %v4372, %v4375
    %vm4377 = vweird.f32 %v4371
    %vm4378 = vweird.f32 %v4372
    %vm4379 = vmor %vm4377, %vm4378
    %v4380 = vsel %vm4379, %v4372, %v4376
    %v4381 = vand.u32 2147483647, %v4371
    %vm4382 = vcmp.eq.f32.partialorder %v4381, 8.507059e+37
    %v4383 = vand.u32 %v4371, 2147483648
    %v4384 = vor.u32 1.1754944e-38, %v4383
    %v4385 = vsel %vm4382, %v4384, %v4380
    %v4386 = vmul.f32 1.0, %v4385
    %v4387 = vmul.f32 %v4366, 0.0
    %v4388 = vmul.f32 %v4347, %v4367
    %v4389 = vadd.f32 %v4387, %v4388
    %v4390 = vtanh.pop %v4389
    %v4391 = vmul.f32 %v4386, %v4390
    %4392 = vst [vmem:[#allocation2] sm:$0x1] %v4391
    %4393 = vmatpush.msra.mxu0 %v3729
    %4394 = vmatpush.msra.mxu0 %v3725
    %4395 = vmatpush.msra.mxu0 %v3721
    %4396 = vmatpush.msra.mxu0 %v3717
    %4397 = vmatpush.msra.mxu0 %v3713
    %4398 = vmatpush.msra.mxu0 %v3709
    %4399 = vmatpush.msra.mxu0 %v3705
    %4400 = vmatpush.msra.mxu0 %v3701
    %4401 = vmatpush.msra.mxu0 %v3697
    %4402 = vmatpush.msra.mxu0 %v3693
    %4403 = vmatpush.msra.mxu0 %v3689
    %4404 = vmatpush.msra.mxu0 %v3685
    %4405 = vmatpush.msra.mxu0 %v3681
    %4406 = vmatpush.msra.mxu0 %v3677
    %4407 = vmatpush.msra.mxu0 %v3673
    %4408 = vmatpush.msra.mxu0 %v3669
    %4409 = vmatmul.f32.gmra.mxu0 %v4155
    %v4410 = vpop.f32.mrf.mxu0
    %v4411 = vadd.f32 0.0, %v4410
    %4412 = vdwg.mxu0
    %4413 = vmatpush.msra.mxu0 %v3730
    %4414 = vmatpush.msra.mxu0 %v3726
    %4415 = vmatpush.msra.mxu0 %v3722
    %4416 = vmatpush.msra.mxu0 %v3718
    %4417 = vmatpush.msra.mxu0 %v3714
    %4418 = vmatpush.msra.mxu0 %v3710
    %4419 = vmatpush.msra.mxu0 %v3706
    %4420 = vmatpush.msra.mxu0 %v3702
    %4421 = vmatpush.msra.mxu0 %v3698
    %4422 = vmatpush.msra.mxu0 %v3694
    %4423 = vmatpush.msra.mxu0 %v3690
    %4424 = vmatpush.msra.mxu0 %v3686
    %4425 = vmatpush.msra.mxu0 %v3682
    %4426 = vmatpush.msra.mxu0 %v3678
    %4427 = vmatpush.msra.mxu0 %v3674
    %4428 = vmatpush.msra.mxu0 %v3670
    %4429 = vmatmul.f32.gmra.mxu0 %v4155
    %v4430 = vpop.f32.mrf.mxu0
    %v4431 = vadd.f32 0.0, %v4430
    %4432 = vdwg.mxu0
    %4433 = vmatpush.msra.mxu0 %v3731
    %4434 = vmatpush.msra.mxu0 %v3727
    %4435 = vmatpush.msra.mxu0 %v3723
    %4436 = vmatpush.msra.mxu0 %v3719
    %4437 = vmatpush.msra.mxu0 %v3715
    %4438 = vmatpush.msra.mxu0 %v3711
    %4439 = vmatpush.msra.mxu0 %v3707
    %4440 = vmatpush.msra.mxu0 %v3703
    %4441 = vmatpush.msra.mxu0 %v3699
    %4442 = vmatpush.msra.mxu0 %v3695
    %4443 = vmatpush.msra.mxu0 %v3691
    %4444 = vmatpush.msra.mxu0 %v3687
    %4445 = vmatpush.msra.mxu0 %v3683
    %4446 = vmatpush.msra.mxu0 %v3679
    %4447 = vmatpush.msra.mxu0 %v3675
    %4448 = vmatpush.msra.mxu0 %v3671
    %4449 = vmatmul.f32.gmra.mxu0 %v4155
    %v4450 = vpop.f32.mrf.mxu0
    %v4451 = vadd.f32 0.0, %v4450
    %4452 = vdwg.mxu0
    %4453 = vmatpush.msra.mxu0 %v3732
    %4454 = vmatpush.msra.mxu0 %v3728
    %4455 = vmatpush.msra.mxu0 %v3724
    %4456 = vmatpush.msra.mxu0 %v3720
    %4457 = vmatpush.msra.mxu0 %v3716
    %4458 = vmatpush.msra.mxu0 %v3712
    %4459 = vmatpush.msra.mxu0 %v3708
    %4460 = vmatpush.msra.mxu0 %v3704
    %4461 = vmatpush.msra.mxu0 %v3700
    %4462 = vmatpush.msra.mxu0 %v3696
    %4463 = vmatpush.msra.mxu0 %v3692
    %4464 = vmatpush.msra.mxu0 %v3688
    %4465 = vmatpush.msra.mxu0 %v3684
    %4466 = vmatpush.msra.mxu0 %v3680
    %4467 = vmatpush.msra.mxu0 %v3676
    %4468 = vmatpush.msra.mxu0 %v3672
    %4469 = vmatmul.f32.gmra.mxu0 %v4155
    %v4470 = vpop.f32.mrf.mxu0
    %v4471 = vadd.f32 0.0, %v4470
    %4472 = vdwg.mxu0
    %v4473 = vadd.f32 %v3607, %v4411
    %v4474 = vadd.f32 %v3627, %v4431
    %v4475 = vadd.f32 %v3647, %v4451
    %v4476 = vadd.f32 %v3667, %v4471
    %v4477 = vxor.u32 %v4473, 2147483648
    %v4478 = vmul.f32 %v4477, 1.442695
    %v4479 = vpow.pop %v4478
    %v4480 = vadd.f32 %v4479, 1.0
    %v4481 = vrcp.pop %v4480
    %v4482 = vmul.f32 %v4480, %v4481
    %v4483 = vsub.f32 1.0, %v4482
    %v4484 = vmul.f32 %v4481, %v4483
    %v4485 = vadd.f32 %v4481, %v4484
    %vm4486 = vweird.f32 %v4480
    %vm4487 = vweird.f32 %v4481
    %vm4488 = vmor %vm4486, %vm4487
    %v4489 = vsel %vm4488, %v4481, %v4485
    %v4490 = vand.u32 2147483647, %v4480
    %vm4491 = vcmp.eq.f32.partialorder %v4490, 8.507059e+37
    %v4492 = vand.u32 %v4480, 2147483648
    %v4493 = vor.u32 1.1754944e-38, %v4492
    %v4494 = vsel %vm4491, %v4493, %v4489
    %v4495 = vmul.f32 1.0, %v4494
    %v4496 = vxor.u32 %v4474, 2147483648
    %v4497 = vmul.f32 %v4496, 1.442695
    %v4498 = vpow.pop %v4497
    %v4499 = vadd.f32 %v4498, 1.0
    %v4500 = vrcp.pop %v4499
    %v4501 = vmul.f32 %v4499, %v4500
    %v4502 = vsub.f32 1.0, %v4501
    %v4503 = vmul.f32 %v4500, %v4502
    %v4504 = vadd.f32 %v4500, %v4503
    %vm4505 = vweird.f32 %v4499
    %vm4506 = vweird.f32 %v4500
    %vm4507 = vmor %vm4505, %vm4506
    %v4508 = vsel %vm4507, %v4500, %v4504
    %v4509 = vand.u32 2147483647, %v4499
    %vm4510 = vcmp.eq.f32.partialorder %v4509, 8.507059e+37
    %v4511 = vand.u32 %v4499, 2147483648
    %v4512 = vor.u32 1.1754944e-38, %v4511
    %v4513 = vsel %vm4510, %v4512, %v4508
    %v4514 = vmul.f32 1.0, %v4513
    %v4515 = vtanh.pop %v4475
    %v4516 = vxor.u32 %v4476, 2147483648
    %v4517 = vmul.f32 %v4516, 1.442695
    %v4518 = vpow.pop %v4517
    %v4519 = vadd.f32 %v4518, 1.0
    %v4520 = vrcp.pop %v4519
    %v4521 = vmul.f32 %v4519, %v4520
    %v4522 = vsub.f32 1.0, %v4521
    %v4523 = vmul.f32 %v4520, %v4522
    %v4524 = vadd.f32 %v4520, %v4523
    %vm4525 = vweird.f32 %v4519
    %vm4526 = vweird.f32 %v4520
    %vm4527 = vmor %vm4525, %vm4526
    %v4528 = vsel %vm4527, %v4520, %v4524
    %v4529 = vand.u32 2147483647, %v4519
    %vm4530 = vcmp.eq.f32.partialorder %v4529, 8.507059e+37
    %v4531 = vand.u32 %v4519, 2147483648
    %v4532 = vor.u32 1.1754944e-38, %v4531
    %v4533 = vsel %vm4530, %v4532, %v4528
    %v4534 = vmul.f32 1.0, %v4533
    %v4535 = vmul.f32 %v4514, %v4153
    %v4536 = vmul.f32 %v4495, %v4515
    %v4537 = vadd.f32 %v4535, %v4536
    %v4538 = vtanh.pop %v4537
    %v4539 = vmul.f32 %v4534, %v4538
    %4540 = vmatpush.msra.mxu0 %v3793
    %4541 = vmatpush.msra.mxu0 %v3789
    %4542 = vmatpush.msra.mxu0 %v3785
    %4543 = vmatpush.msra.mxu0 %v3781
    %4544 = vmatpush.msra.mxu0 %v3777
    %4545 = vmatpush.msra.mxu0 %v3773
    %4546 = vmatpush.msra.mxu0 %v3769
    %4547 = vmatpush.msra.mxu0 %v3765
    %4548 = vmatpush.msra.mxu0 %v3761
    %4549 = vmatpush.msra.mxu0 %v3757
    %4550 = vmatpush.msra.mxu0 %v3753
    %4551 = vmatpush.msra.mxu0 %v3749
    %4552 = vmatpush.msra.mxu0 %v3745
    %4553 = vmatpush.msra.mxu0 %v3741
    %4554 = vmatpush.msra.mxu0 %v3737
    %4555 = vmatpush.msra.mxu0 %v3733
    %4556 = vmatmul.f32.gmra.mxu0 %v4155
    %v4557 = vpop.f32.mrf.mxu0
    %v4558 = vadd.f32 %v4157, %v4557
    %4559 = vdwg.mxu0
    %4560 = vmatpush.msra.mxu0 %v3794
    %4561 = vmatpush.msra.mxu0 %v3790
    %4562 = vmatpush.msra.mxu0 %v3786
    %4563 = vmatpush.msra.mxu0 %v3782
    %4564 = vmatpush.msra.mxu0 %v3778
    %4565 = vmatpush.msra.mxu0 %v3774
    %4566 = vmatpush.msra.mxu0 %v3770
    %4567 = vmatpush.msra.mxu0 %v3766
    %4568 = vmatpush.msra.mxu0 %v3762
    %4569 = vmatpush.msra.mxu0 %v3758
    %4570 = vmatpush.msra.mxu0 %v3754
    %4571 = vmatpush.msra.mxu0 %v3750
    %4572 = vmatpush.msra.mxu0 %v3746
    %4573 = vmatpush.msra.mxu0 %v3742
    %4574 = vmatpush.msra.mxu0 %v3738
    %4575 = vmatpush.msra.mxu0 %v3734
    %4576 = vmatmul.f32.gmra.mxu0 %v4155
    %v4577 = vpop.f32.mrf.mxu0
    %v4578 = vadd.f32 %v4158, %v4577
    %4579 = vdwg.mxu0
    %4580 = vmatpush.msra.mxu0 %v3795
    %4581 = vmatpush.msra.mxu0 %v3791
    %4582 = vmatpush.msra.mxu0 %v3787
    %4583 = vmatpush.msra.mxu0 %v3783
    %4584 = vmatpush.msra.mxu0 %v3779
    %4585 = vmatpush.msra.mxu0 %v3775
    %4586 = vmatpush.msra.mxu0 %v3771
    %4587 = vmatpush.msra.mxu0 %v3767
    %4588 = vmatpush.msra.mxu0 %v3763
    %4589 = vmatpush.msra.mxu0 %v3759
    %4590 = vmatpush.msra.mxu0 %v3755
    %4591 = vmatpush.msra.mxu0 %v3751
    %4592 = vmatpush.msra.mxu0 %v3747
    %4593 = vmatpush.msra.mxu0 %v3743
    %4594 = vmatpush.msra.mxu0 %v3739
    %4595 = vmatpush.msra.mxu0 %v3735
    %4596 = vmatmul.f32.gmra.mxu0 %v4155
    %v4597 = vpop.f32.mrf.mxu0
    %v4598 = vadd.f32 %v4159, %v4597
    %4599 = vdwg.mxu0
    %4600 = vmatpush.msra.mxu0 %v3796
    %4601 = vmatpush.msra.mxu0 %v3792
    %4602 = vmatpush.msra.mxu0 %v3788
    %4603 = vmatpush.msra.mxu0 %v3784
    %4604 = vmatpush.msra.mxu0 %v3780
    %4605 = vmatpush.msra.mxu0 %v3776
    %4606 = vmatpush.msra.mxu0 %v3772
    %4607 = vmatpush.msra.mxu0 %v3768
    %4608 = vmatpush.msra.mxu0 %v3764
    %4609 = vmatpush.msra.mxu0 %v3760
    %4610 = vmatpush.msra.mxu0 %v3756
    %4611 = vmatpush.msra.mxu0 %v3752
    %4612 = vmatpush.msra.mxu0 %v3748
    %4613 = vmatpush.msra.mxu0 %v3744
    %4614 = vmatpush.msra.mxu0 %v3740
    %4615 = vmatpush.msra.mxu0 %v3736
    %4616 = vmatmul.f32.gmra.mxu0 %v4155
    %v4617 = vpop.f32.mrf.mxu0
    %v4618 = vadd.f32 %v4160, %v4617
    %4619 = vdwg.mxu0
    %4620 = vmatpush.msra.mxu0 %v3858
    %4621 = vmatpush.msra.mxu0 %v3854
    %4622 = vmatpush.msra.mxu0 %v3850
    %4623 = vmatpush.msra.mxu0 %v3846
    %4624 = vmatpush.msra.mxu0 %v3842
    %4625 = vmatpush.msra.mxu0 %v3838
    %4626 = vmatpush.msra.mxu0 %v3834
    %4627 = vmatpush.msra.mxu0 %v3830
    %4628 = vmatpush.msra.mxu0 %v3826
    %4629 = vmatpush.msra.mxu0 %v3822
    %4630 = vmatpush.msra.mxu0 %v3818
    %4631 = vmatpush.msra.mxu0 %v3814
    %4632 = vmatpush.msra.mxu0 %v3810
    %4633 = vmatpush.msra.mxu0 %v3806
    %4634 = vmatpush.msra.mxu0 %v3802
    %4635 = vmatpush.msra.mxu0 %v3798
    %4636 = vmatmul.f32.gmra.mxu0 %v4391
    %v4637 = vpop.f32.mrf.mxu0
    %v4638 = vadd.f32 0.0, %v4637
    %4639 = vdwg.mxu0
    %4640 = vmatpush.msra.mxu0 %v3859
    %4641 = vmatpush.msra.mxu0 %v3855
    %4642 = vmatpush.msra.mxu0 %v3851
    %4643 = vmatpush.msra.mxu0 %v3847
    %4644 = vmatpush.msra.mxu0 %v3843
    %4645 = vmatpush.msra.mxu0 %v3839
    %4646 = vmatpush.msra.mxu0 %v3835
    %4647 = vmatpush.msra.mxu0 %v3831
    %4648 = vmatpush.msra.mxu0 %v3827
    %4649 = vmatpush.msra.mxu0 %v3823
    %4650 = vmatpush.msra.mxu0 %v3819
    %4651 = vmatpush.msra.mxu0 %v3815
    %4652 = vmatpush.msra.mxu0 %v3811
    %4653 = vmatpush.msra.mxu0 %v3807
    %4654 = vmatpush.msra.mxu0 %v3803
    %4655 = vmatpush.msra.mxu0 %v3799
    %4656 = vmatmul.f32.gmra.mxu0 %v4391
    %v4657 = vpop.f32.mrf.mxu0
    %v4658 = vadd.f32 0.0, %v4657
    %4659 = vdwg.mxu0
    %4660 = vmatpush.msra.mxu0 %v3860
    %4661 = vmatpush.msra.mxu0 %v3856
    %4662 = vmatpush.msra.mxu0 %v3852
    %4663 = vmatpush.msra.mxu0 %v3848
    %4664 = vmatpush.msra.mxu0 %v3844
    %4665 = vmatpush.msra.mxu0 %v3840
    %4666 = vmatpush.msra.mxu0 %v3836
    %4667 = vmatpush.msra.mxu0 %v3832
    %4668 = vmatpush.msra.mxu0 %v3828
    %4669 = vmatpush.msra.mxu0 %v3824
    %4670 = vmatpush.msra.mxu0 %v3820
    %4671 = vmatpush.msra.mxu0 %v3816
    %4672 = vmatpush.msra.mxu0 %v3812
    %4673 = vmatpush.msra.mxu0 %v3808
    %4674 = vmatpush.msra.mxu0 %v3804
    %4675 = vmatpush.msra.mxu0 %v3800
    %4676 = vmatmul.f32.gmra.mxu0 %v4391
    %v4677 = vpop.f32.mrf.mxu0
    %v4678 = vadd.f32 0.0, %v4677
    %4679 = vdwg.mxu0
    %4680 = vmatpush.msra.mxu0 %v3861
    %4681 = vmatpush.msra.mxu0 %v3857
    %4682 = vmatpush.msra.mxu0 %v3853
    %4683 = vmatpush.msra.mxu0 %v3849
    %4684 = vmatpush.msra.mxu0 %v3845
    %4685 = vmatpush.msra.mxu0 %v3841
    %4686 = vmatpush.msra.mxu0 %v3837
    %4687 = vmatpush.msra.mxu0 %v3833
    %4688 = vmatpush.msra.mxu0 %v3829
    %4689 = vmatpush.msra.mxu0 %v3825
    %4690 = vmatpush.msra.mxu0 %v3821
    %4691 = vmatpush.msra.mxu0 %v3817
    %4692 = vmatpush.msra.mxu0 %v3813
    %4693 = vmatpush.msra.mxu0 %v3809
    %4694 = vmatpush.msra.mxu0 %v3805
    %4695 = vmatpush.msra.mxu0 %v3801
    %4696 = vmatmul.f32.gmra.mxu0 %v4391
    %v4697 = vpop.f32.mrf.mxu0
    %v4698 = vadd.f32 0.0, %v4697
    %4699 = vdwg.mxu0
    %v4700 = vadd.f32 %v4558, %v4638
    %v4701 = vadd.f32 %v4578, %v4658
    %v4702 = vadd.f32 %v4598, %v4678
    %v4703 = vadd.f32 %v4618, %v4698
    %v4704 = vxor.u32 %v4700, 2147483648
    %v4705 = vmul.f32 %v4704, 1.442695
    %v4706 = vpow.pop %v4705
    %v4707 = vadd.f32 %v4706, 1.0
    %v4708 = vrcp.pop %v4707
    %v4709 = vmul.f32 %v4707, %v4708
    %v4710 = vsub.f32 1.0, %v4709
    %v4711 = vmul.f32 %v4708, %v4710
    %v4712 = vadd.f32 %v4708, %v4711
    %vm4713 = vweird.f32 %v4707
    %vm4714 = vweird.f32 %v4708
    %vm4715 = vmor %vm4713, %vm4714
    %v4716 = vsel %vm4715, %v4708, %v4712
    %v4717 = vand.u32 2147483647, %v4707
    %vm4718 = vcmp.eq.f32.partialorder %v4717, 8.507059e+37
    %v4719 = vand.u32 %v4707, 2147483648
    %v4720 = vor.u32 1.1754944e-38, %v4719
    %v4721 = vsel %vm4718, %v4720, %v4716
    %v4722 = vmul.f32 1.0, %v4721
    %v4723 = vxor.u32 %v4701, 2147483648
    %v4724 = vmul.f32 %v4723, 1.442695
    %v4725 = vpow.pop %v4724
    %v4726 = vadd.f32 %v4725, 1.0
    %v4727 = vrcp.pop %v4726
    %v4728 = vmul.f32 %v4726, %v4727
    %v4729 = vsub.f32 1.0, %v4728
    %v4730 = vmul.f32 %v4727, %v4729
    %v4731 = vadd.f32 %v4727, %v4730
    %vm4732 = vweird.f32 %v4726
    %vm4733 = vweird.f32 %v4727
    %vm4734 = vmor %vm4732, %vm4733
    %v4735 = vsel %vm4734, %v4727, %v4731
    %v4736 = vand.u32 2147483647, %v4726
    %vm4737 = vcmp.eq.f32.partialorder %v4736, 8.507059e+37
    %v4738 = vand.u32 %v4726, 2147483648
    %v4739 = vor.u32 1.1754944e-38, %v4738
    %v4740 = vsel %vm4737, %v4739, %v4735
    %v4741 = vmul.f32 1.0, %v4740
    %v4742 = vtanh.pop %v4702
    %v4743 = vxor.u32 %v4703, 2147483648
    %v4744 = vmul.f32 %v4743, 1.442695
    %v4745 = vpow.pop %v4744
    %v4746 = vadd.f32 %v4745, 1.0
    %v4747 = vrcp.pop %v4746
    %v4748 = vmul.f32 %v4746, %v4747
    %v4749 = vsub.f32 1.0, %v4748
    %v4750 = vmul.f32 %v4747, %v4749
    %v4751 = vadd.f32 %v4747, %v4750
    %vm4752 = vweird.f32 %v4746
    %vm4753 = vweird.f32 %v4747
    %vm4754 = vmor %vm4752, %vm4753
    %v4755 = vsel %vm4754, %v4747, %v4751
    %v4756 = vand.u32 2147483647, %v4746
    %vm4757 = vcmp.eq.f32.partialorder %v4756, 8.507059e+37
    %v4758 = vand.u32 %v4746, 2147483648
    %v4759 = vor.u32 1.1754944e-38, %v4758
    %v4760 = vsel %vm4757, %v4759, %v4755
    %v4761 = vmul.f32 1.0, %v4760
    %v4762 = vmul.f32 %v4741, %v4389
    %v4763 = vmul.f32 %v4722, %v4742
    %v4764 = vadd.f32 %v4762, %v4763
    %v4765 = vtanh.pop %v4764
    %v4766 = vmul.f32 %v4761, %v4765
    %4767 = vst [vmem:[#allocation2 + $0x1] sm:$0x1] %v4766
    %4768 = vmatpush.msra.mxu0 %v3729
    %4769 = vmatpush.msra.mxu0 %v3725
    %4770 = vmatpush.msra.mxu0 %v3721
    %4771 = vmatpush.msra.mxu0 %v3717
    %4772 = vmatpush.msra.mxu0 %v3713
    %4773 = vmatpush.msra.mxu0 %v3709
    %4774 = vmatpush.msra.mxu0 %v3705
    %4775 = vmatpush.msra.mxu0 %v3701
    %4776 = vmatpush.msra.mxu0 %v3697
    %4777 = vmatpush.msra.mxu0 %v3693
    %4778 = vmatpush.msra.mxu0 %v3689
    %4779 = vmatpush.msra.mxu0 %v3685
    %4780 = vmatpush.msra.mxu0 %v3681
    %4781 = vmatpush.msra.mxu0 %v3677
    %4782 = vmatpush.msra.mxu0 %v3673
    %4783 = vmatpush.msra.mxu0 %v3669
    %4784 = vmatmul.f32.gmra.mxu0 %v4539
    %v4785 = vpop.f32.mrf.mxu0
    %v4786 = vadd.f32 0.0, %v4785
    %4787 = vdwg.mxu0
    %4788 = vmatpush.msra.mxu0 %v3730
    %4789 = vmatpush.msra.mxu0 %v3726
    %4790 = vmatpush.msra.mxu0 %v3722
    %4791 = vmatpush.msra.mxu0 %v3718
    %4792 = vmatpush.msra.mxu0 %v3714
    %4793 = vmatpush.msra.mxu0 %v3710
    %4794 = vmatpush.msra.mxu0 %v3706
    %4795 = vmatpush.msra.mxu0 %v3702
    %4796 = vmatpush.msra.mxu0 %v3698
    %4797 = vmatpush.msra.mxu0 %v3694
    %4798 = vmatpush.msra.mxu0 %v3690
    %4799 = vmatpush.msra.mxu0 %v3686
    %4800 = vmatpush.msra.mxu0 %v3682
    %4801 = vmatpush.msra.mxu0 %v3678
    %4802 = vmatpush.msra.mxu0 %v3674
    %4803 = vmatpush.msra.mxu0 %v3670
    %4804 = vmatmul.f32.gmra.mxu0 %v4539
    %v4805 = vpop.f32.mrf.mxu0
    %v4806 = vadd.f32 0.0, %v4805
    %4807 = vdwg.mxu0
    %4808 = vmatpush.msra.mxu0 %v3731
    %4809 = vmatpush.msra.mxu0 %v3727
    %4810 = vmatpush.msra.mxu0 %v3723
    %4811 = vmatpush.msra.mxu0 %v3719
    %4812 = vmatpush.msra.mxu0 %v3715
    %4813 = vmatpush.msra.mxu0 %v3711
    %4814 = vmatpush.msra.mxu0 %v3707
    %4815 = vmatpush.msra.mxu0 %v3703
    %4816 = vmatpush.msra.mxu0 %v3699
    %4817 = vmatpush.msra.mxu0 %v3695
    %4818 = vmatpush.msra.mxu0 %v3691
    %4819 = vmatpush.msra.mxu0 %v3687
    %4820 = vmatpush.msra.mxu0 %v3683
    %4821 = vmatpush.msra.mxu0 %v3679
    %4822 = vmatpush.msra.mxu0 %v3675
    %4823 = vmatpush.msra.mxu0 %v3671
    %4824 = vmatmul.f32.gmra.mxu0 %v4539
    %v4825 = vpop.f32.mrf.mxu0
    %v4826 = vadd.f32 0.0, %v4825
    %4827 = vdwg.mxu0
    %4828 = vmatpush.msra.mxu0 %v3732
    %4829 = vmatpush.msra.mxu0 %v3728
    %4830 = vmatpush.msra.mxu0 %v3724
    %4831 = vmatpush.msra.mxu0 %v3720
    %4832 = vmatpush.msra.mxu0 %v3716
    %4833 = vmatpush.msra.mxu0 %v3712
    %4834 = vmatpush.msra.mxu0 %v3708
    %4835 = vmatpush.msra.mxu0 %v3704
    %4836 = vmatpush.msra.mxu0 %v3700
    %4837 = vmatpush.msra.mxu0 %v3696
    %4838 = vmatpush.msra.mxu0 %v3692
    %4839 = vmatpush.msra.mxu0 %v3688
    %4840 = vmatpush.msra.mxu0 %v3684
    %4841 = vmatpush.msra.mxu0 %v3680
    %4842 = vmatpush.msra.mxu0 %v3676
    %4843 = vmatpush.msra.mxu0 %v3672
    %4844 = vmatmul.f32.gmra.mxu0 %v4539
    %v4845 = vpop.f32.mrf.mxu0
    %v4846 = vadd.f32 0.0, %v4845
    %4847 = vdwg.mxu0
    %v4848 = vadd.f32 %v3607, %v4786
    %v4849 = vadd.f32 %v3627, %v4806
    %v4850 = vadd.f32 %v3647, %v4826
    %v4851 = vadd.f32 %v3667, %v4846
    %v4852 = vxor.u32 %v4848, 2147483648
    %v4853 = vmul.f32 %v4852, 1.442695
    %v4854 = vpow.pop %v4853
    %v4855 = vadd.f32 %v4854, 1.0
    %v4856 = vrcp.pop %v4855
    %v4857 = vmul.f32 %v4855, %v4856
    %v4858 = vsub.f32 1.0, %v4857
    %v4859 = vmul.f32 %v4856, %v4858
    %v4860 = vadd.f32 %v4856, %v4859
    %vm4861 = vweird.f32 %v4855
    %vm4862 = vweird.f32 %v4856
    %vm4863 = vmor %vm4861, %vm4862
    %v4864 = vsel %vm4863, %v4856, %v4860
    %v4865 = vand.u32 2147483647, %v4855
    %vm4866 = vcmp.eq.f32.partialorder %v4865, 8.507059e+37
    %v4867 = vand.u32 %v4855, 2147483648
    %v4868 = vor.u32 1.1754944e-38, %v4867
    %v4869 = vsel %vm4866, %v4868, %v4864
    %v4870 = vmul.f32 1.0, %v4869
    %v4871 = vxor.u32 %v4849, 2147483648
    %v4872 = vmul.f32 %v4871, 1.442695
    %v4873 = vpow.pop %v4872
    %v4874 = vadd.f32 %v4873, 1.0
    %v4875 = vrcp.pop %v4874
    %v4876 = vmul.f32 %v4874, %v4875
    %v4877 = vsub.f32 1.0, %v4876
    %v4878 = vmul.f32 %v4875, %v4877
    %v4879 = vadd.f32 %v4875, %v4878
    %vm4880 = vweird.f32 %v4874
    %vm4881 = vweird.f32 %v4875
    %vm4882 = vmor %vm4880, %vm4881
    %v4883 = vsel %vm4882, %v4875, %v4879
    %v4884 = vand.u32 2147483647, %v4874
    %vm4885 = vcmp.eq.f32.partialorder %v4884, 8.507059e+37
    %v4886 = vand.u32 %v4874, 2147483648
    %v4887 = vor.u32 1.1754944e-38, %v4886
    %v4888 = vsel %vm4885, %v4887, %v4883
    %v4889 = vmul.f32 1.0, %v4888
    %v4890 = vtanh.pop %v4850
    %v4891 = vxor.u32 %v4851, 2147483648
    %v4892 = vmul.f32 %v4891, 1.442695
    %v4893 = vpow.pop %v4892
    %v4894 = vadd.f32 %v4893, 1.0
    %v4895 = vrcp.pop %v4894
    %v4896 = vmul.f32 %v4894, %v4895
    %v4897 = vsub.f32 1.0, %v4896
    %v4898 = vmul.f32 %v4895, %v4897
    %v4899 = vadd.f32 %v4895, %v4898
    %vm4900 = vweird.f32 %v4894
    %vm4901 = vweird.f32 %v4895
    %vm4902 = vmor %vm4900, %vm4901
    %v4903 = vsel %vm4902, %v4895, %v4899
    %v4904 = vand.u32 2147483647, %v4894
    %vm4905 = vcmp.eq.f32.partialorder %v4904, 8.507059e+37
    %v4906 = vand.u32 %v4894, 2147483648
    %v4907 = vor.u32 1.1754944e-38, %v4906
    %v4908 = vsel %vm4905, %v4907, %v4903
    %v4909 = vmul.f32 1.0, %v4908
    %v4910 = vmul.f32 %v4889, %v4537
    %v4911 = vmul.f32 %v4870, %v4890
    %v4912 = vadd.f32 %v4910, %v4911
    %v4913 = vtanh.pop %v4912
    %v4914 = vmul.f32 %v4909, %v4913
    %4915 = vmatpush.msra.mxu0 %v3793
    %4916 = vmatpush.msra.mxu0 %v3789
    %4917 = vmatpush.msra.mxu0 %v3785
    %4918 = vmatpush.msra.mxu0 %v3781
    %4919 = vmatpush.msra.mxu0 %v3777
    %4920 = vmatpush.msra.mxu0 %v3773
    %4921 = vmatpush.msra.mxu0 %v3769
    %4922 = vmatpush.msra.mxu0 %v3765
    %4923 = vmatpush.msra.mxu0 %v3761
    %4924 = vmatpush.msra.mxu0 %v3757
    %4925 = vmatpush.msra.mxu0 %v3753
    %4926 = vmatpush.msra.mxu0 %v3749
    %4927 = vmatpush.msra.mxu0 %v3745
    %4928 = vmatpush.msra.mxu0 %v3741
    %4929 = vmatpush.msra.mxu0 %v3737
    %4930 = vmatpush.msra.mxu0 %v3733
    %4931 = vmatmul.f32.gmra.mxu0 %v4539
    %v4932 = vpop.f32.mrf.mxu0
    %v4933 = vadd.f32 %v4157, %v4932
    %4934 = vdwg.mxu0
    %4935 = vmatpush.msra.mxu0 %v3794
    %4936 = vmatpush.msra.mxu0 %v3790
    %4937 = vmatpush.msra.mxu0 %v3786
    %4938 = vmatpush.msra.mxu0 %v3782
    %4939 = vmatpush.msra.mxu0 %v3778
    %4940 = vmatpush.msra.mxu0 %v3774
    %4941 = vmatpush.msra.mxu0 %v3770
    %4942 = vmatpush.msra.mxu0 %v3766
    %4943 = vmatpush.msra.mxu0 %v3762
    %4944 = vmatpush.msra.mxu0 %v3758
    %4945 = vmatpush.msra.mxu0 %v3754
    %4946 = vmatpush.msra.mxu0 %v3750
    %4947 = vmatpush.msra.mxu0 %v3746
    %4948 = vmatpush.msra.mxu0 %v3742
    %4949 = vmatpush.msra.mxu0 %v3738
    %4950 = vmatpush.msra.mxu0 %v3734
    %4951 = vmatmul.f32.gmra.mxu0 %v4539
    %v4952 = vpop.f32.mrf.mxu0
    %v4953 = vadd.f32 %v4158, %v4952
    %4954 = vdwg.mxu0
    %4955 = vmatpush.msra.mxu0 %v3795
    %4956 = vmatpush.msra.mxu0 %v3791
    %4957 = vmatpush.msra.mxu0 %v3787
    %4958 = vmatpush.msra.mxu0 %v3783
    %4959 = vmatpush.msra.mxu0 %v3779
    %4960 = vmatpush.msra.mxu0 %v3775
    %4961 = vmatpush.msra.mxu0 %v3771
    %4962 = vmatpush.msra.mxu0 %v3767
    %4963 = vmatpush.msra.mxu0 %v3763
    %4964 = vmatpush.msra.mxu0 %v3759
    %4965 = vmatpush.msra.mxu0 %v3755
    %4966 = vmatpush.msra.mxu0 %v3751
    %4967 = vmatpush.msra.mxu0 %v3747
    %4968 = vmatpush.msra.mxu0 %v3743
    %4969 = vmatpush.msra.mxu0 %v3739
    %4970 = vmatpush.msra.mxu0 %v3735
    %4971 = vmatmul.f32.gmra.mxu0 %v4539
    %v4972 = vpop.f32.mrf.mxu0
    %v4973 = vadd.f32 %v4159, %v4972
    %4974 = vdwg.mxu0
    %4975 = vmatpush.msra.mxu0 %v3796
    %4976 = vmatpush.msra.mxu0 %v3792
    %4977 = vmatpush.msra.mxu0 %v3788
    %4978 = vmatpush.msra.mxu0 %v3784
    %4979 = vmatpush.msra.mxu0 %v3780
    %4980 = vmatpush.msra.mxu0 %v3776
    %4981 = vmatpush.msra.mxu0 %v3772
    %4982 = vmatpush.msra.mxu0 %v3768
    %4983 = vmatpush.msra.mxu0 %v3764
    %4984 = vmatpush.msra.mxu0 %v3760
    %4985 = vmatpush.msra.mxu0 %v3756
    %4986 = vmatpush.msra.mxu0 %v3752
    %4987 = vmatpush.msra.mxu0 %v3748
    %4988 = vmatpush.msra.mxu0 %v3744
    %4989 = vmatpush.msra.mxu0 %v3740
    %4990 = vmatpush.msra.mxu0 %v3736
    %4991 = vmatmul.f32.gmra.mxu0 %v4539
    %v4992 = vpop.f32.mrf.mxu0
    %v4993 = vadd.f32 %v4160, %v4992
    %4994 = vdwg.mxu0
    %4995 = vmatpush.msra.mxu0 %v3858
    %4996 = vmatpush.msra.mxu0 %v3854
    %4997 = vmatpush.msra.mxu0 %v3850
    %4998 = vmatpush.msra.mxu0 %v3846
    %4999 = vmatpush.msra.mxu0 %v3842
    %5000 = vmatpush.msra.mxu0 %v3838
    %5001 = vmatpush.msra.mxu0 %v3834
    %5002 = vmatpush.msra.mxu0 %v3830
    %5003 = vmatpush.msra.mxu0 %v3826
    %5004 = vmatpush.msra.mxu0 %v3822
    %5005 = vmatpush.msra.mxu0 %v3818
    %5006 = vmatpush.msra.mxu0 %v3814
    %5007 = vmatpush.msra.mxu0 %v3810
    %5008 = vmatpush.msra.mxu0 %v3806
    %5009 = vmatpush.msra.mxu0 %v3802
    %5010 = vmatpush.msra.mxu0 %v3798
    %5011 = vmatmul.f32.gmra.mxu0 %v4766
    %v5012 = vpop.f32.mrf.mxu0
    %v5013 = vadd.f32 0.0, %v5012
    %5014 = vdwg.mxu0
    %5015 = vmatpush.msra.mxu0 %v3859
    %5016 = vmatpush.msra.mxu0 %v3855
    %5017 = vmatpush.msra.mxu0 %v3851
    %5018 = vmatpush.msra.mxu0 %v3847
    %5019 = vmatpush.msra.mxu0 %v3843
    %5020 = vmatpush.msra.mxu0 %v3839
    %5021 = vmatpush.msra.mxu0 %v3835
    %5022 = vmatpush.msra.mxu0 %v3831
    %5023 = vmatpush.msra.mxu0 %v3827
    %5024 = vmatpush.msra.mxu0 %v3823
    %5025 = vmatpush.msra.mxu0 %v3819
    %5026 = vmatpush.msra.mxu0 %v3815
    %5027 = vmatpush.msra.mxu0 %v3811
    %5028 = vmatpush.msra.mxu0 %v3807
    %5029 = vmatpush.msra.mxu0 %v3803
    %5030 = vmatpush.msra.mxu0 %v3799
    %5031 = vmatmul.f32.gmra.mxu0 %v4766
    %v5032 = vpop.f32.mrf.mxu0
    %v5033 = vadd.f32 0.0, %v5032
    %5034 = vdwg.mxu0
    %5035 = vmatpush.msra.mxu0 %v3860
    %5036 = vmatpush.msra.mxu0 %v3856
    %5037 = vmatpush.msra.mxu0 %v3852
    %5038 = vmatpush.msra.mxu0 %v3848
    %5039 = vmatpush.msra.mxu0 %v3844
    %5040 = vmatpush.msra.mxu0 %v3840
    %5041 = vmatpush.msra.mxu0 %v3836
    %5042 = vmatpush.msra.mxu0 %v3832
    %5043 = vmatpush.msra.mxu0 %v3828
    %5044 = vmatpush.msra.mxu0 %v3824
    %5045 = vmatpush.msra.mxu0 %v3820
    %5046 = vmatpush.msra.mxu0 %v3816
    %5047 = vmatpush.msra.mxu0 %v3812
    %5048 = vmatpush.msra.mxu0 %v3808
    %5049 = vmatpush.msra.mxu0 %v3804
    %5050 = vmatpush.msra.mxu0 %v3800
    %5051 = vmatmul.f32.gmra.mxu0 %v4766
    %v5052 = vpop.f32.mrf.mxu0
    %v5053 = vadd.f32 0.0, %v5052
    %5054 = vdwg.mxu0
    %5055 = vmatpush.msra.mxu0 %v3861
    %5056 = vmatpush.msra.mxu0 %v3857
    %5057 = vmatpush.msra.mxu0 %v3853
    %5058 = vmatpush.msra.mxu0 %v3849
    %5059 = vmatpush.msra.mxu0 %v3845
    %5060 = vmatpush.msra.mxu0 %v3841
    %5061 = vmatpush.msra.mxu0 %v3837
    %5062 = vmatpush.msra.mxu0 %v3833
    %5063 = vmatpush.msra.mxu0 %v3829
    %5064 = vmatpush.msra.mxu0 %v3825
    %5065 = vmatpush.msra.mxu0 %v3821
    %5066 = vmatpush.msra.mxu0 %v3817
    %5067 = vmatpush.msra.mxu0 %v3813
    %5068 = vmatpush.msra.mxu0 %v3809
    %5069 = vmatpush.msra.mxu0 %v3805
    %5070 = vmatpush.msra.mxu0 %v3801
    %5071 = vmatmul.f32.gmra.mxu0 %v4766
    %v5072 = vpop.f32.mrf.mxu0
    %v5073 = vadd.f32 0.0, %v5072
    %5074 = vdwg.mxu0
    %v5075 = vadd.f32 %v4933, %v5013
    %v5076 = vadd.f32 %v4953, %v5033
    %v5077 = vadd.f32 %v4973, %v5053
    %v5078 = vadd.f32 %v4993, %v5073
    %v5079 = vxor.u32 %v5075, 2147483648
    %v5080 = vmul.f32 %v5079, 1.442695
    %v5081 = vpow.pop %v5080
    %v5082 = vadd.f32 %v5081, 1.0
    %v5083 = vrcp.pop %v5082
    %v5084 = vmul.f32 %v5082, %v5083
    %v5085 = vsub.f32 1.0, %v5084
    %v5086 = vmul.f32 %v5083, %v5085
    %v5087 = vadd.f32 %v5083, %v5086
    %vm5088 = vweird.f32 %v5082
    %vm5089 = vweird.f32 %v5083
    %vm5090 = vmor %vm5088, %vm5089
    %v5091 = vsel %vm5090, %v5083, %v5087
    %v5092 = vand.u32 2147483647, %v5082
    %vm5093 = vcmp.eq.f32.partialorder %v5092, 8.507059e+37
    %v5094 = vand.u32 %v5082, 2147483648
    %v5095 = vor.u32 1.1754944e-38, %v5094
    %v5096 = vsel %vm5093, %v5095, %v5091
    %v5097 = vmul.f32 1.0, %v5096
    %v5098 = vxor.u32 %v5076, 2147483648
    %v5099 = vmul.f32 %v5098, 1.442695
    %v5100 = vpow.pop %v5099
    %v5101 = vadd.f32 %v5100, 1.0
    %v5102 = vrcp.pop %v5101
    %v5103 = vmul.f32 %v5101, %v5102
    %v5104 = vsub.f32 1.0, %v5103
    %v5105 = vmul.f32 %v5102, %v5104
    %v5106 = vadd.f32 %v5102, %v5105
    %vm5107 = vweird.f32 %v5101
    %vm5108 = vweird.f32 %v5102
    %vm5109 = vmor %vm5107, %vm5108
    %v5110 = vsel %vm5109, %v5102, %v5106
    %v5111 = vand.u32 2147483647, %v5101
    %vm5112 = vcmp.eq.f32.partialorder %v5111, 8.507059e+37
    %v5113 = vand.u32 %v5101, 2147483648
    %v5114 = vor.u32 1.1754944e-38, %v5113
    %v5115 = vsel %vm5112, %v5114, %v5110
    %v5116 = vmul.f32 1.0, %v5115
    %v5117 = vtanh.pop %v5077
    %v5118 = vxor.u32 %v5078, 2147483648
    %v5119 = vmul.f32 %v5118, 1.442695
    %v5120 = vpow.pop %v5119
    %v5121 = vadd.f32 %v5120, 1.0
    %v5122 = vrcp.pop %v5121
    %v5123 = vmul.f32 %v5121, %v5122
    %v5124 = vsub.f32 1.0, %v5123
    %v5125 = vmul.f32 %v5122, %v5124
    %v5126 = vadd.f32 %v5122, %v5125
    %vm5127 = vweird.f32 %v5121
    %vm5128 = vweird.f32 %v5122
    %vm5129 = vmor %vm5127, %vm5128
    %v5130 = vsel %vm5129, %v5122, %v5126
    %v5131 = vand.u32 2147483647, %v5121
    %vm5132 = vcmp.eq.f32.partialorder %v5131, 8.507059e+37
    %v5133 = vand.u32 %v5121, 2147483648
    %v5134 = vor.u32 1.1754944e-38, %v5133
    %v5135 = vsel %vm5132, %v5134, %v5130
    %v5136 = vmul.f32 1.0, %v5135
    %v5137 = vmul.f32 %v5116, %v4764
    %v5138 = vmul.f32 %v5097, %v5117
    %v5139 = vadd.f32 %v5137, %v5138
    %v5140 = vtanh.pop %v5139
    %v5141 = vmul.f32 %v5136, %v5140
    %5142 = vst [vmem:[#allocation2 + $0x2] sm:$0x1] %v5141
    %5143 = vmatpush.msra.mxu0 %v3729
    %5144 = vmatpush.msra.mxu0 %v3725
    %5145 = vmatpush.msra.mxu0 %v3721
    %5146 = vmatpush.msra.mxu0 %v3717
    %5147 = vmatpush.msra.mxu0 %v3713
    %5148 = vmatpush.msra.mxu0 %v3709
    %5149 = vmatpush.msra.mxu0 %v3705
    %5150 = vmatpush.msra.mxu0 %v3701
    %5151 = vmatpush.msra.mxu0 %v3697
    %5152 = vmatpush.msra.mxu0 %v3693
    %5153 = vmatpush.msra.mxu0 %v3689
    %5154 = vmatpush.msra.mxu0 %v3685
    %5155 = vmatpush.msra.mxu0 %v3681
    %5156 = vmatpush.msra.mxu0 %v3677
    %5157 = vmatpush.msra.mxu0 %v3673
    %5158 = vmatpush.msra.mxu0 %v3669
    %5159 = vmatmul.f32.gmra.mxu0 %v4914
    %v5160 = vpop.f32.mrf.mxu0
    %v5161 = vadd.f32 0.0, %v5160
    %5162 = vdwg.mxu0
    %5163 = vmatpush.msra.mxu0 %v3730
    %5164 = vmatpush.msra.mxu0 %v3726
    %5165 = vmatpush.msra.mxu0 %v3722
    %5166 = vmatpush.msra.mxu0 %v3718
    %5167 = vmatpush.msra.mxu0 %v3714
    %5168 = vmatpush.msra.mxu0 %v3710
    %5169 = vmatpush.msra.mxu0 %v3706
    %5170 = vmatpush.msra.mxu0 %v3702
    %5171 = vmatpush.msra.mxu0 %v3698
    %5172 = vmatpush.msra.mxu0 %v3694
    %5173 = vmatpush.msra.mxu0 %v3690
    %5174 = vmatpush.msra.mxu0 %v3686
    %5175 = vmatpush.msra.mxu0 %v3682
    %5176 = vmatpush.msra.mxu0 %v3678
    %5177 = vmatpush.msra.mxu0 %v3674
    %5178 = vmatpush.msra.mxu0 %v3670
    %5179 = vmatmul.f32.gmra.mxu0 %v4914
    %v5180 = vpop.f32.mrf.mxu0
    %v5181 = vadd.f32 0.0, %v5180
    %5182 = vdwg.mxu0
    %5183 = vmatpush.msra.mxu0 %v3731
    %5184 = vmatpush.msra.mxu0 %v3727
    %5185 = vmatpush.msra.mxu0 %v3723
    %5186 = vmatpush.msra.mxu0 %v3719
    %5187 = vmatpush.msra.mxu0 %v3715
    %5188 = vmatpush.msra.mxu0 %v3711
    %5189 = vmatpush.msra.mxu0 %v3707
    %5190 = vmatpush.msra.mxu0 %v3703
    %5191 = vmatpush.msra.mxu0 %v3699
    %5192 = vmatpush.msra.mxu0 %v3695
    %5193 = vmatpush.msra.mxu0 %v3691
    %5194 = vmatpush.msra.mxu0 %v3687
    %5195 = vmatpush.msra.mxu0 %v3683
    %5196 = vmatpush.msra.mxu0 %v3679
    %5197 = vmatpush.msra.mxu0 %v3675
    %5198 = vmatpush.msra.mxu0 %v3671
    %5199 = vmatmul.f32.gmra.mxu0 %v4914
    %v5200 = vpop.f32.mrf.mxu0
    %v5201 = vadd.f32 0.0, %v5200
    %5202 = vdwg.mxu0
    %5203 = vmatpush.msra.mxu0 %v3732
    %5204 = vmatpush.msra.mxu0 %v3728
    %5205 = vmatpush.msra.mxu0 %v3724
    %5206 = vmatpush.msra.mxu0 %v3720
    %5207 = vmatpush.msra.mxu0 %v3716
    %5208 = vmatpush.msra.mxu0 %v3712
    %5209 = vmatpush.msra.mxu0 %v3708
    %5210 = vmatpush.msra.mxu0 %v3704
    %5211 = vmatpush.msra.mxu0 %v3700
    %5212 = vmatpush.msra.mxu0 %v3696
    %5213 = vmatpush.msra.mxu0 %v3692
    %5214 = vmatpush.msra.mxu0 %v3688
    %5215 = vmatpush.msra.mxu0 %v3684
    %5216 = vmatpush.msra.mxu0 %v3680
    %5217 = vmatpush.msra.mxu0 %v3676
    %5218 = vmatpush.msra.mxu0 %v3672
    %5219 = vmatmul.f32.gmra.mxu0 %v4914
    %v5220 = vpop.f32.mrf.mxu0
    %v5221 = vadd.f32 0.0, %v5220
    %5222 = vdwg.mxu0
    %v5223 = vadd.f32 %v3607, %v5161
    %v5224 = vadd.f32 %v3627, %v5181
    %v5225 = vadd.f32 %v3647, %v5201
    %v5226 = vadd.f32 %v3667, %v5221
    %v5227 = vxor.u32 %v5223, 2147483648
    %v5228 = vmul.f32 %v5227, 1.442695
    %v5229 = vpow.pop %v5228
    %v5230 = vadd.f32 %v5229, 1.0
    %v5231 = vrcp.pop %v5230
    %v5232 = vmul.f32 %v5230, %v5231
    %v5233 = vsub.f32 1.0, %v5232
    %v5234 = vmul.f32 %v5231, %v5233
    %v5235 = vadd.f32 %v5231, %v5234
    %vm5236 = vweird.f32 %v5230
    %vm5237 = vweird.f32 %v5231
    %vm5238 = vmor %vm5236, %vm5237
    %v5239 = vsel %vm5238, %v5231, %v5235
    %v5240 = vand.u32 2147483647, %v5230
    %vm5241 = vcmp.eq.f32.partialorder %v5240, 8.507059e+37
    %v5242 = vand.u32 %v5230, 2147483648
    %v5243 = vor.u32 1.1754944e-38, %v5242
    %v5244 = vsel %vm5241, %v5243, %v5239
    %v5245 = vmul.f32 1.0, %v5244
    %v5246 = vxor.u32 %v5224, 2147483648
    %v5247 = vmul.f32 %v5246, 1.442695
    %v5248 = vpow.pop %v5247
    %v5249 = vadd.f32 %v5248, 1.0
    %v5250 = vrcp.pop %v5249
    %v5251 = vmul.f32 %v5249, %v5250
    %v5252 = vsub.f32 1.0, %v5251
    %v5253 = vmul.f32 %v5250, %v5252
    %v5254 = vadd.f32 %v5250, %v5253
    %vm5255 = vweird.f32 %v5249
    %vm5256 = vweird.f32 %v5250
    %vm5257 = vmor %vm5255, %vm5256
    %v5258 = vsel %vm5257, %v5250, %v5254
    %v5259 = vand.u32 2147483647, %v5249
    %vm5260 = vcmp.eq.f32.partialorder %v5259, 8.507059e+37
    %v5261 = vand.u32 %v5249, 2147483648
    %v5262 = vor.u32 1.1754944e-38, %v5261
    %v5263 = vsel %vm5260, %v5262, %v5258
    %v5264 = vmul.f32 1.0, %v5263
    %v5265 = vtanh.pop %v5225
    %v5266 = vxor.u32 %v5226, 2147483648
    %v5267 = vmul.f32 %v5266, 1.442695
    %v5268 = vpow.pop %v5267
    %v5269 = vadd.f32 %v5268, 1.0
    %v5270 = vrcp.pop %v5269
    %v5271 = vmul.f32 %v5269, %v5270
    %v5272 = vsub.f32 1.0, %v5271
    %v5273 = vmul.f32 %v5270, %v5272
    %v5274 = vadd.f32 %v5270, %v5273
    %vm5275 = vweird.f32 %v5269
    %vm5276 = vweird.f32 %v5270
    %vm5277 = vmor %vm5275, %vm5276
    %v5278 = vsel %vm5277, %v5270, %v5274
    %v5279 = vand.u32 2147483647, %v5269
    %vm5280 = vcmp.eq.f32.partialorder %v5279, 8.507059e+37
    %v5281 = vand.u32 %v5269, 2147483648
    %v5282 = vor.u32 1.1754944e-38, %v5281
    %v5283 = vsel %vm5280, %v5282, %v5278
    %v5284 = vmul.f32 1.0, %v5283
    %v5285 = vmul.f32 %v5264, %v4912
    %v5286 = vmul.f32 %v5245, %v5265
    %v5287 = vadd.f32 %v5285, %v5286
    %v5288 = vtanh.pop %v5287
    %v5289 = vmul.f32 %v5284, %v5288
    %5290 = vmatpush.msra.mxu0 %v3793
    %5291 = vmatpush.msra.mxu0 %v3789
    %5292 = vmatpush.msra.mxu0 %v3785
    %5293 = vmatpush.msra.mxu0 %v3781
    %5294 = vmatpush.msra.mxu0 %v3777
    %5295 = vmatpush.msra.mxu0 %v3773
    %5296 = vmatpush.msra.mxu0 %v3769
    %5297 = vmatpush.msra.mxu0 %v3765
    %5298 = vmatpush.msra.mxu0 %v3761
    %5299 = vmatpush.msra.mxu0 %v3757
    %5300 = vmatpush.msra.mxu0 %v3753
    %5301 = vmatpush.msra.mxu0 %v3749
    %5302 = vmatpush.msra.mxu0 %v3745
    %5303 = vmatpush.msra.mxu0 %v3741
    %5304 = vmatpush.msra.mxu0 %v3737
    %5305 = vmatpush.msra.mxu0 %v3733
    %5306 = vmatmul.f32.gmra.mxu0 %v4914
    %v5307 = vpop.f32.mrf.mxu0
    %v5308 = vadd.f32 %v4157, %v5307
    %5309 = vdwg.mxu0
    %5310 = vmatpush.msra.mxu0 %v3794
    %5311 = vmatpush.msra.mxu0 %v3790
    %5312 = vmatpush.msra.mxu0 %v3786
    %5313 = vmatpush.msra.mxu0 %v3782
    %5314 = vmatpush.msra.mxu0 %v3778
    %5315 = vmatpush.msra.mxu0 %v3774
    %5316 = vmatpush.msra.mxu0 %v3770
    %5317 = vmatpush.msra.mxu0 %v3766
    %5318 = vmatpush.msra.mxu0 %v3762
    %5319 = vmatpush.msra.mxu0 %v3758
    %5320 = vmatpush.msra.mxu0 %v3754
    %5321 = vmatpush.msra.mxu0 %v3750
    %5322 = vmatpush.msra.mxu0 %v3746
    %5323 = vmatpush.msra.mxu0 %v3742
    %5324 = vmatpush.msra.mxu0 %v3738
    %5325 = vmatpush.msra.mxu0 %v3734
    %5326 = vmatmul.f32.gmra.mxu0 %v4914
    %v5327 = vpop.f32.mrf.mxu0
    %v5328 = vadd.f32 %v4158, %v5327
    %5329 = vdwg.mxu0
    %5330 = vmatpush.msra.mxu0 %v3795
    %5331 = vmatpush.msra.mxu0 %v3791
    %5332 = vmatpush.msra.mxu0 %v3787
    %5333 = vmatpush.msra.mxu0 %v3783
    %5334 = vmatpush.msra.mxu0 %v3779
    %5335 = vmatpush.msra.mxu0 %v3775
    %5336 = vmatpush.msra.mxu0 %v3771
    %5337 = vmatpush.msra.mxu0 %v3767
    %5338 = vmatpush.msra.mxu0 %v3763
    %5339 = vmatpush.msra.mxu0 %v3759
    %5340 = vmatpush.msra.mxu0 %v3755
    %5341 = vmatpush.msra.mxu0 %v3751
    %5342 = vmatpush.msra.mxu0 %v3747
    %5343 = vmatpush.msra.mxu0 %v3743
    %5344 = vmatpush.msra.mxu0 %v3739
    %5345 = vmatpush.msra.mxu0 %v3735
    %5346 = vmatmul.f32.gmra.mxu0 %v4914
    %v5347 = vpop.f32.mrf.mxu0
    %v5348 = vadd.f32 %v4159, %v5347
    %5349 = vdwg.mxu0
    %5350 = vmatpush.msra.mxu0 %v3796
    %5351 = vmatpush.msra.mxu0 %v3792
    %5352 = vmatpush.msra.mxu0 %v3788
    %5353 = vmatpush.msra.mxu0 %v3784
    %5354 = vmatpush.msra.mxu0 %v3780
    %5355 = vmatpush.msra.mxu0 %v3776
    %5356 = vmatpush.msra.mxu0 %v3772
    %5357 = vmatpush.msra.mxu0 %v3768
    %5358 = vmatpush.msra.mxu0 %v3764
    %5359 = vmatpush.msra.mxu0 %v3760
    %5360 = vmatpush.msra.mxu0 %v3756
    %5361 = vmatpush.msra.mxu0 %v3752
    %5362 = vmatpush.msra.mxu0 %v3748
    %5363 = vmatpush.msra.mxu0 %v3744
    %5364 = vmatpush.msra.mxu0 %v3740
    %5365 = vmatpush.msra.mxu0 %v3736
    %5366 = vmatmul.f32.gmra.mxu0 %v4914
    %v5367 = vpop.f32.mrf.mxu0
    %v5368 = vadd.f32 %v4160, %v5367
    %5369 = vdwg.mxu0
    %5370 = vmatpush.msra.mxu0 %v3858
    %5371 = vmatpush.msra.mxu0 %v3854
    %5372 = vmatpush.msra.mxu0 %v3850
    %5373 = vmatpush.msra.mxu0 %v3846
    %5374 = vmatpush.msra.mxu0 %v3842
    %5375 = vmatpush.msra.mxu0 %v3838
    %5376 = vmatpush.msra.mxu0 %v3834
    %5377 = vmatpush.msra.mxu0 %v3830
    %5378 = vmatpush.msra.mxu0 %v3826
    %5379 = vmatpush.msra.mxu0 %v3822
    %5380 = vmatpush.msra.mxu0 %v3818
    %5381 = vmatpush.msra.mxu0 %v3814
    %5382 = vmatpush.msra.mxu0 %v3810
    %5383 = vmatpush.msra.mxu0 %v3806
    %5384 = vmatpush.msra.mxu0 %v3802
    %5385 = vmatpush.msra.mxu0 %v3798
    %5386 = vmatmul.f32.gmra.mxu0 %v5141
    %v5387 = vpop.f32.mrf.mxu0
    %v5388 = vadd.f32 0.0, %v5387
    %5389 = vdwg.mxu0
    %5390 = vmatpush.msra.mxu0 %v3859
    %5391 = vmatpush.msra.mxu0 %v3855
    %5392 = vmatpush.msra.mxu0 %v3851
    %5393 = vmatpush.msra.mxu0 %v3847
    %5394 = vmatpush.msra.mxu0 %v3843
    %5395 = vmatpush.msra.mxu0 %v3839
    %5396 = vmatpush.msra.mxu0 %v3835
    %5397 = vmatpush.msra.mxu0 %v3831
    %5398 = vmatpush.msra.mxu0 %v3827
    %5399 = vmatpush.msra.mxu0 %v3823
    %5400 = vmatpush.msra.mxu0 %v3819
    %5401 = vmatpush.msra.mxu0 %v3815
    %5402 = vmatpush.msra.mxu0 %v3811
    %5403 = vmatpush.msra.mxu0 %v3807
    %5404 = vmatpush.msra.mxu0 %v3803
    %5405 = vmatpush.msra.mxu0 %v3799
    %5406 = vmatmul.f32.gmra.mxu0 %v5141
    %v5407 = vpop.f32.mrf.mxu0
    %v5408 = vadd.f32 0.0, %v5407
    %5409 = vdwg.mxu0
    %5410 = vmatpush.msra.mxu0 %v3860
    %5411 = vmatpush.msra.mxu0 %v3856
    %5412 = vmatpush.msra.mxu0 %v3852
    %5413 = vmatpush.msra.mxu0 %v3848
    %5414 = vmatpush.msra.mxu0 %v3844
    %5415 = vmatpush.msra.mxu0 %v3840
    %5416 = vmatpush.msra.mxu0 %v3836
    %5417 = vmatpush.msra.mxu0 %v3832
    %5418 = vmatpush.msra.mxu0 %v3828
    %5419 = vmatpush.msra.mxu0 %v3824
    %5420 = vmatpush.msra.mxu0 %v3820
    %5421 = vmatpush.msra.mxu0 %v3816
    %5422 = vmatpush.msra.mxu0 %v3812
    %5423 = vmatpush.msra.mxu0 %v3808
    %5424 = vmatpush.msra.mxu0 %v3804
    %5425 = vmatpush.msra.mxu0 %v3800
    %5426 = vmatmul.f32.gmra.mxu0 %v5141
    %v5427 = vpop.f32.mrf.mxu0
    %v5428 = vadd.f32 0.0, %v5427
    %5429 = vdwg.mxu0
    %5430 = vmatpush.msra.mxu0 %v3861
    %5431 = vmatpush.msra.mxu0 %v3857
    %5432 = vmatpush.msra.mxu0 %v3853
    %5433 = vmatpush.msra.mxu0 %v3849
    %5434 = vmatpush.msra.mxu0 %v3845
    %5435 = vmatpush.msra.mxu0 %v3841
    %5436 = vmatpush.msra.mxu0 %v3837
    %5437 = vmatpush.msra.mxu0 %v3833
    %5438 = vmatpush.msra.mxu0 %v3829
    %5439 = vmatpush.msra.mxu0 %v3825
    %5440 = vmatpush.msra.mxu0 %v3821
    %5441 = vmatpush.msra.mxu0 %v3817
    %5442 = vmatpush.msra.mxu0 %v3813
    %5443 = vmatpush.msra.mxu0 %v3809
    %5444 = vmatpush.msra.mxu0 %v3805
    %5445 = vmatpush.msra.mxu0 %v3801
    %5446 = vmatmul.f32.gmra.mxu0 %v5141
    %v5447 = vpop.f32.mrf.mxu0
    %v5448 = vadd.f32 0.0, %v5447
    %5449 = vdwg.mxu0
    %v5450 = vadd.f32 %v5308, %v5388
    %v5451 = vadd.f32 %v5328, %v5408
    %v5452 = vadd.f32 %v5348, %v5428
    %v5453 = vadd.f32 %v5368, %v5448
    %v5454 = vxor.u32 %v5450, 2147483648
    %v5455 = vmul.f32 %v5454, 1.442695
    %v5456 = vpow.pop %v5455
    %v5457 = vadd.f32 %v5456, 1.0
    %v5458 = vrcp.pop %v5457
    %v5459 = vmul.f32 %v5457, %v5458
    %v5460 = vsub.f32 1.0, %v5459
    %v5461 = vmul.f32 %v5458, %v5460
    %v5462 = vadd.f32 %v5458, %v5461
    %vm5463 = vweird.f32 %v5457
    %vm5464 = vweird.f32 %v5458
    %vm5465 = vmor %vm5463, %vm5464
    %v5466 = vsel %vm5465, %v5458, %v5462
    %v5467 = vand.u32 2147483647, %v5457
    %vm5468 = vcmp.eq.f32.partialorder %v5467, 8.507059e+37
    %v5469 = vand.u32 %v5457, 2147483648
    %v5470 = vor.u32 1.1754944e-38, %v5469
    %v5471 = vsel %vm5468, %v5470, %v5466
    %v5472 = vmul.f32 1.0, %v5471
    %v5473 = vxor.u32 %v5451, 2147483648
    %v5474 = vmul.f32 %v5473, 1.442695
    %v5475 = vpow.pop %v5474
    %v5476 = vadd.f32 %v5475, 1.0
    %v5477 = vrcp.pop %v5476
    %v5478 = vmul.f32 %v5476, %v5477
    %v5479 = vsub.f32 1.0, %v5478
    %v5480 = vmul.f32 %v5477, %v5479
    %v5481 = vadd.f32 %v5477, %v5480
    %vm5482 = vweird.f32 %v5476
    %vm5483 = vweird.f32 %v5477
    %vm5484 = vmor %vm5482, %vm5483
    %v5485 = vsel %vm5484, %v5477, %v5481
    %v5486 = vand.u32 2147483647, %v5476
    %vm5487 = vcmp.eq.f32.partialorder %v5486, 8.507059e+37
    %v5488 = vand.u32 %v5476, 2147483648
    %v5489 = vor.u32 1.1754944e-38, %v5488
    %v5490 = vsel %vm5487, %v5489, %v5485
    %v5491 = vmul.f32 1.0, %v5490
    %v5492 = vtanh.pop %v5452
    %v5493 = vxor.u32 %v5453, 2147483648
    %v5494 = vmul.f32 %v5493, 1.442695
    %v5495 = vpow.pop %v5494
    %v5496 = vadd.f32 %v5495, 1.0
    %v5497 = vrcp.pop %v5496
    %v5498 = vmul.f32 %v5496, %v5497
    %v5499 = vsub.f32 1.0, %v5498
    %v5500 = vmul.f32 %v5497, %v5499
    %v5501 = vadd.f32 %v5497, %v5500
    %vm5502 = vweird.f32 %v5496
    %vm5503 = vweird.f32 %v5497
    %vm5504 = vmor %vm5502, %vm5503
    %v5505 = vsel %vm5504, %v5497, %v5501
    %v5506 = vand.u32 2147483647, %v5496
    %vm5507 = vcmp.eq.f32.partialorder %v5506, 8.507059e+37
    %v5508 = vand.u32 %v5496, 2147483648
    %v5509 = vor.u32 1.1754944e-38, %v5508
    %v5510 = vsel %vm5507, %v5509, %v5505
    %v5511 = vmul.f32 1.0, %v5510
    %v5512 = vmul.f32 %v5491, %v5139
    %v5513 = vmul.f32 %v5472, %v5492
    %v5514 = vadd.f32 %v5512, %v5513
    %v5515 = vtanh.pop %v5514
    %v5516 = vmul.f32 %v5511, %v5515
    %5517 = vst [vmem:[#allocation2 + $0x3] sm:$0x1] %v5516
    %5518 = vmatpush.msra.mxu0 %v3729
    %5519 = vmatpush.msra.mxu0 %v3725
    %5520 = vmatpush.msra.mxu0 %v3721
    %5521 = vmatpush.msra.mxu0 %v3717
    %5522 = vmatpush.msra.mxu0 %v3713
    %5523 = vmatpush.msra.mxu0 %v3709
    %5524 = vmatpush.msra.mxu0 %v3705
    %5525 = vmatpush.msra.mxu0 %v3701
    %5526 = vmatpush.msra.mxu0 %v3697
    %5527 = vmatpush.msra.mxu0 %v3693
    %5528 = vmatpush.msra.mxu0 %v3689
    %5529 = vmatpush.msra.mxu0 %v3685
    %5530 = vmatpush.msra.mxu0 %v3681
    %5531 = vmatpush.msra.mxu0 %v3677
    %5532 = vmatpush.msra.mxu0 %v3673
    %5533 = vmatpush.msra.mxu0 %v3669
    %5534 = vmatmul.f32.gmra.mxu0 %v5289
    %v5535 = vpop.f32.mrf.mxu0
    %v5536 = vadd.f32 0.0, %v5535
    %5537 = vdwg.mxu0
    %5538 = vmatpush.msra.mxu0 %v3730
    %5539 = vmatpush.msra.mxu0 %v3726
    %5540 = vmatpush.msra.mxu0 %v3722
    %5541 = vmatpush.msra.mxu0 %v3718
    %5542 = vmatpush.msra.mxu0 %v3714
    %5543 = vmatpush.msra.mxu0 %v3710
    %5544 = vmatpush.msra.mxu0 %v3706
    %5545 = vmatpush.msra.mxu0 %v3702
    %5546 = vmatpush.msra.mxu0 %v3698
    %5547 = vmatpush.msra.mxu0 %v3694
    %5548 = vmatpush.msra.mxu0 %v3690
    %5549 = vmatpush.msra.mxu0 %v3686
    %5550 = vmatpush.msra.mxu0 %v3682
    %5551 = vmatpush.msra.mxu0 %v3678
    %5552 = vmatpush.msra.mxu0 %v3674
    %5553 = vmatpush.msra.mxu0 %v3670
    %5554 = vmatmul.f32.gmra.mxu0 %v5289
    %v5555 = vpop.f32.mrf.mxu0
    %v5556 = vadd.f32 0.0, %v5555
    %5557 = vdwg.mxu0
    %5558 = vmatpush.msra.mxu0 %v3731
    %5559 = vmatpush.msra.mxu0 %v3727
    %5560 = vmatpush.msra.mxu0 %v3723
    %5561 = vmatpush.msra.mxu0 %v3719
    %5562 = vmatpush.msra.mxu0 %v3715
    %5563 = vmatpush.msra.mxu0 %v3711
    %5564 = vmatpush.msra.mxu0 %v3707
    %5565 = vmatpush.msra.mxu0 %v3703
    %5566 = vmatpush.msra.mxu0 %v3699
    %5567 = vmatpush.msra.mxu0 %v3695
    %5568 = vmatpush.msra.mxu0 %v3691
    %5569 = vmatpush.msra.mxu0 %v3687
    %5570 = vmatpush.msra.mxu0 %v3683
    %5571 = vmatpush.msra.mxu0 %v3679
    %5572 = vmatpush.msra.mxu0 %v3675
    %5573 = vmatpush.msra.mxu0 %v3671
    %5574 = vmatmul.f32.gmra.mxu0 %v5289
    %v5575 = vpop.f32.mrf.mxu0
    %v5576 = vadd.f32 0.0, %v5575
    %5577 = vdwg.mxu0
    %5578 = vmatpush.msra.mxu0 %v3732
    %5579 = vmatpush.msra.mxu0 %v3728
    %5580 = vmatpush.msra.mxu0 %v3724
    %5581 = vmatpush.msra.mxu0 %v3720
    %5582 = vmatpush.msra.mxu0 %v3716
    %5583 = vmatpush.msra.mxu0 %v3712
    %5584 = vmatpush.msra.mxu0 %v3708
    %5585 = vmatpush.msra.mxu0 %v3704
    %5586 = vmatpush.msra.mxu0 %v3700
    %5587 = vmatpush.msra.mxu0 %v3696
    %5588 = vmatpush.msra.mxu0 %v3692
    %5589 = vmatpush.msra.mxu0 %v3688
    %5590 = vmatpush.msra.mxu0 %v3684
    %5591 = vmatpush.msra.mxu0 %v3680
    %5592 = vmatpush.msra.mxu0 %v3676
    %5593 = vmatpush.msra.mxu0 %v3672
    %5594 = vmatmul.f32.gmra.mxu0 %v5289
    %v5595 = vpop.f32.mrf.mxu0
    %v5596 = vadd.f32 0.0, %v5595
    %5597 = vdwg.mxu0
    %v5598 = vadd.f32 %v3607, %v5536
    %v5599 = vadd.f32 %v3627, %v5556
    %v5600 = vadd.f32 %v3647, %v5576
    %v5601 = vadd.f32 %v3667, %v5596
    %v5602 = vxor.u32 %v5598, 2147483648
    %v5603 = vmul.f32 %v5602, 1.442695
    %v5604 = vpow.pop %v5603
    %v5605 = vadd.f32 %v5604, 1.0
    %v5606 = vrcp.pop %v5605
    %v5607 = vmul.f32 %v5605, %v5606
    %v5608 = vsub.f32 1.0, %v5607
    %v5609 = vmul.f32 %v5606, %v5608
    %v5610 = vadd.f32 %v5606, %v5609
    %vm5611 = vweird.f32 %v5605
    %vm5612 = vweird.f32 %v5606
    %vm5613 = vmor %vm5611, %vm5612
    %v5614 = vsel %vm5613, %v5606, %v5610
    %v5615 = vand.u32 2147483647, %v5605
    %vm5616 = vcmp.eq.f32.partialorder %v5615, 8.507059e+37
    %v5617 = vand.u32 %v5605, 2147483648
    %v5618 = vor.u32 1.1754944e-38, %v5617
    %v5619 = vsel %vm5616, %v5618, %v5614
    %v5620 = vmul.f32 1.0, %v5619
    %v5621 = vxor.u32 %v5599, 2147483648
    %v5622 = vmul.f32 %v5621, 1.442695
    %v5623 = vpow.pop %v5622
    %v5624 = vadd.f32 %v5623, 1.0
    %v5625 = vrcp.pop %v5624
    %v5626 = vmul.f32 %v5624, %v5625
    %v5627 = vsub.f32 1.0, %v5626
    %v5628 = vmul.f32 %v5625, %v5627
    %v5629 = vadd.f32 %v5625, %v5628
    %vm5630 = vweird.f32 %v5624
    %vm5631 = vweird.f32 %v5625
    %vm5632 = vmor %vm5630, %vm5631
    %v5633 = vsel %vm5632, %v5625, %v5629
    %v5634 = vand.u32 2147483647, %v5624
    %vm5635 = vcmp.eq.f32.partialorder %v5634, 8.507059e+37
    %v5636 = vand.u32 %v5624, 2147483648
    %v5637 = vor.u32 1.1754944e-38, %v5636
    %v5638 = vsel %vm5635, %v5637, %v5633
    %v5639 = vmul.f32 1.0, %v5638
    %v5640 = vtanh.pop %v5600
    %v5641 = vxor.u32 %v5601, 2147483648
    %v5642 = vmul.f32 %v5641, 1.442695
    %v5643 = vpow.pop %v5642
    %v5644 = vadd.f32 %v5643, 1.0
    %v5645 = vrcp.pop %v5644
    %v5646 = vmul.f32 %v5644, %v5645
    %v5647 = vsub.f32 1.0, %v5646
    %v5648 = vmul.f32 %v5645, %v5647
    %v5649 = vadd.f32 %v5645, %v5648
    %vm5650 = vweird.f32 %v5644
    %vm5651 = vweird.f32 %v5645
    %vm5652 = vmor %vm5650, %vm5651
    %v5653 = vsel %vm5652, %v5645, %v5649
    %v5654 = vand.u32 2147483647, %v5644
    %vm5655 = vcmp.eq.f32.partialorder %v5654, 8.507059e+37
    %v5656 = vand.u32 %v5644, 2147483648
    %v5657 = vor.u32 1.1754944e-38, %v5656
    %v5658 = vsel %vm5655, %v5657, %v5653
    %v5659 = vmul.f32 1.0, %v5658
    %v5660 = vmul.f32 %v5639, %v5287
    %v5661 = vmul.f32 %v5620, %v5640
    %v5662 = vadd.f32 %v5660, %v5661
    %v5663 = vtanh.pop %v5662
    %v5664 = vmul.f32 %v5659, %v5663
    %5665 = vmatpush.msra.mxu0 %v3793
    %5666 = vmatpush.msra.mxu0 %v3789
    %5667 = vmatpush.msra.mxu0 %v3785
    %5668 = vmatpush.msra.mxu0 %v3781
    %5669 = vmatpush.msra.mxu0 %v3777
    %5670 = vmatpush.msra.mxu0 %v3773
    %5671 = vmatpush.msra.mxu0 %v3769
    %5672 = vmatpush.msra.mxu0 %v3765
    %5673 = vmatpush.msra.mxu0 %v3761
    %5674 = vmatpush.msra.mxu0 %v3757
    %5675 = vmatpush.msra.mxu0 %v3753
    %5676 = vmatpush.msra.mxu0 %v3749
    %5677 = vmatpush.msra.mxu0 %v3745
    %5678 = vmatpush.msra.mxu0 %v3741
    %5679 = vmatpush.msra.mxu0 %v3737
    %5680 = vmatpush.msra.mxu0 %v3733
    %5681 = vmatmul.f32.gmra.mxu0 %v5289
    %v5682 = vpop.f32.mrf.mxu0
    %v5683 = vadd.f32 %v4157, %v5682
    %5684 = vdwg.mxu0
    %5685 = vmatpush.msra.mxu0 %v3794
    %5686 = vmatpush.msra.mxu0 %v3790
    %5687 = vmatpush.msra.mxu0 %v3786
    %5688 = vmatpush.msra.mxu0 %v3782
    %5689 = vmatpush.msra.mxu0 %v3778
    %5690 = vmatpush.msra.mxu0 %v3774
    %5691 = vmatpush.msra.mxu0 %v3770
    %5692 = vmatpush.msra.mxu0 %v3766
    %5693 = vmatpush.msra.mxu0 %v3762
    %5694 = vmatpush.msra.mxu0 %v3758
    %5695 = vmatpush.msra.mxu0 %v3754
    %5696 = vmatpush.msra.mxu0 %v3750
    %5697 = vmatpush.msra.mxu0 %v3746
    %5698 = vmatpush.msra.mxu0 %v3742
    %5699 = vmatpush.msra.mxu0 %v3738
    %5700 = vmatpush.msra.mxu0 %v3734
    %5701 = vmatmul.f32.gmra.mxu0 %v5289
    %v5702 = vpop.f32.mrf.mxu0
    %v5703 = vadd.f32 %v4158, %v5702
    %5704 = vdwg.mxu0
    %5705 = vmatpush.msra.mxu0 %v3795
    %5706 = vmatpush.msra.mxu0 %v3791
    %5707 = vmatpush.msra.mxu0 %v3787
    %5708 = vmatpush.msra.mxu0 %v3783
    %5709 = vmatpush.msra.mxu0 %v3779
    %5710 = vmatpush.msra.mxu0 %v3775
    %5711 = vmatpush.msra.mxu0 %v3771
    %5712 = vmatpush.msra.mxu0 %v3767
    %5713 = vmatpush.msra.mxu0 %v3763
    %5714 = vmatpush.msra.mxu0 %v3759
    %5715 = vmatpush.msra.mxu0 %v3755
    %5716 = vmatpush.msra.mxu0 %v3751
    %5717 = vmatpush.msra.mxu0 %v3747
    %5718 = vmatpush.msra.mxu0 %v3743
    %5719 = vmatpush.msra.mxu0 %v3739
    %5720 = vmatpush.msra.mxu0 %v3735
    %5721 = vmatmul.f32.gmra.mxu0 %v5289
    %v5722 = vpop.f32.mrf.mxu0
    %v5723 = vadd.f32 %v4159, %v5722
    %5724 = vdwg.mxu0
    %5725 = vmatpush.msra.mxu0 %v3796
    %5726 = vmatpush.msra.mxu0 %v3792
    %5727 = vmatpush.msra.mxu0 %v3788
    %5728 = vmatpush.msra.mxu0 %v3784
    %5729 = vmatpush.msra.mxu0 %v3780
    %5730 = vmatpush.msra.mxu0 %v3776
    %5731 = vmatpush.msra.mxu0 %v3772
    %5732 = vmatpush.msra.mxu0 %v3768
    %5733 = vmatpush.msra.mxu0 %v3764
    %5734 = vmatpush.msra.mxu0 %v3760
    %5735 = vmatpush.msra.mxu0 %v3756
    %5736 = vmatpush.msra.mxu0 %v3752
    %5737 = vmatpush.msra.mxu0 %v3748
    %5738 = vmatpush.msra.mxu0 %v3744
    %5739 = vmatpush.msra.mxu0 %v3740
    %5740 = vmatpush.msra.mxu0 %v3736
    %5741 = vmatmul.f32.gmra.mxu0 %v5289
    %v5742 = vpop.f32.mrf.mxu0
    %v5743 = vadd.f32 %v4160, %v5742
    %5744 = vdwg.mxu0
    %5745 = vmatpush.msra.mxu0 %v3858
    %5746 = vmatpush.msra.mxu0 %v3854
    %5747 = vmatpush.msra.mxu0 %v3850
    %5748 = vmatpush.msra.mxu0 %v3846
    %5749 = vmatpush.msra.mxu0 %v3842
    %5750 = vmatpush.msra.mxu0 %v3838
    %5751 = vmatpush.msra.mxu0 %v3834
    %5752 = vmatpush.msra.mxu0 %v3830
    %5753 = vmatpush.msra.mxu0 %v3826
    %5754 = vmatpush.msra.mxu0 %v3822
    %5755 = vmatpush.msra.mxu0 %v3818
    %5756 = vmatpush.msra.mxu0 %v3814
    %5757 = vmatpush.msra.mxu0 %v3810
    %5758 = vmatpush.msra.mxu0 %v3806
    %5759 = vmatpush.msra.mxu0 %v3802
    %5760 = vmatpush.msra.mxu0 %v3798
    %5761 = vmatmul.f32.gmra.mxu0 %v5516
    %v5762 = vpop.f32.mrf.mxu0
    %v5763 = vadd.f32 0.0, %v5762
    %5764 = vdwg.mxu0
    %5765 = vmatpush.msra.mxu0 %v3859
    %5766 = vmatpush.msra.mxu0 %v3855
    %5767 = vmatpush.msra.mxu0 %v3851
    %5768 = vmatpush.msra.mxu0 %v3847
    %5769 = vmatpush.msra.mxu0 %v3843
    %5770 = vmatpush.msra.mxu0 %v3839
    %5771 = vmatpush.msra.mxu0 %v3835
    %5772 = vmatpush.msra.mxu0 %v3831
    %5773 = vmatpush.msra.mxu0 %v3827
    %5774 = vmatpush.msra.mxu0 %v3823
    %5775 = vmatpush.msra.mxu0 %v3819
    %5776 = vmatpush.msra.mxu0 %v3815
    %5777 = vmatpush.msra.mxu0 %v3811
    %5778 = vmatpush.msra.mxu0 %v3807
    %5779 = vmatpush.msra.mxu0 %v3803
    %5780 = vmatpush.msra.mxu0 %v3799
    %5781 = vmatmul.f32.gmra.mxu0 %v5516
    %v5782 = vpop.f32.mrf.mxu0
    %v5783 = vadd.f32 0.0, %v5782
    %5784 = vdwg.mxu0
    %5785 = vmatpush.msra.mxu0 %v3860
    %5786 = vmatpush.msra.mxu0 %v3856
    %5787 = vmatpush.msra.mxu0 %v3852
    %5788 = vmatpush.msra.mxu0 %v3848
    %5789 = vmatpush.msra.mxu0 %v3844
    %5790 = vmatpush.msra.mxu0 %v3840
    %5791 = vmatpush.msra.mxu0 %v3836
    %5792 = vmatpush.msra.mxu0 %v3832
    %5793 = vmatpush.msra.mxu0 %v3828
    %5794 = vmatpush.msra.mxu0 %v3824
    %5795 = vmatpush.msra.mxu0 %v3820
    %5796 = vmatpush.msra.mxu0 %v3816
    %5797 = vmatpush.msra.mxu0 %v3812
    %5798 = vmatpush.msra.mxu0 %v3808
    %5799 = vmatpush.msra.mxu0 %v3804
    %5800 = vmatpush.msra.mxu0 %v3800
    %5801 = vmatmul.f32.gmra.mxu0 %v5516
    %v5802 = vpop.f32.mrf.mxu0
    %v5803 = vadd.f32 0.0, %v5802
    %5804 = vdwg.mxu0
    %5805 = vmatpush.msra.mxu0 %v3861
    %5806 = vmatpush.msra.mxu0 %v3857
    %5807 = vmatpush.msra.mxu0 %v3853
    %5808 = vmatpush.msra.mxu0 %v3849
    %5809 = vmatpush.msra.mxu0 %v3845
    %5810 = vmatpush.msra.mxu0 %v3841
    %5811 = vmatpush.msra.mxu0 %v3837
    %5812 = vmatpush.msra.mxu0 %v3833
    %5813 = vmatpush.msra.mxu0 %v3829
    %5814 = vmatpush.msra.mxu0 %v3825
    %5815 = vmatpush.msra.mxu0 %v3821
    %5816 = vmatpush.msra.mxu0 %v3817
    %5817 = vmatpush.msra.mxu0 %v3813
    %5818 = vmatpush.msra.mxu0 %v3809
    %5819 = vmatpush.msra.mxu0 %v3805
    %5820 = vmatpush.msra.mxu0 %v3801
    %5821 = vmatmul.f32.gmra.mxu0 %v5516
    %v5822 = vpop.f32.mrf.mxu0
    %v5823 = vadd.f32 0.0, %v5822
    %5824 = vdwg.mxu0
    %v5825 = vadd.f32 %v5683, %v5763
    %v5826 = vadd.f32 %v5703, %v5783
    %v5827 = vadd.f32 %v5723, %v5803
    %v5828 = vadd.f32 %v5743, %v5823
    %v5829 = vxor.u32 %v5825, 2147483648
    %v5830 = vmul.f32 %v5829, 1.442695
    %v5831 = vpow.pop %v5830
    %v5832 = vadd.f32 %v5831, 1.0
    %v5833 = vrcp.pop %v5832
    %v5834 = vmul.f32 %v5832, %v5833
    %v5835 = vsub.f32 1.0, %v5834
    %v5836 = vmul.f32 %v5833, %v5835
    %v5837 = vadd.f32 %v5833, %v5836
    %vm5838 = vweird.f32 %v5832
    %vm5839 = vweird.f32 %v5833
    %vm5840 = vmor %vm5838, %vm5839
    %v5841 = vsel %vm5840, %v5833, %v5837
    %v5842 = vand.u32 2147483647, %v5832
    %vm5843 = vcmp.eq.f32.partialorder %v5842, 8.507059e+37
    %v5844 = vand.u32 %v5832, 2147483648
    %v5845 = vor.u32 1.1754944e-38, %v5844
    %v5846 = vsel %vm5843, %v5845, %v5841
    %v5847 = vmul.f32 1.0, %v5846
    %v5848 = vxor.u32 %v5826, 2147483648
    %v5849 = vmul.f32 %v5848, 1.442695
    %v5850 = vpow.pop %v5849
    %v5851 = vadd.f32 %v5850, 1.0
    %v5852 = vrcp.pop %v5851
    %v5853 = vmul.f32 %v5851, %v5852
    %v5854 = vsub.f32 1.0, %v5853
    %v5855 = vmul.f32 %v5852, %v5854
    %v5856 = vadd.f32 %v5852, %v5855
    %vm5857 = vweird.f32 %v5851
    %vm5858 = vweird.f32 %v5852
    %vm5859 = vmor %vm5857, %vm5858
    %v5860 = vsel %vm5859, %v5852, %v5856
    %v5861 = vand.u32 2147483647, %v5851
    %vm5862 = vcmp.eq.f32.partialorder %v5861, 8.507059e+37
    %v5863 = vand.u32 %v5851, 2147483648
    %v5864 = vor.u32 1.1754944e-38, %v5863
    %v5865 = vsel %vm5862, %v5864, %v5860
    %v5866 = vmul.f32 1.0, %v5865
    %v5867 = vtanh.pop %v5827
    %v5868 = vxor.u32 %v5828, 2147483648
    %v5869 = vmul.f32 %v5868, 1.442695
    %v5870 = vpow.pop %v5869
    %v5871 = vadd.f32 %v5870, 1.0
    %v5872 = vrcp.pop %v5871
    %v5873 = vmul.f32 %v5871, %v5872
    %v5874 = vsub.f32 1.0, %v5873
    %v5875 = vmul.f32 %v5872, %v5874
    %v5876 = vadd.f32 %v5872, %v5875
    %vm5877 = vweird.f32 %v5871
    %vm5878 = vweird.f32 %v5872
    %vm5879 = vmor %vm5877, %vm5878
    %v5880 = vsel %vm5879, %v5872, %v5876
    %v5881 = vand.u32 2147483647, %v5871
    %vm5882 = vcmp.eq.f32.partialorder %v5881, 8.507059e+37
    %v5883 = vand.u32 %v5871, 2147483648
    %v5884 = vor.u32 1.1754944e-38, %v5883
    %v5885 = vsel %vm5882, %v5884, %v5880
    %v5886 = vmul.f32 1.0, %v5885
    %v5887 = vmul.f32 %v5866, %v5514
    %v5888 = vmul.f32 %v5847, %v5867
    %v5889 = vadd.f32 %v5887, %v5888
    %v5890 = vtanh.pop %v5889
    %v5891 = vmul.f32 %v5886, %v5890
    %5892 = vst [vmem:[#allocation2 + $0x4] sm:$0x1] %v5891
    %5893 = vmatpush.msra.mxu0 %v3729
    %5894 = vmatpush.msra.mxu0 %v3725
    %5895 = vmatpush.msra.mxu0 %v3721
    %5896 = vmatpush.msra.mxu0 %v3717
    %5897 = vmatpush.msra.mxu0 %v3713
    %5898 = vmatpush.msra.mxu0 %v3709
    %5899 = vmatpush.msra.mxu0 %v3705
    %5900 = vmatpush.msra.mxu0 %v3701
    %5901 = vmatpush.msra.mxu0 %v3697
    %5902 = vmatpush.msra.mxu0 %v3693
    %5903 = vmatpush.msra.mxu0 %v3689
    %5904 = vmatpush.msra.mxu0 %v3685
    %5905 = vmatpush.msra.mxu0 %v3681
    %5906 = vmatpush.msra.mxu0 %v3677
    %5907 = vmatpush.msra.mxu0 %v3673
    %5908 = vmatpush.msra.mxu0 %v3669
    %5909 = vmatmul.f32.gmra.mxu0 %v5664
    %v5910 = vpop.f32.mrf.mxu0
    %v5911 = vadd.f32 0.0, %v5910
    %5912 = vdwg.mxu0
    %5913 = vmatpush.msra.mxu0 %v3730
    %5914 = vmatpush.msra.mxu0 %v3726
    %5915 = vmatpush.msra.mxu0 %v3722
    %5916 = vmatpush.msra.mxu0 %v3718
    %5917 = vmatpush.msra.mxu0 %v3714
    %5918 = vmatpush.msra.mxu0 %v3710
    %5919 = vmatpush.msra.mxu0 %v3706
    %5920 = vmatpush.msra.mxu0 %v3702
    %5921 = vmatpush.msra.mxu0 %v3698
    %5922 = vmatpush.msra.mxu0 %v3694
    %5923 = vmatpush.msra.mxu0 %v3690
    %5924 = vmatpush.msra.mxu0 %v3686
    %5925 = vmatpush.msra.mxu0 %v3682
    %5926 = vmatpush.msra.mxu0 %v3678
    %5927 = vmatpush.msra.mxu0 %v3674
    %5928 = vmatpush.msra.mxu0 %v3670
    %5929 = vmatmul.f32.gmra.mxu0 %v5664
    %v5930 = vpop.f32.mrf.mxu0
    %v5931 = vadd.f32 0.0, %v5930
    %5932 = vdwg.mxu0
    %5933 = vmatpush.msra.mxu0 %v3731
    %5934 = vmatpush.msra.mxu0 %v3727
    %5935 = vmatpush.msra.mxu0 %v3723
    %5936 = vmatpush.msra.mxu0 %v3719
    %5937 = vmatpush.msra.mxu0 %v3715
    %5938 = vmatpush.msra.mxu0 %v3711
    %5939 = vmatpush.msra.mxu0 %v3707
    %5940 = vmatpush.msra.mxu0 %v3703
    %5941 = vmatpush.msra.mxu0 %v3699
    %5942 = vmatpush.msra.mxu0 %v3695
    %5943 = vmatpush.msra.mxu0 %v3691
    %5944 = vmatpush.msra.mxu0 %v3687
    %5945 = vmatpush.msra.mxu0 %v3683
    %5946 = vmatpush.msra.mxu0 %v3679
    %5947 = vmatpush.msra.mxu0 %v3675
    %5948 = vmatpush.msra.mxu0 %v3671
    %5949 = vmatmul.f32.gmra.mxu0 %v5664
    %v5950 = vpop.f32.mrf.mxu0
    %v5951 = vadd.f32 0.0, %v5950
    %5952 = vdwg.mxu0
    %5953 = vmatpush.msra.mxu0 %v3732
    %5954 = vmatpush.msra.mxu0 %v3728
    %5955 = vmatpush.msra.mxu0 %v3724
    %5956 = vmatpush.msra.mxu0 %v3720
    %5957 = vmatpush.msra.mxu0 %v3716
    %5958 = vmatpush.msra.mxu0 %v3712
    %5959 = vmatpush.msra.mxu0 %v3708
    %5960 = vmatpush.msra.mxu0 %v3704
    %5961 = vmatpush.msra.mxu0 %v3700
    %5962 = vmatpush.msra.mxu0 %v3696
    %5963 = vmatpush.msra.mxu0 %v3692
    %5964 = vmatpush.msra.mxu0 %v3688
    %5965 = vmatpush.msra.mxu0 %v3684
    %5966 = vmatpush.msra.mxu0 %v3680
    %5967 = vmatpush.msra.mxu0 %v3676
    %5968 = vmatpush.msra.mxu0 %v3672
    %5969 = vmatmul.f32.gmra.mxu0 %v5664
    %v5970 = vpop.f32.mrf.mxu0
    %v5971 = vadd.f32 0.0, %v5970
    %5972 = vdwg.mxu0
    %v5973 = vadd.f32 %v3607, %v5911
    %v5974 = vadd.f32 %v3627, %v5931
    %v5975 = vadd.f32 %v3647, %v5951
    %v5976 = vadd.f32 %v3667, %v5971
    %v5977 = vxor.u32 %v5973, 2147483648
    %v5978 = vmul.f32 %v5977, 1.442695
    %v5979 = vpow.pop %v5978
    %v5980 = vadd.f32 %v5979, 1.0
    %v5981 = vrcp.pop %v5980
    %v5982 = vmul.f32 %v5980, %v5981
    %v5983 = vsub.f32 1.0, %v5982
    %v5984 = vmul.f32 %v5981, %v5983
    %v5985 = vadd.f32 %v5981, %v5984
    %vm5986 = vweird.f32 %v5980
    %vm5987 = vweird.f32 %v5981
    %vm5988 = vmor %vm5986, %vm5987
    %v5989 = vsel %vm5988, %v5981, %v5985
    %v5990 = vand.u32 2147483647, %v5980
    %vm5991 = vcmp.eq.f32.partialorder %v5990, 8.507059e+37
    %v5992 = vand.u32 %v5980, 2147483648
    %v5993 = vor.u32 1.1754944e-38, %v5992
    %v5994 = vsel %vm5991, %v5993, %v5989
    %v5995 = vmul.f32 1.0, %v5994
    %v5996 = vxor.u32 %v5974, 2147483648
    %v5997 = vmul.f32 %v5996, 1.442695
    %v5998 = vpow.pop %v5997
    %v5999 = vadd.f32 %v5998, 1.0
    %v6000 = vrcp.pop %v5999
    %v6001 = vmul.f32 %v5999, %v6000
    %v6002 = vsub.f32 1.0, %v6001
    %v6003 = vmul.f32 %v6000, %v6002
    %v6004 = vadd.f32 %v6000, %v6003
    %vm6005 = vweird.f32 %v5999
    %vm6006 = vweird.f32 %v6000
    %vm6007 = vmor %vm6005, %vm6006
    %v6008 = vsel %vm6007, %v6000, %v6004
    %v6009 = vand.u32 2147483647, %v5999
    %vm6010 = vcmp.eq.f32.partialorder %v6009, 8.507059e+37
    %v6011 = vand.u32 %v5999, 2147483648
    %v6012 = vor.u32 1.1754944e-38, %v6011
    %v6013 = vsel %vm6010, %v6012, %v6008
    %v6014 = vmul.f32 1.0, %v6013
    %v6015 = vtanh.pop %v5975
    %v6016 = vxor.u32 %v5976, 2147483648
    %v6017 = vmul.f32 %v6016, 1.442695
    %v6018 = vpow.pop %v6017
    %v6019 = vadd.f32 %v6018, 1.0
    %v6020 = vrcp.pop %v6019
    %v6021 = vmul.f32 %v6019, %v6020
    %v6022 = vsub.f32 1.0, %v6021
    %v6023 = vmul.f32 %v6020, %v6022
    %v6024 = vadd.f32 %v6020, %v6023
    %vm6025 = vweird.f32 %v6019
    %vm6026 = vweird.f32 %v6020
    %vm6027 = vmor %vm6025, %vm6026
    %v6028 = vsel %vm6027, %v6020, %v6024
    %v6029 = vand.u32 2147483647, %v6019
    %vm6030 = vcmp.eq.f32.partialorder %v6029, 8.507059e+37
    %v6031 = vand.u32 %v6019, 2147483648
    %v6032 = vor.u32 1.1754944e-38, %v6031
    %v6033 = vsel %vm6030, %v6032, %v6028
    %v6034 = vmul.f32 1.0, %v6033
    %v6035 = vmul.f32 %v6014, %v5662
    %v6036 = vmul.f32 %v5995, %v6015
    %v6037 = vadd.f32 %v6035, %v6036
    %v6038 = vtanh.pop %v6037
    %v6039 = vmul.f32 %v6034, %v6038
    %6040 = vmatpush.msra.mxu0 %v3793
    %6041 = vmatpush.msra.mxu0 %v3789
    %6042 = vmatpush.msra.mxu0 %v3785
    %6043 = vmatpush.msra.mxu0 %v3781
    %6044 = vmatpush.msra.mxu0 %v3777
    %6045 = vmatpush.msra.mxu0 %v3773
    %6046 = vmatpush.msra.mxu0 %v3769
    %6047 = vmatpush.msra.mxu0 %v3765
    %6048 = vmatpush.msra.mxu0 %v3761
    %6049 = vmatpush.msra.mxu0 %v3757
    %6050 = vmatpush.msra.mxu0 %v3753
    %6051 = vmatpush.msra.mxu0 %v3749
    %6052 = vmatpush.msra.mxu0 %v3745
    %6053 = vmatpush.msra.mxu0 %v3741
    %6054 = vmatpush.msra.mxu0 %v3737
    %6055 = vmatpush.msra.mxu0 %v3733
    %6056 = vmatmul.f32.gmra.mxu0 %v5664
    %v6057 = vpop.f32.mrf.mxu0
    %v6058 = vadd.f32 %v4157, %v6057
    %6059 = vdwg.mxu0
    %6060 = vmatpush.msra.mxu0 %v3794
    %6061 = vmatpush.msra.mxu0 %v3790
    %6062 = vmatpush.msra.mxu0 %v3786
    %6063 = vmatpush.msra.mxu0 %v3782
    %6064 = vmatpush.msra.mxu0 %v3778
    %6065 = vmatpush.msra.mxu0 %v3774
    %6066 = vmatpush.msra.mxu0 %v3770
    %6067 = vmatpush.msra.mxu0 %v3766
    %6068 = vmatpush.msra.mxu0 %v3762
    %6069 = vmatpush.msra.mxu0 %v3758
    %6070 = vmatpush.msra.mxu0 %v3754
    %6071 = vmatpush.msra.mxu0 %v3750
    %6072 = vmatpush.msra.mxu0 %v3746
    %6073 = vmatpush.msra.mxu0 %v3742
    %6074 = vmatpush.msra.mxu0 %v3738
    %6075 = vmatpush.msra.mxu0 %v3734
    %6076 = vmatmul.f32.gmra.mxu0 %v5664
    %v6077 = vpop.f32.mrf.mxu0
    %v6078 = vadd.f32 %v4158, %v6077
    %6079 = vdwg.mxu0
    %6080 = vmatpush.msra.mxu0 %v3795
    %6081 = vmatpush.msra.mxu0 %v3791
    %6082 = vmatpush.msra.mxu0 %v3787
    %6083 = vmatpush.msra.mxu0 %v3783
    %6084 = vmatpush.msra.mxu0 %v3779
    %6085 = vmatpush.msra.mxu0 %v3775
    %6086 = vmatpush.msra.mxu0 %v3771
    %6087 = vmatpush.msra.mxu0 %v3767
    %6088 = vmatpush.msra.mxu0 %v3763
    %6089 = vmatpush.msra.mxu0 %v3759
    %6090 = vmatpush.msra.mxu0 %v3755
    %6091 = vmatpush.msra.mxu0 %v3751
    %6092 = vmatpush.msra.mxu0 %v3747
    %6093 = vmatpush.msra.mxu0 %v3743
    %6094 = vmatpush.msra.mxu0 %v3739
    %6095 = vmatpush.msra.mxu0 %v3735
    %6096 = vmatmul.f32.gmra.mxu0 %v5664
    %v6097 = vpop.f32.mrf.mxu0
    %v6098 = vadd.f32 %v4159, %v6097
    %6099 = vdwg.mxu0
    %6100 = vmatpush.msra.mxu0 %v3796
    %6101 = vmatpush.msra.mxu0 %v3792
    %6102 = vmatpush.msra.mxu0 %v3788
    %6103 = vmatpush.msra.mxu0 %v3784
    %6104 = vmatpush.msra.mxu0 %v3780
    %6105 = vmatpush.msra.mxu0 %v3776
    %6106 = vmatpush.msra.mxu0 %v3772
    %6107 = vmatpush.msra.mxu0 %v3768
    %6108 = vmatpush.msra.mxu0 %v3764
    %6109 = vmatpush.msra.mxu0 %v3760
    %6110 = vmatpush.msra.mxu0 %v3756
    %6111 = vmatpush.msra.mxu0 %v3752
    %6112 = vmatpush.msra.mxu0 %v3748
    %6113 = vmatpush.msra.mxu0 %v3744
    %6114 = vmatpush.msra.mxu0 %v3740
    %6115 = vmatpush.msra.mxu0 %v3736
    %6116 = vmatmul.f32.gmra.mxu0 %v5664
    %v6117 = vpop.f32.mrf.mxu0
    %v6118 = vadd.f32 %v4160, %v6117
    %6119 = vdwg.mxu0
    %6120 = vmatpush.msra.mxu0 %v3858
    %6121 = vmatpush.msra.mxu0 %v3854
    %6122 = vmatpush.msra.mxu0 %v3850
    %6123 = vmatpush.msra.mxu0 %v3846
    %6124 = vmatpush.msra.mxu0 %v3842
    %6125 = vmatpush.msra.mxu0 %v3838
    %6126 = vmatpush.msra.mxu0 %v3834
    %6127 = vmatpush.msra.mxu0 %v3830
    %6128 = vmatpush.msra.mxu0 %v3826
    %6129 = vmatpush.msra.mxu0 %v3822
    %6130 = vmatpush.msra.mxu0 %v3818
    %6131 = vmatpush.msra.mxu0 %v3814
    %6132 = vmatpush.msra.mxu0 %v3810
    %6133 = vmatpush.msra.mxu0 %v3806
    %6134 = vmatpush.msra.mxu0 %v3802
    %6135 = vmatpush.msra.mxu0 %v3798
    %6136 = vmatmul.f32.gmra.mxu0 %v5891
    %v6137 = vpop.f32.mrf.mxu0
    %v6138 = vadd.f32 0.0, %v6137
    %6139 = vdwg.mxu0
    %6140 = vmatpush.msra.mxu0 %v3859
    %6141 = vmatpush.msra.mxu0 %v3855
    %6142 = vmatpush.msra.mxu0 %v3851
    %6143 = vmatpush.msra.mxu0 %v3847
    %6144 = vmatpush.msra.mxu0 %v3843
    %6145 = vmatpush.msra.mxu0 %v3839
    %6146 = vmatpush.msra.mxu0 %v3835
    %6147 = vmatpush.msra.mxu0 %v3831
    %6148 = vmatpush.msra.mxu0 %v3827
    %6149 = vmatpush.msra.mxu0 %v3823
    %6150 = vmatpush.msra.mxu0 %v3819
    %6151 = vmatpush.msra.mxu0 %v3815
    %6152 = vmatpush.msra.mxu0 %v3811
    %6153 = vmatpush.msra.mxu0 %v3807
    %6154 = vmatpush.msra.mxu0 %v3803
    %6155 = vmatpush.msra.mxu0 %v3799
    %6156 = vmatmul.f32.gmra.mxu0 %v5891
    %v6157 = vpop.f32.mrf.mxu0
    %v6158 = vadd.f32 0.0, %v6157
    %6159 = vdwg.mxu0
    %6160 = vmatpush.msra.mxu0 %v3860
    %6161 = vmatpush.msra.mxu0 %v3856
    %6162 = vmatpush.msra.mxu0 %v3852
    %6163 = vmatpush.msra.mxu0 %v3848
    %6164 = vmatpush.msra.mxu0 %v3844
    %6165 = vmatpush.msra.mxu0 %v3840
    %6166 = vmatpush.msra.mxu0 %v3836
    %6167 = vmatpush.msra.mxu0 %v3832
    %6168 = vmatpush.msra.mxu0 %v3828
    %6169 = vmatpush.msra.mxu0 %v3824
    %6170 = vmatpush.msra.mxu0 %v3820
    %6171 = vmatpush.msra.mxu0 %v3816
    %6172 = vmatpush.msra.mxu0 %v3812
    %6173 = vmatpush.msra.mxu0 %v3808
    %6174 = vmatpush.msra.mxu0 %v3804
    %6175 = vmatpush.msra.mxu0 %v3800
    %6176 = vmatmul.f32.gmra.mxu0 %v5891
    %v6177 = vpop.f32.mrf.mxu0
    %v6178 = vadd.f32 0.0, %v6177
    %6179 = vdwg.mxu0
    %6180 = vmatpush.msra.mxu0 %v3861
    %6181 = vmatpush.msra.mxu0 %v3857
    %6182 = vmatpush.msra.mxu0 %v3853
    %6183 = vmatpush.msra.mxu0 %v3849
    %6184 = vmatpush.msra.mxu0 %v3845
    %6185 = vmatpush.msra.mxu0 %v3841
    %6186 = vmatpush.msra.mxu0 %v3837
    %6187 = vmatpush.msra.mxu0 %v3833
    %6188 = vmatpush.msra.mxu0 %v3829
    %6189 = vmatpush.msra.mxu0 %v3825
    %6190 = vmatpush.msra.mxu0 %v3821
    %6191 = vmatpush.msra.mxu0 %v3817
    %6192 = vmatpush.msra.mxu0 %v3813
    %6193 = vmatpush.msra.mxu0 %v3809
    %6194 = vmatpush.msra.mxu0 %v3805
    %6195 = vmatpush.msra.mxu0 %v3801
    %6196 = vmatmul.f32.gmra.mxu0 %v5891
    %v6197 = vpop.f32.mrf.mxu0
    %v6198 = vadd.f32 0.0, %v6197
    %6199 = vdwg.mxu0
    %v6200 = vadd.f32 %v6058, %v6138
    %v6201 = vadd.f32 %v6078, %v6158
    %v6202 = vadd.f32 %v6098, %v6178
    %v6203 = vadd.f32 %v6118, %v6198
    %v6204 = vxor.u32 %v6200, 2147483648
    %v6205 = vmul.f32 %v6204, 1.442695
    %v6206 = vpow.pop %v6205
    %v6207 = vadd.f32 %v6206, 1.0
    %v6208 = vrcp.pop %v6207
    %v6209 = vmul.f32 %v6207, %v6208
    %v6210 = vsub.f32 1.0, %v6209
    %v6211 = vmul.f32 %v6208, %v6210
    %v6212 = vadd.f32 %v6208, %v6211
    %vm6213 = vweird.f32 %v6207
    %vm6214 = vweird.f32 %v6208
    %vm6215 = vmor %vm6213, %vm6214
    %v6216 = vsel %vm6215, %v6208, %v6212
    %v6217 = vand.u32 2147483647, %v6207
    %vm6218 = vcmp.eq.f32.partialorder %v6217, 8.507059e+37
    %v6219 = vand.u32 %v6207, 2147483648
    %v6220 = vor.u32 1.1754944e-38, %v6219
    %v6221 = vsel %vm6218, %v6220, %v6216
    %v6222 = vmul.f32 1.0, %v6221
    %v6223 = vxor.u32 %v6201, 2147483648
    %v6224 = vmul.f32 %v6223, 1.442695
    %v6225 = vpow.pop %v6224
    %v6226 = vadd.f32 %v6225, 1.0
    %v6227 = vrcp.pop %v6226
    %v6228 = vmul.f32 %v6226, %v6227
    %v6229 = vsub.f32 1.0, %v6228
    %v6230 = vmul.f32 %v6227, %v6229
    %v6231 = vadd.f32 %v6227, %v6230
    %vm6232 = vweird.f32 %v6226
    %vm6233 = vweird.f32 %v6227
    %vm6234 = vmor %vm6232, %vm6233
    %v6235 = vsel %vm6234, %v6227, %v6231
    %v6236 = vand.u32 2147483647, %v6226
    %vm6237 = vcmp.eq.f32.partialorder %v6236, 8.507059e+37
    %v6238 = vand.u32 %v6226, 2147483648
    %v6239 = vor.u32 1.1754944e-38, %v6238
    %v6240 = vsel %vm6237, %v6239, %v6235
    %v6241 = vmul.f32 1.0, %v6240
    %v6242 = vtanh.pop %v6202
    %v6243 = vxor.u32 %v6203, 2147483648
    %v6244 = vmul.f32 %v6243, 1.442695
    %v6245 = vpow.pop %v6244
    %v6246 = vadd.f32 %v6245, 1.0
    %v6247 = vrcp.pop %v6246
    %v6248 = vmul.f32 %v6246, %v6247
    %v6249 = vsub.f32 1.0, %v6248
    %v6250 = vmul.f32 %v6247, %v6249
    %v6251 = vadd.f32 %v6247, %v6250
    %vm6252 = vweird.f32 %v6246
    %vm6253 = vweird.f32 %v6247
    %vm6254 = vmor %vm6252, %vm6253
    %v6255 = vsel %vm6254, %v6247, %v6251
    %v6256 = vand.u32 2147483647, %v6246
    %vm6257 = vcmp.eq.f32.partialorder %v6256, 8.507059e+37
    %v6258 = vand.u32 %v6246, 2147483648
    %v6259 = vor.u32 1.1754944e-38, %v6258
    %v6260 = vsel %vm6257, %v6259, %v6255
    %v6261 = vmul.f32 1.0, %v6260
    %v6262 = vmul.f32 %v6241, %v5889
    %v6263 = vmul.f32 %v6222, %v6242
    %v6264 = vadd.f32 %v6262, %v6263
    %v6265 = vtanh.pop %v6264
    %v6266 = vmul.f32 %v6261, %v6265
    %6267 = vst [vmem:[#allocation2 + $0x5] sm:$0x1] %v6266
    %6268 = vmatpush.msra.mxu0 %v3729
    %6269 = vmatpush.msra.mxu0 %v3725
    %6270 = vmatpush.msra.mxu0 %v3721
    %6271 = vmatpush.msra.mxu0 %v3717
    %6272 = vmatpush.msra.mxu0 %v3713
    %6273 = vmatpush.msra.mxu0 %v3709
    %6274 = vmatpush.msra.mxu0 %v3705
    %6275 = vmatpush.msra.mxu0 %v3701
    %6276 = vmatpush.msra.mxu0 %v3697
    %6277 = vmatpush.msra.mxu0 %v3693
    %6278 = vmatpush.msra.mxu0 %v3689
    %6279 = vmatpush.msra.mxu0 %v3685
    %6280 = vmatpush.msra.mxu0 %v3681
    %6281 = vmatpush.msra.mxu0 %v3677
    %6282 = vmatpush.msra.mxu0 %v3673
    %6283 = vmatpush.msra.mxu0 %v3669
    %6284 = vmatmul.f32.gmra.mxu0 %v6039
    %v6285 = vpop.f32.mrf.mxu0
    %v6286 = vadd.f32 0.0, %v6285
    %6287 = vdwg.mxu0
    %6288 = vmatpush.msra.mxu0 %v3730
    %6289 = vmatpush.msra.mxu0 %v3726
    %6290 = vmatpush.msra.mxu0 %v3722
    %6291 = vmatpush.msra.mxu0 %v3718
    %6292 = vmatpush.msra.mxu0 %v3714
    %6293 = vmatpush.msra.mxu0 %v3710
    %6294 = vmatpush.msra.mxu0 %v3706
    %6295 = vmatpush.msra.mxu0 %v3702
    %6296 = vmatpush.msra.mxu0 %v3698
    %6297 = vmatpush.msra.mxu0 %v3694
    %6298 = vmatpush.msra.mxu0 %v3690
    %6299 = vmatpush.msra.mxu0 %v3686
    %6300 = vmatpush.msra.mxu0 %v3682
    %6301 = vmatpush.msra.mxu0 %v3678
    %6302 = vmatpush.msra.mxu0 %v3674
    %6303 = vmatpush.msra.mxu0 %v3670
    %6304 = vmatmul.f32.gmra.mxu0 %v6039
    %v6305 = vpop.f32.mrf.mxu0
    %v6306 = vadd.f32 0.0, %v6305
    %6307 = vdwg.mxu0
    %6308 = vmatpush.msra.mxu0 %v3731
    %6309 = vmatpush.msra.mxu0 %v3727
    %6310 = vmatpush.msra.mxu0 %v3723
    %6311 = vmatpush.msra.mxu0 %v3719
    %6312 = vmatpush.msra.mxu0 %v3715
    %6313 = vmatpush.msra.mxu0 %v3711
    %6314 = vmatpush.msra.mxu0 %v3707
    %6315 = vmatpush.msra.mxu0 %v3703
    %6316 = vmatpush.msra.mxu0 %v3699
    %6317 = vmatpush.msra.mxu0 %v3695
    %6318 = vmatpush.msra.mxu0 %v3691
    %6319 = vmatpush.msra.mxu0 %v3687
    %6320 = vmatpush.msra.mxu0 %v3683
    %6321 = vmatpush.msra.mxu0 %v3679
    %6322 = vmatpush.msra.mxu0 %v3675
    %6323 = vmatpush.msra.mxu0 %v3671
    %6324 = vmatmul.f32.gmra.mxu0 %v6039
    %v6325 = vpop.f32.mrf.mxu0
    %v6326 = vadd.f32 0.0, %v6325
    %6327 = vdwg.mxu0
    %6328 = vmatpush.msra.mxu0 %v3732
    %6329 = vmatpush.msra.mxu0 %v3728
    %6330 = vmatpush.msra.mxu0 %v3724
    %6331 = vmatpush.msra.mxu0 %v3720
    %6332 = vmatpush.msra.mxu0 %v3716
    %6333 = vmatpush.msra.mxu0 %v3712
    %6334 = vmatpush.msra.mxu0 %v3708
    %6335 = vmatpush.msra.mxu0 %v3704
    %6336 = vmatpush.msra.mxu0 %v3700
    %6337 = vmatpush.msra.mxu0 %v3696
    %6338 = vmatpush.msra.mxu0 %v3692
    %6339 = vmatpush.msra.mxu0 %v3688
    %6340 = vmatpush.msra.mxu0 %v3684
    %6341 = vmatpush.msra.mxu0 %v3680
    %6342 = vmatpush.msra.mxu0 %v3676
    %6343 = vmatpush.msra.mxu0 %v3672
    %6344 = vmatmul.f32.gmra.mxu0 %v6039
    %v6345 = vpop.f32.mrf.mxu0
    %v6346 = vadd.f32 0.0, %v6345
    %6347 = vdwg.mxu0
    %v6348 = vadd.f32 %v3607, %v6286
    %v6349 = vadd.f32 %v3627, %v6306
    %v6350 = vadd.f32 %v3647, %v6326
    %v6351 = vadd.f32 %v3667, %v6346
    %v6352 = vxor.u32 %v6348, 2147483648
    %v6353 = vmul.f32 %v6352, 1.442695
    %v6354 = vpow.pop %v6353
    %v6355 = vadd.f32 %v6354, 1.0
    %v6356 = vrcp.pop %v6355
    %v6357 = vmul.f32 %v6355, %v6356
    %v6358 = vsub.f32 1.0, %v6357
    %v6359 = vmul.f32 %v6356, %v6358
    %v6360 = vadd.f32 %v6356, %v6359
    %vm6361 = vweird.f32 %v6355
    %vm6362 = vweird.f32 %v6356
    %vm6363 = vmor %vm6361, %vm6362
    %v6364 = vsel %vm6363, %v6356, %v6360
    %v6365 = vand.u32 2147483647, %v6355
    %vm6366 = vcmp.eq.f32.partialorder %v6365, 8.507059e+37
    %v6367 = vand.u32 %v6355, 2147483648
    %v6368 = vor.u32 1.1754944e-38, %v6367
    %v6369 = vsel %vm6366, %v6368, %v6364
    %v6370 = vmul.f32 1.0, %v6369
    %v6371 = vxor.u32 %v6349, 2147483648
    %v6372 = vmul.f32 %v6371, 1.442695
    %v6373 = vpow.pop %v6372
    %v6374 = vadd.f32 %v6373, 1.0
    %v6375 = vrcp.pop %v6374
    %v6376 = vmul.f32 %v6374, %v6375
    %v6377 = vsub.f32 1.0, %v6376
    %v6378 = vmul.f32 %v6375, %v6377
    %v6379 = vadd.f32 %v6375, %v6378
    %vm6380 = vweird.f32 %v6374
    %vm6381 = vweird.f32 %v6375
    %vm6382 = vmor %vm6380, %vm6381
    %v6383 = vsel %vm6382, %v6375, %v6379
    %v6384 = vand.u32 2147483647, %v6374
    %vm6385 = vcmp.eq.f32.partialorder %v6384, 8.507059e+37
    %v6386 = vand.u32 %v6374, 2147483648
    %v6387 = vor.u32 1.1754944e-38, %v6386
    %v6388 = vsel %vm6385, %v6387, %v6383
    %v6389 = vmul.f32 1.0, %v6388
    %v6390 = vtanh.pop %v6350
    %v6391 = vxor.u32 %v6351, 2147483648
    %v6392 = vmul.f32 %v6391, 1.442695
    %v6393 = vpow.pop %v6392
    %v6394 = vadd.f32 %v6393, 1.0
    %v6395 = vrcp.pop %v6394
    %v6396 = vmul.f32 %v6394, %v6395
    %v6397 = vsub.f32 1.0, %v6396
    %v6398 = vmul.f32 %v6395, %v6397
    %v6399 = vadd.f32 %v6395, %v6398
    %vm6400 = vweird.f32 %v6394
    %vm6401 = vweird.f32 %v6395
    %vm6402 = vmor %vm6400, %vm6401
    %v6403 = vsel %vm6402, %v6395, %v6399
    %v6404 = vand.u32 2147483647, %v6394
    %vm6405 = vcmp.eq.f32.partialorder %v6404, 8.507059e+37
    %v6406 = vand.u32 %v6394, 2147483648
    %v6407 = vor.u32 1.1754944e-38, %v6406
    %v6408 = vsel %vm6405, %v6407, %v6403
    %v6409 = vmul.f32 1.0, %v6408
    %v6410 = vmul.f32 %v6389, %v6037
    %v6411 = vmul.f32 %v6370, %v6390
    %v6412 = vadd.f32 %v6410, %v6411
    %v6413 = vtanh.pop %v6412
    %v6414 = vmul.f32 %v6409, %v6413
    %6415 = vmatpush.msra.mxu0 %v3793
    %6416 = vmatpush.msra.mxu0 %v3789
    %6417 = vmatpush.msra.mxu0 %v3785
    %6418 = vmatpush.msra.mxu0 %v3781
    %6419 = vmatpush.msra.mxu0 %v3777
    %6420 = vmatpush.msra.mxu0 %v3773
    %6421 = vmatpush.msra.mxu0 %v3769
    %6422 = vmatpush.msra.mxu0 %v3765
    %6423 = vmatpush.msra.mxu0 %v3761
    %6424 = vmatpush.msra.mxu0 %v3757
    %6425 = vmatpush.msra.mxu0 %v3753
    %6426 = vmatpush.msra.mxu0 %v3749
    %6427 = vmatpush.msra.mxu0 %v3745
    %6428 = vmatpush.msra.mxu0 %v3741
    %6429 = vmatpush.msra.mxu0 %v3737
    %6430 = vmatpush.msra.mxu0 %v3733
    %6431 = vmatmul.f32.gmra.mxu0 %v6039
    %v6432 = vpop.f32.mrf.mxu0
    %v6433 = vadd.f32 %v4157, %v6432
    %6434 = vdwg.mxu0
    %6435 = vmatpush.msra.mxu0 %v3794
    %6436 = vmatpush.msra.mxu0 %v3790
    %6437 = vmatpush.msra.mxu0 %v3786
    %6438 = vmatpush.msra.mxu0 %v3782
    %6439 = vmatpush.msra.mxu0 %v3778
    %6440 = vmatpush.msra.mxu0 %v3774
    %6441 = vmatpush.msra.mxu0 %v3770
    %6442 = vmatpush.msra.mxu0 %v3766
    %6443 = vmatpush.msra.mxu0 %v3762
    %6444 = vmatpush.msra.mxu0 %v3758
    %6445 = vmatpush.msra.mxu0 %v3754
    %6446 = vmatpush.msra.mxu0 %v3750
    %6447 = vmatpush.msra.mxu0 %v3746
    %6448 = vmatpush.msra.mxu0 %v3742
    %6449 = vmatpush.msra.mxu0 %v3738
    %6450 = vmatpush.msra.mxu0 %v3734
    %6451 = vmatmul.f32.gmra.mxu0 %v6039
    %v6452 = vpop.f32.mrf.mxu0
    %v6453 = vadd.f32 %v4158, %v6452
    %6454 = vdwg.mxu0
    %6455 = vmatpush.msra.mxu0 %v3795
    %6456 = vmatpush.msra.mxu0 %v3791
    %6457 = vmatpush.msra.mxu0 %v3787
    %6458 = vmatpush.msra.mxu0 %v3783
    %6459 = vmatpush.msra.mxu0 %v3779
    %6460 = vmatpush.msra.mxu0 %v3775
    %6461 = vmatpush.msra.mxu0 %v3771
    %6462 = vmatpush.msra.mxu0 %v3767
    %6463 = vmatpush.msra.mxu0 %v3763
    %6464 = vmatpush.msra.mxu0 %v3759
    %6465 = vmatpush.msra.mxu0 %v3755
    %6466 = vmatpush.msra.mxu0 %v3751
    %6467 = vmatpush.msra.mxu0 %v3747
    %6468 = vmatpush.msra.mxu0 %v3743
    %6469 = vmatpush.msra.mxu0 %v3739
    %6470 = vmatpush.msra.mxu0 %v3735
    %6471 = vmatmul.f32.gmra.mxu0 %v6039
    %v6472 = vpop.f32.mrf.mxu0
    %v6473 = vadd.f32 %v4159, %v6472
    %6474 = vdwg.mxu0
    %6475 = vmatpush.msra.mxu0 %v3796
    %6476 = vmatpush.msra.mxu0 %v3792
    %6477 = vmatpush.msra.mxu0 %v3788
    %6478 = vmatpush.msra.mxu0 %v3784
    %6479 = vmatpush.msra.mxu0 %v3780
    %6480 = vmatpush.msra.mxu0 %v3776
    %6481 = vmatpush.msra.mxu0 %v3772
    %6482 = vmatpush.msra.mxu0 %v3768
    %6483 = vmatpush.msra.mxu0 %v3764
    %6484 = vmatpush.msra.mxu0 %v3760
    %6485 = vmatpush.msra.mxu0 %v3756
    %6486 = vmatpush.msra.mxu0 %v3752
    %6487 = vmatpush.msra.mxu0 %v3748
    %6488 = vmatpush.msra.mxu0 %v3744
    %6489 = vmatpush.msra.mxu0 %v3740
    %6490 = vmatpush.msra.mxu0 %v3736
    %6491 = vmatmul.f32.gmra.mxu0 %v6039
    %v6492 = vpop.f32.mrf.mxu0
    %v6493 = vadd.f32 %v4160, %v6492
    %6494 = vdwg.mxu0
    %6495 = vmatpush.msra.mxu0 %v3858
    %6496 = vmatpush.msra.mxu0 %v3854
    %6497 = vmatpush.msra.mxu0 %v3850
    %6498 = vmatpush.msra.mxu0 %v3846
    %6499 = vmatpush.msra.mxu0 %v3842
    %6500 = vmatpush.msra.mxu0 %v3838
    %6501 = vmatpush.msra.mxu0 %v3834
    %6502 = vmatpush.msra.mxu0 %v3830
    %6503 = vmatpush.msra.mxu0 %v3826
    %6504 = vmatpush.msra.mxu0 %v3822
    %6505 = vmatpush.msra.mxu0 %v3818
    %6506 = vmatpush.msra.mxu0 %v3814
    %6507 = vmatpush.msra.mxu0 %v3810
    %6508 = vmatpush.msra.mxu0 %v3806
    %6509 = vmatpush.msra.mxu0 %v3802
    %6510 = vmatpush.msra.mxu0 %v3798
    %6511 = vmatmul.f32.gmra.mxu0 %v6266
    %v6512 = vpop.f32.mrf.mxu0
    %v6513 = vadd.f32 0.0, %v6512
    %6514 = vdwg.mxu0
    %6515 = vmatpush.msra.mxu0 %v3859
    %6516 = vmatpush.msra.mxu0 %v3855
    %6517 = vmatpush.msra.mxu0 %v3851
    %6518 = vmatpush.msra.mxu0 %v3847
    %6519 = vmatpush.msra.mxu0 %v3843
    %6520 = vmatpush.msra.mxu0 %v3839
    %6521 = vmatpush.msra.mxu0 %v3835
    %6522 = vmatpush.msra.mxu0 %v3831
    %6523 = vmatpush.msra.mxu0 %v3827
    %6524 = vmatpush.msra.mxu0 %v3823
    %6525 = vmatpush.msra.mxu0 %v3819
    %6526 = vmatpush.msra.mxu0 %v3815
    %6527 = vmatpush.msra.mxu0 %v3811
    %6528 = vmatpush.msra.mxu0 %v3807
    %6529 = vmatpush.msra.mxu0 %v3803
    %6530 = vmatpush.msra.mxu0 %v3799
    %6531 = vmatmul.f32.gmra.mxu0 %v6266
    %v6532 = vpop.f32.mrf.mxu0
    %v6533 = vadd.f32 0.0, %v6532
    %6534 = vdwg.mxu0
    %6535 = vmatpush.msra.mxu0 %v3860
    %6536 = vmatpush.msra.mxu0 %v3856
    %6537 = vmatpush.msra.mxu0 %v3852
    %6538 = vmatpush.msra.mxu0 %v3848
    %6539 = vmatpush.msra.mxu0 %v3844
    %6540 = vmatpush.msra.mxu0 %v3840
    %6541 = vmatpush.msra.mxu0 %v3836
    %6542 = vmatpush.msra.mxu0 %v3832
    %6543 = vmatpush.msra.mxu0 %v3828
    %6544 = vmatpush.msra.mxu0 %v3824
    %6545 = vmatpush.msra.mxu0 %v3820
    %6546 = vmatpush.msra.mxu0 %v3816
    %6547 = vmatpush.msra.mxu0 %v3812
    %6548 = vmatpush.msra.mxu0 %v3808
    %6549 = vmatpush.msra.mxu0 %v3804
    %6550 = vmatpush.msra.mxu0 %v3800
    %6551 = vmatmul.f32.gmra.mxu0 %v6266
    %v6552 = vpop.f32.mrf.mxu0
    %v6553 = vadd.f32 0.0, %v6552
    %6554 = vdwg.mxu0
    %6555 = vmatpush.msra.mxu0 %v3861
    %6556 = vmatpush.msra.mxu0 %v3857
    %6557 = vmatpush.msra.mxu0 %v3853
    %6558 = vmatpush.msra.mxu0 %v3849
    %6559 = vmatpush.msra.mxu0 %v3845
    %6560 = vmatpush.msra.mxu0 %v3841
    %6561 = vmatpush.msra.mxu0 %v3837
    %6562 = vmatpush.msra.mxu0 %v3833
    %6563 = vmatpush.msra.mxu0 %v3829
    %6564 = vmatpush.msra.mxu0 %v3825
    %6565 = vmatpush.msra.mxu0 %v3821
    %6566 = vmatpush.msra.mxu0 %v3817
    %6567 = vmatpush.msra.mxu0 %v3813
    %6568 = vmatpush.msra.mxu0 %v3809
    %6569 = vmatpush.msra.mxu0 %v3805
    %6570 = vmatpush.msra.mxu0 %v3801
    %6571 = vmatmul.f32.gmra.mxu0 %v6266
    %v6572 = vpop.f32.mrf.mxu0
    %v6573 = vadd.f32 0.0, %v6572
    %6574 = vdwg.mxu0
    %v6575 = vadd.f32 %v6433, %v6513
    %v6576 = vadd.f32 %v6453, %v6533
    %v6577 = vadd.f32 %v6473, %v6553
    %v6578 = vadd.f32 %v6493, %v6573
    %v6579 = vxor.u32 %v6575, 2147483648
    %v6580 = vmul.f32 %v6579, 1.442695
    %v6581 = vpow.pop %v6580
    %v6582 = vadd.f32 %v6581, 1.0
    %v6583 = vrcp.pop %v6582
    %v6584 = vmul.f32 %v6582, %v6583
    %v6585 = vsub.f32 1.0, %v6584
    %v6586 = vmul.f32 %v6583, %v6585
    %v6587 = vadd.f32 %v6583, %v6586
    %vm6588 = vweird.f32 %v6582
    %vm6589 = vweird.f32 %v6583
    %vm6590 = vmor %vm6588, %vm6589
    %v6591 = vsel %vm6590, %v6583, %v6587
    %v6592 = vand.u32 2147483647, %v6582
    %vm6593 = vcmp.eq.f32.partialorder %v6592, 8.507059e+37
    %v6594 = vand.u32 %v6582, 2147483648
    %v6595 = vor.u32 1.1754944e-38, %v6594
    %v6596 = vsel %vm6593, %v6595, %v6591
    %v6597 = vmul.f32 1.0, %v6596
    %v6598 = vxor.u32 %v6576, 2147483648
    %v6599 = vmul.f32 %v6598, 1.442695
    %v6600 = vpow.pop %v6599
    %v6601 = vadd.f32 %v6600, 1.0
    %v6602 = vrcp.pop %v6601
    %v6603 = vmul.f32 %v6601, %v6602
    %v6604 = vsub.f32 1.0, %v6603
    %v6605 = vmul.f32 %v6602, %v6604
    %v6606 = vadd.f32 %v6602, %v6605
    %vm6607 = vweird.f32 %v6601
    %vm6608 = vweird.f32 %v6602
    %vm6609 = vmor %vm6607, %vm6608
    %v6610 = vsel %vm6609, %v6602, %v6606
    %v6611 = vand.u32 2147483647, %v6601
    %vm6612 = vcmp.eq.f32.partialorder %v6611, 8.507059e+37
    %v6613 = vand.u32 %v6601, 2147483648
    %v6614 = vor.u32 1.1754944e-38, %v6613
    %v6615 = vsel %vm6612, %v6614, %v6610
    %v6616 = vmul.f32 1.0, %v6615
    %v6617 = vtanh.pop %v6577
    %v6618 = vxor.u32 %v6578, 2147483648
    %v6619 = vmul.f32 %v6618, 1.442695
    %v6620 = vpow.pop %v6619
    %v6621 = vadd.f32 %v6620, 1.0
    %v6622 = vrcp.pop %v6621
    %v6623 = vmul.f32 %v6621, %v6622
    %v6624 = vsub.f32 1.0, %v6623
    %v6625 = vmul.f32 %v6622, %v6624
    %v6626 = vadd.f32 %v6622, %v6625
    %vm6627 = vweird.f32 %v6621
    %vm6628 = vweird.f32 %v6622
    %vm6629 = vmor %vm6627, %vm6628
    %v6630 = vsel %vm6629, %v6622, %v6626
    %v6631 = vand.u32 2147483647, %v6621
    %vm6632 = vcmp.eq.f32.partialorder %v6631, 8.507059e+37
    %v6633 = vand.u32 %v6621, 2147483648
    %v6634 = vor.u32 1.1754944e-38, %v6633
    %v6635 = vsel %vm6632, %v6634, %v6630
    %v6636 = vmul.f32 1.0, %v6635
    %v6637 = vmul.f32 %v6616, %v6264
    %v6638 = vmul.f32 %v6597, %v6617
    %v6639 = vadd.f32 %v6637, %v6638
    %v6640 = vtanh.pop %v6639
    %v6641 = vmul.f32 %v6636, %v6640
    %6642 = vst [vmem:[#allocation2 + $0x6] sm:$0x1] %v6641
    %6643 = vmatpush.msra.mxu0 %v3793
    %6644 = vmatpush.msra.mxu0 %v3789
    %6645 = vmatpush.msra.mxu0 %v3785
    %6646 = vmatpush.msra.mxu0 %v3781
    %6647 = vmatpush.msra.mxu0 %v3777
    %6648 = vmatpush.msra.mxu0 %v3773
    %6649 = vmatpush.msra.mxu0 %v3769
    %6650 = vmatpush.msra.mxu0 %v3765
    %6651 = vmatpush.msra.mxu0 %v3761
    %6652 = vmatpush.msra.mxu0 %v3757
    %6653 = vmatpush.msra.mxu0 %v3753
    %6654 = vmatpush.msra.mxu0 %v3749
    %6655 = vmatpush.msra.mxu0 %v3745
    %6656 = vmatpush.msra.mxu0 %v3741
    %6657 = vmatpush.msra.mxu0 %v3737
    %6658 = vmatpush.msra.mxu0 %v3733
    %6659 = vmatmul.f32.gmra.mxu0 %v6414
    %v6660 = vpop.f32.mrf.mxu0
    %v6661 = vadd.f32 %v4157, %v6660
    %6662 = vdwg.mxu0
    %6663 = vmatpush.msra.mxu0 %v3794
    %6664 = vmatpush.msra.mxu0 %v3790
    %6665 = vmatpush.msra.mxu0 %v3786
    %6666 = vmatpush.msra.mxu0 %v3782
    %6667 = vmatpush.msra.mxu0 %v3778
    %6668 = vmatpush.msra.mxu0 %v3774
    %6669 = vmatpush.msra.mxu0 %v3770
    %6670 = vmatpush.msra.mxu0 %v3766
    %6671 = vmatpush.msra.mxu0 %v3762
    %6672 = vmatpush.msra.mxu0 %v3758
    %6673 = vmatpush.msra.mxu0 %v3754
    %6674 = vmatpush.msra.mxu0 %v3750
    %6675 = vmatpush.msra.mxu0 %v3746
    %6676 = vmatpush.msra.mxu0 %v3742
    %6677 = vmatpush.msra.mxu0 %v3738
    %6678 = vmatpush.msra.mxu0 %v3734
    %6679 = vmatmul.f32.gmra.mxu0 %v6414
    %v6680 = vpop.f32.mrf.mxu0
    %v6681 = vadd.f32 %v4158, %v6680
    %6682 = vdwg.mxu0
    %6683 = vmatpush.msra.mxu0 %v3795
    %6684 = vmatpush.msra.mxu0 %v3791
    %6685 = vmatpush.msra.mxu0 %v3787
    %6686 = vmatpush.msra.mxu0 %v3783
    %6687 = vmatpush.msra.mxu0 %v3779
    %6688 = vmatpush.msra.mxu0 %v3775
    %6689 = vmatpush.msra.mxu0 %v3771
    %6690 = vmatpush.msra.mxu0 %v3767
    %6691 = vmatpush.msra.mxu0 %v3763
    %6692 = vmatpush.msra.mxu0 %v3759
    %6693 = vmatpush.msra.mxu0 %v3755
    %6694 = vmatpush.msra.mxu0 %v3751
    %6695 = vmatpush.msra.mxu0 %v3747
    %6696 = vmatpush.msra.mxu0 %v3743
    %6697 = vmatpush.msra.mxu0 %v3739
    %6698 = vmatpush.msra.mxu0 %v3735
    %6699 = vmatmul.f32.gmra.mxu0 %v6414
    %v6700 = vpop.f32.mrf.mxu0
    %v6701 = vadd.f32 %v4159, %v6700
    %6702 = vdwg.mxu0
    %6703 = vmatpush.msra.mxu0 %v3796
    %6704 = vmatpush.msra.mxu0 %v3792
    %6705 = vmatpush.msra.mxu0 %v3788
    %6706 = vmatpush.msra.mxu0 %v3784
    %6707 = vmatpush.msra.mxu0 %v3780
    %6708 = vmatpush.msra.mxu0 %v3776
    %6709 = vmatpush.msra.mxu0 %v3772
    %6710 = vmatpush.msra.mxu0 %v3768
    %6711 = vmatpush.msra.mxu0 %v3764
    %6712 = vmatpush.msra.mxu0 %v3760
    %6713 = vmatpush.msra.mxu0 %v3756
    %6714 = vmatpush.msra.mxu0 %v3752
    %6715 = vmatpush.msra.mxu0 %v3748
    %6716 = vmatpush.msra.mxu0 %v3744
    %6717 = vmatpush.msra.mxu0 %v3740
    %6718 = vmatpush.msra.mxu0 %v3736
    %6719 = vmatmul.f32.gmra.mxu0 %v6414
    %v6720 = vpop.f32.mrf.mxu0
    %v6721 = vadd.f32 %v4160, %v6720
    %6722 = vdwg.mxu0
    %6723 = vmatpush.msra.mxu0 %v3858
    %6724 = vmatpush.msra.mxu0 %v3854
    %6725 = vmatpush.msra.mxu0 %v3850
    %6726 = vmatpush.msra.mxu0 %v3846
    %6727 = vmatpush.msra.mxu0 %v3842
    %6728 = vmatpush.msra.mxu0 %v3838
    %6729 = vmatpush.msra.mxu0 %v3834
    %6730 = vmatpush.msra.mxu0 %v3830
    %6731 = vmatpush.msra.mxu0 %v3826
    %6732 = vmatpush.msra.mxu0 %v3822
    %6733 = vmatpush.msra.mxu0 %v3818
    %6734 = vmatpush.msra.mxu0 %v3814
    %6735 = vmatpush.msra.mxu0 %v3810
    %6736 = vmatpush.msra.mxu0 %v3806
    %6737 = vmatpush.msra.mxu0 %v3802
    %6738 = vmatpush.msra.mxu0 %v3798
    %6739 = vmatmul.f32.gmra.mxu0 %v6641
    %v6740 = vpop.f32.mrf.mxu0
    %v6741 = vadd.f32 0.0, %v6740
    %6742 = vdwg.mxu0
    %6743 = vmatpush.msra.mxu0 %v3859
    %6744 = vmatpush.msra.mxu0 %v3855
    %6745 = vmatpush.msra.mxu0 %v3851
    %6746 = vmatpush.msra.mxu0 %v3847
    %6747 = vmatpush.msra.mxu0 %v3843
    %6748 = vmatpush.msra.mxu0 %v3839
    %6749 = vmatpush.msra.mxu0 %v3835
    %6750 = vmatpush.msra.mxu0 %v3831
    %6751 = vmatpush.msra.mxu0 %v3827
    %6752 = vmatpush.msra.mxu0 %v3823
    %6753 = vmatpush.msra.mxu0 %v3819
    %6754 = vmatpush.msra.mxu0 %v3815
    %6755 = vmatpush.msra.mxu0 %v3811
    %6756 = vmatpush.msra.mxu0 %v3807
    %6757 = vmatpush.msra.mxu0 %v3803
    %6758 = vmatpush.msra.mxu0 %v3799
    %6759 = vmatmul.f32.gmra.mxu0 %v6641
    %v6760 = vpop.f32.mrf.mxu0
    %v6761 = vadd.f32 0.0, %v6760
    %6762 = vdwg.mxu0
    %6763 = vmatpush.msra.mxu0 %v3860
    %6764 = vmatpush.msra.mxu0 %v3856
    %6765 = vmatpush.msra.mxu0 %v3852
    %6766 = vmatpush.msra.mxu0 %v3848
    %6767 = vmatpush.msra.mxu0 %v3844
    %6768 = vmatpush.msra.mxu0 %v3840
    %6769 = vmatpush.msra.mxu0 %v3836
    %6770 = vmatpush.msra.mxu0 %v3832
    %6771 = vmatpush.msra.mxu0 %v3828
    %6772 = vmatpush.msra.mxu0 %v3824
    %6773 = vmatpush.msra.mxu0 %v3820
    %6774 = vmatpush.msra.mxu0 %v3816
    %6775 = vmatpush.msra.mxu0 %v3812
    %6776 = vmatpush.msra.mxu0 %v3808
    %6777 = vmatpush.msra.mxu0 %v3804
    %6778 = vmatpush.msra.mxu0 %v3800
    %6779 = vmatmul.f32.gmra.mxu0 %v6641
    %v6780 = vpop.f32.mrf.mxu0
    %v6781 = vadd.f32 0.0, %v6780
    %6782 = vdwg.mxu0
    %6783 = vmatpush.msra.mxu0 %v3861
    %6784 = vmatpush.msra.mxu0 %v3857
    %6785 = vmatpush.msra.mxu0 %v3853
    %6786 = vmatpush.msra.mxu0 %v3849
    %6787 = vmatpush.msra.mxu0 %v3845
    %6788 = vmatpush.msra.mxu0 %v3841
    %6789 = vmatpush.msra.mxu0 %v3837
    %6790 = vmatpush.msra.mxu0 %v3833
    %6791 = vmatpush.msra.mxu0 %v3829
    %6792 = vmatpush.msra.mxu0 %v3825
    %6793 = vmatpush.msra.mxu0 %v3821
    %6794 = vmatpush.msra.mxu0 %v3817
    %6795 = vmatpush.msra.mxu0 %v3813
    %6796 = vmatpush.msra.mxu0 %v3809
    %6797 = vmatpush.msra.mxu0 %v3805
    %6798 = vmatpush.msra.mxu0 %v3801
    %6799 = vmatmul.f32.gmra.mxu0 %v6641
    %v6800 = vpop.f32.mrf.mxu0
    %v6801 = vadd.f32 0.0, %v6800
    %6802 = vdwg.mxu0
    %v6803 = vadd.f32 %v6661, %v6741
    %v6804 = vadd.f32 %v6681, %v6761
    %v6805 = vadd.f32 %v6701, %v6781
    %v6806 = vadd.f32 %v6721, %v6801
    %v6807 = vxor.u32 %v6803, 2147483648
    %v6808 = vmul.f32 %v6807, 1.442695
    %v6809 = vpow.pop %v6808
    %v6810 = vadd.f32 %v6809, 1.0
    %v6811 = vrcp.pop %v6810
    %v6812 = vmul.f32 %v6810, %v6811
    %v6813 = vsub.f32 1.0, %v6812
    %v6814 = vmul.f32 %v6811, %v6813
    %v6815 = vadd.f32 %v6811, %v6814
    %vm6816 = vweird.f32 %v6810
    %vm6817 = vweird.f32 %v6811
    %vm6818 = vmor %vm6816, %vm6817
    %v6819 = vsel %vm6818, %v6811, %v6815
    %v6820 = vand.u32 2147483647, %v6810
    %vm6821 = vcmp.eq.f32.partialorder %v6820, 8.507059e+37
    %v6822 = vand.u32 %v6810, 2147483648
    %v6823 = vor.u32 1.1754944e-38, %v6822
    %v6824 = vsel %vm6821, %v6823, %v6819
    %v6825 = vmul.f32 1.0, %v6824
    %v6826 = vxor.u32 %v6804, 2147483648
    %v6827 = vmul.f32 %v6826, 1.442695
    %v6828 = vpow.pop %v6827
    %v6829 = vadd.f32 %v6828, 1.0
    %v6830 = vrcp.pop %v6829
    %v6831 = vmul.f32 %v6829, %v6830
    %v6832 = vsub.f32 1.0, %v6831
    %v6833 = vmul.f32 %v6830, %v6832
    %v6834 = vadd.f32 %v6830, %v6833
    %vm6835 = vweird.f32 %v6829
    %vm6836 = vweird.f32 %v6830
    %vm6837 = vmor %vm6835, %vm6836
    %v6838 = vsel %vm6837, %v6830, %v6834
    %v6839 = vand.u32 2147483647, %v6829
    %vm6840 = vcmp.eq.f32.partialorder %v6839, 8.507059e+37
    %v6841 = vand.u32 %v6829, 2147483648
    %v6842 = vor.u32 1.1754944e-38, %v6841
    %v6843 = vsel %vm6840, %v6842, %v6838
    %v6844 = vmul.f32 1.0, %v6843
    %v6845 = vtanh.pop %v6805
    %v6846 = vxor.u32 %v6806, 2147483648
    %v6847 = vmul.f32 %v6846, 1.442695
    %v6848 = vpow.pop %v6847
    %v6849 = vadd.f32 %v6848, 1.0
    %v6850 = vrcp.pop %v6849
    %v6851 = vmul.f32 %v6849, %v6850
    %v6852 = vsub.f32 1.0, %v6851
    %v6853 = vmul.f32 %v6850, %v6852
    %v6854 = vadd.f32 %v6850, %v6853
    %vm6855 = vweird.f32 %v6849
    %vm6856 = vweird.f32 %v6850
    %vm6857 = vmor %vm6855, %vm6856
    %v6858 = vsel %vm6857, %v6850, %v6854
    %v6859 = vand.u32 2147483647, %v6849
    %vm6860 = vcmp.eq.f32.partialorder %v6859, 8.507059e+37
    %v6861 = vand.u32 %v6849, 2147483648
    %v6862 = vor.u32 1.1754944e-38, %v6861
    %v6863 = vsel %vm6860, %v6862, %v6858
    %v6864 = vmul.f32 1.0, %v6863
    %v6865 = vmul.f32 %v6844, %v6639
    %v6866 = vmul.f32 %v6825, %v6845
    %v6867 = vadd.f32 %v6865, %v6866
    %v6868 = vtanh.pop %v6867
    %v6869 = vmul.f32 %v6864, %v6868
    %6870 = vst [vmem:[#allocation2 + $0x7] sm:$0x1] %v6869
    %v6871 = vld [vmem:[#allocation2] sm:$0xff]
    %v6872 = vld [vmem:[%s13] sm:$0x1]
    %v6874 = vperm.slane %v6872, 0
    %v6876 = vmul.f32 %v6871, %v6874
    %6877 = vadd.xlane.f32.xlu0 %v6876
    %v6878 = vpop.xlane.xlu0 %6877
    %v6879 = vld [vmem:[#allocation3] sm:$0x1]
    %v6881 = vperm.slane %v6879, 0
    %v6883 = vadd.f32 %v6878, %v6881
    %vm6884 = vcmask 7168
    %6885 = vst.msk [vmem:[%s15] sm:$0xff] %vm6884, %v6883
    // Predicated region
    $region90: #{tpu_custom_call.1} parent=1 // pred_check
      _
    $region91: #{tpu_custom_call.1} parent=1 // pred_check_branch
      %6887 = sbr.rel (0) target = $region93
    $region92: #{tpu_custom_call.1} parent=1 // pred_region
      _
    $region93: #{tpu_custom_call.1} parent=1 // pred_fallthru
      _
    // Predicated region
    $region94: #{tpu_custom_call.1} parent=1 // pred_check
      _
    $region95: #{tpu_custom_call.1} parent=1 // pred_check_branch
      %6889 = sbr.rel (0) target = $region97
    $region96: #{tpu_custom_call.1} parent=1 // pred_region
      _
    $region97: #{tpu_custom_call.1} parent=1 // pred_fallthru
      _
    %6890 = vsyncpa [#allocation5], 1
    %6891 = vsyncpa [#allocation7], 1
    %6892 = vsyncpa [#allocation10], 1
    %6893 = vsyncpa [#allocation13], 1

</llo_original>
